<compile_context>
chip_gen: v6e
topology: v6e:2x2x1
jax: 0.10.0
libtpu: 0.0.40
codegen_flags: <defaults>
</compile_context>

<pallas_src>
import functools
import numpy as np
import jax
import jax.numpy as jnp
from jax.experimental import pallas as pl
from jax.experimental.pallas import tpu as pltpu

# _WhisperHParams
SAMPLE_RATE = 16000
N_FFT = 400
N_MELS = 80
HOP_LENGTH = 160
CHUNK_LENGTH = 30
N_SAMPLES = CHUNK_LENGTH * SAMPLE_RATE
N_FRAMES = N_SAMPLES // HOP_LENGTH          # 3000

N_FREQ = N_FFT // 2 + 1                     # 201 one-sided rFFT bins
F_PAD = 256                                 # freq dim zero-padded to lane multiple
MEL_PAD = 128                               # mel dim zero-padded to lane multiple
K_FRAME = 3 * HOP_LENGTH                    # 480 (frame = 3 hop rows; last 80 taps zero)
TILE_T = 1024                               # frames per grid step (128-multiple)


def _mel_filterbank(n_fft, n_mels=80, sr=16000, min_mel=0,
                    max_mel=45.245640471924965, dtype=np.float32):
    """Slaney-normalized mel filterbank (verbatim from the reference module)."""
    fbank = np.zeros((n_mels, n_fft // 2 + 1), dtype=dtype)
    freq_bins = np.fft.rfftfreq(n=n_fft, d=1.0 / sr)
    mel = np.linspace(min_mel, max_mel, n_mels + 2)
    f_min = 0.0
    f_sp = 200.0 / 3
    freqs = f_min + f_sp * mel
    min_log_hz = 1000.0
    min_log_mel = (min_log_hz - f_min) / f_sp
    logstep = np.log(6.4) / 27.0
    log_t = mel >= min_log_mel
    freqs[log_t] = min_log_hz * np.exp(logstep * (mel[log_t] - min_log_mel))
    mel_bins = freqs
    mel_spacing = np.diff(mel_bins)
    ramps = mel_bins.reshape(-1, 1) - freq_bins.reshape(1, -1)
    for i in range(n_mels):
        left = -ramps[i] / mel_spacing[i]
        right = ramps[i + 2] / mel_spacing[i + 1]
        fbank[i] = np.maximum(0, np.minimum(left, right))
    energy_norm = 2.0 / (mel_bins[2:n_mels + 2] - mel_bins[:n_mels])
    fbank *= energy_norm[:, np.newaxis]
    return fbank


def _make_params():
    """Transposed windowed real-DFT weight W^T (512, 480) bf16 + mel fb (128, 256) f32."""
    n = np.arange(N_FFT)
    window = 0.5 - 0.5 * np.cos(2.0 * np.pi * n / N_FFT)     # torch.hann_window (periodic)
    f = np.arange(N_FREQ)
    ang = 2.0 * np.pi * np.outer(f, n) / N_FFT               # (N_FREQ, N_FFT)
    # Rows [0:256) are cos (re), rows [256:512) are sin (im); cols [400:480) zero
    # so the extra 80 samples of the 3-hop frame contribute nothing.
    w_t = np.zeros((2 * F_PAD, K_FRAME), np.float32)          # (512, 480)
    w_t[:N_FREQ, :N_FFT] = (np.cos(ang) * window[None, :]).astype(np.float32)
    w_t[F_PAD:F_PAD + N_FREQ, :N_FFT] = (np.sin(ang) * window[None, :]).astype(np.float32)
    mel_fb = _mel_filterbank(n_fft=N_FFT, n_mels=N_MELS, sr=SAMPLE_RATE)   # (80, 201)
    mel_tt = np.zeros((MEL_PAD, F_PAD), np.float32)                        # (128, 256)
    mel_tt[:N_MELS, :N_FREQ] = mel_fb
    return jnp.asarray(w_t).astype(jnp.bfloat16), jnp.asarray(mel_tt)


def _stft_mel_kernel(f_ref, w_ref, mel_ref, logspec_ref, max_ref, *, t_valid):
    # f_ref:   (1, 480, TILE_T)  bf16  frames^T (time on lanes)
    # w_ref:   (512, 480)        bf16  [hann*cos ; hann*sin]^T
    # mel_ref: (128, 256)        f32   padded mel filterbank
    t = pl.program_id(1)

    # One K=480 bf16 matmul (f32 accumulate): re/im of all TILE_T frames at once.
    re_im = jnp.dot(w_ref[...], f_ref[0],
                    preferred_element_type=jnp.float32)          # (512, TILE_T) f32
    re = re_im[:F_PAD, :]
    im = re_im[F_PAD:, :]
    power = re * re + im * im                                    # |STFT|^2, (256, TILE_T)

    mel = jnp.dot(mel_ref[...], power,
                  preferred_element_type=jnp.float32)            # (128, TILE_T)
    log_spec = jnp.log10(jnp.maximum(mel, 1e-10))                # clamp(min).log10()

    # already lane-dense and pre-transposed: (80, TILE_T) with time on lanes.
    logspec_ref[0] = log_spec[:N_MELS, :]

    # per-tile max over *valid* (mel < 80, frame < t_valid) entries only.
    mrow = jax.lax.broadcasted_iota(jnp.int32, (MEL_PAD, TILE_T), 0)
    tcol = jax.lax.broadcasted_iota(jnp.int32, (MEL_PAD, TILE_T), 1)
    valid = (mrow < N_MELS) & ((tcol + t * TILE_T) < t_valid)
    tile_max = jnp.max(jnp.where(valid, log_spec, -jnp.inf))
    max_ref[0, 0] = jnp.full((8, 128), tile_max, dtype=jnp.float32)


def _finalize_kernel(specmin_ref, ls_ref, out_ref, *, t_valid):
    # specmin_ref: (1,) f32 SMEM; ls_ref: (1, 80, T_pad); out: (1, 80, 3000)
    spec_min = specmin_ref[0]
    # 128-aligned prefix for the data write (unmasked stores); the few garbage
    # columns in [t_valid, t_up) are overwritten by the pad write below.
    t_up = min(((t_valid + 127) // 128) * 128, N_FRAMES)
    ls = jnp.maximum(ls_ref[0, :, :t_up], spec_min)
    out_ref[0, :, 0:t_up] = (ls + 4.0) * 0.25
    if t_valid < N_FRAMES:
        pad_val = (spec_min + 4.0) * 0.25
        out_ref[0, :, t_valid:] = jnp.full((N_MELS, N_FRAMES - t_valid),
                                           pad_val, jnp.float32)


def whisper_pre_pipeline(audio_pcm):
    B, L = audio_pcm.shape
    T = L // HOP_LENGTH              # frames after dropping the last STFT frame
    assert 0 < T <= N_FRAMES, "audio must be non-empty and at most 30 s"
    n_tiles = -(-T // TILE_T)
    t_pad = n_tiles * TILE_T
    w_t, mel_tt = _make_params()

    # reflect pad (torch.stft center=True, pad_mode='reflect'), hop-row framing,
    # then frames^T = [hop_i ; hop_{i+1} ; hop_{i+2}] with time on the last axis.
    pad = N_FFT // 2
    x = jnp.pad(audio_pcm.astype(jnp.float32), ((0, 0), (pad, pad)), mode="reflect")
    need = (t_pad + 2) * HOP_LENGTH
    if x.shape[1] < need:
        x = jnp.pad(x, ((0, 0), (0, need - x.shape[1])))
    else:
        x = x[:, :need]
    x = x.astype(jnp.bfloat16)                          # bf16 MXU operand (f32 accumulate)
    hops = x.reshape(B, t_pad + 2, HOP_LENGTH)
    hops_t = jnp.transpose(hops, (0, 2, 1))             # (B, 160, t_pad + 2)
    frames_t = jnp.concatenate([hops_t[:, :, 0:t_pad],
                                hops_t[:, :, 1:t_pad + 1],
                                hops_t[:, :, 2:t_pad + 2]], axis=1)   # (B, 480, t_pad)

    k1 = functools.partial(_stft_mel_kernel, t_valid=T)
    log_spec, maxes = pl.pallas_call(
        k1,
        out_shape=(jax.ShapeDtypeStruct((B, N_MELS, t_pad), jnp.float32),
                   jax.ShapeDtypeStruct((B, n_tiles, 8, 128), jnp.float32)),
        grid=(B, n_tiles),
        in_specs=[
            pl.BlockSpec((1, K_FRAME, TILE_T), lambda b, t: (b, 0, t)),
            # constant weights: constant index_map => no re-DMA between grid steps
            pl.BlockSpec((2 * F_PAD, K_FRAME), lambda b, t: (0, 0)),
            pl.BlockSpec((MEL_PAD, F_PAD), lambda b, t: (0, 0)),
        ],
        out_specs=(
            pl.BlockSpec((1, N_MELS, TILE_T), lambda b, t: (b, 0, t)),
            pl.BlockSpec((1, 1, 8, 128), lambda b, t: (b, t, 0, 0)),
        ),
        compiler_params=pltpu.CompilerParams(
            dimension_semantics=("parallel", "parallel"),
            vmem_limit_bytes=32 * 1024 * 1024),
    )(frames_t, w_t, mel_tt)

    # global spec_min = max(log_spec over valid region, all batches) - 8.0
    # (matches torch .max() without dims: reduction over batch AND time).
    spec_min = (jnp.max(maxes) - 8.0).reshape(1).astype(jnp.float32)

    k2 = functools.partial(_finalize_kernel, t_valid=T)
    out = pl.pallas_call(
        k2,
        out_shape=jax.ShapeDtypeStruct((B, N_MELS, N_FRAMES), jnp.float32),
        grid=(B,),
        in_specs=[
            pl.BlockSpec(memory_space=pltpu.MemorySpace.SMEM),
            pl.BlockSpec((1, N_MELS, t_pad), lambda b: (b, 0, 0)),
        ],
        out_specs=pl.BlockSpec((1, N_MELS, N_FRAMES), lambda b: (b, 0, 0)),
        compiler_params=pltpu.CompilerParams(dimension_semantics=("parallel",)),
    )(spec_min, log_spec)
    return out


if __name__ == "__main__":
    key = jax.random.PRNGKey(0)
    B, L = 2, 8000                     # 0.5 s of 16 kHz audio (small but shape-consistent)
    audio = 0.1 * jax.random.normal(key, (B, L), dtype=jnp.float32)
    out = jax.jit(whisper_pre_pipeline)(audio)
    jax.block_until_ready(out)
    assert out.shape == (B, N_MELS, N_FRAMES) and out.dtype == jnp.float32
    assert bool(jnp.all(jnp.isfinite(out)))
    print("KERNEL_OK")
</pallas_src>

<mosaic_0001>
module attributes {stable_mosaic.version = 11 : i64} {
  func.func @_stft_mel_kernel(%arg0: i32, %arg1: i32, %arg2: memref<1x480x1024xbf16, #tpu.memory_space<vmem>>, %arg3: memref<512x480xbf16, #tpu.memory_space<vmem>>, %arg4: memref<128x256xf32, #tpu.memory_space<vmem>>, %arg5: memref<1x80x1024xf32, #tpu.memory_space<vmem>>, %arg6: memref<1x1x8x128xf32, #tpu.memory_space<vmem>>) attributes {dimension_semantics = [#tpu.dimension_semantics<parallel>, #tpu.dimension_semantics<parallel>], iteration_bounds = array<i64: 2, 1>, scalar_prefetch = 0 : i64, scratch_operands = 0 : i64, tpu.core_type = #tpu.core_type<tc>, window_params = [{transform_indices = @transform_0, window_bounds = array<i64: 1, 480, 1024>}, {pipeline_mode = #tpu.pipeline_mode<synchronous>, transform_indices = @transform_1, window_bounds = array<i64: 512, 480>}, {pipeline_mode = #tpu.pipeline_mode<synchronous>, transform_indices = @transform_2, window_bounds = array<i64: 128, 256>}, {transform_indices = @transform_3, window_bounds = array<i64: 1, 80, 1024>}, {transform_indices = @transform_4, window_bounds = array<i64: 1, 1, 8, 128>}]} {
    %c0 = arith.constant 0 : index
    %c0_0 = arith.constant 0 : index
    %0 = vector.load %arg3[%c0, %c0_0] : memref<512x480xbf16, #tpu.memory_space<vmem>>, vector<512x480xbf16>
    %c0_1 = arith.constant 0 : index
    %c0_2 = arith.constant 0 : index
    %c0_3 = arith.constant 0 : index
    %1 = vector.load %arg2[%c0_1, %c0_2, %c0_3] : memref<1x480x1024xbf16, #tpu.memory_space<vmem>>, vector<1x480x1024xbf16>
    %2 = vector.shape_cast %1 : vector<1x480x1024xbf16> to vector<480x1024xbf16>
    %cst = arith.constant dense<0.000000e+00> : vector<512x1024xf32>
    %3 = tpu.matmul %0, %2, %cst {dimension_numbers = #tpu.dot_dimension_numbers<[1], [0], [0], [1], [0, 0, 1, 1], [], []>} : vector<512x480xbf16>, vector<480x1024xbf16>, vector<512x1024xf32> -> vector<512x1024xf32>
    %4 = vector.extract_strided_slice %3 {offsets = [0, 0], sizes = [256, 1024], strides = [1, 1]} : vector<512x1024xf32> to vector<256x1024xf32>
    %5 = vector.extract_strided_slice %3 {offsets = [256, 0], sizes = [256, 1024], strides = [1, 1]} : vector<512x1024xf32> to vector<256x1024xf32>
    %6 = arith.mulf %4, %4 : vector<256x1024xf32>
    %7 = arith.mulf %5, %5 : vector<256x1024xf32>
    %8 = arith.addf %6, %7 : vector<256x1024xf32>
    %c0_4 = arith.constant 0 : index
    %c0_5 = arith.constant 0 : index
    %9 = vector.load %arg4[%c0_4, %c0_5] : memref<128x256xf32, #tpu.memory_space<vmem>>, vector<128x256xf32>
    %cst_6 = arith.constant dense<0.000000e+00> : vector<128x1024xf32>
    %10 = tpu.matmul %9, %8, %cst_6 {dimension_numbers = #tpu.dot_dimension_numbers<[1], [0], [0], [1], [0, 0, 1, 1], [], []>} : vector<128x256xf32>, vector<256x1024xf32>, vector<128x1024xf32> -> vector<128x1024xf32>
    %cst_7 = arith.constant 1.000000e-10 : f32
    %11 = vector.broadcast %cst_7 : f32 to vector<128x1024xf32>
    %12 = arith.maximumf %10, %11 : vector<128x1024xf32>
    %13 = math.log %12 : vector<128x1024xf32>
    %cst_8 = arith.constant 0.434294492 : f32
    %14 = vector.broadcast %cst_8 : f32 to vector<128x1024xf32>
    %15 = arith.mulf %13, %14 : vector<128x1024xf32>
    %16 = vector.extract_strided_slice %15 {offsets = [0, 0], sizes = [80, 1024], strides = [1, 1]} : vector<128x1024xf32> to vector<80x1024xf32>
    %c0_9 = arith.constant 0 : index
    %c0_10 = arith.constant 0 : index
    %c0_11 = arith.constant 0 : index
    %17 = vector.load %arg5[%c0_9, %c0_10, %c0_11] : memref<1x80x1024xf32, #tpu.memory_space<vmem>>, vector<1x80x1024xf32>
    %18 = vector.shape_cast %17 : vector<1x80x1024xf32> to vector<80x1024xf32>
    %19 = vector.shape_cast %16 : vector<80x1024xf32> to vector<1x80x1024xf32>
    tpu.vector_store %arg5[%c0_9, %c0_10, %c0_11], %19 {strides = array<i32>} : memref<1x80x1024xf32, #tpu.memory_space<vmem>>, vector<1x80x1024xf32>,
    %20 = tpu.iota {dimensions = array<i32: 0>} : vector<128x1024xi32>
    %21 = tpu.iota {dimensions = array<i32: 1>} : vector<128x1024xi32>
    %c80_i32 = arith.constant 80 : i32
    %22 = vector.broadcast %c80_i32 : i32 to vector<128x1024xi32>
    %23 = arith.cmpi slt, %20, %22 : vector<128x1024xi32>
    %c1024_i32 = arith.constant 1024 : i32
    %24 = arith.muli %arg1, %c1024_i32 : i32
    %25 = vector.broadcast %24 : i32 to vector<128x1024xi32>
    %26 = arith.addi %21, %25 : vector<128x1024xi32>
    %c50_i32 = arith.constant 50 : i32
    %27 = vector.broadcast %c50_i32 : i32 to vector<128x1024xi32>
    %28 = arith.cmpi slt, %26, %27 : vector<128x1024xi32>
    %29 = arith.andi %23, %28 : vector<128x1024xi1>
    %cst_12 = arith.constant 0xFF800000 : f32
    %30 = vector.broadcast %cst_12 : f32 to vector<128x1024xf32>
    %31 = arith.select %29, %15, %30 : vector<128x1024xi1>, vector<128x1024xf32>
    %32 = vector.shape_cast %31 : vector<128x1024xf32> to vector<1x128x1024xf32>
    %cst_13 = arith.constant dense<0xFF800000> : vector<1xf32>
    %33 = vector.multi_reduction <maximumf>, %32, %cst_13 [1, 2] : vector<1x128x1024xf32> to vector<1xf32>
    %34 = vector.shape_cast %33 : vector<1xf32> to vector<1x1x1xf32>
    %35 = vector.extract %34[0, 0, 0] : f32 from vector<1x1x1xf32>
    %36 = vector.broadcast %35 : f32 to vector<8x128xf32>
    %c0_14 = arith.constant 0 : index
    %c0_15 = arith.constant 0 : index
    %c0_16 = arith.constant 0 : index
    %c0_17 = arith.constant 0 : index
    %37 = vector.load %arg6[%c0_14, %c0_15, %c0_16, %c0_17] : memref<1x1x8x128xf32, #tpu.memory_space<vmem>>, vector<1x1x8x128xf32>
    %38 = vector.shape_cast %37 : vector<1x1x8x128xf32> to vector<8x128xf32>
    %39 = vector.shape_cast %36 : vector<8x128xf32> to vector<1x1x8x128xf32>
    tpu.vector_store %arg6[%c0_14, %c0_15, %c0_16, %c0_17], %39 {strides = array<i32>} : memref<1x1x8x128xf32, #tpu.memory_space<vmem>>, vector<1x1x8x128xf32>,
    return
  }
  func.func @transform_0(%arg0: i32, %arg1: i32) -> (i32, i32, i32) {
    %c0_i32 = arith.constant 0 : i32
    %c0_i32_0 = arith.constant 0 : i32
    return %arg0, %c0_i32, %arg1 : i32, i32, i32
  }
  func.func @transform_1(%arg0: i32, %arg1: i32) -> (i32, i32) {
    %c0_i32 = arith.constant 0 : i32
    %c0_i32_0 = arith.constant 0 : i32
    %c0_i32_1 = arith.constant 0 : i32
    return %c0_i32, %c0_i32_0 : i32, i32
  }
  func.func @transform_2(%arg0: i32, %arg1: i32) -> (i32, i32) {
    %c0_i32 = arith.constant 0 : i32
    %c0_i32_0 = arith.constant 0 : i32
    %c0_i32_1 = arith.constant 0 : i32
    return %c0_i32, %c0_i32_0 : i32, i32
  }
  func.func @transform_3(%arg0: i32, %arg1: i32) -> (i32, i32, i32) {
    %c0_i32 = arith.constant 0 : i32
    %c0_i32_0 = arith.constant 0 : i32
    return %arg0, %c0_i32, %arg1 : i32, i32, i32
  }
  func.func @transform_4(%arg0: i32, %arg1: i32) -> (i32, i32, i32, i32) {
    %c0_i32 = arith.constant 0 : i32
    %c0_i32_0 = arith.constant 0 : i32
    %c0_i32_1 = arith.constant 0 : i32
    return %arg0, %arg1, %c0_i32, %c0_i32_0 : i32, i32, i32, i32
  }
}

module attributes {stable_mosaic.version = 11 : i64} {
  func.func @_finalize_kernel(%arg0: i32, %arg1: memref<1xf32, #tpu.memory_space<smem>>, %arg2: memref<1x80x1024xf32, #tpu.memory_space<vmem>>, %arg3: memref<1x80x3000xf32, #tpu.memory_space<vmem>>) attributes {dimension_semantics = [#tpu.dimension_semantics<parallel>], iteration_bounds = array<i64: 2>, scalar_prefetch = 0 : i64, scratch_operands = 0 : i64, tpu.core_type = #tpu.core_type<tc>, window_params = [{transform_indices = @transform_0, window_bounds = array<i64: 1>}, {transform_indices = @transform_1, window_bounds = array<i64: 1, 80, 1024>}, {transform_indices = @transform_2, window_bounds = array<i64: 1, 80, 3000>}]} {
    %c0 = arith.constant 0 : index
    %0 = memref.load %arg1[%c0] : memref<1xf32, #tpu.memory_space<smem>>
    %c0_0 = arith.constant 0 : index
    %c0_1 = arith.constant 0 : index
    %c0_2 = arith.constant 0 : index
    %1 = vector.load %arg2[%c0_0, %c0_1, %c0_2] : memref<1x80x1024xf32, #tpu.memory_space<vmem>>, vector<1x80x128xf32>
    %2 = vector.shape_cast %1 : vector<1x80x128xf32> to vector<80x128xf32>
    %3 = vector.broadcast %0 : f32 to vector<80x128xf32>
    %4 = arith.maximumf %2, %3 : vector<80x128xf32>
    %cst = arith.constant 4.000000e+00 : f32
    %5 = vector.broadcast %cst : f32 to vector<80x128xf32>
    %6 = arith.addf %4, %5 : vector<80x128xf32>
    %cst_3 = arith.constant 2.500000e-01 : f32
    %7 = vector.broadcast %cst_3 : f32 to vector<80x128xf32>
    %8 = arith.mulf %6, %7 : vector<80x128xf32>
    %c0_4 = arith.constant 0 : index
    %c0_5 = arith.constant 0 : index
    %c0_6 = arith.constant 0 : index
    %9 = vector.load %arg3[%c0_4, %c0_5, %c0_6] : memref<1x80x3000xf32, #tpu.memory_space<vmem>>, vector<1x80x128xf32>
    %10 = vector.shape_cast %9 : vector<1x80x128xf32> to vector<80x128xf32>
    %11 = vector.shape_cast %8 : vector<80x128xf32> to vector<1x80x128xf32>
    tpu.vector_store %arg3[%c0_4, %c0_5, %c0_6], %11 {strides = array<i32>} : memref<1x80x3000xf32, #tpu.memory_space<vmem>>, vector<1x80x128xf32>,
    %cst_7 = arith.constant 4.000000e+00 : f32
    %12 = arith.addf %0, %cst_7 : f32
    %cst_8 = arith.constant 2.500000e-01 : f32
    %13 = arith.mulf %12, %cst_8 : f32
    %14 = vector.broadcast %13 : f32 to vector<80x2950xf32>
    %c0_9 = arith.constant 0 : index
    %c0_10 = arith.constant 0 : index
    %c50 = arith.constant 50 : index
    %15 = vector.load %arg3[%c0_9, %c0_10, %c50] : memref<1x80x3000xf32, #tpu.memory_space<vmem>>, vector<1x80x2950xf32>
    %16 = vector.shape_cast %15 : vector<1x80x2950xf32> to vector<80x2950xf32>
    %17 = vector.shape_cast %14 : vector<80x2950xf32> to vector<1x80x2950xf32>
    tpu.vector_store %arg3[%c0_9, %c0_10, %c50], %17 {strides = array<i32>} : memref<1x80x3000xf32, #tpu.memory_space<vmem>>, vector<1x80x2950xf32>,
    return
  }
  func.func @transform_0(%arg0: i32) -> i32 {
    %c0_i32 = arith.constant 0 : i32
    %c0_i32_0 = arith.constant 0 : i32
    return %c0_i32 : i32
  }
  func.func @transform_1(%arg0: i32) -> (i32, i32, i32) {
    %c0_i32 = arith.constant 0 : i32
    %c0_i32_0 = arith.constant 0 : i32
    %c0_i32_1 = arith.constant 0 : i32
    return %arg0, %c0_i32, %c0_i32_0 : i32, i32, i32
  }
  func.func @transform_2(%arg0: i32) -> (i32, i32, i32) {
    %c0_i32 = arith.constant 0 : i32
    %c0_i32_0 = arith.constant 0 : i32
    %c0_i32_1 = arith.constant 0 : i32
    return %arg0, %c0_i32, %c0_i32_0 : i32, i32, i32
  }
}

</mosaic_0001>

<llo_original>
// kernel: reverse.1
$region0: #{reverse.1}
  %s0 = inlined_call_operand.vmem [shape: bf16[2,256], index: 0, kind: input, shape index: {}]
  %s1 = inlined_call_operand.vmem [shape: bf16[2,256], index: 1, kind: output, shape index: {}]
  %v2 = vlaneseq
  %v3 = vsub.s32 127, %v2
  %4 = vset.pattern.permute.xlu0 %v3
  $region1: #{reverse.1} parent=0
    #allocation0 [shape = 'u8[4096]{0}', space=vmem, size = 0x1000, scoped, tag = 'operand span for operand 0']
    #allocation1 [shape = 'u8[1024]{0}', space=vmem, size = 0x400, scoped, tag = 'packed  for operand 0']
    #allocation2 [shape = 'u8[4096]{0}', space=vmem, size = 0x1000, scoped, tag = 'operand span for operand 1']
    #allocation3 [shape = 'u8[1024]{0}', space=vmem, size = 0x400, scoped, tag = 'packed  for operand 1']
    loop: start=0, step=1, limit=4
    $region2: #{reverse.1} parent=1 // loop_pre_header
      _
    $region3: #{reverse.1} parent=1 // loop_header
      %s6 = sphi 0, %s10
      %p7 = scmp.ge.s32.totalorder %s6, 4
      %s13 = sphi 0, %s25
      %s14 = sphi 0, %s21
      %s15 = sphi 0, %s13
      %s16 = sphi 0, %s14
      %s17 = sphi 0, %s15
      %s18 = sphi 0, %s16
    $region4: #{reverse.1} parent=1 // loop_header_branch
      %9 = sbr.rel (%p7) target = $region8
    $region5: #{reverse.1} parent=1 // loop_body
      %s11 = ssub.s32 %s6, 1
      %s12 = ssub.s32 %s6, 2
      %s19 = sadd.s32 1, %s14
      %p20 = scmp.ge.s32.totalorder %s19, 2
      %s21 = scalar_select %p20, 0, %s19
      %s22 = sadd.s32 1, %s13
      %s23 = scalar_select %p20, %s22, %s13
      %p24 = scmp.ge.s32.totalorder %s23, 1
      %s25 = scalar_select %p24, 0, %s23
      %p26 = scmp.le.s32.totalorder 1, %s6
      %p27 = scmp.lt.s32.totalorder %s6, 3
      %p28 = pnand %p26, %p27
      %p29 = pneg %p28
      // Predicated region
      $region9: #{reverse.1} parent=5 // pred_check
        _
      $region10: #{reverse.1} parent=5 // pred_check_branch
        %31 = sbr.rel (%p28) target = $region12
      $region11: #{reverse.1} parent=5 // pred_region
        %s32 = ssub.s32 %s6, 1
      $region12: #{reverse.1} parent=5 // pred_fallthru
        _
      %p33 = scmp.lt.s32.totalorder %s6, 2
      // Predicated region
      $region13: #{reverse.1} parent=5 // pred_check
        %p34 = pneg %p33
      $region14: #{reverse.1} parent=5 // pred_check_branch
        %36 = sbr.rel (%p34) target = $region16
      $region15: #{reverse.1} parent=5 // pred_region
        %s37 = sand.u32 %s6, 1
        %s38 = sand.u32 %s6, 1
        %s39 = scalar_lea.vmem [#allocation1], %s38
        %s40 = ssub.s32 1, %s14
        %s41 = smul.addr %s13, 2
        %s42 = sadd.s32 %s40, %s41
        %s43 = scalar_lea.vmem %s0, %s42
        // Predicated region
        $region17: #{reverse.1} parent=15 // pred_check
          _
        $region18: #{reverse.1} parent=15 // pred_check_branch
          %45 = sbr.rel (0) target = $region20
        $region19: #{reverse.1} parent=15 // pred_region
          // Predicated region
          $region21: #{reverse.1} parent=19 // pred_check
            _
          $region22: #{reverse.1} parent=19 // pred_check_branch
            %47 = sbr.rel target = $region24
          $region23: #{reverse.1} parent=19 // pred_region
            // Predicated region
            $region36: #{reverse.1} parent=23 // pred_check
              _
            $region37: #{reverse.1} parent=23 // pred_check_branch
              %63 = sbr.rel (0) target = $region39
            $region38: #{reverse.1} parent=23 // pred_region
              %s65 = ssub.s32 2, 1
              loop: start=0, step=1, limit=1
              $region40: #{reverse.1} parent=38 // loop_pre_header
                _
              $region41: #{reverse.1} parent=38 // loop_header
                %s67 = sphi 0, %s71
                %p68 = scmp.ge.s32.totalorder %s67, 1
                %s72 = sphi %s43, %s43
                %s73 = sphi %s39, %s39
              $region42: #{reverse.1} parent=38 // loop_header_branch
                %70 = sbr.rel (%p68) target = $region46
              $region43: #{reverse.1} parent=38 // loop_body
                %v74 = vld [vmem:[%s72] sm:%s65]
                %75 = vst [vmem:[%s73] sm:%s65] %v74
              $region44: #{reverse.1} parent=38 // loop_footer
                %s71 = sadd.s32 1, %s67
              $region45: #{reverse.1} parent=38 // loop_footer_branch
                %66 = sbr.rel target = $region41
              $region46: #{reverse.1} parent=38 // loop_exit
                _
            $region39: #{reverse.1} parent=23 // pred_fallthru
              _
          $region24: #{reverse.1} parent=19 // pred_fallthru
            _
          // Predicated region
          $region25: #{reverse.1} parent=19 // pred_check
            _
          $region26: #{reverse.1} parent=19 // pred_check_branch
            %49 = sbr.rel (0) target = $region28
          $region27: #{reverse.1} parent=19 // pred_region
            %s51 = ssub.s32 2, 1
            loop: start=0, step=1, limit=1
            $region29: #{reverse.1} parent=27 // loop_pre_header
              _
            $region30: #{reverse.1} parent=27 // loop_header
              %s53 = sphi 0, %s57
              %p54 = scmp.ge.s32.totalorder %s53, 1
              %s58 = sphi %s43, %s43
              %s59 = sphi %s39, %s39
            $region31: #{reverse.1} parent=27 // loop_header_branch
              %56 = sbr.rel (%p54) target = $region35
            $region32: #{reverse.1} parent=27 // loop_body
              %v60 = vld [vmem:[%s58] sm:%s51]
              %61 = vst [vmem:[%s59] sm:%s51] %v60
            $region33: #{reverse.1} parent=27 // loop_footer
              %s57 = sadd.s32 1, %s53
            $region34: #{reverse.1} parent=27 // loop_footer_branch
              %52 = sbr.rel target = $region30
            $region35: #{reverse.1} parent=27 // loop_exit
              _
          $region28: #{reverse.1} parent=19 // pred_fallthru
            _
        $region20: #{reverse.1} parent=15 // pred_fallthru
          _
        %76 = vnop
      $region16: #{reverse.1} parent=5 // pred_fallthru
        _
      %p77 = scmp.le.s32.totalorder 1, %s6
      %p78 = scmp.lt.s32.totalorder %s6, 3
      %p79 = pnand %p77, %p78
      %p80 = pneg %p79
      // Predicated region
      $region47: #{reverse.1} parent=5 // pred_check
        _
      $region48: #{reverse.1} parent=5 // pred_check_branch
        %82 = sbr.rel (%p79) target = $region50
      $region49: #{reverse.1} parent=5 // pred_region
        %s83 = ssub.s32 %s6, 1
        %s84 = sand.u32 %s11, 1
        %s85 = sand.u32 %s11, 1
        %s86 = scalar_lea.vmem [#allocation1], %s85
        %s87 = sand.u32 %s11, 1
        %s88 = sand.u32 %s11, 1
        %s89 = scalar_lea.vmem [#allocation1], %s88
        %s90 = sand.u32 %s11, 1
        %s91 = sand.u32 %s11, 1
        %s92 = scalar_lea.vmem [#allocation3], %s91
        %s94 = smul.u32 1, 2
        %s95 = sshll.u32 1, %s94
        %s96 = ssub.s32 %s95, 1
        %s97 = sshrl.u32 %s96, 1
        %s98 = sor.u32 %s96, %s97
        %s99 = sand.u32 %s98, 85
        %s100 = sshrl.u32 %s99, 1
        %s101 = sor.u32 %s99, %s100
        %s102 = sand.u32 51, %s101
        %s103 = sshrl.u32 %s102, 2
        %s104 = sor.u32 %s102, %s103
        %s105 = sand.u32 15, %s104
        %v106 = vld [vmem:[%s89] sm:%s105]
        %v107 = vunpack.c.l.bf16 %v106
        %v108 = vunpack.c.h.bf16 %v106
        %109 = vst [vmem:[#allocation0] sm:%s96] %v107
        %s110 = ssub.s32 1, %s16
        %v111 = vld [vmem:[#allocation0] sm:$0xff]
        %112 = vperm.xlu0 %4, %v111
        %v113 = vpop.permute.xlu0 %112
        %114 = vst [vmem:[#allocation2] sm:$0xff] %v113
        %s116 = smul.u32 1, 2
        %s117 = sshll.u32 1, %s116
        %s118 = ssub.s32 %s117, 1
        %s119 = sshrl.u32 %s116, 1
        %v120 = vld [vmem:[#allocation2] sm:%s118]
        %v121 = vpack.c.bf16 0.0, %v120
        %s122 = sshll.u32 1, %s119
        %s123 = ssub.s32 %s122, 1
        %124 = vst [vmem:[%s92] sm:%s123] %v121
        %s125 = sand.u32 %s11, 1
        %s126 = sand.u32 %s11, 1
        %s127 = scalar_lea.vmem [#allocation3], %s126
        %s128 = smul.addr %s15, 2
        %s129 = sadd.s32 %s16, %s128
        %s130 = scalar_lea.vmem %s1, %s129
        // Predicated region
        $region51: #{reverse.1} parent=49 // pred_check
          _
        $region52: #{reverse.1} parent=49 // pred_check_branch
          %132 = sbr.rel (0) target = $region54
        $region53: #{reverse.1} parent=49 // pred_region
          // Predicated region
          $region55: #{reverse.1} parent=53 // pred_check
            _
          $region56: #{reverse.1} parent=53 // pred_check_branch
            %134 = sbr.rel target = $region58
          $region57: #{reverse.1} parent=53 // pred_region
            // Predicated region
            $region70: #{reverse.1} parent=57 // pred_check
              _
            $region71: #{reverse.1} parent=57 // pred_check_branch
              %150 = sbr.rel (0) target = $region73
            $region72: #{reverse.1} parent=57 // pred_region
              %s152 = ssub.s32 2, 1
              loop: start=0, step=1, limit=1
              $region74: #{reverse.1} parent=72 // loop_pre_header
                _
              $region75: #{reverse.1} parent=72 // loop_header
                %s154 = sphi 0, %s158
                %p155 = scmp.ge.s32.totalorder %s154, 1
                %s159 = sphi %s127, %s127
                %s160 = sphi %s130, %s130
              $region76: #{reverse.1} parent=72 // loop_header_branch
                %157 = sbr.rel (%p155) target = $region80
              $region77: #{reverse.1} parent=72 // loop_body
                %v161 = vld [vmem:[%s159] sm:%s152]
                %162 = vst [vmem:[%s160] sm:%s152] %v161
              $region78: #{reverse.1} parent=72 // loop_footer
                %s158 = sadd.s32 1, %s154
              $region79: #{reverse.1} parent=72 // loop_footer_branch
                %153 = sbr.rel target = $region75
              $region80: #{reverse.1} parent=72 // loop_exit
                _
            $region73: #{reverse.1} parent=57 // pred_fallthru
              _
          $region58: #{reverse.1} parent=53 // pred_fallthru
            _
          // Predicated region
          $region59: #{reverse.1} parent=53 // pred_check
            _
          $region60: #{reverse.1} parent=53 // pred_check_branch
            %136 = sbr.rel (0) target = $region62
          $region61: #{reverse.1} parent=53 // pred_region
            %s138 = ssub.s32 2, 1
            loop: start=0, step=1, limit=1
            $region63: #{reverse.1} parent=61 // loop_pre_header
              _
            $region64: #{reverse.1} parent=61 // loop_header
              %s140 = sphi 0, %s144
              %p141 = scmp.ge.s32.totalorder %s140, 1
              %s145 = sphi %s127, %s127
              %s146 = sphi %s130, %s130
            $region65: #{reverse.1} parent=61 // loop_header_branch
              %143 = sbr.rel (%p141) target = $region69
            $region66: #{reverse.1} parent=61 // loop_body
              %v147 = vld [vmem:[%s145] sm:%s138]
              %148 = vst [vmem:[%s146] sm:%s138] %v147
            $region67: #{reverse.1} parent=61 // loop_footer
              %s144 = sadd.s32 1, %s140
            $region68: #{reverse.1} parent=61 // loop_footer_branch
              %139 = sbr.rel target = $region64
            $region69: #{reverse.1} parent=61 // loop_exit
              _
          $region62: #{reverse.1} parent=53 // pred_fallthru
            _
        $region54: #{reverse.1} parent=49 // pred_fallthru
          _
        %163 = vnop
      $region50: #{reverse.1} parent=5 // pred_fallthru
        _
      %p164 = scmp.le.s32.totalorder 2, %s6
      // Predicated region
      $region81: #{reverse.1} parent=5 // pred_check
        %p165 = pneg %p164
      $region82: #{reverse.1} parent=5 // pred_check_branch
        %167 = sbr.rel (%p165) target = $region84
      $region83: #{reverse.1} parent=5 // pred_region
        %s168 = ssub.s32 %s6, 2
        %s169 = sand.u32 %s12, 1
        %s170 = sand.u32 %s12, 1
        %s171 = scalar_lea.vmem [#allocation3], %s170
      $region84: #{reverse.1} parent=5 // pred_fallthru
        _
    $region6: #{reverse.1} parent=1 // loop_footer
      %s10 = sadd.s32 1, %s6
    $region7: #{reverse.1} parent=1 // loop_footer_branch
      %5 = sbr.rel target = $region3
    $region8: #{reverse.1} parent=1 // loop_exit
      _

// kernel: whisper_pre_pipeline.2
$region0: #{whisper_pre_pipeline.2}
  #allocation0 [shape = 'u32[]', space=smem, size = 0x4, offset = 0x4, fixed_abs, tag = 'smem constant byte address 0x4 - core index']
  #allocation1 [shape = 'u32[144,128]{1,0:T(1,128)}', space=vmem, size = 0x12000, scoped, tag = 'internal scratch']
  %s0 = inlined_call_operand.vmem [shape: bf16[2,480,1024], index: 0, kind: input, shape index: {}]
  %s1 = inlined_call_operand.vmem [shape: bf16[512,480], index: 1, kind: input, shape index: {}]
  %s2 = inlined_call_operand.vmem [shape: f32[128,256], index: 2, kind: input, shape index: {}]
  %s3 = inlined_call_operand.vmem [shape: f32[2,80,1024], index: 3, kind: output, shape index: {0}]
  %s4 = inlined_call_operand.vmem [shape: f32[2,1,8,128], index: 4, kind: output, shape index: {1}]
  %5 = xla_tuple %s3, %s4
  %s6 = sld [smem:[#allocation0]]
  $region53: #{whisper_pre_pipeline.2} parent=0
    _
  %s8 = ssub.s32 1, %s6
  %s9 = scalar_select 0, %s8, %s6
  loop: start=0, step=1, limit=4
  $region2: #{whisper_pre_pipeline.2} parent=0 // loop_pre_header
    _
  $region3: #{whisper_pre_pipeline.2} parent=0 // loop_header
    %s11 = sphi 0, %s15
    %p12 = scmp.ge.s32.totalorder %s11, 4
    %s18 = sphi 0, %s30
    %s19 = sphi 0, %s26
    %s20 = sphi 0, %s18
    %s21 = sphi 0, %s19
    %s22 = sphi 0, %s20
    %s23 = sphi 0, %s21
    %s35 = sphi 0, %s37
    %s38 = sphi 0, %s35
    %s39 = sphi 0, %s38
    %s55 = sphi 0, %s39
    %s59 = sphi 0, %s59
    %s61 = sphi 0, %s59
    %s62 = sphi 0, %s61
    %s76 = sphi 0, %s62
    %s80 = sphi 0, %s80
    %s82 = sphi 0, %s80
    %s83 = sphi 0, %s82
    %s97 = sphi 0, %s83
    %s105 = sphi 0, %s107
    %s108 = sphi 0, %s105
    %s109 = sphi 0, %s108
    %s125 = sphi 0, %s109
    %s133 = sphi 0, %s135
    %s136 = sphi 0, %s133
    %s137 = sphi 0, %s136
    %s153 = sphi 0, %s137
  $region4: #{whisper_pre_pipeline.2} parent=0 // loop_header_branch
    %14 = sbr.rel (%p12) target = $region8
  $region5: #{whisper_pre_pipeline.2} parent=0 // loop_body
    %s16 = ssub.s32 %s11, 1
    %s17 = ssub.s32 %s11, 2
    %s24 = sadd.s32 1, %s19
    %p25 = scmp.ge.s32.totalorder %s24, 1
    %s26 = scalar_select %p25, 0, %s24
    %s27 = sadd.s32 1, %s18
    %s28 = scalar_select %p25, %s27, %s18
    %p29 = scmp.ge.s32.totalorder %s28, 2
    %s30 = scalar_select %p29, 0, %s28
    %s31 = ssub.s32 %s18, %s30
    %s32 = ssub.s32 %s19, %s26
    %s33 = sor.u32 %s31, %s32
    %p34 = scmp.eq.s32.totalorder %s33, 0
    %s36 = sadd.s32 %s35, 1
    %s37 = scalar_select %p34, %s35, %s36
    %p40 = pneg %p34
    %p41 = scmp.eq.s32.totalorder %s11, 1
    %p42 = por %p40, %p41
    %p43 = scmp.ne.s32.totalorder %s35, %s38
    %p44 = scmp.eq.s32.totalorder %s11, 0
    %p45 = por %p43, %p44
    %p46 = scmp.ne.s32.totalorder %s35, %s38
    %p47 = scmp.eq.s32.totalorder %s16, 1
    %p48 = por %p46, %p47
    %p49 = scmp.ne.s32.totalorder %s38, %s39
    %p50 = scmp.eq.s32.totalorder %s16, 0
    %p51 = por %p49, %p50
    %p52 = scmp.ne.s32.totalorder %s38, %s39
    %p53 = scmp.eq.s32.totalorder %s17, 1
    %p54 = por %p52, %p53
    %p56 = scmp.ne.s32.totalorder %s39, %s55
    %p57 = scmp.eq.s32.totalorder %s17, 0
    %p58 = por %p56, %p57
    %s60 = sadd.s32 %s59, 1
    %p63 = scmp.eq.s32.totalorder %s11, 1
    %p64 = scmp.ne.s32.totalorder %s59, %s61
    %p65 = scmp.eq.s32.totalorder %s11, 0
    %p66 = por %p64, %p65
    %p67 = scmp.ne.s32.totalorder %s59, %s61
    %p68 = scmp.eq.s32.totalorder %s16, 1
    %p69 = por %p67, %p68
    %p70 = scmp.ne.s32.totalorder %s61, %s62
    %p71 = scmp.eq.s32.totalorder %s16, 0
    %p72 = por %p70, %p71
    %p73 = scmp.ne.s32.totalorder %s61, %s62
    %p74 = scmp.eq.s32.totalorder %s17, 1
    %p75 = por %p73, %p74
    %p77 = scmp.ne.s32.totalorder %s62, %s76
    %p78 = scmp.eq.s32.totalorder %s17, 0
    %p79 = por %p77, %p78
    %s81 = sadd.s32 %s80, 1
    %p84 = scmp.eq.s32.totalorder %s11, 1
    %p85 = scmp.ne.s32.totalorder %s80, %s82
    %p86 = scmp.eq.s32.totalorder %s11, 0
    %p87 = por %p85, %p86
    %p88 = scmp.ne.s32.totalorder %s80, %s82
    %p89 = scmp.eq.s32.totalorder %s16, 1
    %p90 = por %p88, %p89
    %p91 = scmp.ne.s32.totalorder %s82, %s83
    %p92 = scmp.eq.s32.totalorder %s16, 0
    %p93 = por %p91, %p92
    %p94 = scmp.ne.s32.totalorder %s82, %s83
    %p95 = scmp.eq.s32.totalorder %s17, 1
    %p96 = por %p94, %p95
    %p98 = scmp.ne.s32.totalorder %s83, %s97
    %p99 = scmp.eq.s32.totalorder %s17, 0
    %p100 = por %p98, %p99
    %s101 = ssub.s32 %s18, %s30
    %s102 = ssub.s32 %s19, %s26
    %s103 = sor.u32 %s101, %s102
    %p104 = scmp.eq.s32.totalorder %s103, 0
    %s106 = sadd.s32 %s105, 1
    %s107 = scalar_select %p104, %s105, %s106
    %p110 = pneg %p104
    %p111 = scmp.eq.s32.totalorder %s11, 1
    %p112 = por %p110, %p111
    %p113 = scmp.ne.s32.totalorder %s105, %s108
    %p114 = scmp.eq.s32.totalorder %s11, 0
    %p115 = por %p113, %p114
    %p116 = scmp.ne.s32.totalorder %s105, %s108
    %p117 = scmp.eq.s32.totalorder %s16, 1
    %p118 = por %p116, %p117
    %p119 = scmp.ne.s32.totalorder %s108, %s109
    %p120 = scmp.eq.s32.totalorder %s16, 0
    %p121 = por %p119, %p120
    %p122 = scmp.ne.s32.totalorder %s108, %s109
    %p123 = scmp.eq.s32.totalorder %s17, 1
    %p124 = por %p122, %p123
    %p126 = scmp.ne.s32.totalorder %s109, %s125
    %p127 = scmp.eq.s32.totalorder %s17, 0
    %p128 = por %p126, %p127
    %s129 = ssub.s32 %s18, %s30
    %s130 = ssub.s32 %s19, %s26
    %s131 = sor.u32 %s129, %s130
    %p132 = scmp.eq.s32.totalorder %s131, 0
    %s134 = sadd.s32 %s133, 1
    %s135 = scalar_select %p132, %s133, %s134
    %p138 = pneg %p132
    %p139 = scmp.eq.s32.totalorder %s11, 1
    %p140 = por %p138, %p139
    %p141 = scmp.ne.s32.totalorder %s133, %s136
    %p142 = scmp.eq.s32.totalorder %s11, 0
    %p143 = por %p141, %p142
    %p144 = scmp.ne.s32.totalorder %s133, %s136
    %p145 = scmp.eq.s32.totalorder %s16, 1
    %p146 = por %p144, %p145
    %p147 = scmp.ne.s32.totalorder %s136, %s137
    %p148 = scmp.eq.s32.totalorder %s16, 0
    %p149 = por %p147, %p148
    %p150 = scmp.ne.s32.totalorder %s136, %s137
    %p151 = scmp.eq.s32.totalorder %s17, 1
    %p152 = por %p150, %p151
    %p154 = scmp.ne.s32.totalorder %s137, %s153
    %p155 = scmp.eq.s32.totalorder %s17, 0
    %p156 = por %p154, %p155
    %p157 = scmp.le.s32.totalorder 1, %s11
    %p158 = scmp.lt.s32.totalorder %s11, 3
    %p159 = pnand %p157, %p158
    %p160 = pneg %p159
    // Predicated region
    $region9: #{whisper_pre_pipeline.2} parent=5 // pred_check
      _
    $region10: #{whisper_pre_pipeline.2} parent=5 // pred_check_branch
      %162 = sbr.rel (%p159) target = $region12
    $region11: #{whisper_pre_pipeline.2} parent=5 // pred_region
      %s163 = ssub.s32 %s11, 1
      // Predicated region
      $region13: #{whisper_pre_pipeline.2} parent=11 // pred_check
        %p164 = pneg %p72
      $region14: #{whisper_pre_pipeline.2} parent=11 // pred_check_branch
        %166 = sbr.rel (%p164) target = $region16
      $region15: #{whisper_pre_pipeline.2} parent=11 // pred_region
        _
      $region16: #{whisper_pre_pipeline.2} parent=11 // pred_fallthru
        _
      // Predicated region
      $region17: #{whisper_pre_pipeline.2} parent=11 // pred_check
        %p167 = pneg %p93
      $region18: #{whisper_pre_pipeline.2} parent=11 // pred_check_branch
        %169 = sbr.rel (%p167) target = $region20
      $region19: #{whisper_pre_pipeline.2} parent=11 // pred_region
        _
      $region20: #{whisper_pre_pipeline.2} parent=11 // pred_fallthru
        _
    $region12: #{whisper_pre_pipeline.2} parent=5 // pred_fallthru
      _
    %p170 = scmp.lt.s32.totalorder %s11, 2
    // Predicated region
    $region21: #{whisper_pre_pipeline.2} parent=5 // pred_check
      %p171 = pneg %p170
    $region22: #{whisper_pre_pipeline.2} parent=5 // pred_check_branch
      %173 = sbr.rel (%p171) target = $region24
    $region23: #{whisper_pre_pipeline.2} parent=5 // pred_region
      // Predicated region
      $region25: #{whisper_pre_pipeline.2} parent=23 // pred_check
        %p174 = pneg %p45
      $region26: #{whisper_pre_pipeline.2} parent=23 // pred_check_branch
        %176 = sbr.rel (%p174) target = $region28
      $region27: #{whisper_pre_pipeline.2} parent=23 // pred_region
        %s177 = smul.u32 8, %s19
        %p178 = scmp.lt.s32.totalorder %s18, 1
        %s179 = scalar_select %p178, %s18, 1
        %p180 = scmp.lt.s32.totalorder %s177, 7
        %s181 = scalar_select %p180, %s177, 7
        %s182 = smul.addr %s179, 480
        %s183 = sadd.s32 %s181, %s182
        %s184 = smul.addr %s183, 4
        %s185 = scalar_lea.vmem %s0, %s184
        %s186 = smul.u32 8, %s19
      $region28: #{whisper_pre_pipeline.2} parent=23 // pred_fallthru
        _
    $region24: #{whisper_pre_pipeline.2} parent=5 // pred_fallthru
      _
    %p187 = scmp.le.s32.totalorder 1, %s11
    %p188 = scmp.lt.s32.totalorder %s11, 3
    %p189 = pnand %p187, %p188
    %p190 = pneg %p189
    // Predicated region
    $region29: #{whisper_pre_pipeline.2} parent=5 // pred_check
      _
    $region30: #{whisper_pre_pipeline.2} parent=5 // pred_check_branch
      %192 = sbr.rel (%p189) target = $region32
    $region31: #{whisper_pre_pipeline.2} parent=5 // pred_region
      %s193 = ssub.s32 %s11, 1
      %s194 = smul.u32 8, %s21
      %p195 = scmp.lt.s32.totalorder %s20, 1
      %s196 = scalar_select %p195, %s20, 1
      %p197 = scmp.lt.s32.totalorder %s194, 7
      %s198 = scalar_select %p197, %s194, 7
      %s199 = smul.addr %s196, 480
      %s200 = sadd.s32 %s198, %s199
      %s201 = smul.addr %s200, 4
      %s202 = scalar_lea.vmem %s0, %s201
      %p203 = pneg %p51
      %p204 = pneg %p48
      %p205 = pneg %p72
      %p206 = pneg %p69
      %p207 = pneg %p93
      %p208 = pneg %p90
      %p209 = pneg %p121
      %p210 = pneg %p118
      %s211 = smul.u32 8, %s21
      %p212 = scmp.lt.s32.totalorder %s20, 1
      %s213 = scalar_select %p212, %s20, 1
      %p214 = scmp.lt.s32.totalorder %s211, 7
      %s215 = scalar_select %p214, %s211, 7
      %s216 = smul.addr %s213, 80
      %s217 = sadd.s32 %s215, %s216
      %s218 = smul.addr %s217, 8
      %s219 = scalar_lea.vmem %s3, %s218
      %p220 = pneg %p149
      %p221 = pneg %p146
      %p222 = scmp.lt.s32.totalorder %s20, 1
      %s223 = scalar_select %p222, %s20, 1
      %p224 = scmp.lt.s32.totalorder %s21, 0
      %s225 = scalar_select %p224, %s21, 0
      %s226 = sadd.s32 %s225, %s223
      %s227 = smul.addr %s226, 8
      %s228 = scalar_lea.vmem %s4, %s227
      %s229 = smul.u32 8, %s21
      %p230 = scmp.lt.s32.totalorder %s20, 1
      %s231 = scalar_select %p230, %s20, 1
      %p232 = scmp.lt.s32.totalorder %s229, 7
      %s233 = scalar_select %p232, %s229, 7
      %s234 = smul.addr %s231, 480
      %s235 = sadd.s32 %s233, %s234
      %s236 = smul.addr %s235, 4
      %s237 = scalar_lea.vmem %s0, %s236
      %s238 = smul.u32 8, %s21
      %s239 = smul.u32 8, %s21
      %p240 = scmp.lt.s32.totalorder %s20, 1
      %s241 = scalar_select %p240, %s20, 1
      %p242 = scmp.lt.s32.totalorder %s239, 7
      %s243 = scalar_select %p242, %s239, 7
      %s244 = smul.addr %s241, 80
      %s245 = sadd.s32 %s243, %s244
      %s246 = smul.addr %s245, 8
      %s247 = scalar_lea.vmem %s3, %s246
      %s248 = smul.u32 8, %s21
      %p249 = scmp.lt.s32.totalorder %s20, 1
      %s250 = scalar_select %p249, %s20, 1
      %p251 = scmp.lt.s32.totalorder %s21, 0
      %s252 = scalar_select %p251, %s21, 0
      %s253 = sadd.s32 %s252, %s250
      %s254 = smul.addr %s253, 8
      %s255 = scalar_lea.vmem %s4, %s254
      %v257 = vld [vmem:[%s1] sm:$0xff]
      %v258 = vld [vmem:[%s1 + $0x8] sm:$0xff]
      %v259 = vld [vmem:[%s1 + $0x10] sm:$0xff]
      %v260 = vld [vmem:[%s1 + $0x18] sm:$0xff]
      %v261 = vld [vmem:[%s1 + $0x20] sm:$0xff]
      %v262 = vld [vmem:[%s1 + $0x28] sm:$0xff]
      %v263 = vld [vmem:[%s1 + $0x30] sm:$0xff]
      %v264 = vld [vmem:[%s1 + $0x38] sm:$0xff]
      %v265 = vld [vmem:[%s1 + $0x40] sm:$0xff]
      %v266 = vld [vmem:[%s1 + $0x48] sm:$0xff]
      %v267 = vld [vmem:[%s1 + $0x50] sm:$0xff]
      %v268 = vld [vmem:[%s1 + $0x58] sm:$0xff]
      %v269 = vld [vmem:[%s1 + $0x60] sm:$0xff]
      %v270 = vld [vmem:[%s1 + $0x68] sm:$0xff]
      %v271 = vld [vmem:[%s1 + $0x70] sm:$0xff]
      %v272 = vld [vmem:[%s1 + $0x78] sm:$0xff]
      %v273 = vld [vmem:[%s1 + $0x80] sm:$0xff]
      %v274 = vld [vmem:[%s1 + $0x88] sm:$0xff]
      %v275 = vld [vmem:[%s1 + $0x90] sm:$0xff]
      %v276 = vld [vmem:[%s1 + $0x98] sm:$0xff]
      %v277 = vld [vmem:[%s1 + $0xa0] sm:$0xff]
      %v278 = vld [vmem:[%s1 + $0xa8] sm:$0xff]
      %v279 = vld [vmem:[%s1 + $0xb0] sm:$0xff]
      %v280 = vld [vmem:[%s1 + $0xb8] sm:$0xff]
      %v281 = vld [vmem:[%s1 + $0xc0] sm:$0xff]
      %v282 = vld [vmem:[%s1 + $0xc8] sm:$0xff]
      %v283 = vld [vmem:[%s1 + $0xd0] sm:$0xff]
      %v284 = vld [vmem:[%s1 + $0xd8] sm:$0xff]
      %v285 = vld [vmem:[%s1 + $0xe0] sm:$0xff]
      %v286 = vld [vmem:[%s1 + $0xe8] sm:$0xff]
      %v287 = vld [vmem:[%s1 + $0xf0] sm:$0xff]
      %v288 = vld [vmem:[%s1 + $0xf8] sm:$0xff]
      %v289 = vld [vmem:[%s1 + $0x100] sm:$0xff]
      %v290 = vld [vmem:[%s1 + $0x108] sm:$0xff]
      %v291 = vld [vmem:[%s1 + $0x110] sm:$0xff]
      %v292 = vld [vmem:[%s1 + $0x118] sm:$0xff]
      %v293 = vld [vmem:[%s1 + $0x120] sm:$0xff]
      %v294 = vld [vmem:[%s1 + $0x128] sm:$0xff]
      %v295 = vld [vmem:[%s1 + $0x130] sm:$0xff]
      %v296 = vld [vmem:[%s1 + $0x138] sm:$0xff]
      %v297 = vld [vmem:[%s1 + $0x140] sm:$0xff]
      %v298 = vld [vmem:[%s1 + $0x148] sm:$0xff]
      %v299 = vld [vmem:[%s1 + $0x150] sm:$0xff]
      %v300 = vld [vmem:[%s1 + $0x158] sm:$0xff]
      %v301 = vld [vmem:[%s1 + $0x160] sm:$0xff]
      %v302 = vld [vmem:[%s1 + $0x168] sm:$0xff]
      %v303 = vld [vmem:[%s1 + $0x170] sm:$0xff]
      %v304 = vld [vmem:[%s1 + $0x178] sm:$0xff]
      %v305 = vld [vmem:[%s1 + $0x180] sm:$0xff]
      %v306 = vld [vmem:[%s1 + $0x188] sm:$0xff]
      %v307 = vld [vmem:[%s1 + $0x190] sm:$0xff]
      %v308 = vld [vmem:[%s1 + $0x198] sm:$0xff]
      %v309 = vld [vmem:[%s1 + $0x1a0] sm:$0xff]
      %v310 = vld [vmem:[%s1 + $0x1a8] sm:$0xff]
      %v311 = vld [vmem:[%s1 + $0x1b0] sm:$0xff]
      %v312 = vld [vmem:[%s1 + $0x1b8] sm:$0xff]
      %v313 = vld [vmem:[%s1 + $0x1c0] sm:$0xff]
      %v314 = vld [vmem:[%s1 + $0x1c8] sm:$0xff]
      %v315 = vld [vmem:[%s1 + $0x1d0] sm:$0xff]
      %v316 = vld [vmem:[%s1 + $0x1d8] sm:$0xff]
      %v317 = vld [vmem:[%s1 + $0x1e0] sm:$0xff]
      %v318 = vld [vmem:[%s1 + $0x1e8] sm:$0xff]
      %v319 = vld [vmem:[%s1 + $0x1f0] sm:$0xff]
      %v320 = vld [vmem:[%s1 + $0x1f8] sm:$0xff]
      %v321 = vld [vmem:[%s1 + $0x200] sm:$0xff]
      %v322 = vld [vmem:[%s1 + $0x208] sm:$0xff]
      %v323 = vld [vmem:[%s1 + $0x210] sm:$0xff]
      %v324 = vld [vmem:[%s1 + $0x218] sm:$0xff]
      %v325 = vld [vmem:[%s1 + $0x220] sm:$0xff]
      %v326 = vld [vmem:[%s1 + $0x228] sm:$0xff]
      %v327 = vld [vmem:[%s1 + $0x230] sm:$0xff]
      %v328 = vld [vmem:[%s1 + $0x238] sm:$0xff]
      %v329 = vld [vmem:[%s1 + $0x240] sm:$0xff]
      %v330 = vld [vmem:[%s1 + $0x248] sm:$0xff]
      %v331 = vld [vmem:[%s1 + $0x250] sm:$0xff]
      %v332 = vld [vmem:[%s1 + $0x258] sm:$0xff]
      %v333 = vld [vmem:[%s1 + $0x260] sm:$0xff]
      %v334 = vld [vmem:[%s1 + $0x268] sm:$0xff]
      %v335 = vld [vmem:[%s1 + $0x270] sm:$0xff]
      %v336 = vld [vmem:[%s1 + $0x278] sm:$0xff]
      %v337 = vld [vmem:[%s1 + $0x280] sm:$0xff]
      %v338 = vld [vmem:[%s1 + $0x288] sm:$0xff]
      %v339 = vld [vmem:[%s1 + $0x290] sm:$0xff]
      %v340 = vld [vmem:[%s1 + $0x298] sm:$0xff]
      %v341 = vld [vmem:[%s1 + $0x2a0] sm:$0xff]
      %v342 = vld [vmem:[%s1 + $0x2a8] sm:$0xff]
      %v343 = vld [vmem:[%s1 + $0x2b0] sm:$0xff]
      %v344 = vld [vmem:[%s1 + $0x2b8] sm:$0xff]
      %v345 = vld [vmem:[%s1 + $0x2c0] sm:$0xff]
      %v346 = vld [vmem:[%s1 + $0x2c8] sm:$0xff]
      %v347 = vld [vmem:[%s1 + $0x2d0] sm:$0xff]
      %v348 = vld [vmem:[%s1 + $0x2d8] sm:$0xff]
      %v349 = vld [vmem:[%s1 + $0x2e0] sm:$0xff]
      %v350 = vld [vmem:[%s1 + $0x2e8] sm:$0xff]
      %v351 = vld [vmem:[%s1 + $0x2f0] sm:$0xff]
      %v352 = vld [vmem:[%s1 + $0x2f8] sm:$0xff]
      %v353 = vld [vmem:[%s1 + $0x300] sm:$0xff]
      %v354 = vld [vmem:[%s1 + $0x308] sm:$0xff]
      %v355 = vld [vmem:[%s1 + $0x310] sm:$0xff]
      %v356 = vld [vmem:[%s1 + $0x318] sm:$0xff]
      %v357 = vld [vmem:[%s1 + $0x320] sm:$0xff]
      %v358 = vld [vmem:[%s1 + $0x328] sm:$0xff]
      %v359 = vld [vmem:[%s1 + $0x330] sm:$0xff]
      %v360 = vld [vmem:[%s1 + $0x338] sm:$0xff]
      %v361 = vld [vmem:[%s1 + $0x340] sm:$0xff]
      %v362 = vld [vmem:[%s1 + $0x348] sm:$0xff]
      %v363 = vld [vmem:[%s1 + $0x350] sm:$0xff]
      %v364 = vld [vmem:[%s1 + $0x358] sm:$0xff]
      %v365 = vld [vmem:[%s1 + $0x360] sm:$0xff]
      %v366 = vld [vmem:[%s1 + $0x368] sm:$0xff]
      %v367 = vld [vmem:[%s1 + $0x370] sm:$0xff]
      %v368 = vld [vmem:[%s1 + $0x378] sm:$0xff]
      %v369 = vld [vmem:[%s1 + $0x380] sm:$0xff]
      %v370 = vld [vmem:[%s1 + $0x388] sm:$0xff]
      %v371 = vld [vmem:[%s1 + $0x390] sm:$0xff]
      %v372 = vld [vmem:[%s1 + $0x398] sm:$0xff]
      %v373 = vld [vmem:[%s1 + $0x3a0] sm:$0xff]
      %v374 = vld [vmem:[%s1 + $0x3a8] sm:$0xff]
      %v375 = vld [vmem:[%s1 + $0x3b0] sm:$0xff]
      %v376 = vld [vmem:[%s1 + $0x3b8] sm:$0xff]
      %v377 = vld [vmem:[%s1 + $0x3c0] sm:$0xff]
      %v378 = vld [vmem:[%s1 + $0x3c8] sm:$0xff]
      %v379 = vld [vmem:[%s1 + $0x3d0] sm:$0xff]
      %v380 = vld [vmem:[%s1 + $0x3d8] sm:$0xff]
      %v381 = vld [vmem:[%s1 + $0x3e0] sm:$0xff]
      %v382 = vld [vmem:[%s1 + $0x3e8] sm:$0xff]
      %v383 = vld [vmem:[%s1 + $0x3f0] sm:$0xff]
      %v384 = vld [vmem:[%s1 + $0x3f8] sm:$0xff]
      %v385 = vld [vmem:[%s237] sm:$0xff]
      %v386 = vld [vmem:[%s237 + $0x8] sm:$0xff]
      %v387 = vld [vmem:[%s237 + $0x10] sm:$0xff]
      %v388 = vld [vmem:[%s237 + $0x18] sm:$0xff]
      %v389 = vld [vmem:[%s237 + $0x20] sm:$0xff]
      %v390 = vld [vmem:[%s237 + $0x28] sm:$0xff]
      %v391 = vld [vmem:[%s237 + $0x30] sm:$0xff]
      %v392 = vld [vmem:[%s237 + $0x38] sm:$0xff]
      %v393 = vld [vmem:[%s237 + $0x40] sm:$0xff]
      %v394 = vld [vmem:[%s237 + $0x48] sm:$0xff]
      %v395 = vld [vmem:[%s237 + $0x50] sm:$0xff]
      %v396 = vld [vmem:[%s237 + $0x58] sm:$0xff]
      %v397 = vld [vmem:[%s237 + $0x60] sm:$0xff]
      %v398 = vld [vmem:[%s237 + $0x68] sm:$0xff]
      %v399 = vld [vmem:[%s237 + $0x70] sm:$0xff]
      %v400 = vld [vmem:[%s237 + $0x78] sm:$0xff]
      %v401 = vld [vmem:[%s237 + $0x80] sm:$0xff]
      %v402 = vld [vmem:[%s237 + $0x88] sm:$0xff]
      %v403 = vld [vmem:[%s237 + $0x90] sm:$0xff]
      %v404 = vld [vmem:[%s237 + $0x98] sm:$0xff]
      %v405 = vld [vmem:[%s237 + $0xa0] sm:$0xff]
      %v406 = vld [vmem:[%s237 + $0xa8] sm:$0xff]
      %v407 = vld [vmem:[%s237 + $0xb0] sm:$0xff]
      %v408 = vld [vmem:[%s237 + $0xb8] sm:$0xff]
      %v409 = vld [vmem:[%s237 + $0xc0] sm:$0xff]
      %v410 = vld [vmem:[%s237 + $0xc8] sm:$0xff]
      %v411 = vld [vmem:[%s237 + $0xd0] sm:$0xff]
      %v412 = vld [vmem:[%s237 + $0xd8] sm:$0xff]
      %v413 = vld [vmem:[%s237 + $0xe0] sm:$0xff]
      %v414 = vld [vmem:[%s237 + $0xe8] sm:$0xff]
      %v415 = vld [vmem:[%s237 + $0xf0] sm:$0xff]
      %v416 = vld [vmem:[%s237 + $0xf8] sm:$0xff]
      %v417 = vld [vmem:[%s237 + $0x100] sm:$0xff]
      %v418 = vld [vmem:[%s237 + $0x108] sm:$0xff]
      %v419 = vld [vmem:[%s237 + $0x110] sm:$0xff]
      %v420 = vld [vmem:[%s237 + $0x118] sm:$0xff]
      %v421 = vld [vmem:[%s237 + $0x120] sm:$0xff]
      %v422 = vld [vmem:[%s237 + $0x128] sm:$0xff]
      %v423 = vld [vmem:[%s237 + $0x130] sm:$0xff]
      %v424 = vld [vmem:[%s237 + $0x138] sm:$0xff]
      %v425 = vld [vmem:[%s237 + $0x140] sm:$0xff]
      %v426 = vld [vmem:[%s237 + $0x148] sm:$0xff]
      %v427 = vld [vmem:[%s237 + $0x150] sm:$0xff]
      %v428 = vld [vmem:[%s237 + $0x158] sm:$0xff]
      %v429 = vld [vmem:[%s237 + $0x160] sm:$0xff]
      %v430 = vld [vmem:[%s237 + $0x168] sm:$0xff]
      %v431 = vld [vmem:[%s237 + $0x170] sm:$0xff]
      %v432 = vld [vmem:[%s237 + $0x178] sm:$0xff]
      %v433 = vld [vmem:[%s237 + $0x180] sm:$0xff]
      %v434 = vld [vmem:[%s237 + $0x188] sm:$0xff]
      %v435 = vld [vmem:[%s237 + $0x190] sm:$0xff]
      %v436 = vld [vmem:[%s237 + $0x198] sm:$0xff]
      %v437 = vld [vmem:[%s237 + $0x1a0] sm:$0xff]
      %v438 = vld [vmem:[%s237 + $0x1a8] sm:$0xff]
      %v439 = vld [vmem:[%s237 + $0x1b0] sm:$0xff]
      %v440 = vld [vmem:[%s237 + $0x1b8] sm:$0xff]
      %v441 = vld [vmem:[%s237 + $0x1c0] sm:$0xff]
      %v442 = vld [vmem:[%s237 + $0x1c8] sm:$0xff]
      %v443 = vld [vmem:[%s237 + $0x1d0] sm:$0xff]
      %v444 = vld [vmem:[%s237 + $0x1d8] sm:$0xff]
      %v445 = vld [vmem:[%s237 + $0x1e0] sm:$0xff]
      %v446 = vld [vmem:[%s237 + $0x1e8] sm:$0xff]
      %v447 = vld [vmem:[%s237 + $0x1f0] sm:$0xff]
      %v448 = vld [vmem:[%s237 + $0x1f8] sm:$0xff]
      %v449 = vld [vmem:[%s237 + $0x200] sm:$0xff]
      %v450 = vld [vmem:[%s237 + $0x208] sm:$0xff]
      %v451 = vld [vmem:[%s237 + $0x210] sm:$0xff]
      %v452 = vld [vmem:[%s237 + $0x218] sm:$0xff]
      %v453 = vld [vmem:[%s237 + $0x220] sm:$0xff]
      %v454 = vld [vmem:[%s237 + $0x228] sm:$0xff]
      %v455 = vld [vmem:[%s237 + $0x230] sm:$0xff]
      %v456 = vld [vmem:[%s237 + $0x238] sm:$0xff]
      %v457 = vld [vmem:[%s237 + $0x240] sm:$0xff]
      %v458 = vld [vmem:[%s237 + $0x248] sm:$0xff]
      %v459 = vld [vmem:[%s237 + $0x250] sm:$0xff]
      %v460 = vld [vmem:[%s237 + $0x258] sm:$0xff]
      %v461 = vld [vmem:[%s237 + $0x260] sm:$0xff]
      %v462 = vld [vmem:[%s237 + $0x268] sm:$0xff]
      %v463 = vld [vmem:[%s237 + $0x270] sm:$0xff]
      %v464 = vld [vmem:[%s237 + $0x278] sm:$0xff]
      %v465 = vld [vmem:[%s237 + $0x280] sm:$0xff]
      %v466 = vld [vmem:[%s237 + $0x288] sm:$0xff]
      %v467 = vld [vmem:[%s237 + $0x290] sm:$0xff]
      %v468 = vld [vmem:[%s237 + $0x298] sm:$0xff]
      %v469 = vld [vmem:[%s237 + $0x2a0] sm:$0xff]
      %v470 = vld [vmem:[%s237 + $0x2a8] sm:$0xff]
      %v471 = vld [vmem:[%s237 + $0x2b0] sm:$0xff]
      %v472 = vld [vmem:[%s237 + $0x2b8] sm:$0xff]
      %v473 = vld [vmem:[%s237 + $0x2c0] sm:$0xff]
      %v474 = vld [vmem:[%s237 + $0x2c8] sm:$0xff]
      %v475 = vld [vmem:[%s237 + $0x2d0] sm:$0xff]
      %v476 = vld [vmem:[%s237 + $0x2d8] sm:$0xff]
      %v477 = vld [vmem:[%s237 + $0x2e0] sm:$0xff]
      %v478 = vld [vmem:[%s237 + $0x2e8] sm:$0xff]
      %v479 = vld [vmem:[%s237 + $0x2f0] sm:$0xff]
      %v480 = vld [vmem:[%s237 + $0x2f8] sm:$0xff]
      %v481 = vld [vmem:[%s237 + $0x300] sm:$0xff]
      %v482 = vld [vmem:[%s237 + $0x308] sm:$0xff]
      %v483 = vld [vmem:[%s237 + $0x310] sm:$0xff]
      %v484 = vld [vmem:[%s237 + $0x318] sm:$0xff]
      %v485 = vld [vmem:[%s237 + $0x320] sm:$0xff]
      %v486 = vld [vmem:[%s237 + $0x328] sm:$0xff]
      %v487 = vld [vmem:[%s237 + $0x330] sm:$0xff]
      %v488 = vld [vmem:[%s237 + $0x338] sm:$0xff]
      %v489 = vld [vmem:[%s237 + $0x340] sm:$0xff]
      %v490 = vld [vmem:[%s237 + $0x348] sm:$0xff]
      %v491 = vld [vmem:[%s237 + $0x350] sm:$0xff]
      %v492 = vld [vmem:[%s237 + $0x358] sm:$0xff]
      %v493 = vld [vmem:[%s237 + $0x360] sm:$0xff]
      %v494 = vld [vmem:[%s237 + $0x368] sm:$0xff]
      %v495 = vld [vmem:[%s237 + $0x370] sm:$0xff]
      %v496 = vld [vmem:[%s237 + $0x378] sm:$0xff]
      %v497 = vld [vmem:[%s237 + $0x380] sm:$0xff]
      %v498 = vld [vmem:[%s237 + $0x388] sm:$0xff]
      %v499 = vld [vmem:[%s237 + $0x390] sm:$0xff]
      %v500 = vld [vmem:[%s237 + $0x398] sm:$0xff]
      %v501 = vld [vmem:[%s237 + $0x3a0] sm:$0xff]
      %v502 = vld [vmem:[%s237 + $0x3a8] sm:$0xff]
      %v503 = vld [vmem:[%s237 + $0x3b0] sm:$0xff]
      %v504 = vld [vmem:[%s237 + $0x3b8] sm:$0xff]
      %v505 = vld [vmem:[%s237 + $0x3c0] sm:$0xff]
      %v506 = vld [vmem:[%s237 + $0x3c8] sm:$0xff]
      %v507 = vld [vmem:[%s237 + $0x3d0] sm:$0xff]
      %v508 = vld [vmem:[%s237 + $0x3d8] sm:$0xff]
      %v509 = vld [vmem:[%s237 + $0x3e0] sm:$0xff]
      %v510 = vld [vmem:[%s237 + $0x3e8] sm:$0xff]
      %v511 = vld [vmem:[%s237 + $0x3f0] sm:$0xff]
      %v512 = vld [vmem:[%s237 + $0x3f8] sm:$0xff]
      %v513 = vld [vmem:[%s237 + $0x400] sm:$0xff]
      %v514 = vld [vmem:[%s237 + $0x408] sm:$0xff]
      %v515 = vld [vmem:[%s237 + $0x410] sm:$0xff]
      %v516 = vld [vmem:[%s237 + $0x418] sm:$0xff]
      %v517 = vld [vmem:[%s237 + $0x420] sm:$0xff]
      %v518 = vld [vmem:[%s237 + $0x428] sm:$0xff]
      %v519 = vld [vmem:[%s237 + $0x430] sm:$0xff]
      %v520 = vld [vmem:[%s237 + $0x438] sm:$0xff]
      %v521 = vld [vmem:[%s237 + $0x440] sm:$0xff]
      %v522 = vld [vmem:[%s237 + $0x448] sm:$0xff]
      %v523 = vld [vmem:[%s237 + $0x450] sm:$0xff]
      %v524 = vld [vmem:[%s237 + $0x458] sm:$0xff]
      %v525 = vld [vmem:[%s237 + $0x460] sm:$0xff]
      %v526 = vld [vmem:[%s237 + $0x468] sm:$0xff]
      %v527 = vld [vmem:[%s237 + $0x470] sm:$0xff]
      %v528 = vld [vmem:[%s237 + $0x478] sm:$0xff]
      %v529 = vld [vmem:[%s237 + $0x480] sm:$0xff]
      %v530 = vld [vmem:[%s237 + $0x488] sm:$0xff]
      %v531 = vld [vmem:[%s237 + $0x490] sm:$0xff]
      %v532 = vld [vmem:[%s237 + $0x498] sm:$0xff]
      %v533 = vld [vmem:[%s237 + $0x4a0] sm:$0xff]
      %v534 = vld [vmem:[%s237 + $0x4a8] sm:$0xff]
      %v535 = vld [vmem:[%s237 + $0x4b0] sm:$0xff]
      %v536 = vld [vmem:[%s237 + $0x4b8] sm:$0xff]
      %v537 = vld [vmem:[%s237 + $0x4c0] sm:$0xff]
      %v538 = vld [vmem:[%s237 + $0x4c8] sm:$0xff]
      %v539 = vld [vmem:[%s237 + $0x4d0] sm:$0xff]
      %v540 = vld [vmem:[%s237 + $0x4d8] sm:$0xff]
      %v541 = vld [vmem:[%s237 + $0x4e0] sm:$0xff]
      %v542 = vld [vmem:[%s237 + $0x4e8] sm:$0xff]
      %v543 = vld [vmem:[%s237 + $0x4f0] sm:$0xff]
      %v544 = vld [vmem:[%s237 + $0x4f8] sm:$0xff]
      %v545 = vld [vmem:[%s237 + $0x500] sm:$0xff]
      %v546 = vld [vmem:[%s237 + $0x508] sm:$0xff]
      %v547 = vld [vmem:[%s237 + $0x510] sm:$0xff]
      %v548 = vld [vmem:[%s237 + $0x518] sm:$0xff]
      %v549 = vld [vmem:[%s237 + $0x520] sm:$0xff]
      %v550 = vld [vmem:[%s237 + $0x528] sm:$0xff]
      %v551 = vld [vmem:[%s237 + $0x530] sm:$0xff]
      %v552 = vld [vmem:[%s237 + $0x538] sm:$0xff]
      %v553 = vld [vmem:[%s237 + $0x540] sm:$0xff]
      %v554 = vld [vmem:[%s237 + $0x548] sm:$0xff]
      %v555 = vld [vmem:[%s237 + $0x550] sm:$0xff]
      %v556 = vld [vmem:[%s237 + $0x558] sm:$0xff]
      %v557 = vld [vmem:[%s237 + $0x560] sm:$0xff]
      %v558 = vld [vmem:[%s237 + $0x568] sm:$0xff]
      %v559 = vld [vmem:[%s237 + $0x570] sm:$0xff]
      %v560 = vld [vmem:[%s237 + $0x578] sm:$0xff]
      %v561 = vld [vmem:[%s237 + $0x580] sm:$0xff]
      %v562 = vld [vmem:[%s237 + $0x588] sm:$0xff]
      %v563 = vld [vmem:[%s237 + $0x590] sm:$0xff]
      %v564 = vld [vmem:[%s237 + $0x598] sm:$0xff]
      %v565 = vld [vmem:[%s237 + $0x5a0] sm:$0xff]
      %v566 = vld [vmem:[%s237 + $0x5a8] sm:$0xff]
      %v567 = vld [vmem:[%s237 + $0x5b0] sm:$0xff]
      %v568 = vld [vmem:[%s237 + $0x5b8] sm:$0xff]
      %v569 = vld [vmem:[%s237 + $0x5c0] sm:$0xff]
      %v570 = vld [vmem:[%s237 + $0x5c8] sm:$0xff]
      %v571 = vld [vmem:[%s237 + $0x5d0] sm:$0xff]
      %v572 = vld [vmem:[%s237 + $0x5d8] sm:$0xff]
      %v573 = vld [vmem:[%s237 + $0x5e0] sm:$0xff]
      %v574 = vld [vmem:[%s237 + $0x5e8] sm:$0xff]
      %v575 = vld [vmem:[%s237 + $0x5f0] sm:$0xff]
      %v576 = vld [vmem:[%s237 + $0x5f8] sm:$0xff]
      %v577 = vld [vmem:[%s237 + $0x600] sm:$0xff]
      %v578 = vld [vmem:[%s237 + $0x608] sm:$0xff]
      %v579 = vld [vmem:[%s237 + $0x610] sm:$0xff]
      %v580 = vld [vmem:[%s237 + $0x618] sm:$0xff]
      %v581 = vld [vmem:[%s237 + $0x620] sm:$0xff]
      %v582 = vld [vmem:[%s237 + $0x628] sm:$0xff]
      %v583 = vld [vmem:[%s237 + $0x630] sm:$0xff]
      %v584 = vld [vmem:[%s237 + $0x638] sm:$0xff]
      %v585 = vld [vmem:[%s237 + $0x640] sm:$0xff]
      %v586 = vld [vmem:[%s237 + $0x648] sm:$0xff]
      %v587 = vld [vmem:[%s237 + $0x650] sm:$0xff]
      %v588 = vld [vmem:[%s237 + $0x658] sm:$0xff]
      %v589 = vld [vmem:[%s237 + $0x660] sm:$0xff]
      %v590 = vld [vmem:[%s237 + $0x668] sm:$0xff]
      %v591 = vld [vmem:[%s237 + $0x670] sm:$0xff]
      %v592 = vld [vmem:[%s237 + $0x678] sm:$0xff]
      %v593 = vld [vmem:[%s237 + $0x680] sm:$0xff]
      %v594 = vld [vmem:[%s237 + $0x688] sm:$0xff]
      %v595 = vld [vmem:[%s237 + $0x690] sm:$0xff]
      %v596 = vld [vmem:[%s237 + $0x698] sm:$0xff]
      %v597 = vld [vmem:[%s237 + $0x6a0] sm:$0xff]
      %v598 = vld [vmem:[%s237 + $0x6a8] sm:$0xff]
      %v599 = vld [vmem:[%s237 + $0x6b0] sm:$0xff]
      %v600 = vld [vmem:[%s237 + $0x6b8] sm:$0xff]
      %v601 = vld [vmem:[%s237 + $0x6c0] sm:$0xff]
      %v602 = vld [vmem:[%s237 + $0x6c8] sm:$0xff]
      %v603 = vld [vmem:[%s237 + $0x6d0] sm:$0xff]
      %v604 = vld [vmem:[%s237 + $0x6d8] sm:$0xff]
      %v605 = vld [vmem:[%s237 + $0x6e0] sm:$0xff]
      %v606 = vld [vmem:[%s237 + $0x6e8] sm:$0xff]
      %v607 = vld [vmem:[%s237 + $0x6f0] sm:$0xff]
      %v608 = vld [vmem:[%s237 + $0x6f8] sm:$0xff]
      %v609 = vld [vmem:[%s237 + $0x700] sm:$0xff]
      %v610 = vld [vmem:[%s237 + $0x708] sm:$0xff]
      %v611 = vld [vmem:[%s237 + $0x710] sm:$0xff]
      %v612 = vld [vmem:[%s237 + $0x718] sm:$0xff]
      %v613 = vld [vmem:[%s237 + $0x720] sm:$0xff]
      %v614 = vld [vmem:[%s237 + $0x728] sm:$0xff]
      %v615 = vld [vmem:[%s237 + $0x730] sm:$0xff]
      %v616 = vld [vmem:[%s237 + $0x738] sm:$0xff]
      %v617 = vld [vmem:[%s237 + $0x740] sm:$0xff]
      %v618 = vld [vmem:[%s237 + $0x748] sm:$0xff]
      %v619 = vld [vmem:[%s237 + $0x750] sm:$0xff]
      %v620 = vld [vmem:[%s237 + $0x758] sm:$0xff]
      %v621 = vld [vmem:[%s237 + $0x760] sm:$0xff]
      %v622 = vld [vmem:[%s237 + $0x768] sm:$0xff]
      %v623 = vld [vmem:[%s237 + $0x770] sm:$0xff]
      %v624 = vld [vmem:[%s237 + $0x778] sm:$0xff]
      %v753 = vunpack.c.l.b16 %v257
      %v754 = vunpack.c.h.b16 %v257
      %v755 = vunpack.c.l.b16 %v258
      %v756 = vunpack.c.h.b16 %v258
      %v757 = vunpack.c.l.b16 %v259
      %v758 = vunpack.c.h.b16 %v259
      %v759 = vunpack.c.l.b16 %v260
      %v760 = vunpack.c.h.b16 %v260
      %v761 = vunpack.c.l.b16 %v261
      %v762 = vunpack.c.h.b16 %v261
      %v763 = vunpack.c.l.b16 %v262
      %v764 = vunpack.c.h.b16 %v262
      %v765 = vunpack.c.l.b16 %v263
      %v766 = vunpack.c.h.b16 %v263
      %v767 = vunpack.c.l.b16 %v264
      %v768 = vunpack.c.h.b16 %v264
      %v769 = vunpack.c.l.b16 %v265
      %v770 = vunpack.c.h.b16 %v265
      %v771 = vunpack.c.l.b16 %v266
      %v772 = vunpack.c.h.b16 %v266
      %v773 = vunpack.c.l.b16 %v267
      %v774 = vunpack.c.h.b16 %v267
      %v775 = vunpack.c.l.b16 %v268
      %v776 = vunpack.c.h.b16 %v268
      %v777 = vunpack.c.l.b16 %v269
      %v778 = vunpack.c.h.b16 %v269
      %v779 = vunpack.c.l.b16 %v270
      %v780 = vunpack.c.h.b16 %v270
      %v781 = vunpack.c.l.b16 %v271
      %v782 = vunpack.c.h.b16 %v271
      %v783 = vunpack.c.l.b16 %v272
      %v784 = vunpack.c.h.b16 %v272
      %v785 = vunpack.c.l.b16 %v273
      %v786 = vunpack.c.h.b16 %v273
      %v787 = vunpack.c.l.b16 %v274
      %v788 = vunpack.c.h.b16 %v274
      %v789 = vunpack.c.l.b16 %v275
      %v790 = vunpack.c.h.b16 %v275
      %v791 = vunpack.c.l.b16 %v276
      %v792 = vunpack.c.h.b16 %v276
      %v793 = vunpack.c.l.b16 %v277
      %v794 = vunpack.c.h.b16 %v277
      %v795 = vunpack.c.l.b16 %v278
      %v796 = vunpack.c.h.b16 %v278
      %v797 = vunpack.c.l.b16 %v279
      %v798 = vunpack.c.h.b16 %v279
      %v799 = vunpack.c.l.b16 %v280
      %v800 = vunpack.c.h.b16 %v280
      %v801 = vunpack.c.l.b16 %v281
      %v802 = vunpack.c.h.b16 %v281
      %v803 = vunpack.c.l.b16 %v282
      %v804 = vunpack.c.h.b16 %v282
      %v805 = vunpack.c.l.b16 %v283
      %v806 = vunpack.c.h.b16 %v283
      %v807 = vunpack.c.l.b16 %v284
      %v808 = vunpack.c.h.b16 %v284
      %v809 = vunpack.c.l.b16 %v285
      %v810 = vunpack.c.h.b16 %v285
      %v811 = vunpack.c.l.b16 %v286
      %v812 = vunpack.c.h.b16 %v286
      %v813 = vunpack.c.l.b16 %v287
      %v814 = vunpack.c.h.b16 %v287
      %v815 = vunpack.c.l.b16 %v288
      %v816 = vunpack.c.h.b16 %v288
      %v817 = vunpack.c.l.b16 %v289
      %v818 = vunpack.c.h.b16 %v289
      %v819 = vunpack.c.l.b16 %v290
      %v820 = vunpack.c.h.b16 %v290
      %v821 = vunpack.c.l.b16 %v291
      %v822 = vunpack.c.h.b16 %v291
      %v823 = vunpack.c.l.b16 %v292
      %v824 = vunpack.c.h.b16 %v292
      %v825 = vunpack.c.l.b16 %v293
      %v826 = vunpack.c.h.b16 %v293
      %v827 = vunpack.c.l.b16 %v294
      %v828 = vunpack.c.h.b16 %v294
      %v829 = vunpack.c.l.b16 %v295
      %v830 = vunpack.c.h.b16 %v295
      %v831 = vunpack.c.l.b16 %v296
      %v832 = vunpack.c.h.b16 %v296
      %v833 = vunpack.c.l.b16 %v297
      %v834 = vunpack.c.h.b16 %v297
      %v835 = vunpack.c.l.b16 %v298
      %v836 = vunpack.c.h.b16 %v298
      %v837 = vunpack.c.l.b16 %v299
      %v838 = vunpack.c.h.b16 %v299
      %v839 = vunpack.c.l.b16 %v300
      %v840 = vunpack.c.h.b16 %v300
      %v841 = vunpack.c.l.b16 %v301
      %v842 = vunpack.c.h.b16 %v301
      %v843 = vunpack.c.l.b16 %v302
      %v844 = vunpack.c.h.b16 %v302
      %v845 = vunpack.c.l.b16 %v303
      %v846 = vunpack.c.h.b16 %v303
      %v847 = vunpack.c.l.b16 %v304
      %v848 = vunpack.c.h.b16 %v304
      %v849 = vunpack.c.l.b16 %v305
      %v850 = vunpack.c.h.b16 %v305
      %v851 = vunpack.c.l.b16 %v306
      %v852 = vunpack.c.h.b16 %v306
      %v853 = vunpack.c.l.b16 %v307
      %v854 = vunpack.c.h.b16 %v307
      %v855 = vunpack.c.l.b16 %v308
      %v856 = vunpack.c.h.b16 %v308
      %v857 = vunpack.c.l.b16 %v309
      %v858 = vunpack.c.h.b16 %v309
      %v859 = vunpack.c.l.b16 %v310
      %v860 = vunpack.c.h.b16 %v310
      %v861 = vunpack.c.l.b16 %v311
      %v862 = vunpack.c.h.b16 %v311
      %v863 = vunpack.c.l.b16 %v312
      %v864 = vunpack.c.h.b16 %v312
      %v865 = vunpack.c.l.b16 %v313
      %v866 = vunpack.c.h.b16 %v313
      %v867 = vunpack.c.l.b16 %v314
      %v868 = vunpack.c.h.b16 %v314
      %v869 = vunpack.c.l.b16 %v315
      %v870 = vunpack.c.h.b16 %v315
      %v871 = vunpack.c.l.b16 %v316
      %v872 = vunpack.c.h.b16 %v316
      %v873 = vunpack.c.l.b16 %v317
      %v874 = vunpack.c.h.b16 %v317
      %v875 = vunpack.c.l.b16 %v318
      %v876 = vunpack.c.h.b16 %v318
      %v877 = vunpack.c.l.b16 %v319
      %v878 = vunpack.c.h.b16 %v319
      %v879 = vunpack.c.l.b16 %v320
      %v880 = vunpack.c.h.b16 %v320
      %v881 = vunpack.c.l.b16 %v321
      %v882 = vunpack.c.h.b16 %v321
      %v883 = vunpack.c.l.b16 %v322
      %v884 = vunpack.c.h.b16 %v322
      %v885 = vunpack.c.l.b16 %v323
      %v886 = vunpack.c.h.b16 %v323
      %v887 = vunpack.c.l.b16 %v324
      %v888 = vunpack.c.h.b16 %v324
      %v889 = vunpack.c.l.b16 %v325
      %v890 = vunpack.c.h.b16 %v325
      %v891 = vunpack.c.l.b16 %v326
      %v892 = vunpack.c.h.b16 %v326
      %v893 = vunpack.c.l.b16 %v327
      %v894 = vunpack.c.h.b16 %v327
      %v895 = vunpack.c.l.b16 %v328
      %v896 = vunpack.c.h.b16 %v328
      %v897 = vunpack.c.l.b16 %v329
      %v898 = vunpack.c.h.b16 %v329
      %v899 = vunpack.c.l.b16 %v330
      %v900 = vunpack.c.h.b16 %v330
      %v901 = vunpack.c.l.b16 %v331
      %v902 = vunpack.c.h.b16 %v331
      %v903 = vunpack.c.l.b16 %v332
      %v904 = vunpack.c.h.b16 %v332
      %v905 = vunpack.c.l.b16 %v333
      %v906 = vunpack.c.h.b16 %v333
      %v907 = vunpack.c.l.b16 %v334
      %v908 = vunpack.c.h.b16 %v334
      %v909 = vunpack.c.l.b16 %v335
      %v910 = vunpack.c.h.b16 %v335
      %v911 = vunpack.c.l.b16 %v336
      %v912 = vunpack.c.h.b16 %v336
      %v913 = vunpack.c.l.b16 %v337
      %v914 = vunpack.c.h.b16 %v337
      %v915 = vunpack.c.l.b16 %v338
      %v916 = vunpack.c.h.b16 %v338
      %v917 = vunpack.c.l.b16 %v339
      %v918 = vunpack.c.h.b16 %v339
      %v919 = vunpack.c.l.b16 %v340
      %v920 = vunpack.c.h.b16 %v340
      %v921 = vunpack.c.l.b16 %v341
      %v922 = vunpack.c.h.b16 %v341
      %v923 = vunpack.c.l.b16 %v342
      %v924 = vunpack.c.h.b16 %v342
      %v925 = vunpack.c.l.b16 %v343
      %v926 = vunpack.c.h.b16 %v343
      %v927 = vunpack.c.l.b16 %v344
      %v928 = vunpack.c.h.b16 %v344
      %v929 = vunpack.c.l.b16 %v345
      %v930 = vunpack.c.h.b16 %v345
      %v931 = vunpack.c.l.b16 %v346
      %v932 = vunpack.c.h.b16 %v346
      %v933 = vunpack.c.l.b16 %v347
      %v934 = vunpack.c.h.b16 %v347
      %v935 = vunpack.c.l.b16 %v348
      %v936 = vunpack.c.h.b16 %v348
      %v937 = vunpack.c.l.b16 %v349
      %v938 = vunpack.c.h.b16 %v349
      %v939 = vunpack.c.l.b16 %v350
      %v940 = vunpack.c.h.b16 %v350
      %v941 = vunpack.c.l.b16 %v351
      %v942 = vunpack.c.h.b16 %v351
      %v943 = vunpack.c.l.b16 %v352
      %v944 = vunpack.c.h.b16 %v352
      %v945 = vunpack.c.l.b16 %v353
      %v946 = vunpack.c.h.b16 %v353
      %v947 = vunpack.c.l.b16 %v354
      %v948 = vunpack.c.h.b16 %v354
      %v949 = vunpack.c.l.b16 %v355
      %v950 = vunpack.c.h.b16 %v355
      %v951 = vunpack.c.l.b16 %v356
      %v952 = vunpack.c.h.b16 %v356
      %v953 = vunpack.c.l.b16 %v357
      %v954 = vunpack.c.h.b16 %v357
      %v955 = vunpack.c.l.b16 %v358
      %v956 = vunpack.c.h.b16 %v358
      %v957 = vunpack.c.l.b16 %v359
      %v958 = vunpack.c.h.b16 %v359
      %v959 = vunpack.c.l.b16 %v360
      %v960 = vunpack.c.h.b16 %v360
      %v961 = vunpack.c.l.b16 %v361
      %v962 = vunpack.c.h.b16 %v361
      %v963 = vunpack.c.l.b16 %v362
      %v964 = vunpack.c.h.b16 %v362
      %v965 = vunpack.c.l.b16 %v363
      %v966 = vunpack.c.h.b16 %v363
      %v967 = vunpack.c.l.b16 %v364
      %v968 = vunpack.c.h.b16 %v364
      %v969 = vunpack.c.l.b16 %v365
      %v970 = vunpack.c.h.b16 %v365
      %v971 = vunpack.c.l.b16 %v366
      %v972 = vunpack.c.h.b16 %v366
      %v973 = vunpack.c.l.b16 %v367
      %v974 = vunpack.c.h.b16 %v367
      %v975 = vunpack.c.l.b16 %v368
      %v976 = vunpack.c.h.b16 %v368
      %v977 = vunpack.c.l.b16 %v369
      %v978 = vunpack.c.h.b16 %v369
      %v979 = vunpack.c.l.b16 %v370
      %v980 = vunpack.c.h.b16 %v370
      %v981 = vunpack.c.l.b16 %v371
      %v982 = vunpack.c.h.b16 %v371
      %v983 = vunpack.c.l.b16 %v372
      %v984 = vunpack.c.h.b16 %v372
      %v985 = vunpack.c.l.b16 %v373
      %v986 = vunpack.c.h.b16 %v373
      %v987 = vunpack.c.l.b16 %v374
      %v988 = vunpack.c.h.b16 %v374
      %v989 = vunpack.c.l.b16 %v375
      %v990 = vunpack.c.h.b16 %v375
      %v991 = vunpack.c.l.b16 %v376
      %v992 = vunpack.c.h.b16 %v376
      %v993 = vunpack.c.l.b16 %v377
      %v994 = vunpack.c.h.b16 %v377
      %v995 = vunpack.c.l.b16 %v378
      %v996 = vunpack.c.h.b16 %v378
      %v997 = vunpack.c.l.b16 %v379
      %v998 = vunpack.c.h.b16 %v379
      %v999 = vunpack.c.l.b16 %v380
      %v1000 = vunpack.c.h.b16 %v380
      %v1001 = vunpack.c.l.b16 %v381
      %v1002 = vunpack.c.h.b16 %v381
      %v1003 = vunpack.c.l.b16 %v382
      %v1004 = vunpack.c.h.b16 %v382
      %v1005 = vunpack.c.l.b16 %v383
      %v1006 = vunpack.c.h.b16 %v383
      %v1007 = vunpack.c.l.b16 %v384
      %v1008 = vunpack.c.h.b16 %v384
      %v1009 = vpack.c.b16 %v757, %v753
      %v1010 = vpack.c.b16 %v758, %v754
      %v1011 = vpack.c.b16 %v759, %v755
      %v1012 = vpack.c.b16 %v760, %v756
      %v1013 = vpack.c.b16 %v765, %v761
      %v1014 = vpack.c.b16 %v766, %v762
      %v1015 = vpack.c.b16 %v767, %v763
      %v1016 = vpack.c.b16 %v768, %v764
      %v1017 = vpack.c.b16 %v773, %v769
      %v1018 = vpack.c.b16 %v774, %v770
      %v1019 = vpack.c.b16 %v775, %v771
      %v1020 = vpack.c.b16 %v776, %v772
      %v1021 = vpack.c.b16 %v781, %v777
      %v1022 = vpack.c.b16 %v782, %v778
      %v1023 = vpack.c.b16 %v783, %v779
      %v1024 = vpack.c.b16 %v784, %v780
      %v1025 = vpack.c.b16 %v789, %v785
      %v1026 = vpack.c.b16 %v790, %v786
      %v1027 = vpack.c.b16 %v791, %v787
      %v1028 = vpack.c.b16 %v792, %v788
      %v1029 = vpack.c.b16 %v797, %v793
      %v1030 = vpack.c.b16 %v798, %v794
      %v1031 = vpack.c.b16 %v799, %v795
      %v1032 = vpack.c.b16 %v800, %v796
      %v1033 = vpack.c.b16 %v805, %v801
      %v1034 = vpack.c.b16 %v806, %v802
      %v1035 = vpack.c.b16 %v807, %v803
      %v1036 = vpack.c.b16 %v808, %v804
      %v1037 = vpack.c.b16 %v813, %v809
      %v1038 = vpack.c.b16 %v814, %v810
      %v1039 = vpack.c.b16 %v815, %v811
      %v1040 = vpack.c.b16 %v816, %v812
      %v1041 = vpack.c.b16 %v821, %v817
      %v1042 = vpack.c.b16 %v822, %v818
      %v1043 = vpack.c.b16 %v823, %v819
      %v1044 = vpack.c.b16 %v824, %v820
      %v1045 = vpack.c.b16 %v829, %v825
      %v1046 = vpack.c.b16 %v830, %v826
      %v1047 = vpack.c.b16 %v831, %v827
      %v1048 = vpack.c.b16 %v832, %v828
      %v1049 = vpack.c.b16 %v837, %v833
      %v1050 = vpack.c.b16 %v838, %v834
      %v1051 = vpack.c.b16 %v839, %v835
      %v1052 = vpack.c.b16 %v840, %v836
      %v1053 = vpack.c.b16 %v845, %v841
      %v1054 = vpack.c.b16 %v846, %v842
      %v1055 = vpack.c.b16 %v847, %v843
      %v1056 = vpack.c.b16 %v848, %v844
      %v1057 = vpack.c.b16 %v853, %v849
      %v1058 = vpack.c.b16 %v854, %v850
      %v1059 = vpack.c.b16 %v855, %v851
      %v1060 = vpack.c.b16 %v856, %v852
      %v1061 = vpack.c.b16 %v861, %v857
      %v1062 = vpack.c.b16 %v862, %v858
      %v1063 = vpack.c.b16 %v863, %v859
      %v1064 = vpack.c.b16 %v864, %v860
      %v1065 = vpack.c.b16 %v869, %v865
      %v1066 = vpack.c.b16 %v870, %v866
      %v1067 = vpack.c.b16 %v871, %v867
      %v1068 = vpack.c.b16 %v872, %v868
      %v1069 = vpack.c.b16 %v877, %v873
      %v1070 = vpack.c.b16 %v878, %v874
      %v1071 = vpack.c.b16 %v879, %v875
      %v1072 = vpack.c.b16 %v880, %v876
      %v1073 = vpack.c.b16 %v885, %v881
      %v1074 = vpack.c.b16 %v886, %v882
      %v1075 = vpack.c.b16 %v887, %v883
      %v1076 = vpack.c.b16 %v888, %v884
      %v1077 = vpack.c.b16 %v893, %v889
      %v1078 = vpack.c.b16 %v894, %v890
      %v1079 = vpack.c.b16 %v895, %v891
      %v1080 = vpack.c.b16 %v896, %v892
      %v1081 = vpack.c.b16 %v901, %v897
      %v1082 = vpack.c.b16 %v902, %v898
      %v1083 = vpack.c.b16 %v903, %v899
      %v1084 = vpack.c.b16 %v904, %v900
      %v1085 = vpack.c.b16 %v909, %v905
      %v1086 = vpack.c.b16 %v910, %v906
      %v1087 = vpack.c.b16 %v911, %v907
      %v1088 = vpack.c.b16 %v912, %v908
      %v1089 = vpack.c.b16 %v917, %v913
      %v1090 = vpack.c.b16 %v918, %v914
      %v1091 = vpack.c.b16 %v919, %v915
      %v1092 = vpack.c.b16 %v920, %v916
      %v1093 = vpack.c.b16 %v925, %v921
      %v1094 = vpack.c.b16 %v926, %v922
      %v1095 = vpack.c.b16 %v927, %v923
      %v1096 = vpack.c.b16 %v928, %v924
      %v1097 = vpack.c.b16 %v933, %v929
      %v1098 = vpack.c.b16 %v934, %v930
      %v1099 = vpack.c.b16 %v935, %v931
      %v1100 = vpack.c.b16 %v936, %v932
      %v1101 = vpack.c.b16 %v941, %v937
      %v1102 = vpack.c.b16 %v942, %v938
      %v1103 = vpack.c.b16 %v943, %v939
      %v1104 = vpack.c.b16 %v944, %v940
      %v1105 = vpack.c.b16 %v949, %v945
      %v1106 = vpack.c.b16 %v950, %v946
      %v1107 = vpack.c.b16 %v951, %v947
      %v1108 = vpack.c.b16 %v952, %v948
      %v1109 = vpack.c.b16 %v957, %v953
      %v1110 = vpack.c.b16 %v958, %v954
      %v1111 = vpack.c.b16 %v959, %v955
      %v1112 = vpack.c.b16 %v960, %v956
      %v1113 = vpack.c.b16 %v965, %v961
      %v1114 = vpack.c.b16 %v966, %v962
      %v1115 = vpack.c.b16 %v967, %v963
      %v1116 = vpack.c.b16 %v968, %v964
      %v1117 = vpack.c.b16 %v973, %v969
      %v1118 = vpack.c.b16 %v974, %v970
      %v1119 = vpack.c.b16 %v975, %v971
      %v1120 = vpack.c.b16 %v976, %v972
      %v1121 = vpack.c.b16 %v981, %v977
      %v1122 = vpack.c.b16 %v982, %v978
      %v1123 = vpack.c.b16 %v983, %v979
      %v1124 = vpack.c.b16 %v984, %v980
      %v1125 = vpack.c.b16 %v989, %v985
      %v1126 = vpack.c.b16 %v990, %v986
      %v1127 = vpack.c.b16 %v991, %v987
      %v1128 = vpack.c.b16 %v992, %v988
      %v1129 = vpack.c.b16 %v997, %v993
      %v1130 = vpack.c.b16 %v998, %v994
      %v1131 = vpack.c.b16 %v999, %v995
      %v1132 = vpack.c.b16 %v1000, %v996
      %v1133 = vpack.c.b16 %v1005, %v1001
      %v1134 = vpack.c.b16 %v1006, %v1002
      %v1135 = vpack.c.b16 %v1007, %v1003
      %v1136 = vpack.c.b16 %v1008, %v1004
      %v1473 = vunpack.c.l.b16 %v385
      %v1474 = vunpack.c.h.b16 %v385
      %v1475 = vunpack.c.l.b16 %v386
      %v1476 = vunpack.c.h.b16 %v386
      %v1477 = vunpack.c.l.b16 %v387
      %v1478 = vunpack.c.h.b16 %v387
      %v1479 = vunpack.c.l.b16 %v388
      %v1480 = vunpack.c.h.b16 %v388
      %v1481 = vunpack.c.l.b16 %v389
      %v1482 = vunpack.c.h.b16 %v389
      %v1483 = vunpack.c.l.b16 %v390
      %v1484 = vunpack.c.h.b16 %v390
      %v1485 = vunpack.c.l.b16 %v391
      %v1486 = vunpack.c.h.b16 %v391
      %v1487 = vunpack.c.l.b16 %v392
      %v1488 = vunpack.c.h.b16 %v392
      %v1489 = vunpack.c.l.b16 %v393
      %v1490 = vunpack.c.h.b16 %v393
      %v1491 = vunpack.c.l.b16 %v394
      %v1492 = vunpack.c.h.b16 %v394
      %v1493 = vunpack.c.l.b16 %v395
      %v1494 = vunpack.c.h.b16 %v395
      %v1495 = vunpack.c.l.b16 %v396
      %v1496 = vunpack.c.h.b16 %v396
      %v1497 = vunpack.c.l.b16 %v397
      %v1498 = vunpack.c.h.b16 %v397
      %v1499 = vunpack.c.l.b16 %v398
      %v1500 = vunpack.c.h.b16 %v398
      %v1501 = vunpack.c.l.b16 %v399
      %v1502 = vunpack.c.h.b16 %v399
      %v1503 = vunpack.c.l.b16 %v400
      %v1504 = vunpack.c.h.b16 %v400
      %v1505 = vunpack.c.l.b16 %v401
      %v1506 = vunpack.c.h.b16 %v401
      %v1507 = vunpack.c.l.b16 %v402
      %v1508 = vunpack.c.h.b16 %v402
      %v1509 = vunpack.c.l.b16 %v403
      %v1510 = vunpack.c.h.b16 %v403
      %v1511 = vunpack.c.l.b16 %v404
      %v1512 = vunpack.c.h.b16 %v404
      %v1513 = vunpack.c.l.b16 %v405
      %v1514 = vunpack.c.h.b16 %v405
      %v1515 = vunpack.c.l.b16 %v406
      %v1516 = vunpack.c.h.b16 %v406
      %v1517 = vunpack.c.l.b16 %v407
      %v1518 = vunpack.c.h.b16 %v407
      %v1519 = vunpack.c.l.b16 %v408
      %v1520 = vunpack.c.h.b16 %v408
      %v1521 = vunpack.c.l.b16 %v409
      %v1522 = vunpack.c.h.b16 %v409
      %v1523 = vunpack.c.l.b16 %v410
      %v1524 = vunpack.c.h.b16 %v410
      %v1525 = vunpack.c.l.b16 %v411
      %v1526 = vunpack.c.h.b16 %v411
      %v1527 = vunpack.c.l.b16 %v412
      %v1528 = vunpack.c.h.b16 %v412
      %v1529 = vunpack.c.l.b16 %v413
      %v1530 = vunpack.c.h.b16 %v413
      %v1531 = vunpack.c.l.b16 %v414
      %v1532 = vunpack.c.h.b16 %v414
      %v1533 = vunpack.c.l.b16 %v415
      %v1534 = vunpack.c.h.b16 %v415
      %v1535 = vunpack.c.l.b16 %v416
      %v1536 = vunpack.c.h.b16 %v416
      %v1537 = vunpack.c.l.b16 %v417
      %v1538 = vunpack.c.h.b16 %v417
      %v1539 = vunpack.c.l.b16 %v418
      %v1540 = vunpack.c.h.b16 %v418
      %v1541 = vunpack.c.l.b16 %v419
      %v1542 = vunpack.c.h.b16 %v419
      %v1543 = vunpack.c.l.b16 %v420
      %v1544 = vunpack.c.h.b16 %v420
      %v1545 = vunpack.c.l.b16 %v421
      %v1546 = vunpack.c.h.b16 %v421
      %v1547 = vunpack.c.l.b16 %v422
      %v1548 = vunpack.c.h.b16 %v422
      %v1549 = vunpack.c.l.b16 %v423
      %v1550 = vunpack.c.h.b16 %v423
      %v1551 = vunpack.c.l.b16 %v424
      %v1552 = vunpack.c.h.b16 %v424
      %v1553 = vunpack.c.l.b16 %v425
      %v1554 = vunpack.c.h.b16 %v425
      %v1555 = vunpack.c.l.b16 %v426
      %v1556 = vunpack.c.h.b16 %v426
      %v1557 = vunpack.c.l.b16 %v427
      %v1558 = vunpack.c.h.b16 %v427
      %v1559 = vunpack.c.l.b16 %v428
      %v1560 = vunpack.c.h.b16 %v428
      %v1561 = vunpack.c.l.b16 %v429
      %v1562 = vunpack.c.h.b16 %v429
      %v1563 = vunpack.c.l.b16 %v430
      %v1564 = vunpack.c.h.b16 %v430
      %v1565 = vunpack.c.l.b16 %v431
      %v1566 = vunpack.c.h.b16 %v431
      %v1567 = vunpack.c.l.b16 %v432
      %v1568 = vunpack.c.h.b16 %v432
      %v1569 = vunpack.c.l.b16 %v433
      %v1570 = vunpack.c.h.b16 %v433
      %v1571 = vunpack.c.l.b16 %v434
      %v1572 = vunpack.c.h.b16 %v434
      %v1573 = vunpack.c.l.b16 %v435
      %v1574 = vunpack.c.h.b16 %v435
      %v1575 = vunpack.c.l.b16 %v436
      %v1576 = vunpack.c.h.b16 %v436
      %v1577 = vunpack.c.l.b16 %v437
      %v1578 = vunpack.c.h.b16 %v437
      %v1579 = vunpack.c.l.b16 %v438
      %v1580 = vunpack.c.h.b16 %v438
      %v1581 = vunpack.c.l.b16 %v439
      %v1582 = vunpack.c.h.b16 %v439
      %v1583 = vunpack.c.l.b16 %v440
      %v1584 = vunpack.c.h.b16 %v440
      %v1585 = vunpack.c.l.b16 %v441
      %v1586 = vunpack.c.h.b16 %v441
      %v1587 = vunpack.c.l.b16 %v442
      %v1588 = vunpack.c.h.b16 %v442
      %v1589 = vunpack.c.l.b16 %v443
      %v1590 = vunpack.c.h.b16 %v443
      %v1591 = vunpack.c.l.b16 %v444
      %v1592 = vunpack.c.h.b16 %v444
      %v1593 = vunpack.c.l.b16 %v445
      %v1594 = vunpack.c.h.b16 %v445
      %v1595 = vunpack.c.l.b16 %v446
      %v1596 = vunpack.c.h.b16 %v446
      %v1597 = vunpack.c.l.b16 %v447
      %v1598 = vunpack.c.h.b16 %v447
      %v1599 = vunpack.c.l.b16 %v448
      %v1600 = vunpack.c.h.b16 %v448
      %v1601 = vunpack.c.l.b16 %v449
      %v1602 = vunpack.c.h.b16 %v449
      %v1603 = vunpack.c.l.b16 %v450
      %v1604 = vunpack.c.h.b16 %v450
      %v1605 = vunpack.c.l.b16 %v451
      %v1606 = vunpack.c.h.b16 %v451
      %v1607 = vunpack.c.l.b16 %v452
      %v1608 = vunpack.c.h.b16 %v452
      %v1609 = vunpack.c.l.b16 %v453
      %v1610 = vunpack.c.h.b16 %v453
      %v1611 = vunpack.c.l.b16 %v454
      %v1612 = vunpack.c.h.b16 %v454
      %v1613 = vunpack.c.l.b16 %v455
      %v1614 = vunpack.c.h.b16 %v455
      %v1615 = vunpack.c.l.b16 %v456
      %v1616 = vunpack.c.h.b16 %v456
      %v1617 = vunpack.c.l.b16 %v457
      %v1618 = vunpack.c.h.b16 %v457
      %v1619 = vunpack.c.l.b16 %v458
      %v1620 = vunpack.c.h.b16 %v458
      %v1621 = vunpack.c.l.b16 %v459
      %v1622 = vunpack.c.h.b16 %v459
      %v1623 = vunpack.c.l.b16 %v460
      %v1624 = vunpack.c.h.b16 %v460
      %v1625 = vunpack.c.l.b16 %v461
      %v1626 = vunpack.c.h.b16 %v461
      %v1627 = vunpack.c.l.b16 %v462
      %v1628 = vunpack.c.h.b16 %v462
      %v1629 = vunpack.c.l.b16 %v463
      %v1630 = vunpack.c.h.b16 %v463
      %v1631 = vunpack.c.l.b16 %v464
      %v1632 = vunpack.c.h.b16 %v464
      %v1633 = vunpack.c.l.b16 %v465
      %v1634 = vunpack.c.h.b16 %v465
      %v1635 = vunpack.c.l.b16 %v466
      %v1636 = vunpack.c.h.b16 %v466
      %v1637 = vunpack.c.l.b16 %v467
      %v1638 = vunpack.c.h.b16 %v467
      %v1639 = vunpack.c.l.b16 %v468
      %v1640 = vunpack.c.h.b16 %v468
      %v1641 = vunpack.c.l.b16 %v469
      %v1642 = vunpack.c.h.b16 %v469
      %v1643 = vunpack.c.l.b16 %v470
      %v1644 = vunpack.c.h.b16 %v470
      %v1645 = vunpack.c.l.b16 %v471
      %v1646 = vunpack.c.h.b16 %v471
      %v1647 = vunpack.c.l.b16 %v472
      %v1648 = vunpack.c.h.b16 %v472
      %v1649 = vunpack.c.l.b16 %v473
      %v1650 = vunpack.c.h.b16 %v473
      %v1651 = vunpack.c.l.b16 %v474
      %v1652 = vunpack.c.h.b16 %v474
      %v1653 = vunpack.c.l.b16 %v475
      %v1654 = vunpack.c.h.b16 %v475
      %v1655 = vunpack.c.l.b16 %v476
      %v1656 = vunpack.c.h.b16 %v476
      %v1657 = vunpack.c.l.b16 %v477
      %v1658 = vunpack.c.h.b16 %v477
      %v1659 = vunpack.c.l.b16 %v478
      %v1660 = vunpack.c.h.b16 %v478
      %v1661 = vunpack.c.l.b16 %v479
      %v1662 = vunpack.c.h.b16 %v479
      %v1663 = vunpack.c.l.b16 %v480
      %v1664 = vunpack.c.h.b16 %v480
      %v1665 = vunpack.c.l.b16 %v481
      %v1666 = vunpack.c.h.b16 %v481
      %v1667 = vunpack.c.l.b16 %v482
      %v1668 = vunpack.c.h.b16 %v482
      %v1669 = vunpack.c.l.b16 %v483
      %v1670 = vunpack.c.h.b16 %v483
      %v1671 = vunpack.c.l.b16 %v484
      %v1672 = vunpack.c.h.b16 %v484
      %v1673 = vunpack.c.l.b16 %v485
      %v1674 = vunpack.c.h.b16 %v485
      %v1675 = vunpack.c.l.b16 %v486
      %v1676 = vunpack.c.h.b16 %v486
      %v1677 = vunpack.c.l.b16 %v487
      %v1678 = vunpack.c.h.b16 %v487
      %v1679 = vunpack.c.l.b16 %v488
      %v1680 = vunpack.c.h.b16 %v488
      %v1681 = vunpack.c.l.b16 %v489
      %v1682 = vunpack.c.h.b16 %v489
      %v1683 = vunpack.c.l.b16 %v490
      %v1684 = vunpack.c.h.b16 %v490
      %v1685 = vunpack.c.l.b16 %v491
      %v1686 = vunpack.c.h.b16 %v491
      %v1687 = vunpack.c.l.b16 %v492
      %v1688 = vunpack.c.h.b16 %v492
      %v1689 = vunpack.c.l.b16 %v493
      %v1690 = vunpack.c.h.b16 %v493
      %v1691 = vunpack.c.l.b16 %v494
      %v1692 = vunpack.c.h.b16 %v494
      %v1693 = vunpack.c.l.b16 %v495
      %v1694 = vunpack.c.h.b16 %v495
      %v1695 = vunpack.c.l.b16 %v496
      %v1696 = vunpack.c.h.b16 %v496
      %v1697 = vunpack.c.l.b16 %v497
      %v1698 = vunpack.c.h.b16 %v497
      %v1699 = vunpack.c.l.b16 %v498
      %v1700 = vunpack.c.h.b16 %v498
      %v1701 = vunpack.c.l.b16 %v499
      %v1702 = vunpack.c.h.b16 %v499
      %v1703 = vunpack.c.l.b16 %v500
      %v1704 = vunpack.c.h.b16 %v500
      %v1705 = vunpack.c.l.b16 %v501
      %v1706 = vunpack.c.h.b16 %v501
      %v1707 = vunpack.c.l.b16 %v502
      %v1708 = vunpack.c.h.b16 %v502
      %v1709 = vunpack.c.l.b16 %v503
      %v1710 = vunpack.c.h.b16 %v503
      %v1711 = vunpack.c.l.b16 %v504
      %v1712 = vunpack.c.h.b16 %v504
      %v1713 = vunpack.c.l.b16 %v505
      %v1714 = vunpack.c.h.b16 %v505
      %v1715 = vunpack.c.l.b16 %v506
      %v1716 = vunpack.c.h.b16 %v506
      %v1717 = vunpack.c.l.b16 %v507
      %v1718 = vunpack.c.h.b16 %v507
      %v1719 = vunpack.c.l.b16 %v508
      %v1720 = vunpack.c.h.b16 %v508
      %v1721 = vunpack.c.l.b16 %v509
      %v1722 = vunpack.c.h.b16 %v509
      %v1723 = vunpack.c.l.b16 %v510
      %v1724 = vunpack.c.h.b16 %v510
      %v1725 = vunpack.c.l.b16 %v511
      %v1726 = vunpack.c.h.b16 %v511
      %v1727 = vunpack.c.l.b16 %v512
      %v1728 = vunpack.c.h.b16 %v512
      %v1729 = vunpack.c.l.b16 %v513
      %v1730 = vunpack.c.h.b16 %v513
      %v1731 = vunpack.c.l.b16 %v514
      %v1732 = vunpack.c.h.b16 %v514
      %v1733 = vunpack.c.l.b16 %v515
      %v1734 = vunpack.c.h.b16 %v515
      %v1735 = vunpack.c.l.b16 %v516
      %v1736 = vunpack.c.h.b16 %v516
      %v1737 = vunpack.c.l.b16 %v517
      %v1738 = vunpack.c.h.b16 %v517
      %v1739 = vunpack.c.l.b16 %v518
      %v1740 = vunpack.c.h.b16 %v518
      %v1741 = vunpack.c.l.b16 %v519
      %v1742 = vunpack.c.h.b16 %v519
      %v1743 = vunpack.c.l.b16 %v520
      %v1744 = vunpack.c.h.b16 %v520
      %v1745 = vunpack.c.l.b16 %v521
      %v1746 = vunpack.c.h.b16 %v521
      %v1747 = vunpack.c.l.b16 %v522
      %v1748 = vunpack.c.h.b16 %v522
      %v1749 = vunpack.c.l.b16 %v523
      %v1750 = vunpack.c.h.b16 %v523
      %v1751 = vunpack.c.l.b16 %v524
      %v1752 = vunpack.c.h.b16 %v524
      %v1753 = vunpack.c.l.b16 %v525
      %v1754 = vunpack.c.h.b16 %v525
      %v1755 = vunpack.c.l.b16 %v526
      %v1756 = vunpack.c.h.b16 %v526
      %v1757 = vunpack.c.l.b16 %v527
      %v1758 = vunpack.c.h.b16 %v527
      %v1759 = vunpack.c.l.b16 %v528
      %v1760 = vunpack.c.h.b16 %v528
      %v1761 = vunpack.c.l.b16 %v529
      %v1762 = vunpack.c.h.b16 %v529
      %v1763 = vunpack.c.l.b16 %v530
      %v1764 = vunpack.c.h.b16 %v530
      %v1765 = vunpack.c.l.b16 %v531
      %v1766 = vunpack.c.h.b16 %v531
      %v1767 = vunpack.c.l.b16 %v532
      %v1768 = vunpack.c.h.b16 %v532
      %v1769 = vunpack.c.l.b16 %v533
      %v1770 = vunpack.c.h.b16 %v533
      %v1771 = vunpack.c.l.b16 %v534
      %v1772 = vunpack.c.h.b16 %v534
      %v1773 = vunpack.c.l.b16 %v535
      %v1774 = vunpack.c.h.b16 %v535
      %v1775 = vunpack.c.l.b16 %v536
      %v1776 = vunpack.c.h.b16 %v536
      %v1777 = vunpack.c.l.b16 %v537
      %v1778 = vunpack.c.h.b16 %v537
      %v1779 = vunpack.c.l.b16 %v538
      %v1780 = vunpack.c.h.b16 %v538
      %v1781 = vunpack.c.l.b16 %v539
      %v1782 = vunpack.c.h.b16 %v539
      %v1783 = vunpack.c.l.b16 %v540
      %v1784 = vunpack.c.h.b16 %v540
      %v1785 = vunpack.c.l.b16 %v541
      %v1786 = vunpack.c.h.b16 %v541
      %v1787 = vunpack.c.l.b16 %v542
      %v1788 = vunpack.c.h.b16 %v542
      %v1789 = vunpack.c.l.b16 %v543
      %v1790 = vunpack.c.h.b16 %v543
      %v1791 = vunpack.c.l.b16 %v544
      %v1792 = vunpack.c.h.b16 %v544
      %v1793 = vunpack.c.l.b16 %v545
      %v1794 = vunpack.c.h.b16 %v545
      %v1795 = vunpack.c.l.b16 %v546
      %v1796 = vunpack.c.h.b16 %v546
      %v1797 = vunpack.c.l.b16 %v547
      %v1798 = vunpack.c.h.b16 %v547
      %v1799 = vunpack.c.l.b16 %v548
      %v1800 = vunpack.c.h.b16 %v548
      %v1801 = vunpack.c.l.b16 %v549
      %v1802 = vunpack.c.h.b16 %v549
      %v1803 = vunpack.c.l.b16 %v550
      %v1804 = vunpack.c.h.b16 %v550
      %v1805 = vunpack.c.l.b16 %v551
      %v1806 = vunpack.c.h.b16 %v551
      %v1807 = vunpack.c.l.b16 %v552
      %v1808 = vunpack.c.h.b16 %v552
      %v1809 = vunpack.c.l.b16 %v553
      %v1810 = vunpack.c.h.b16 %v553
      %v1811 = vunpack.c.l.b16 %v554
      %v1812 = vunpack.c.h.b16 %v554
      %v1813 = vunpack.c.l.b16 %v555
      %v1814 = vunpack.c.h.b16 %v555
      %v1815 = vunpack.c.l.b16 %v556
      %v1816 = vunpack.c.h.b16 %v556
      %v1817 = vunpack.c.l.b16 %v557
      %v1818 = vunpack.c.h.b16 %v557
      %v1819 = vunpack.c.l.b16 %v558
      %v1820 = vunpack.c.h.b16 %v558
      %v1821 = vunpack.c.l.b16 %v559
      %v1822 = vunpack.c.h.b16 %v559
      %v1823 = vunpack.c.l.b16 %v560
      %v1824 = vunpack.c.h.b16 %v560
      %v1825 = vunpack.c.l.b16 %v561
      %v1826 = vunpack.c.h.b16 %v561
      %v1827 = vunpack.c.l.b16 %v562
      %v1828 = vunpack.c.h.b16 %v562
      %v1829 = vunpack.c.l.b16 %v563
      %v1830 = vunpack.c.h.b16 %v563
      %v1831 = vunpack.c.l.b16 %v564
      %v1832 = vunpack.c.h.b16 %v564
      %v1833 = vunpack.c.l.b16 %v565
      %v1834 = vunpack.c.h.b16 %v565
      %v1835 = vunpack.c.l.b16 %v566
      %v1836 = vunpack.c.h.b16 %v566
      %v1837 = vunpack.c.l.b16 %v567
      %v1838 = vunpack.c.h.b16 %v567
      %v1839 = vunpack.c.l.b16 %v568
      %v1840 = vunpack.c.h.b16 %v568
      %v1841 = vunpack.c.l.b16 %v569
      %v1842 = vunpack.c.h.b16 %v569
      %v1843 = vunpack.c.l.b16 %v570
      %v1844 = vunpack.c.h.b16 %v570
      %v1845 = vunpack.c.l.b16 %v571
      %v1846 = vunpack.c.h.b16 %v571
      %v1847 = vunpack.c.l.b16 %v572
      %v1848 = vunpack.c.h.b16 %v572
      %v1849 = vunpack.c.l.b16 %v573
      %v1850 = vunpack.c.h.b16 %v573
      %v1851 = vunpack.c.l.b16 %v574
      %v1852 = vunpack.c.h.b16 %v574
      %v1853 = vunpack.c.l.b16 %v575
      %v1854 = vunpack.c.h.b16 %v575
      %v1855 = vunpack.c.l.b16 %v576
      %v1856 = vunpack.c.h.b16 %v576
      %v1857 = vunpack.c.l.b16 %v577
      %v1858 = vunpack.c.h.b16 %v577
      %v1859 = vunpack.c.l.b16 %v578
      %v1860 = vunpack.c.h.b16 %v578
      %v1861 = vunpack.c.l.b16 %v579
      %v1862 = vunpack.c.h.b16 %v579
      %v1863 = vunpack.c.l.b16 %v580
      %v1864 = vunpack.c.h.b16 %v580
      %v1865 = vunpack.c.l.b16 %v581
      %v1866 = vunpack.c.h.b16 %v581
      %v1867 = vunpack.c.l.b16 %v582
      %v1868 = vunpack.c.h.b16 %v582
      %v1869 = vunpack.c.l.b16 %v583
      %v1870 = vunpack.c.h.b16 %v583
      %v1871 = vunpack.c.l.b16 %v584
      %v1872 = vunpack.c.h.b16 %v584
      %v1873 = vunpack.c.l.b16 %v585
      %v1874 = vunpack.c.h.b16 %v585
      %v1875 = vunpack.c.l.b16 %v586
      %v1876 = vunpack.c.h.b16 %v586
      %v1877 = vunpack.c.l.b16 %v587
      %v1878 = vunpack.c.h.b16 %v587
      %v1879 = vunpack.c.l.b16 %v588
      %v1880 = vunpack.c.h.b16 %v588
      %v1881 = vunpack.c.l.b16 %v589
      %v1882 = vunpack.c.h.b16 %v589
      %v1883 = vunpack.c.l.b16 %v590
      %v1884 = vunpack.c.h.b16 %v590
      %v1885 = vunpack.c.l.b16 %v591
      %v1886 = vunpack.c.h.b16 %v591
      %v1887 = vunpack.c.l.b16 %v592
      %v1888 = vunpack.c.h.b16 %v592
      %v1889 = vunpack.c.l.b16 %v593
      %v1890 = vunpack.c.h.b16 %v593
      %v1891 = vunpack.c.l.b16 %v594
      %v1892 = vunpack.c.h.b16 %v594
      %v1893 = vunpack.c.l.b16 %v595
      %v1894 = vunpack.c.h.b16 %v595
      %v1895 = vunpack.c.l.b16 %v596
      %v1896 = vunpack.c.h.b16 %v596
      %v1897 = vunpack.c.l.b16 %v597
      %v1898 = vunpack.c.h.b16 %v597
      %v1899 = vunpack.c.l.b16 %v598
      %v1900 = vunpack.c.h.b16 %v598
      %v1901 = vunpack.c.l.b16 %v599
      %v1902 = vunpack.c.h.b16 %v599
      %v1903 = vunpack.c.l.b16 %v600
      %v1904 = vunpack.c.h.b16 %v600
      %v1905 = vunpack.c.l.b16 %v601
      %v1906 = vunpack.c.h.b16 %v601
      %v1907 = vunpack.c.l.b16 %v602
      %v1908 = vunpack.c.h.b16 %v602
      %v1909 = vunpack.c.l.b16 %v603
      %v1910 = vunpack.c.h.b16 %v603
      %v1911 = vunpack.c.l.b16 %v604
      %v1912 = vunpack.c.h.b16 %v604
      %v1913 = vunpack.c.l.b16 %v605
      %v1914 = vunpack.c.h.b16 %v605
      %v1915 = vunpack.c.l.b16 %v606
      %v1916 = vunpack.c.h.b16 %v606
      %v1917 = vunpack.c.l.b16 %v607
      %v1918 = vunpack.c.h.b16 %v607
      %v1919 = vunpack.c.l.b16 %v608
      %v1920 = vunpack.c.h.b16 %v608
      %v1921 = vunpack.c.l.b16 %v609
      %v1922 = vunpack.c.h.b16 %v609
      %v1923 = vunpack.c.l.b16 %v610
      %v1924 = vunpack.c.h.b16 %v610
      %v1925 = vunpack.c.l.b16 %v611
      %v1926 = vunpack.c.h.b16 %v611
      %v1927 = vunpack.c.l.b16 %v612
      %v1928 = vunpack.c.h.b16 %v612
      %v1929 = vunpack.c.l.b16 %v613
      %v1930 = vunpack.c.h.b16 %v613
      %v1931 = vunpack.c.l.b16 %v614
      %v1932 = vunpack.c.h.b16 %v614
      %v1933 = vunpack.c.l.b16 %v615
      %v1934 = vunpack.c.h.b16 %v615
      %v1935 = vunpack.c.l.b16 %v616
      %v1936 = vunpack.c.h.b16 %v616
      %v1937 = vunpack.c.l.b16 %v617
      %v1938 = vunpack.c.h.b16 %v617
      %v1939 = vunpack.c.l.b16 %v618
      %v1940 = vunpack.c.h.b16 %v618
      %v1941 = vunpack.c.l.b16 %v619
      %v1942 = vunpack.c.h.b16 %v619
      %v1943 = vunpack.c.l.b16 %v620
      %v1944 = vunpack.c.h.b16 %v620
      %v1945 = vunpack.c.l.b16 %v621
      %v1946 = vunpack.c.h.b16 %v621
      %v1947 = vunpack.c.l.b16 %v622
      %v1948 = vunpack.c.h.b16 %v622
      %v1949 = vunpack.c.l.b16 %v623
      %v1950 = vunpack.c.h.b16 %v623
      %v1951 = vunpack.c.l.b16 %v624
      %v1952 = vunpack.c.h.b16 %v624
      %v1953 = vpack.c.b16 %v1481, %v1473
      %v1954 = vpack.c.b16 %v1482, %v1474
      %v1955 = vpack.c.b16 %v1483, %v1475
      %v1956 = vpack.c.b16 %v1484, %v1476
      %v1957 = vpack.c.b16 %v1485, %v1477
      %v1958 = vpack.c.b16 %v1486, %v1478
      %v1959 = vpack.c.b16 %v1487, %v1479
      %v1960 = vpack.c.b16 %v1488, %v1480
      %v1961 = vpack.c.b16 %v1497, %v1489
      %v1962 = vpack.c.b16 %v1498, %v1490
      %v1963 = vpack.c.b16 %v1499, %v1491
      %v1964 = vpack.c.b16 %v1500, %v1492
      %v1965 = vpack.c.b16 %v1501, %v1493
      %v1966 = vpack.c.b16 %v1502, %v1494
      %v1967 = vpack.c.b16 %v1503, %v1495
      %v1968 = vpack.c.b16 %v1504, %v1496
      %v1969 = vpack.c.b16 %v1513, %v1505
      %v1970 = vpack.c.b16 %v1514, %v1506
      %v1971 = vpack.c.b16 %v1515, %v1507
      %v1972 = vpack.c.b16 %v1516, %v1508
      %v1973 = vpack.c.b16 %v1517, %v1509
      %v1974 = vpack.c.b16 %v1518, %v1510
      %v1975 = vpack.c.b16 %v1519, %v1511
      %v1976 = vpack.c.b16 %v1520, %v1512
      %v1977 = vpack.c.b16 %v1529, %v1521
      %v1978 = vpack.c.b16 %v1530, %v1522
      %v1979 = vpack.c.b16 %v1531, %v1523
      %v1980 = vpack.c.b16 %v1532, %v1524
      %v1981 = vpack.c.b16 %v1533, %v1525
      %v1982 = vpack.c.b16 %v1534, %v1526
      %v1983 = vpack.c.b16 %v1535, %v1527
      %v1984 = vpack.c.b16 %v1536, %v1528
      %v1985 = vpack.c.b16 %v1545, %v1537
      %v1986 = vpack.c.b16 %v1546, %v1538
      %v1987 = vpack.c.b16 %v1547, %v1539
      %v1988 = vpack.c.b16 %v1548, %v1540
      %v1989 = vpack.c.b16 %v1549, %v1541
      %v1990 = vpack.c.b16 %v1550, %v1542
      %v1991 = vpack.c.b16 %v1551, %v1543
      %v1992 = vpack.c.b16 %v1552, %v1544
      %v1993 = vpack.c.b16 %v1561, %v1553
      %v1994 = vpack.c.b16 %v1562, %v1554
      %v1995 = vpack.c.b16 %v1563, %v1555
      %v1996 = vpack.c.b16 %v1564, %v1556
      %v1997 = vpack.c.b16 %v1565, %v1557
      %v1998 = vpack.c.b16 %v1566, %v1558
      %v1999 = vpack.c.b16 %v1567, %v1559
      %v2000 = vpack.c.b16 %v1568, %v1560
      %v2001 = vpack.c.b16 %v1577, %v1569
      %v2002 = vpack.c.b16 %v1578, %v1570
      %v2003 = vpack.c.b16 %v1579, %v1571
      %v2004 = vpack.c.b16 %v1580, %v1572
      %v2005 = vpack.c.b16 %v1581, %v1573
      %v2006 = vpack.c.b16 %v1582, %v1574
      %v2007 = vpack.c.b16 %v1583, %v1575
      %v2008 = vpack.c.b16 %v1584, %v1576
      %v2009 = vpack.c.b16 %v1593, %v1585
      %v2010 = vpack.c.b16 %v1594, %v1586
      %v2011 = vpack.c.b16 %v1595, %v1587
      %v2012 = vpack.c.b16 %v1596, %v1588
      %v2013 = vpack.c.b16 %v1597, %v1589
      %v2014 = vpack.c.b16 %v1598, %v1590
      %v2015 = vpack.c.b16 %v1599, %v1591
      %v2016 = vpack.c.b16 %v1600, %v1592
      %v2017 = vpack.c.b16 %v1609, %v1601
      %v2018 = vpack.c.b16 %v1610, %v1602
      %v2019 = vpack.c.b16 %v1611, %v1603
      %v2020 = vpack.c.b16 %v1612, %v1604
      %v2021 = vpack.c.b16 %v1613, %v1605
      %v2022 = vpack.c.b16 %v1614, %v1606
      %v2023 = vpack.c.b16 %v1615, %v1607
      %v2024 = vpack.c.b16 %v1616, %v1608
      %v2025 = vpack.c.b16 %v1625, %v1617
      %v2026 = vpack.c.b16 %v1626, %v1618
      %v2027 = vpack.c.b16 %v1627, %v1619
      %v2028 = vpack.c.b16 %v1628, %v1620
      %v2029 = vpack.c.b16 %v1629, %v1621
      %v2030 = vpack.c.b16 %v1630, %v1622
      %v2031 = vpack.c.b16 %v1631, %v1623
      %v2032 = vpack.c.b16 %v1632, %v1624
      %v2033 = vpack.c.b16 %v1641, %v1633
      %v2034 = vpack.c.b16 %v1642, %v1634
      %v2035 = vpack.c.b16 %v1643, %v1635
      %v2036 = vpack.c.b16 %v1644, %v1636
      %v2037 = vpack.c.b16 %v1645, %v1637
      %v2038 = vpack.c.b16 %v1646, %v1638
      %v2039 = vpack.c.b16 %v1647, %v1639
      %v2040 = vpack.c.b16 %v1648, %v1640
      %v2041 = vpack.c.b16 %v1657, %v1649
      %v2042 = vpack.c.b16 %v1658, %v1650
      %v2043 = vpack.c.b16 %v1659, %v1651
      %v2044 = vpack.c.b16 %v1660, %v1652
      %v2045 = vpack.c.b16 %v1661, %v1653
      %v2046 = vpack.c.b16 %v1662, %v1654
      %v2047 = vpack.c.b16 %v1663, %v1655
      %v2048 = vpack.c.b16 %v1664, %v1656
      %v2049 = vpack.c.b16 %v1673, %v1665
      %v2050 = vpack.c.b16 %v1674, %v1666
      %v2051 = vpack.c.b16 %v1675, %v1667
      %v2052 = vpack.c.b16 %v1676, %v1668
      %v2053 = vpack.c.b16 %v1677, %v1669
      %v2054 = vpack.c.b16 %v1678, %v1670
      %v2055 = vpack.c.b16 %v1679, %v1671
      %v2056 = vpack.c.b16 %v1680, %v1672
      %v2057 = vpack.c.b16 %v1689, %v1681
      %v2058 = vpack.c.b16 %v1690, %v1682
      %v2059 = vpack.c.b16 %v1691, %v1683
      %v2060 = vpack.c.b16 %v1692, %v1684
      %v2061 = vpack.c.b16 %v1693, %v1685
      %v2062 = vpack.c.b16 %v1694, %v1686
      %v2063 = vpack.c.b16 %v1695, %v1687
      %v2064 = vpack.c.b16 %v1696, %v1688
      %v2065 = vpack.c.b16 %v1705, %v1697
      %v2066 = vpack.c.b16 %v1706, %v1698
      %v2067 = vpack.c.b16 %v1707, %v1699
      %v2068 = vpack.c.b16 %v1708, %v1700
      %v2069 = vpack.c.b16 %v1709, %v1701
      %v2070 = vpack.c.b16 %v1710, %v1702
      %v2071 = vpack.c.b16 %v1711, %v1703
      %v2072 = vpack.c.b16 %v1712, %v1704
      %v2073 = vpack.c.b16 %v1721, %v1713
      %v2074 = vpack.c.b16 %v1722, %v1714
      %v2075 = vpack.c.b16 %v1723, %v1715
      %v2076 = vpack.c.b16 %v1724, %v1716
      %v2077 = vpack.c.b16 %v1725, %v1717
      %v2078 = vpack.c.b16 %v1726, %v1718
      %v2079 = vpack.c.b16 %v1727, %v1719
      %v2080 = vpack.c.b16 %v1728, %v1720
      %v2081 = vpack.c.b16 %v1737, %v1729
      %v2082 = vpack.c.b16 %v1738, %v1730
      %v2083 = vpack.c.b16 %v1739, %v1731
      %v2084 = vpack.c.b16 %v1740, %v1732
      %v2085 = vpack.c.b16 %v1741, %v1733
      %v2086 = vpack.c.b16 %v1742, %v1734
      %v2087 = vpack.c.b16 %v1743, %v1735
      %v2088 = vpack.c.b16 %v1744, %v1736
      %v2089 = vpack.c.b16 %v1753, %v1745
      %v2090 = vpack.c.b16 %v1754, %v1746
      %v2091 = vpack.c.b16 %v1755, %v1747
      %v2092 = vpack.c.b16 %v1756, %v1748
      %v2093 = vpack.c.b16 %v1757, %v1749
      %v2094 = vpack.c.b16 %v1758, %v1750
      %v2095 = vpack.c.b16 %v1759, %v1751
      %v2096 = vpack.c.b16 %v1760, %v1752
      %v2097 = vpack.c.b16 %v1769, %v1761
      %v2098 = vpack.c.b16 %v1770, %v1762
      %v2099 = vpack.c.b16 %v1771, %v1763
      %v2100 = vpack.c.b16 %v1772, %v1764
      %v2101 = vpack.c.b16 %v1773, %v1765
      %v2102 = vpack.c.b16 %v1774, %v1766
      %v2103 = vpack.c.b16 %v1775, %v1767
      %v2104 = vpack.c.b16 %v1776, %v1768
      %v2105 = vpack.c.b16 %v1785, %v1777
      %v2106 = vpack.c.b16 %v1786, %v1778
      %v2107 = vpack.c.b16 %v1787, %v1779
      %v2108 = vpack.c.b16 %v1788, %v1780
      %v2109 = vpack.c.b16 %v1789, %v1781
      %v2110 = vpack.c.b16 %v1790, %v1782
      %v2111 = vpack.c.b16 %v1791, %v1783
      %v2112 = vpack.c.b16 %v1792, %v1784
      %v2113 = vpack.c.b16 %v1801, %v1793
      %v2114 = vpack.c.b16 %v1802, %v1794
      %v2115 = vpack.c.b16 %v1803, %v1795
      %v2116 = vpack.c.b16 %v1804, %v1796
      %v2117 = vpack.c.b16 %v1805, %v1797
      %v2118 = vpack.c.b16 %v1806, %v1798
      %v2119 = vpack.c.b16 %v1807, %v1799
      %v2120 = vpack.c.b16 %v1808, %v1800
      %v2121 = vpack.c.b16 %v1817, %v1809
      %v2122 = vpack.c.b16 %v1818, %v1810
      %v2123 = vpack.c.b16 %v1819, %v1811
      %v2124 = vpack.c.b16 %v1820, %v1812
      %v2125 = vpack.c.b16 %v1821, %v1813
      %v2126 = vpack.c.b16 %v1822, %v1814
      %v2127 = vpack.c.b16 %v1823, %v1815
      %v2128 = vpack.c.b16 %v1824, %v1816
      %v2129 = vpack.c.b16 %v1833, %v1825
      %v2130 = vpack.c.b16 %v1834, %v1826
      %v2131 = vpack.c.b16 %v1835, %v1827
      %v2132 = vpack.c.b16 %v1836, %v1828
      %v2133 = vpack.c.b16 %v1837, %v1829
      %v2134 = vpack.c.b16 %v1838, %v1830
      %v2135 = vpack.c.b16 %v1839, %v1831
      %v2136 = vpack.c.b16 %v1840, %v1832
      %v2137 = vpack.c.b16 %v1849, %v1841
      %v2138 = vpack.c.b16 %v1850, %v1842
      %v2139 = vpack.c.b16 %v1851, %v1843
      %v2140 = vpack.c.b16 %v1852, %v1844
      %v2141 = vpack.c.b16 %v1853, %v1845
      %v2142 = vpack.c.b16 %v1854, %v1846
      %v2143 = vpack.c.b16 %v1855, %v1847
      %v2144 = vpack.c.b16 %v1856, %v1848
      %v2145 = vpack.c.b16 %v1865, %v1857
      %v2146 = vpack.c.b16 %v1866, %v1858
      %v2147 = vpack.c.b16 %v1867, %v1859
      %v2148 = vpack.c.b16 %v1868, %v1860
      %v2149 = vpack.c.b16 %v1869, %v1861
      %v2150 = vpack.c.b16 %v1870, %v1862
      %v2151 = vpack.c.b16 %v1871, %v1863
      %v2152 = vpack.c.b16 %v1872, %v1864
      %v2153 = vpack.c.b16 %v1881, %v1873
      %v2154 = vpack.c.b16 %v1882, %v1874
      %v2155 = vpack.c.b16 %v1883, %v1875
      %v2156 = vpack.c.b16 %v1884, %v1876
      %v2157 = vpack.c.b16 %v1885, %v1877
      %v2158 = vpack.c.b16 %v1886, %v1878
      %v2159 = vpack.c.b16 %v1887, %v1879
      %v2160 = vpack.c.b16 %v1888, %v1880
      %v2161 = vpack.c.b16 %v1897, %v1889
      %v2162 = vpack.c.b16 %v1898, %v1890
      %v2163 = vpack.c.b16 %v1899, %v1891
      %v2164 = vpack.c.b16 %v1900, %v1892
      %v2165 = vpack.c.b16 %v1901, %v1893
      %v2166 = vpack.c.b16 %v1902, %v1894
      %v2167 = vpack.c.b16 %v1903, %v1895
      %v2168 = vpack.c.b16 %v1904, %v1896
      %v2169 = vpack.c.b16 %v1913, %v1905
      %v2170 = vpack.c.b16 %v1914, %v1906
      %v2171 = vpack.c.b16 %v1915, %v1907
      %v2172 = vpack.c.b16 %v1916, %v1908
      %v2173 = vpack.c.b16 %v1917, %v1909
      %v2174 = vpack.c.b16 %v1918, %v1910
      %v2175 = vpack.c.b16 %v1919, %v1911
      %v2176 = vpack.c.b16 %v1920, %v1912
      %v2177 = vpack.c.b16 %v1929, %v1921
      %v2178 = vpack.c.b16 %v1930, %v1922
      %v2179 = vpack.c.b16 %v1931, %v1923
      %v2180 = vpack.c.b16 %v1932, %v1924
      %v2181 = vpack.c.b16 %v1933, %v1925
      %v2182 = vpack.c.b16 %v1934, %v1926
      %v2183 = vpack.c.b16 %v1935, %v1927
      %v2184 = vpack.c.b16 %v1936, %v1928
      %v2185 = vpack.c.b16 %v1945, %v1937
      %v2186 = vpack.c.b16 %v1946, %v1938
      %v2187 = vpack.c.b16 %v1947, %v1939
      %v2188 = vpack.c.b16 %v1948, %v1940
      %v2189 = vpack.c.b16 %v1949, %v1941
      %v2190 = vpack.c.b16 %v1950, %v1942
      %v2191 = vpack.c.b16 %v1951, %v1943
      %v2192 = vpack.c.b16 %v1952, %v1944
      %vm2433 = vcmask 785408
      %v2435 = vsel %vm2433, %v1012, 0
      %v2438 = vsel %vm2433, %v1016, 0
      %v2441 = vsel %vm2433, %v1020, 0
      %v2444 = vsel %vm2433, %v1024, 0
      %v2447 = vsel %vm2433, %v1028, 0
      %v2450 = vsel %vm2433, %v1032, 0
      %v2453 = vsel %vm2433, %v1036, 0
      %v2456 = vsel %vm2433, %v1040, 0
      %v2459 = vsel %vm2433, %v1044, 0
      %v2462 = vsel %vm2433, %v1048, 0
      %v2465 = vsel %vm2433, %v1052, 0
      %v2468 = vsel %vm2433, %v1056, 0
      %v2471 = vsel %vm2433, %v1060, 0
      %v2474 = vsel %vm2433, %v1064, 0
      %v2477 = vsel %vm2433, %v1068, 0
      %v2480 = vsel %vm2433, %v1072, 0
      %v2483 = vsel %vm2433, %v1076, 0
      %v2486 = vsel %vm2433, %v1080, 0
      %v2489 = vsel %vm2433, %v1084, 0
      %v2492 = vsel %vm2433, %v1088, 0
      %v2495 = vsel %vm2433, %v1092, 0
      %v2498 = vsel %vm2433, %v1096, 0
      %v2501 = vsel %vm2433, %v1100, 0
      %v2504 = vsel %vm2433, %v1104, 0
      %v2507 = vsel %vm2433, %v1108, 0
      %v2510 = vsel %vm2433, %v1112, 0
      %v2513 = vsel %vm2433, %v1116, 0
      %v2516 = vsel %vm2433, %v1120, 0
      %v2519 = vsel %vm2433, %v1124, 0
      %v2522 = vsel %vm2433, %v1128, 0
      %v2525 = vsel %vm2433, %v1132, 0
      %v2528 = vsel %vm2433, %v1136, 0
      %2530 = vmatprep.subr.bf16.mxu0 %v2010
      %2531 = vmatpush1.bf16.msra.mxu0 %v2009
      %2532 = vmatprep.subr.bf16.mxu0 %v2002
      %2533 = vmatpush1.bf16.msra.mxu0 %v2001
      %2534 = vmatprep.subr.bf16.mxu0 %v1994
      %2535 = vmatpush1.bf16.msra.mxu0 %v1993
      %2536 = vmatprep.subr.bf16.mxu0 %v1986
      %2537 = vmatpush1.bf16.msra.mxu0 %v1985
      %2538 = vmatprep.subr.bf16.mxu0 %v1978
      %2539 = vmatpush1.bf16.msra.mxu0 %v1977
      %2540 = vmatprep.subr.bf16.mxu0 %v1970
      %2541 = vmatpush1.bf16.msra.mxu0 %v1969
      %2542 = vmatprep.subr.bf16.mxu0 %v1962
      %2543 = vmatpush1.bf16.msra.mxu0 %v1961
      %2544 = vmatprep.subr.bf16.mxu0 %v1954
      %2545 = vmatpush1.bf16.msra.mxu0 %v1953
      %2546 = vmatprep.subr.bf16.mxu0 %v2074
      %2547 = vmatpush2.bf16.msra.mxu0 %v2073
      %2548 = vmatprep.subr.bf16.mxu0 %v2066
      %2549 = vmatpush2.bf16.msra.mxu0 %v2065
      %2550 = vmatprep.subr.bf16.mxu0 %v2058
      %2551 = vmatpush2.bf16.msra.mxu0 %v2057
      %2552 = vmatprep.subr.bf16.mxu0 %v2050
      %2553 = vmatpush2.bf16.msra.mxu0 %v2049
      %2554 = vmatprep.subr.bf16.mxu0 %v2042
      %2555 = vmatpush2.bf16.msra.mxu0 %v2041
      %2556 = vmatprep.subr.bf16.mxu0 %v2034
      %2557 = vmatpush2.bf16.msra.mxu0 %v2033
      %2558 = vmatprep.subr.bf16.mxu0 %v2026
      %2559 = vmatpush2.bf16.msra.mxu0 %v2025
      %2560 = vmatprep.subr.bf16.mxu0 %v2018
      %2561 = vmatpush2.bf16.msra.mxu0 %v2017
      %2562 = vmatprep.mubr.bf16.mxu0 %v1010
      %2563 = vmatmul.mubr.bf16.gmra.mxu0 %v1009
      %v2564 = vpop.f32.mrf.mxu0
      %v2565 = vadd.f32 0.0, %v2564
      %v2566 = vpop.f32.mrf.mxu0
      %v2567 = vadd.f32 0.0, %v2566
      %v2568 = vpop.f32.mrf.mxu0
      %v2569 = vadd.f32 0.0, %v2568
      %v2570 = vpop.f32.mrf.mxu0
      %v2571 = vadd.f32 0.0, %v2570
      %2572 = vmatprep.mubr.bf16.mxu0 %v1014
      %2573 = vmatmul.mubr.bf16.gmra.mxu0 %v1013
      %v2574 = vpop.f32.mrf.mxu0
      %v2575 = vadd.f32 0.0, %v2574
      %v2576 = vpop.f32.mrf.mxu0
      %v2577 = vadd.f32 0.0, %v2576
      %v2578 = vpop.f32.mrf.mxu0
      %v2579 = vadd.f32 0.0, %v2578
      %v2580 = vpop.f32.mrf.mxu0
      %v2581 = vadd.f32 0.0, %v2580
      %2582 = vmatprep.mubr.bf16.mxu0 %v1018
      %2583 = vmatmul.mubr.bf16.gmra.mxu0 %v1017
      %v2584 = vpop.f32.mrf.mxu0
      %v2585 = vadd.f32 0.0, %v2584
      %v2586 = vpop.f32.mrf.mxu0
      %v2587 = vadd.f32 0.0, %v2586
      %v2588 = vpop.f32.mrf.mxu0
      %v2589 = vadd.f32 0.0, %v2588
      %v2590 = vpop.f32.mrf.mxu0
      %v2591 = vadd.f32 0.0, %v2590
      %2592 = vmatprep.mubr.bf16.mxu0 %v1022
      %2593 = vmatmul.mubr.bf16.gmra.mxu0 %v1021
      %v2594 = vpop.f32.mrf.mxu0
      %v2595 = vadd.f32 0.0, %v2594
      %v2596 = vpop.f32.mrf.mxu0
      %v2597 = vadd.f32 0.0, %v2596
      %v2598 = vpop.f32.mrf.mxu0
      %v2599 = vadd.f32 0.0, %v2598
      %v2600 = vpop.f32.mrf.mxu0
      %v2601 = vadd.f32 0.0, %v2600
      %2602 = vmatprep.mubr.bf16.mxu0 %v1026
      %2603 = vmatmul.mubr.bf16.gmra.mxu0 %v1025
      %v2604 = vpop.f32.mrf.mxu0
      %v2605 = vadd.f32 0.0, %v2604
      %v2606 = vpop.f32.mrf.mxu0
      %v2607 = vadd.f32 0.0, %v2606
      %v2608 = vpop.f32.mrf.mxu0
      %v2609 = vadd.f32 0.0, %v2608
      %v2610 = vpop.f32.mrf.mxu0
      %v2611 = vadd.f32 0.0, %v2610
      %2612 = vmatprep.mubr.bf16.mxu0 %v1030
      %2613 = vmatmul.mubr.bf16.gmra.mxu0 %v1029
      %v2614 = vpop.f32.mrf.mxu0
      %v2615 = vadd.f32 0.0, %v2614
      %v2616 = vpop.f32.mrf.mxu0
      %v2617 = vadd.f32 0.0, %v2616
      %v2618 = vpop.f32.mrf.mxu0
      %v2619 = vadd.f32 0.0, %v2618
      %v2620 = vpop.f32.mrf.mxu0
      %v2621 = vadd.f32 0.0, %v2620
      %2622 = vmatprep.mubr.bf16.mxu0 %v1034
      %2623 = vmatmul.mubr.bf16.gmra.mxu0 %v1033
      %v2624 = vpop.f32.mrf.mxu0
      %v2625 = vadd.f32 0.0, %v2624
      %v2626 = vpop.f32.mrf.mxu0
      %v2627 = vadd.f32 0.0, %v2626
      %v2628 = vpop.f32.mrf.mxu0
      %v2629 = vadd.f32 0.0, %v2628
      %v2630 = vpop.f32.mrf.mxu0
      %v2631 = vadd.f32 0.0, %v2630
      %2632 = vmatprep.mubr.bf16.mxu0 %v1038
      %2633 = vmatmul.mubr.bf16.gmra.mxu0 %v1037
      %v2634 = vpop.f32.mrf.mxu0
      %v2635 = vadd.f32 0.0, %v2634
      %v2636 = vpop.f32.mrf.mxu0
      %v2637 = vadd.f32 0.0, %v2636
      %v2638 = vpop.f32.mrf.mxu0
      %v2639 = vadd.f32 0.0, %v2638
      %v2640 = vpop.f32.mrf.mxu0
      %v2641 = vadd.f32 0.0, %v2640
      %2642 = vmatprep.mubr.bf16.mxu0 %v1042
      %2643 = vmatmul.mubr.bf16.gmra.mxu0 %v1041
      %v2644 = vpop.f32.mrf.mxu0
      %v2645 = vadd.f32 0.0, %v2644
      %v2646 = vpop.f32.mrf.mxu0
      %v2647 = vadd.f32 0.0, %v2646
      %v2648 = vpop.f32.mrf.mxu0
      %v2649 = vadd.f32 0.0, %v2648
      %v2650 = vpop.f32.mrf.mxu0
      %v2651 = vadd.f32 0.0, %v2650
      %2652 = vmatprep.mubr.bf16.mxu0 %v1046
      %2653 = vmatmul.mubr.bf16.gmra.mxu0 %v1045
      %v2654 = vpop.f32.mrf.mxu0
      %v2655 = vadd.f32 0.0, %v2654
      %v2656 = vpop.f32.mrf.mxu0
      %v2657 = vadd.f32 0.0, %v2656
      %v2658 = vpop.f32.mrf.mxu0
      %v2659 = vadd.f32 0.0, %v2658
      %v2660 = vpop.f32.mrf.mxu0
      %v2661 = vadd.f32 0.0, %v2660
      %2662 = vmatprep.mubr.bf16.mxu0 %v1050
      %2663 = vmatmul.mubr.bf16.gmra.mxu0 %v1049
      %v2664 = vpop.f32.mrf.mxu0
      %v2665 = vadd.f32 0.0, %v2664
      %v2666 = vpop.f32.mrf.mxu0
      %v2667 = vadd.f32 0.0, %v2666
      %v2668 = vpop.f32.mrf.mxu0
      %v2669 = vadd.f32 0.0, %v2668
      %v2670 = vpop.f32.mrf.mxu0
      %v2671 = vadd.f32 0.0, %v2670
      %2672 = vmatprep.mubr.bf16.mxu0 %v1054
      %2673 = vmatmul.mubr.bf16.gmra.mxu0 %v1053
      %v2674 = vpop.f32.mrf.mxu0
      %v2675 = vadd.f32 0.0, %v2674
      %v2676 = vpop.f32.mrf.mxu0
      %v2677 = vadd.f32 0.0, %v2676
      %v2678 = vpop.f32.mrf.mxu0
      %v2679 = vadd.f32 0.0, %v2678
      %v2680 = vpop.f32.mrf.mxu0
      %v2681 = vadd.f32 0.0, %v2680
      %2682 = vmatprep.mubr.bf16.mxu0 %v1058
      %2683 = vmatmul.mubr.bf16.gmra.mxu0 %v1057
      %v2684 = vpop.f32.mrf.mxu0
      %v2685 = vadd.f32 0.0, %v2684
      %v2686 = vpop.f32.mrf.mxu0
      %v2687 = vadd.f32 0.0, %v2686
      %v2688 = vpop.f32.mrf.mxu0
      %v2689 = vadd.f32 0.0, %v2688
      %v2690 = vpop.f32.mrf.mxu0
      %v2691 = vadd.f32 0.0, %v2690
      %2692 = vmatprep.mubr.bf16.mxu0 %v1062
      %2693 = vmatmul.mubr.bf16.gmra.mxu0 %v1061
      %v2694 = vpop.f32.mrf.mxu0
      %v2695 = vadd.f32 0.0, %v2694
      %v2696 = vpop.f32.mrf.mxu0
      %v2697 = vadd.f32 0.0, %v2696
      %v2698 = vpop.f32.mrf.mxu0
      %v2699 = vadd.f32 0.0, %v2698
      %v2700 = vpop.f32.mrf.mxu0
      %v2701 = vadd.f32 0.0, %v2700
      %2702 = vmatprep.mubr.bf16.mxu0 %v1066
      %2703 = vmatmul.mubr.bf16.gmra.mxu0 %v1065
      %v2704 = vpop.f32.mrf.mxu0
      %v2705 = vadd.f32 0.0, %v2704
      %v2706 = vpop.f32.mrf.mxu0
      %v2707 = vadd.f32 0.0, %v2706
      %v2708 = vpop.f32.mrf.mxu0
      %v2709 = vadd.f32 0.0, %v2708
      %v2710 = vpop.f32.mrf.mxu0
      %v2711 = vadd.f32 0.0, %v2710
      %2712 = vmatprep.mubr.bf16.mxu0 %v1070
      %2713 = vmatmul.mubr.bf16.gmra.mxu0 %v1069
      %v2714 = vpop.f32.mrf.mxu0
      %v2715 = vadd.f32 0.0, %v2714
      %v2716 = vpop.f32.mrf.mxu0
      %v2717 = vadd.f32 0.0, %v2716
      %v2718 = vpop.f32.mrf.mxu0
      %v2719 = vadd.f32 0.0, %v2718
      %v2720 = vpop.f32.mrf.mxu0
      %v2721 = vadd.f32 0.0, %v2720
      %2722 = vmatprep.mubr.bf16.mxu0 %v1074
      %2723 = vmatmul.mubr.bf16.gmra.mxu0 %v1073
      %v2724 = vpop.f32.mrf.mxu0
      %v2725 = vadd.f32 0.0, %v2724
      %v2726 = vpop.f32.mrf.mxu0
      %v2727 = vadd.f32 0.0, %v2726
      %v2728 = vpop.f32.mrf.mxu0
      %v2729 = vadd.f32 0.0, %v2728
      %v2730 = vpop.f32.mrf.mxu0
      %v2731 = vadd.f32 0.0, %v2730
      %2732 = vmatprep.mubr.bf16.mxu0 %v1078
      %2733 = vmatmul.mubr.bf16.gmra.mxu0 %v1077
      %v2734 = vpop.f32.mrf.mxu0
      %v2735 = vadd.f32 0.0, %v2734
      %v2736 = vpop.f32.mrf.mxu0
      %v2737 = vadd.f32 0.0, %v2736
      %v2738 = vpop.f32.mrf.mxu0
      %v2739 = vadd.f32 0.0, %v2738
      %v2740 = vpop.f32.mrf.mxu0
      %v2741 = vadd.f32 0.0, %v2740
      %2742 = vmatprep.mubr.bf16.mxu0 %v1082
      %2743 = vmatmul.mubr.bf16.gmra.mxu0 %v1081
      %v2744 = vpop.f32.mrf.mxu0
      %v2745 = vadd.f32 0.0, %v2744
      %v2746 = vpop.f32.mrf.mxu0
      %v2747 = vadd.f32 0.0, %v2746
      %v2748 = vpop.f32.mrf.mxu0
      %v2749 = vadd.f32 0.0, %v2748
      %v2750 = vpop.f32.mrf.mxu0
      %v2751 = vadd.f32 0.0, %v2750
      %2752 = vmatprep.mubr.bf16.mxu0 %v1086
      %2753 = vmatmul.mubr.bf16.gmra.mxu0 %v1085
      %v2754 = vpop.f32.mrf.mxu0
      %v2755 = vadd.f32 0.0, %v2754
      %v2756 = vpop.f32.mrf.mxu0
      %v2757 = vadd.f32 0.0, %v2756
      %v2758 = vpop.f32.mrf.mxu0
      %v2759 = vadd.f32 0.0, %v2758
      %v2760 = vpop.f32.mrf.mxu0
      %v2761 = vadd.f32 0.0, %v2760
      %2762 = vmatprep.mubr.bf16.mxu0 %v1090
      %2763 = vmatmul.mubr.bf16.gmra.mxu0 %v1089
      %v2764 = vpop.f32.mrf.mxu0
      %v2765 = vadd.f32 0.0, %v2764
      %v2766 = vpop.f32.mrf.mxu0
      %v2767 = vadd.f32 0.0, %v2766
      %v2768 = vpop.f32.mrf.mxu0
      %v2769 = vadd.f32 0.0, %v2768
      %v2770 = vpop.f32.mrf.mxu0
      %v2771 = vadd.f32 0.0, %v2770
      %2772 = vmatprep.mubr.bf16.mxu0 %v1094
      %2773 = vmatmul.mubr.bf16.gmra.mxu0 %v1093
      %v2774 = vpop.f32.mrf.mxu0
      %v2775 = vadd.f32 0.0, %v2774
      %v2776 = vpop.f32.mrf.mxu0
      %v2777 = vadd.f32 0.0, %v2776
      %v2778 = vpop.f32.mrf.mxu0
      %v2779 = vadd.f32 0.0, %v2778
      %v2780 = vpop.f32.mrf.mxu0
      %v2781 = vadd.f32 0.0, %v2780
      %2782 = vmatprep.mubr.bf16.mxu0 %v1098
      %2783 = vmatmul.mubr.bf16.gmra.mxu0 %v1097
      %v2784 = vpop.f32.mrf.mxu0
      %v2785 = vadd.f32 0.0, %v2784
      %v2786 = vpop.f32.mrf.mxu0
      %v2787 = vadd.f32 0.0, %v2786
      %v2788 = vpop.f32.mrf.mxu0
      %v2789 = vadd.f32 0.0, %v2788
      %v2790 = vpop.f32.mrf.mxu0
      %v2791 = vadd.f32 0.0, %v2790
      %2792 = vmatprep.mubr.bf16.mxu0 %v1102
      %2793 = vmatmul.mubr.bf16.gmra.mxu0 %v1101
      %v2794 = vpop.f32.mrf.mxu0
      %v2795 = vadd.f32 0.0, %v2794
      %v2796 = vpop.f32.mrf.mxu0
      %v2797 = vadd.f32 0.0, %v2796
      %v2798 = vpop.f32.mrf.mxu0
      %v2799 = vadd.f32 0.0, %v2798
      %v2800 = vpop.f32.mrf.mxu0
      %v2801 = vadd.f32 0.0, %v2800
      %2802 = vmatprep.mubr.bf16.mxu0 %v1106
      %2803 = vmatmul.mubr.bf16.gmra.mxu0 %v1105
      %v2804 = vpop.f32.mrf.mxu0
      %v2805 = vadd.f32 0.0, %v2804
      %v2806 = vpop.f32.mrf.mxu0
      %v2807 = vadd.f32 0.0, %v2806
      %v2808 = vpop.f32.mrf.mxu0
      %v2809 = vadd.f32 0.0, %v2808
      %v2810 = vpop.f32.mrf.mxu0
      %v2811 = vadd.f32 0.0, %v2810
      %2812 = vmatprep.mubr.bf16.mxu0 %v1110
      %2813 = vmatmul.mubr.bf16.gmra.mxu0 %v1109
      %v2814 = vpop.f32.mrf.mxu0
      %v2815 = vadd.f32 0.0, %v2814
      %v2816 = vpop.f32.mrf.mxu0
      %v2817 = vadd.f32 0.0, %v2816
      %v2818 = vpop.f32.mrf.mxu0
      %v2819 = vadd.f32 0.0, %v2818
      %v2820 = vpop.f32.mrf.mxu0
      %v2821 = vadd.f32 0.0, %v2820
      %2822 = vmatprep.mubr.bf16.mxu0 %v1114
      %2823 = vmatmul.mubr.bf16.gmra.mxu0 %v1113
      %v2824 = vpop.f32.mrf.mxu0
      %v2825 = vadd.f32 0.0, %v2824
      %v2826 = vpop.f32.mrf.mxu0
      %v2827 = vadd.f32 0.0, %v2826
      %v2828 = vpop.f32.mrf.mxu0
      %v2829 = vadd.f32 0.0, %v2828
      %v2830 = vpop.f32.mrf.mxu0
      %v2831 = vadd.f32 0.0, %v2830
      %2832 = vmatprep.mubr.bf16.mxu0 %v1118
      %2833 = vmatmul.mubr.bf16.gmra.mxu0 %v1117
      %v2834 = vpop.f32.mrf.mxu0
      %v2835 = vadd.f32 0.0, %v2834
      %v2836 = vpop.f32.mrf.mxu0
      %v2837 = vadd.f32 0.0, %v2836
      %v2838 = vpop.f32.mrf.mxu0
      %v2839 = vadd.f32 0.0, %v2838
      %v2840 = vpop.f32.mrf.mxu0
      %v2841 = vadd.f32 0.0, %v2840
      %2842 = vmatprep.mubr.bf16.mxu0 %v1122
      %2843 = vmatmul.mubr.bf16.gmra.mxu0 %v1121
      %v2844 = vpop.f32.mrf.mxu0
      %v2845 = vadd.f32 0.0, %v2844
      %v2846 = vpop.f32.mrf.mxu0
      %v2847 = vadd.f32 0.0, %v2846
      %v2848 = vpop.f32.mrf.mxu0
      %v2849 = vadd.f32 0.0, %v2848
      %v2850 = vpop.f32.mrf.mxu0
      %v2851 = vadd.f32 0.0, %v2850
      %2852 = vmatprep.mubr.bf16.mxu0 %v1126
      %2853 = vmatmul.mubr.bf16.gmra.mxu0 %v1125
      %v2854 = vpop.f32.mrf.mxu0
      %v2855 = vadd.f32 0.0, %v2854
      %v2856 = vpop.f32.mrf.mxu0
      %v2857 = vadd.f32 0.0, %v2856
      %v2858 = vpop.f32.mrf.mxu0
      %v2859 = vadd.f32 0.0, %v2858
      %v2860 = vpop.f32.mrf.mxu0
      %v2861 = vadd.f32 0.0, %v2860
      %2862 = vmatprep.mubr.bf16.mxu0 %v1130
      %2863 = vmatmul.mubr.bf16.gmra.mxu0 %v1129
      %v2864 = vpop.f32.mrf.mxu0
      %v2865 = vadd.f32 0.0, %v2864
      %v2866 = vpop.f32.mrf.mxu0
      %v2867 = vadd.f32 0.0, %v2866
      %v2868 = vpop.f32.mrf.mxu0
      %v2869 = vadd.f32 0.0, %v2868
      %v2870 = vpop.f32.mrf.mxu0
      %v2871 = vadd.f32 0.0, %v2870
      %2872 = vmatprep.mubr.bf16.mxu0 %v1134
      %2873 = vmatmul.mubr.bf16.gmra.mxu0 %v1133
      %v2874 = vpop.f32.mrf.mxu0
      %v2875 = vadd.f32 0.0, %v2874
      %v2876 = vpop.f32.mrf.mxu0
      %v2877 = vadd.f32 0.0, %v2876
      %v2878 = vpop.f32.mrf.mxu0
      %v2879 = vadd.f32 0.0, %v2878
      %v2880 = vpop.f32.mrf.mxu0
      %v2881 = vadd.f32 0.0, %v2880
      %2882 = vdwg.mxu0
      %2883 = vmatprep.subr.bf16.mxu0 %v2138
      %2884 = vmatpush1.bf16.msra.mxu0 %v2137
      %2885 = vmatprep.subr.bf16.mxu0 %v2130
      %2886 = vmatpush1.bf16.msra.mxu0 %v2129
      %2887 = vmatprep.subr.bf16.mxu0 %v2122
      %2888 = vmatpush1.bf16.msra.mxu0 %v2121
      %2889 = vmatprep.subr.bf16.mxu0 %v2114
      %2890 = vmatpush1.bf16.msra.mxu0 %v2113
      %2891 = vmatprep.subr.bf16.mxu0 %v2106
      %2892 = vmatpush1.bf16.msra.mxu0 %v2105
      %2893 = vmatprep.subr.bf16.mxu0 %v2098
      %2894 = vmatpush1.bf16.msra.mxu0 %v2097
      %2895 = vmatprep.subr.bf16.mxu0 %v2090
      %2896 = vmatpush1.bf16.msra.mxu0 %v2089
      %2897 = vmatprep.subr.bf16.mxu0 %v2082
      %2898 = vmatpush1.bf16.msra.mxu0 %v2081
      %2899 = vmatprep.subr.bf16.mxu0 0
      %2900 = vmatpush2.bf16.msra.mxu0 0
      %2901 = vmatprep.subr.bf16.mxu0 0
      %2902 = vmatpush2.bf16.msra.mxu0 0
      %2903 = vmatprep.subr.bf16.mxu0 %v2186
      %2904 = vmatpush2.bf16.msra.mxu0 %v2185
      %2905 = vmatprep.subr.bf16.mxu0 %v2178
      %2906 = vmatpush2.bf16.msra.mxu0 %v2177
      %2907 = vmatprep.subr.bf16.mxu0 %v2170
      %2908 = vmatpush2.bf16.msra.mxu0 %v2169
      %2909 = vmatprep.subr.bf16.mxu0 %v2162
      %2910 = vmatpush2.bf16.msra.mxu0 %v2161
      %2911 = vmatprep.subr.bf16.mxu0 %v2154
      %2912 = vmatpush2.bf16.msra.mxu0 %v2153
      %2913 = vmatprep.subr.bf16.mxu0 %v2146
      %2914 = vmatpush2.bf16.msra.mxu0 %v2145
      %2915 = vmatprep.mubr.bf16.mxu0 %v2435
      %2916 = vmatmul.mubr.bf16.gmra.mxu0 %v1011
      %v2917 = vpop.f32.mrf.mxu0
      %v2918 = vadd.f32 %v2565, %v2917
      %v2919 = vpop.f32.mrf.mxu0
      %v2920 = vadd.f32 %v2567, %v2919
      %v2921 = vpop.f32.mrf.mxu0
      %v2922 = vadd.f32 %v2569, %v2921
      %v2923 = vpop.f32.mrf.mxu0
      %v2924 = vadd.f32 %v2571, %v2923
      %2925 = vmatprep.mubr.bf16.mxu0 %v2438
      %2926 = vmatmul.mubr.bf16.gmra.mxu0 %v1015
      %v2927 = vpop.f32.mrf.mxu0
      %v2928 = vadd.f32 %v2575, %v2927
      %v2929 = vpop.f32.mrf.mxu0
      %v2930 = vadd.f32 %v2577, %v2929
      %v2931 = vpop.f32.mrf.mxu0
      %v2932 = vadd.f32 %v2579, %v2931
      %v2933 = vpop.f32.mrf.mxu0
      %v2934 = vadd.f32 %v2581, %v2933
      %2935 = vmatprep.mubr.bf16.mxu0 %v2441
      %2936 = vmatmul.mubr.bf16.gmra.mxu0 %v1019
      %v2937 = vpop.f32.mrf.mxu0
      %v2938 = vadd.f32 %v2585, %v2937
      %v2939 = vpop.f32.mrf.mxu0
      %v2940 = vadd.f32 %v2587, %v2939
      %v2941 = vpop.f32.mrf.mxu0
      %v2942 = vadd.f32 %v2589, %v2941
      %v2943 = vpop.f32.mrf.mxu0
      %v2944 = vadd.f32 %v2591, %v2943
      %2945 = vmatprep.mubr.bf16.mxu0 %v2444
      %2946 = vmatmul.mubr.bf16.gmra.mxu0 %v1023
      %v2947 = vpop.f32.mrf.mxu0
      %v2948 = vadd.f32 %v2595, %v2947
      %v2949 = vpop.f32.mrf.mxu0
      %v2950 = vadd.f32 %v2597, %v2949
      %v2951 = vpop.f32.mrf.mxu0
      %v2952 = vadd.f32 %v2599, %v2951
      %v2953 = vpop.f32.mrf.mxu0
      %v2954 = vadd.f32 %v2601, %v2953
      %2955 = vmatprep.mubr.bf16.mxu0 %v2447
      %2956 = vmatmul.mubr.bf16.gmra.mxu0 %v1027
      %v2957 = vpop.f32.mrf.mxu0
      %v2958 = vadd.f32 %v2605, %v2957
      %v2959 = vpop.f32.mrf.mxu0
      %v2960 = vadd.f32 %v2607, %v2959
      %v2961 = vpop.f32.mrf.mxu0
      %v2962 = vadd.f32 %v2609, %v2961
      %v2963 = vpop.f32.mrf.mxu0
      %v2964 = vadd.f32 %v2611, %v2963
      %2965 = vmatprep.mubr.bf16.mxu0 %v2450
      %2966 = vmatmul.mubr.bf16.gmra.mxu0 %v1031
      %v2967 = vpop.f32.mrf.mxu0
      %v2968 = vadd.f32 %v2615, %v2967
      %v2969 = vpop.f32.mrf.mxu0
      %v2970 = vadd.f32 %v2617, %v2969
      %v2971 = vpop.f32.mrf.mxu0
      %v2972 = vadd.f32 %v2619, %v2971
      %v2973 = vpop.f32.mrf.mxu0
      %v2974 = vadd.f32 %v2621, %v2973
      %2975 = vmatprep.mubr.bf16.mxu0 %v2453
      %2976 = vmatmul.mubr.bf16.gmra.mxu0 %v1035
      %v2977 = vpop.f32.mrf.mxu0
      %v2978 = vadd.f32 %v2625, %v2977
      %v2979 = vpop.f32.mrf.mxu0
      %v2980 = vadd.f32 %v2627, %v2979
      %v2981 = vpop.f32.mrf.mxu0
      %v2982 = vadd.f32 %v2629, %v2981
      %v2983 = vpop.f32.mrf.mxu0
      %v2984 = vadd.f32 %v2631, %v2983
      %2985 = vmatprep.mubr.bf16.mxu0 %v2456
      %2986 = vmatmul.mubr.bf16.gmra.mxu0 %v1039
      %v2987 = vpop.f32.mrf.mxu0
      %v2988 = vadd.f32 %v2635, %v2987
      %v2989 = vpop.f32.mrf.mxu0
      %v2990 = vadd.f32 %v2637, %v2989
      %v2991 = vpop.f32.mrf.mxu0
      %v2992 = vadd.f32 %v2639, %v2991
      %v2993 = vpop.f32.mrf.mxu0
      %v2994 = vadd.f32 %v2641, %v2993
      %2995 = vmatprep.mubr.bf16.mxu0 %v2459
      %2996 = vmatmul.mubr.bf16.gmra.mxu0 %v1043
      %v2997 = vpop.f32.mrf.mxu0
      %v2998 = vadd.f32 %v2645, %v2997
      %v2999 = vpop.f32.mrf.mxu0
      %v3000 = vadd.f32 %v2647, %v2999
      %v3001 = vpop.f32.mrf.mxu0
      %v3002 = vadd.f32 %v2649, %v3001
      %v3003 = vpop.f32.mrf.mxu0
      %v3004 = vadd.f32 %v2651, %v3003
      %3005 = vmatprep.mubr.bf16.mxu0 %v2462
      %3006 = vmatmul.mubr.bf16.gmra.mxu0 %v1047
      %v3007 = vpop.f32.mrf.mxu0
      %v3008 = vadd.f32 %v2655, %v3007
      %v3009 = vpop.f32.mrf.mxu0
      %v3010 = vadd.f32 %v2657, %v3009
      %v3011 = vpop.f32.mrf.mxu0
      %v3012 = vadd.f32 %v2659, %v3011
      %v3013 = vpop.f32.mrf.mxu0
      %v3014 = vadd.f32 %v2661, %v3013
      %3015 = vmatprep.mubr.bf16.mxu0 %v2465
      %3016 = vmatmul.mubr.bf16.gmra.mxu0 %v1051
      %v3017 = vpop.f32.mrf.mxu0
      %v3018 = vadd.f32 %v2665, %v3017
      %v3019 = vpop.f32.mrf.mxu0
      %v3020 = vadd.f32 %v2667, %v3019
      %v3021 = vpop.f32.mrf.mxu0
      %v3022 = vadd.f32 %v2669, %v3021
      %v3023 = vpop.f32.mrf.mxu0
      %v3024 = vadd.f32 %v2671, %v3023
      %3025 = vmatprep.mubr.bf16.mxu0 %v2468
      %3026 = vmatmul.mubr.bf16.gmra.mxu0 %v1055
      %v3027 = vpop.f32.mrf.mxu0
      %v3028 = vadd.f32 %v2675, %v3027
      %v3029 = vpop.f32.mrf.mxu0
      %v3030 = vadd.f32 %v2677, %v3029
      %v3031 = vpop.f32.mrf.mxu0
      %v3032 = vadd.f32 %v2679, %v3031
      %v3033 = vpop.f32.mrf.mxu0
      %v3034 = vadd.f32 %v2681, %v3033
      %3035 = vmatprep.mubr.bf16.mxu0 %v2471
      %3036 = vmatmul.mubr.bf16.gmra.mxu0 %v1059
      %v3037 = vpop.f32.mrf.mxu0
      %v3038 = vadd.f32 %v2685, %v3037
      %v3039 = vpop.f32.mrf.mxu0
      %v3040 = vadd.f32 %v2687, %v3039
      %v3041 = vpop.f32.mrf.mxu0
      %v3042 = vadd.f32 %v2689, %v3041
      %v3043 = vpop.f32.mrf.mxu0
      %v3044 = vadd.f32 %v2691, %v3043
      %3045 = vmatprep.mubr.bf16.mxu0 %v2474
      %3046 = vmatmul.mubr.bf16.gmra.mxu0 %v1063
      %v3047 = vpop.f32.mrf.mxu0
      %v3048 = vadd.f32 %v2695, %v3047
      %v3049 = vpop.f32.mrf.mxu0
      %v3050 = vadd.f32 %v2697, %v3049
      %v3051 = vpop.f32.mrf.mxu0
      %v3052 = vadd.f32 %v2699, %v3051
      %v3053 = vpop.f32.mrf.mxu0
      %v3054 = vadd.f32 %v2701, %v3053
      %3055 = vmatprep.mubr.bf16.mxu0 %v2477
      %3056 = vmatmul.mubr.bf16.gmra.mxu0 %v1067
      %v3057 = vpop.f32.mrf.mxu0
      %v3058 = vadd.f32 %v2705, %v3057
      %v3059 = vpop.f32.mrf.mxu0
      %v3060 = vadd.f32 %v2707, %v3059
      %v3061 = vpop.f32.mrf.mxu0
      %v3062 = vadd.f32 %v2709, %v3061
      %v3063 = vpop.f32.mrf.mxu0
      %v3064 = vadd.f32 %v2711, %v3063
      %3065 = vmatprep.mubr.bf16.mxu0 %v2480
      %3066 = vmatmul.mubr.bf16.gmra.mxu0 %v1071
      %v3067 = vpop.f32.mrf.mxu0
      %v3068 = vadd.f32 %v2715, %v3067
      %v3069 = vpop.f32.mrf.mxu0
      %v3070 = vadd.f32 %v2717, %v3069
      %v3071 = vpop.f32.mrf.mxu0
      %v3072 = vadd.f32 %v2719, %v3071
      %v3073 = vpop.f32.mrf.mxu0
      %v3074 = vadd.f32 %v2721, %v3073
      %3075 = vmatprep.mubr.bf16.mxu0 %v2483
      %3076 = vmatmul.mubr.bf16.gmra.mxu0 %v1075
      %v3077 = vpop.f32.mrf.mxu0
      %v3078 = vadd.f32 %v2725, %v3077
      %v3079 = vpop.f32.mrf.mxu0
      %v3080 = vadd.f32 %v2727, %v3079
      %v3081 = vpop.f32.mrf.mxu0
      %v3082 = vadd.f32 %v2729, %v3081
      %v3083 = vpop.f32.mrf.mxu0
      %v3084 = vadd.f32 %v2731, %v3083
      %3085 = vmatprep.mubr.bf16.mxu0 %v2486
      %3086 = vmatmul.mubr.bf16.gmra.mxu0 %v1079
      %v3087 = vpop.f32.mrf.mxu0
      %v3088 = vadd.f32 %v2735, %v3087
      %v3089 = vpop.f32.mrf.mxu0
      %v3090 = vadd.f32 %v2737, %v3089
      %v3091 = vpop.f32.mrf.mxu0
      %v3092 = vadd.f32 %v2739, %v3091
      %v3093 = vpop.f32.mrf.mxu0
      %v3094 = vadd.f32 %v2741, %v3093
      %3095 = vmatprep.mubr.bf16.mxu0 %v2489
      %3096 = vmatmul.mubr.bf16.gmra.mxu0 %v1083
      %v3097 = vpop.f32.mrf.mxu0
      %v3098 = vadd.f32 %v2745, %v3097
      %v3099 = vpop.f32.mrf.mxu0
      %v3100 = vadd.f32 %v2747, %v3099
      %v3101 = vpop.f32.mrf.mxu0
      %v3102 = vadd.f32 %v2749, %v3101
      %v3103 = vpop.f32.mrf.mxu0
      %v3104 = vadd.f32 %v2751, %v3103
      %3105 = vmatprep.mubr.bf16.mxu0 %v2492
      %3106 = vmatmul.mubr.bf16.gmra.mxu0 %v1087
      %v3107 = vpop.f32.mrf.mxu0
      %v3108 = vadd.f32 %v2755, %v3107
      %v3109 = vpop.f32.mrf.mxu0
      %v3110 = vadd.f32 %v2757, %v3109
      %v3111 = vpop.f32.mrf.mxu0
      %v3112 = vadd.f32 %v2759, %v3111
      %v3113 = vpop.f32.mrf.mxu0
      %v3114 = vadd.f32 %v2761, %v3113
      %3115 = vmatprep.mubr.bf16.mxu0 %v2495
      %3116 = vmatmul.mubr.bf16.gmra.mxu0 %v1091
      %v3117 = vpop.f32.mrf.mxu0
      %v3118 = vadd.f32 %v2765, %v3117
      %v3119 = vpop.f32.mrf.mxu0
      %v3120 = vadd.f32 %v2767, %v3119
      %v3121 = vpop.f32.mrf.mxu0
      %v3122 = vadd.f32 %v2769, %v3121
      %v3123 = vpop.f32.mrf.mxu0
      %v3124 = vadd.f32 %v2771, %v3123
      %3125 = vmatprep.mubr.bf16.mxu0 %v2498
      %3126 = vmatmul.mubr.bf16.gmra.mxu0 %v1095
      %v3127 = vpop.f32.mrf.mxu0
      %v3128 = vadd.f32 %v2775, %v3127
      %v3129 = vpop.f32.mrf.mxu0
      %v3130 = vadd.f32 %v2777, %v3129
      %v3131 = vpop.f32.mrf.mxu0
      %v3132 = vadd.f32 %v2779, %v3131
      %v3133 = vpop.f32.mrf.mxu0
      %v3134 = vadd.f32 %v2781, %v3133
      %3135 = vmatprep.mubr.bf16.mxu0 %v2501
      %3136 = vmatmul.mubr.bf16.gmra.mxu0 %v1099
      %v3137 = vpop.f32.mrf.mxu0
      %v3138 = vadd.f32 %v2785, %v3137
      %v3139 = vpop.f32.mrf.mxu0
      %v3140 = vadd.f32 %v2787, %v3139
      %v3141 = vpop.f32.mrf.mxu0
      %v3142 = vadd.f32 %v2789, %v3141
      %v3143 = vpop.f32.mrf.mxu0
      %v3144 = vadd.f32 %v2791, %v3143
      %3145 = vmatprep.mubr.bf16.mxu0 %v2504
      %3146 = vmatmul.mubr.bf16.gmra.mxu0 %v1103
      %v3147 = vpop.f32.mrf.mxu0
      %v3148 = vadd.f32 %v2795, %v3147
      %v3149 = vpop.f32.mrf.mxu0
      %v3150 = vadd.f32 %v2797, %v3149
      %v3151 = vpop.f32.mrf.mxu0
      %v3152 = vadd.f32 %v2799, %v3151
      %v3153 = vpop.f32.mrf.mxu0
      %v3154 = vadd.f32 %v2801, %v3153
      %3155 = vmatprep.mubr.bf16.mxu0 %v2507
      %3156 = vmatmul.mubr.bf16.gmra.mxu0 %v1107
      %v3157 = vpop.f32.mrf.mxu0
      %v3158 = vadd.f32 %v2805, %v3157
      %v3159 = vpop.f32.mrf.mxu0
      %v3160 = vadd.f32 %v2807, %v3159
      %v3161 = vpop.f32.mrf.mxu0
      %v3162 = vadd.f32 %v2809, %v3161
      %v3163 = vpop.f32.mrf.mxu0
      %v3164 = vadd.f32 %v2811, %v3163
      %3165 = vmatprep.mubr.bf16.mxu0 %v2510
      %3166 = vmatmul.mubr.bf16.gmra.mxu0 %v1111
      %v3167 = vpop.f32.mrf.mxu0
      %v3168 = vadd.f32 %v2815, %v3167
      %v3169 = vpop.f32.mrf.mxu0
      %v3170 = vadd.f32 %v2817, %v3169
      %v3171 = vpop.f32.mrf.mxu0
      %v3172 = vadd.f32 %v2819, %v3171
      %v3173 = vpop.f32.mrf.mxu0
      %v3174 = vadd.f32 %v2821, %v3173
      %3175 = vmatprep.mubr.bf16.mxu0 %v2513
      %3176 = vmatmul.mubr.bf16.gmra.mxu0 %v1115
      %v3177 = vpop.f32.mrf.mxu0
      %v3178 = vadd.f32 %v2825, %v3177
      %v3179 = vpop.f32.mrf.mxu0
      %v3180 = vadd.f32 %v2827, %v3179
      %v3181 = vpop.f32.mrf.mxu0
      %v3182 = vadd.f32 %v2829, %v3181
      %v3183 = vpop.f32.mrf.mxu0
      %v3184 = vadd.f32 %v2831, %v3183
      %3185 = vmatprep.mubr.bf16.mxu0 %v2516
      %3186 = vmatmul.mubr.bf16.gmra.mxu0 %v1119
      %v3187 = vpop.f32.mrf.mxu0
      %v3188 = vadd.f32 %v2835, %v3187
      %v3189 = vpop.f32.mrf.mxu0
      %v3190 = vadd.f32 %v2837, %v3189
      %v3191 = vpop.f32.mrf.mxu0
      %v3192 = vadd.f32 %v2839, %v3191
      %v3193 = vpop.f32.mrf.mxu0
      %v3194 = vadd.f32 %v2841, %v3193
      %3195 = vmatprep.mubr.bf16.mxu0 %v2519
      %3196 = vmatmul.mubr.bf16.gmra.mxu0 %v1123
      %v3197 = vpop.f32.mrf.mxu0
      %v3198 = vadd.f32 %v2845, %v3197
      %v3199 = vpop.f32.mrf.mxu0
      %v3200 = vadd.f32 %v2847, %v3199
      %v3201 = vpop.f32.mrf.mxu0
      %v3202 = vadd.f32 %v2849, %v3201
      %v3203 = vpop.f32.mrf.mxu0
      %v3204 = vadd.f32 %v2851, %v3203
      %3205 = vmatprep.mubr.bf16.mxu0 %v2522
      %3206 = vmatmul.mubr.bf16.gmra.mxu0 %v1127
      %v3207 = vpop.f32.mrf.mxu0
      %v3208 = vadd.f32 %v2855, %v3207
      %v3209 = vpop.f32.mrf.mxu0
      %v3210 = vadd.f32 %v2857, %v3209
      %v3211 = vpop.f32.mrf.mxu0
      %v3212 = vadd.f32 %v2859, %v3211
      %v3213 = vpop.f32.mrf.mxu0
      %v3214 = vadd.f32 %v2861, %v3213
      %3215 = vmatprep.mubr.bf16.mxu0 %v2525
      %3216 = vmatmul.mubr.bf16.gmra.mxu0 %v1131
      %v3217 = vpop.f32.mrf.mxu0
      %v3218 = vadd.f32 %v2865, %v3217
      %v3219 = vpop.f32.mrf.mxu0
      %v3220 = vadd.f32 %v2867, %v3219
      %v3221 = vpop.f32.mrf.mxu0
      %v3222 = vadd.f32 %v2869, %v3221
      %v3223 = vpop.f32.mrf.mxu0
      %v3224 = vadd.f32 %v2871, %v3223
      %3225 = vmatprep.mubr.bf16.mxu0 %v2528
      %3226 = vmatmul.mubr.bf16.gmra.mxu0 %v1135
      %v3227 = vpop.f32.mrf.mxu0
      %v3228 = vadd.f32 %v2875, %v3227
      %v3229 = vpop.f32.mrf.mxu0
      %v3230 = vadd.f32 %v2877, %v3229
      %v3231 = vpop.f32.mrf.mxu0
      %v3232 = vadd.f32 %v2879, %v3231
      %v3233 = vpop.f32.mrf.mxu0
      %v3234 = vadd.f32 %v2881, %v3233
      %3235 = vdwg.mxu0
      %3236 = vmatprep.subr.bf16.mxu0 %v2012
      %3237 = vmatpush1.bf16.msra.mxu0 %v2011
      %3238 = vmatprep.subr.bf16.mxu0 %v2004
      %3239 = vmatpush1.bf16.msra.mxu0 %v2003
      %3240 = vmatprep.subr.bf16.mxu0 %v1996
      %3241 = vmatpush1.bf16.msra.mxu0 %v1995
      %3242 = vmatprep.subr.bf16.mxu0 %v1988
      %3243 = vmatpush1.bf16.msra.mxu0 %v1987
      %3244 = vmatprep.subr.bf16.mxu0 %v1980
      %3245 = vmatpush1.bf16.msra.mxu0 %v1979
      %3246 = vmatprep.subr.bf16.mxu0 %v1972
      %3247 = vmatpush1.bf16.msra.mxu0 %v1971
      %3248 = vmatprep.subr.bf16.mxu0 %v1964
      %3249 = vmatpush1.bf16.msra.mxu0 %v1963
      %3250 = vmatprep.subr.bf16.mxu0 %v1956
      %3251 = vmatpush1.bf16.msra.mxu0 %v1955
      %3252 = vmatprep.subr.bf16.mxu0 %v2076
      %3253 = vmatpush2.bf16.msra.mxu0 %v2075
      %3254 = vmatprep.subr.bf16.mxu0 %v2068
      %3255 = vmatpush2.bf16.msra.mxu0 %v2067
      %3256 = vmatprep.subr.bf16.mxu0 %v2060
      %3257 = vmatpush2.bf16.msra.mxu0 %v2059
      %3258 = vmatprep.subr.bf16.mxu0 %v2052
      %3259 = vmatpush2.bf16.msra.mxu0 %v2051
      %3260 = vmatprep.subr.bf16.mxu0 %v2044
      %3261 = vmatpush2.bf16.msra.mxu0 %v2043
      %3262 = vmatprep.subr.bf16.mxu0 %v2036
      %3263 = vmatpush2.bf16.msra.mxu0 %v2035
      %3264 = vmatprep.subr.bf16.mxu0 %v2028
      %3265 = vmatpush2.bf16.msra.mxu0 %v2027
      %3266 = vmatprep.subr.bf16.mxu0 %v2020
      %3267 = vmatpush2.bf16.msra.mxu0 %v2019
      %3268 = vmatprep.mubr.bf16.mxu0 %v1010
      %3269 = vmatmul.mubr.bf16.gmra.mxu0 %v1009
      %v3270 = vpop.f32.mrf.mxu0
      %v3271 = vadd.f32 0.0, %v3270
      %v3272 = vpop.f32.mrf.mxu0
      %v3273 = vadd.f32 0.0, %v3272
      %v3274 = vpop.f32.mrf.mxu0
      %v3275 = vadd.f32 0.0, %v3274
      %v3276 = vpop.f32.mrf.mxu0
      %v3277 = vadd.f32 0.0, %v3276
      %3278 = vmatprep.mubr.bf16.mxu0 %v1014
      %3279 = vmatmul.mubr.bf16.gmra.mxu0 %v1013
      %v3280 = vpop.f32.mrf.mxu0
      %v3281 = vadd.f32 0.0, %v3280
      %v3282 = vpop.f32.mrf.mxu0
      %v3283 = vadd.f32 0.0, %v3282
      %v3284 = vpop.f32.mrf.mxu0
      %v3285 = vadd.f32 0.0, %v3284
      %v3286 = vpop.f32.mrf.mxu0
      %v3287 = vadd.f32 0.0, %v3286
      %3288 = vmatprep.mubr.bf16.mxu0 %v1018
      %3289 = vmatmul.mubr.bf16.gmra.mxu0 %v1017
      %v3290 = vpop.f32.mrf.mxu0
      %v3291 = vadd.f32 0.0, %v3290
      %v3292 = vpop.f32.mrf.mxu0
      %v3293 = vadd.f32 0.0, %v3292
      %v3294 = vpop.f32.mrf.mxu0
      %v3295 = vadd.f32 0.0, %v3294
      %v3296 = vpop.f32.mrf.mxu0
      %v3297 = vadd.f32 0.0, %v3296
      %3298 = vmatprep.mubr.bf16.mxu0 %v1022
      %3299 = vmatmul.mubr.bf16.gmra.mxu0 %v1021
      %v3300 = vpop.f32.mrf.mxu0
      %v3301 = vadd.f32 0.0, %v3300
      %v3302 = vpop.f32.mrf.mxu0
      %v3303 = vadd.f32 0.0, %v3302
      %v3304 = vpop.f32.mrf.mxu0
      %v3305 = vadd.f32 0.0, %v3304
      %v3306 = vpop.f32.mrf.mxu0
      %v3307 = vadd.f32 0.0, %v3306
      %3308 = vmatprep.mubr.bf16.mxu0 %v1026
      %3309 = vmatmul.mubr.bf16.gmra.mxu0 %v1025
      %v3310 = vpop.f32.mrf.mxu0
      %v3311 = vadd.f32 0.0, %v3310
      %v3312 = vpop.f32.mrf.mxu0
      %v3313 = vadd.f32 0.0, %v3312
      %v3314 = vpop.f32.mrf.mxu0
      %v3315 = vadd.f32 0.0, %v3314
      %v3316 = vpop.f32.mrf.mxu0
      %v3317 = vadd.f32 0.0, %v3316
      %3318 = vmatprep.mubr.bf16.mxu0 %v1030
      %3319 = vmatmul.mubr.bf16.gmra.mxu0 %v1029
      %v3320 = vpop.f32.mrf.mxu0
      %v3321 = vadd.f32 0.0, %v3320
      %v3322 = vpop.f32.mrf.mxu0
      %v3323 = vadd.f32 0.0, %v3322
      %v3324 = vpop.f32.mrf.mxu0
      %v3325 = vadd.f32 0.0, %v3324
      %v3326 = vpop.f32.mrf.mxu0
      %v3327 = vadd.f32 0.0, %v3326
      %3328 = vmatprep.mubr.bf16.mxu0 %v1034
      %3329 = vmatmul.mubr.bf16.gmra.mxu0 %v1033
      %v3330 = vpop.f32.mrf.mxu0
      %v3331 = vadd.f32 0.0, %v3330
      %v3332 = vpop.f32.mrf.mxu0
      %v3333 = vadd.f32 0.0, %v3332
      %v3334 = vpop.f32.mrf.mxu0
      %v3335 = vadd.f32 0.0, %v3334
      %v3336 = vpop.f32.mrf.mxu0
      %v3337 = vadd.f32 0.0, %v3336
      %3338 = vmatprep.mubr.bf16.mxu0 %v1038
      %3339 = vmatmul.mubr.bf16.gmra.mxu0 %v1037
      %v3340 = vpop.f32.mrf.mxu0
      %v3341 = vadd.f32 0.0, %v3340
      %v3342 = vpop.f32.mrf.mxu0
      %v3343 = vadd.f32 0.0, %v3342
      %v3344 = vpop.f32.mrf.mxu0
      %v3345 = vadd.f32 0.0, %v3344
      %v3346 = vpop.f32.mrf.mxu0
      %v3347 = vadd.f32 0.0, %v3346
      %3348 = vmatprep.mubr.bf16.mxu0 %v1042
      %3349 = vmatmul.mubr.bf16.gmra.mxu0 %v1041
      %v3350 = vpop.f32.mrf.mxu0
      %v3351 = vadd.f32 0.0, %v3350
      %v3352 = vpop.f32.mrf.mxu0
      %v3353 = vadd.f32 0.0, %v3352
      %v3354 = vpop.f32.mrf.mxu0
      %v3355 = vadd.f32 0.0, %v3354
      %v3356 = vpop.f32.mrf.mxu0
      %v3357 = vadd.f32 0.0, %v3356
      %3358 = vmatprep.mubr.bf16.mxu0 %v1046
      %3359 = vmatmul.mubr.bf16.gmra.mxu0 %v1045
      %v3360 = vpop.f32.mrf.mxu0
      %v3361 = vadd.f32 0.0, %v3360
      %v3362 = vpop.f32.mrf.mxu0
      %v3363 = vadd.f32 0.0, %v3362
      %v3364 = vpop.f32.mrf.mxu0
      %v3365 = vadd.f32 0.0, %v3364
      %v3366 = vpop.f32.mrf.mxu0
      %v3367 = vadd.f32 0.0, %v3366
      %3368 = vmatprep.mubr.bf16.mxu0 %v1050
      %3369 = vmatmul.mubr.bf16.gmra.mxu0 %v1049
      %v3370 = vpop.f32.mrf.mxu0
      %v3371 = vadd.f32 0.0, %v3370
      %v3372 = vpop.f32.mrf.mxu0
      %v3373 = vadd.f32 0.0, %v3372
      %v3374 = vpop.f32.mrf.mxu0
      %v3375 = vadd.f32 0.0, %v3374
      %v3376 = vpop.f32.mrf.mxu0
      %v3377 = vadd.f32 0.0, %v3376
      %3378 = vmatprep.mubr.bf16.mxu0 %v1054
      %3379 = vmatmul.mubr.bf16.gmra.mxu0 %v1053
      %v3380 = vpop.f32.mrf.mxu0
      %v3381 = vadd.f32 0.0, %v3380
      %v3382 = vpop.f32.mrf.mxu0
      %v3383 = vadd.f32 0.0, %v3382
      %v3384 = vpop.f32.mrf.mxu0
      %v3385 = vadd.f32 0.0, %v3384
      %v3386 = vpop.f32.mrf.mxu0
      %v3387 = vadd.f32 0.0, %v3386
      %3388 = vmatprep.mubr.bf16.mxu0 %v1058
      %3389 = vmatmul.mubr.bf16.gmra.mxu0 %v1057
      %v3390 = vpop.f32.mrf.mxu0
      %v3391 = vadd.f32 0.0, %v3390
      %v3392 = vpop.f32.mrf.mxu0
      %v3393 = vadd.f32 0.0, %v3392
      %v3394 = vpop.f32.mrf.mxu0
      %v3395 = vadd.f32 0.0, %v3394
      %v3396 = vpop.f32.mrf.mxu0
      %v3397 = vadd.f32 0.0, %v3396
      %3398 = vmatprep.mubr.bf16.mxu0 %v1062
      %3399 = vmatmul.mubr.bf16.gmra.mxu0 %v1061
      %v3400 = vpop.f32.mrf.mxu0
      %v3401 = vadd.f32 0.0, %v3400
      %v3402 = vpop.f32.mrf.mxu0
      %v3403 = vadd.f32 0.0, %v3402
      %v3404 = vpop.f32.mrf.mxu0
      %v3405 = vadd.f32 0.0, %v3404
      %v3406 = vpop.f32.mrf.mxu0
      %v3407 = vadd.f32 0.0, %v3406
      %3408 = vmatprep.mubr.bf16.mxu0 %v1066
      %3409 = vmatmul.mubr.bf16.gmra.mxu0 %v1065
      %v3410 = vpop.f32.mrf.mxu0
      %v3411 = vadd.f32 0.0, %v3410
      %v3412 = vpop.f32.mrf.mxu0
      %v3413 = vadd.f32 0.0, %v3412
      %v3414 = vpop.f32.mrf.mxu0
      %v3415 = vadd.f32 0.0, %v3414
      %v3416 = vpop.f32.mrf.mxu0
      %v3417 = vadd.f32 0.0, %v3416
      %3418 = vmatprep.mubr.bf16.mxu0 %v1070
      %3419 = vmatmul.mubr.bf16.gmra.mxu0 %v1069
      %v3420 = vpop.f32.mrf.mxu0
      %v3421 = vadd.f32 0.0, %v3420
      %v3422 = vpop.f32.mrf.mxu0
      %v3423 = vadd.f32 0.0, %v3422
      %v3424 = vpop.f32.mrf.mxu0
      %v3425 = vadd.f32 0.0, %v3424
      %v3426 = vpop.f32.mrf.mxu0
      %v3427 = vadd.f32 0.0, %v3426
      %3428 = vmatprep.mubr.bf16.mxu0 %v1074
      %3429 = vmatmul.mubr.bf16.gmra.mxu0 %v1073
      %v3430 = vpop.f32.mrf.mxu0
      %v3431 = vadd.f32 0.0, %v3430
      %v3432 = vpop.f32.mrf.mxu0
      %v3433 = vadd.f32 0.0, %v3432
      %v3434 = vpop.f32.mrf.mxu0
      %v3435 = vadd.f32 0.0, %v3434
      %v3436 = vpop.f32.mrf.mxu0
      %v3437 = vadd.f32 0.0, %v3436
      %3438 = vmatprep.mubr.bf16.mxu0 %v1078
      %3439 = vmatmul.mubr.bf16.gmra.mxu0 %v1077
      %v3440 = vpop.f32.mrf.mxu0
      %v3441 = vadd.f32 0.0, %v3440
      %v3442 = vpop.f32.mrf.mxu0
      %v3443 = vadd.f32 0.0, %v3442
      %v3444 = vpop.f32.mrf.mxu0
      %v3445 = vadd.f32 0.0, %v3444
      %v3446 = vpop.f32.mrf.mxu0
      %v3447 = vadd.f32 0.0, %v3446
      %3448 = vmatprep.mubr.bf16.mxu0 %v1082
      %3449 = vmatmul.mubr.bf16.gmra.mxu0 %v1081
      %v3450 = vpop.f32.mrf.mxu0
      %v3451 = vadd.f32 0.0, %v3450
      %v3452 = vpop.f32.mrf.mxu0
      %v3453 = vadd.f32 0.0, %v3452
      %v3454 = vpop.f32.mrf.mxu0
      %v3455 = vadd.f32 0.0, %v3454
      %v3456 = vpop.f32.mrf.mxu0
      %v3457 = vadd.f32 0.0, %v3456
      %3458 = vmatprep.mubr.bf16.mxu0 %v1086
      %3459 = vmatmul.mubr.bf16.gmra.mxu0 %v1085
      %v3460 = vpop.f32.mrf.mxu0
      %v3461 = vadd.f32 0.0, %v3460
      %v3462 = vpop.f32.mrf.mxu0
      %v3463 = vadd.f32 0.0, %v3462
      %v3464 = vpop.f32.mrf.mxu0
      %v3465 = vadd.f32 0.0, %v3464
      %v3466 = vpop.f32.mrf.mxu0
      %v3467 = vadd.f32 0.0, %v3466
      %3468 = vmatprep.mubr.bf16.mxu0 %v1090
      %3469 = vmatmul.mubr.bf16.gmra.mxu0 %v1089
      %v3470 = vpop.f32.mrf.mxu0
      %v3471 = vadd.f32 0.0, %v3470
      %v3472 = vpop.f32.mrf.mxu0
      %v3473 = vadd.f32 0.0, %v3472
      %v3474 = vpop.f32.mrf.mxu0
      %v3475 = vadd.f32 0.0, %v3474
      %v3476 = vpop.f32.mrf.mxu0
      %v3477 = vadd.f32 0.0, %v3476
      %3478 = vmatprep.mubr.bf16.mxu0 %v1094
      %3479 = vmatmul.mubr.bf16.gmra.mxu0 %v1093
      %v3480 = vpop.f32.mrf.mxu0
      %v3481 = vadd.f32 0.0, %v3480
      %v3482 = vpop.f32.mrf.mxu0
      %v3483 = vadd.f32 0.0, %v3482
      %v3484 = vpop.f32.mrf.mxu0
      %v3485 = vadd.f32 0.0, %v3484
      %v3486 = vpop.f32.mrf.mxu0
      %v3487 = vadd.f32 0.0, %v3486
      %3488 = vmatprep.mubr.bf16.mxu0 %v1098
      %3489 = vmatmul.mubr.bf16.gmra.mxu0 %v1097
      %v3490 = vpop.f32.mrf.mxu0
      %v3491 = vadd.f32 0.0, %v3490
      %v3492 = vpop.f32.mrf.mxu0
      %v3493 = vadd.f32 0.0, %v3492
      %v3494 = vpop.f32.mrf.mxu0
      %v3495 = vadd.f32 0.0, %v3494
      %v3496 = vpop.f32.mrf.mxu0
      %v3497 = vadd.f32 0.0, %v3496
      %3498 = vmatprep.mubr.bf16.mxu0 %v1102
      %3499 = vmatmul.mubr.bf16.gmra.mxu0 %v1101
      %v3500 = vpop.f32.mrf.mxu0
      %v3501 = vadd.f32 0.0, %v3500
      %v3502 = vpop.f32.mrf.mxu0
      %v3503 = vadd.f32 0.0, %v3502
      %v3504 = vpop.f32.mrf.mxu0
      %v3505 = vadd.f32 0.0, %v3504
      %v3506 = vpop.f32.mrf.mxu0
      %v3507 = vadd.f32 0.0, %v3506
      %3508 = vmatprep.mubr.bf16.mxu0 %v1106
      %3509 = vmatmul.mubr.bf16.gmra.mxu0 %v1105
      %v3510 = vpop.f32.mrf.mxu0
      %v3511 = vadd.f32 0.0, %v3510
      %v3512 = vpop.f32.mrf.mxu0
      %v3513 = vadd.f32 0.0, %v3512
      %v3514 = vpop.f32.mrf.mxu0
      %v3515 = vadd.f32 0.0, %v3514
      %v3516 = vpop.f32.mrf.mxu0
      %v3517 = vadd.f32 0.0, %v3516
      %3518 = vmatprep.mubr.bf16.mxu0 %v1110
      %3519 = vmatmul.mubr.bf16.gmra.mxu0 %v1109
      %v3520 = vpop.f32.mrf.mxu0
      %v3521 = vadd.f32 0.0, %v3520
      %v3522 = vpop.f32.mrf.mxu0
      %v3523 = vadd.f32 0.0, %v3522
      %v3524 = vpop.f32.mrf.mxu0
      %v3525 = vadd.f32 0.0, %v3524
      %v3526 = vpop.f32.mrf.mxu0
      %v3527 = vadd.f32 0.0, %v3526
      %3528 = vmatprep.mubr.bf16.mxu0 %v1114
      %3529 = vmatmul.mubr.bf16.gmra.mxu0 %v1113
      %v3530 = vpop.f32.mrf.mxu0
      %v3531 = vadd.f32 0.0, %v3530
      %v3532 = vpop.f32.mrf.mxu0
      %v3533 = vadd.f32 0.0, %v3532
      %v3534 = vpop.f32.mrf.mxu0
      %v3535 = vadd.f32 0.0, %v3534
      %v3536 = vpop.f32.mrf.mxu0
      %v3537 = vadd.f32 0.0, %v3536
      %3538 = vmatprep.mubr.bf16.mxu0 %v1118
      %3539 = vmatmul.mubr.bf16.gmra.mxu0 %v1117
      %v3540 = vpop.f32.mrf.mxu0
      %v3541 = vadd.f32 0.0, %v3540
      %v3542 = vpop.f32.mrf.mxu0
      %v3543 = vadd.f32 0.0, %v3542
      %v3544 = vpop.f32.mrf.mxu0
      %v3545 = vadd.f32 0.0, %v3544
      %v3546 = vpop.f32.mrf.mxu0
      %v3547 = vadd.f32 0.0, %v3546
      %3548 = vmatprep.mubr.bf16.mxu0 %v1122
      %3549 = vmatmul.mubr.bf16.gmra.mxu0 %v1121
      %v3550 = vpop.f32.mrf.mxu0
      %v3551 = vadd.f32 0.0, %v3550
      %v3552 = vpop.f32.mrf.mxu0
      %v3553 = vadd.f32 0.0, %v3552
      %v3554 = vpop.f32.mrf.mxu0
      %v3555 = vadd.f32 0.0, %v3554
      %v3556 = vpop.f32.mrf.mxu0
      %v3557 = vadd.f32 0.0, %v3556
      %3558 = vmatprep.mubr.bf16.mxu0 %v1126
      %3559 = vmatmul.mubr.bf16.gmra.mxu0 %v1125
      %v3560 = vpop.f32.mrf.mxu0
      %v3561 = vadd.f32 0.0, %v3560
      %v3562 = vpop.f32.mrf.mxu0
      %v3563 = vadd.f32 0.0, %v3562
      %v3564 = vpop.f32.mrf.mxu0
      %v3565 = vadd.f32 0.0, %v3564
      %v3566 = vpop.f32.mrf.mxu0
      %v3567 = vadd.f32 0.0, %v3566
      %3568 = vmatprep.mubr.bf16.mxu0 %v1130
      %3569 = vmatmul.mubr.bf16.gmra.mxu0 %v1129
      %v3570 = vpop.f32.mrf.mxu0
      %v3571 = vadd.f32 0.0, %v3570
      %v3572 = vpop.f32.mrf.mxu0
      %v3573 = vadd.f32 0.0, %v3572
      %v3574 = vpop.f32.mrf.mxu0
      %v3575 = vadd.f32 0.0, %v3574
      %v3576 = vpop.f32.mrf.mxu0
      %v3577 = vadd.f32 0.0, %v3576
      %3578 = vmatprep.mubr.bf16.mxu0 %v1134
      %3579 = vmatmul.mubr.bf16.gmra.mxu0 %v1133
      %v3580 = vpop.f32.mrf.mxu0
      %v3581 = vadd.f32 0.0, %v3580
      %v3582 = vpop.f32.mrf.mxu0
      %v3583 = vadd.f32 0.0, %v3582
      %v3584 = vpop.f32.mrf.mxu0
      %v3585 = vadd.f32 0.0, %v3584
      %v3586 = vpop.f32.mrf.mxu0
      %v3587 = vadd.f32 0.0, %v3586
      %3588 = vdwg.mxu0
      %3589 = vmatprep.subr.bf16.mxu0 %v2140
      %3590 = vmatpush1.bf16.msra.mxu0 %v2139
      %3591 = vmatprep.subr.bf16.mxu0 %v2132
      %3592 = vmatpush1.bf16.msra.mxu0 %v2131
      %3593 = vmatprep.subr.bf16.mxu0 %v2124
      %3594 = vmatpush1.bf16.msra.mxu0 %v2123
      %3595 = vmatprep.subr.bf16.mxu0 %v2116
      %3596 = vmatpush1.bf16.msra.mxu0 %v2115
      %3597 = vmatprep.subr.bf16.mxu0 %v2108
      %3598 = vmatpush1.bf16.msra.mxu0 %v2107
      %3599 = vmatprep.subr.bf16.mxu0 %v2100
      %3600 = vmatpush1.bf16.msra.mxu0 %v2099
      %3601 = vmatprep.subr.bf16.mxu0 %v2092
      %3602 = vmatpush1.bf16.msra.mxu0 %v2091
      %3603 = vmatprep.subr.bf16.mxu0 %v2084
      %3604 = vmatpush1.bf16.msra.mxu0 %v2083
      %3605 = vmatprep.subr.bf16.mxu0 0
      %3606 = vmatpush2.bf16.msra.mxu0 0
      %3607 = vmatprep.subr.bf16.mxu0 0
      %3608 = vmatpush2.bf16.msra.mxu0 0
      %3609 = vmatprep.subr.bf16.mxu0 %v2188
      %3610 = vmatpush2.bf16.msra.mxu0 %v2187
      %3611 = vmatprep.subr.bf16.mxu0 %v2180
      %3612 = vmatpush2.bf16.msra.mxu0 %v2179
      %3613 = vmatprep.subr.bf16.mxu0 %v2172
      %3614 = vmatpush2.bf16.msra.mxu0 %v2171
      %3615 = vmatprep.subr.bf16.mxu0 %v2164
      %3616 = vmatpush2.bf16.msra.mxu0 %v2163
      %3617 = vmatprep.subr.bf16.mxu0 %v2156
      %3618 = vmatpush2.bf16.msra.mxu0 %v2155
      %3619 = vmatprep.subr.bf16.mxu0 %v2148
      %3620 = vmatpush2.bf16.msra.mxu0 %v2147
      %3621 = vmatprep.mubr.bf16.mxu0 %v2435
      %3622 = vmatmul.mubr.bf16.gmra.mxu0 %v1011
      %v3623 = vpop.f32.mrf.mxu0
      %v3624 = vadd.f32 %v3271, %v3623
      %v3625 = vpop.f32.mrf.mxu0
      %v3626 = vadd.f32 %v3273, %v3625
      %v3627 = vpop.f32.mrf.mxu0
      %v3628 = vadd.f32 %v3275, %v3627
      %v3629 = vpop.f32.mrf.mxu0
      %v3630 = vadd.f32 %v3277, %v3629
      %3631 = vmatprep.mubr.bf16.mxu0 %v2438
      %3632 = vmatmul.mubr.bf16.gmra.mxu0 %v1015
      %v3633 = vpop.f32.mrf.mxu0
      %v3634 = vadd.f32 %v3281, %v3633
      %v3635 = vpop.f32.mrf.mxu0
      %v3636 = vadd.f32 %v3283, %v3635
      %v3637 = vpop.f32.mrf.mxu0
      %v3638 = vadd.f32 %v3285, %v3637
      %v3639 = vpop.f32.mrf.mxu0
      %v3640 = vadd.f32 %v3287, %v3639
      %3641 = vmatprep.mubr.bf16.mxu0 %v2441
      %3642 = vmatmul.mubr.bf16.gmra.mxu0 %v1019
      %v3643 = vpop.f32.mrf.mxu0
      %v3644 = vadd.f32 %v3291, %v3643
      %v3645 = vpop.f32.mrf.mxu0
      %v3646 = vadd.f32 %v3293, %v3645
      %v3647 = vpop.f32.mrf.mxu0
      %v3648 = vadd.f32 %v3295, %v3647
      %v3649 = vpop.f32.mrf.mxu0
      %v3650 = vadd.f32 %v3297, %v3649
      %3651 = vmatprep.mubr.bf16.mxu0 %v2444
      %3652 = vmatmul.mubr.bf16.gmra.mxu0 %v1023
      %v3653 = vpop.f32.mrf.mxu0
      %v3654 = vadd.f32 %v3301, %v3653
      %v3655 = vpop.f32.mrf.mxu0
      %v3656 = vadd.f32 %v3303, %v3655
      %v3657 = vpop.f32.mrf.mxu0
      %v3658 = vadd.f32 %v3305, %v3657
      %v3659 = vpop.f32.mrf.mxu0
      %v3660 = vadd.f32 %v3307, %v3659
      %3661 = vmatprep.mubr.bf16.mxu0 %v2447
      %3662 = vmatmul.mubr.bf16.gmra.mxu0 %v1027
      %v3663 = vpop.f32.mrf.mxu0
      %v3664 = vadd.f32 %v3311, %v3663
      %v3665 = vpop.f32.mrf.mxu0
      %v3666 = vadd.f32 %v3313, %v3665
      %v3667 = vpop.f32.mrf.mxu0
      %v3668 = vadd.f32 %v3315, %v3667
      %v3669 = vpop.f32.mrf.mxu0
      %v3670 = vadd.f32 %v3317, %v3669
      %3671 = vmatprep.mubr.bf16.mxu0 %v2450
      %3672 = vmatmul.mubr.bf16.gmra.mxu0 %v1031
      %v3673 = vpop.f32.mrf.mxu0
      %v3674 = vadd.f32 %v3321, %v3673
      %v3675 = vpop.f32.mrf.mxu0
      %v3676 = vadd.f32 %v3323, %v3675
      %v3677 = vpop.f32.mrf.mxu0
      %v3678 = vadd.f32 %v3325, %v3677
      %v3679 = vpop.f32.mrf.mxu0
      %v3680 = vadd.f32 %v3327, %v3679
      %3681 = vmatprep.mubr.bf16.mxu0 %v2453
      %3682 = vmatmul.mubr.bf16.gmra.mxu0 %v1035
      %v3683 = vpop.f32.mrf.mxu0
      %v3684 = vadd.f32 %v3331, %v3683
      %v3685 = vpop.f32.mrf.mxu0
      %v3686 = vadd.f32 %v3333, %v3685
      %v3687 = vpop.f32.mrf.mxu0
      %v3688 = vadd.f32 %v3335, %v3687
      %v3689 = vpop.f32.mrf.mxu0
      %v3690 = vadd.f32 %v3337, %v3689
      %3691 = vmatprep.mubr.bf16.mxu0 %v2456
      %3692 = vmatmul.mubr.bf16.gmra.mxu0 %v1039
      %v3693 = vpop.f32.mrf.mxu0
      %v3694 = vadd.f32 %v3341, %v3693
      %v3695 = vpop.f32.mrf.mxu0
      %v3696 = vadd.f32 %v3343, %v3695
      %v3697 = vpop.f32.mrf.mxu0
      %v3698 = vadd.f32 %v3345, %v3697
      %v3699 = vpop.f32.mrf.mxu0
      %v3700 = vadd.f32 %v3347, %v3699
      %3701 = vmatprep.mubr.bf16.mxu0 %v2459
      %3702 = vmatmul.mubr.bf16.gmra.mxu0 %v1043
      %v3703 = vpop.f32.mrf.mxu0
      %v3704 = vadd.f32 %v3351, %v3703
      %v3705 = vpop.f32.mrf.mxu0
      %v3706 = vadd.f32 %v3353, %v3705
      %v3707 = vpop.f32.mrf.mxu0
      %v3708 = vadd.f32 %v3355, %v3707
      %v3709 = vpop.f32.mrf.mxu0
      %v3710 = vadd.f32 %v3357, %v3709
      %3711 = vmatprep.mubr.bf16.mxu0 %v2462
      %3712 = vmatmul.mubr.bf16.gmra.mxu0 %v1047
      %v3713 = vpop.f32.mrf.mxu0
      %v3714 = vadd.f32 %v3361, %v3713
      %v3715 = vpop.f32.mrf.mxu0
      %v3716 = vadd.f32 %v3363, %v3715
      %v3717 = vpop.f32.mrf.mxu0
      %v3718 = vadd.f32 %v3365, %v3717
      %v3719 = vpop.f32.mrf.mxu0
      %v3720 = vadd.f32 %v3367, %v3719
      %3721 = vmatprep.mubr.bf16.mxu0 %v2465
      %3722 = vmatmul.mubr.bf16.gmra.mxu0 %v1051
      %v3723 = vpop.f32.mrf.mxu0
      %v3724 = vadd.f32 %v3371, %v3723
      %v3725 = vpop.f32.mrf.mxu0
      %v3726 = vadd.f32 %v3373, %v3725
      %v3727 = vpop.f32.mrf.mxu0
      %v3728 = vadd.f32 %v3375, %v3727
      %v3729 = vpop.f32.mrf.mxu0
      %v3730 = vadd.f32 %v3377, %v3729
      %3731 = vmatprep.mubr.bf16.mxu0 %v2468
      %3732 = vmatmul.mubr.bf16.gmra.mxu0 %v1055
      %v3733 = vpop.f32.mrf.mxu0
      %v3734 = vadd.f32 %v3381, %v3733
      %v3735 = vpop.f32.mrf.mxu0
      %v3736 = vadd.f32 %v3383, %v3735
      %v3737 = vpop.f32.mrf.mxu0
      %v3738 = vadd.f32 %v3385, %v3737
      %v3739 = vpop.f32.mrf.mxu0
      %v3740 = vadd.f32 %v3387, %v3739
      %3741 = vmatprep.mubr.bf16.mxu0 %v2471
      %3742 = vmatmul.mubr.bf16.gmra.mxu0 %v1059
      %v3743 = vpop.f32.mrf.mxu0
      %v3744 = vadd.f32 %v3391, %v3743
      %v3745 = vpop.f32.mrf.mxu0
      %v3746 = vadd.f32 %v3393, %v3745
      %v3747 = vpop.f32.mrf.mxu0
      %v3748 = vadd.f32 %v3395, %v3747
      %v3749 = vpop.f32.mrf.mxu0
      %v3750 = vadd.f32 %v3397, %v3749
      %3751 = vmatprep.mubr.bf16.mxu0 %v2474
      %3752 = vmatmul.mubr.bf16.gmra.mxu0 %v1063
      %v3753 = vpop.f32.mrf.mxu0
      %v3754 = vadd.f32 %v3401, %v3753
      %v3755 = vpop.f32.mrf.mxu0
      %v3756 = vadd.f32 %v3403, %v3755
      %v3757 = vpop.f32.mrf.mxu0
      %v3758 = vadd.f32 %v3405, %v3757
      %v3759 = vpop.f32.mrf.mxu0
      %v3760 = vadd.f32 %v3407, %v3759
      %3761 = vmatprep.mubr.bf16.mxu0 %v2477
      %3762 = vmatmul.mubr.bf16.gmra.mxu0 %v1067
      %v3763 = vpop.f32.mrf.mxu0
      %v3764 = vadd.f32 %v3411, %v3763
      %v3765 = vpop.f32.mrf.mxu0
      %v3766 = vadd.f32 %v3413, %v3765
      %v3767 = vpop.f32.mrf.mxu0
      %v3768 = vadd.f32 %v3415, %v3767
      %v3769 = vpop.f32.mrf.mxu0
      %v3770 = vadd.f32 %v3417, %v3769
      %3771 = vmatprep.mubr.bf16.mxu0 %v2480
      %3772 = vmatmul.mubr.bf16.gmra.mxu0 %v1071
      %v3773 = vpop.f32.mrf.mxu0
      %v3774 = vadd.f32 %v3421, %v3773
      %v3775 = vpop.f32.mrf.mxu0
      %v3776 = vadd.f32 %v3423, %v3775
      %v3777 = vpop.f32.mrf.mxu0
      %v3778 = vadd.f32 %v3425, %v3777
      %v3779 = vpop.f32.mrf.mxu0
      %v3780 = vadd.f32 %v3427, %v3779
      %3781 = vmatprep.mubr.bf16.mxu0 %v2483
      %3782 = vmatmul.mubr.bf16.gmra.mxu0 %v1075
      %v3783 = vpop.f32.mrf.mxu0
      %v3784 = vadd.f32 %v3431, %v3783
      %v3785 = vpop.f32.mrf.mxu0
      %v3786 = vadd.f32 %v3433, %v3785
      %v3787 = vpop.f32.mrf.mxu0
      %v3788 = vadd.f32 %v3435, %v3787
      %v3789 = vpop.f32.mrf.mxu0
      %v3790 = vadd.f32 %v3437, %v3789
      %3791 = vmatprep.mubr.bf16.mxu0 %v2486
      %3792 = vmatmul.mubr.bf16.gmra.mxu0 %v1079
      %v3793 = vpop.f32.mrf.mxu0
      %v3794 = vadd.f32 %v3441, %v3793
      %v3795 = vpop.f32.mrf.mxu0
      %v3796 = vadd.f32 %v3443, %v3795
      %v3797 = vpop.f32.mrf.mxu0
      %v3798 = vadd.f32 %v3445, %v3797
      %v3799 = vpop.f32.mrf.mxu0
      %v3800 = vadd.f32 %v3447, %v3799
      %3801 = vmatprep.mubr.bf16.mxu0 %v2489
      %3802 = vmatmul.mubr.bf16.gmra.mxu0 %v1083
      %v3803 = vpop.f32.mrf.mxu0
      %v3804 = vadd.f32 %v3451, %v3803
      %v3805 = vpop.f32.mrf.mxu0
      %v3806 = vadd.f32 %v3453, %v3805
      %v3807 = vpop.f32.mrf.mxu0
      %v3808 = vadd.f32 %v3455, %v3807
      %v3809 = vpop.f32.mrf.mxu0
      %v3810 = vadd.f32 %v3457, %v3809
      %3811 = vmatprep.mubr.bf16.mxu0 %v2492
      %3812 = vmatmul.mubr.bf16.gmra.mxu0 %v1087
      %v3813 = vpop.f32.mrf.mxu0
      %v3814 = vadd.f32 %v3461, %v3813
      %v3815 = vpop.f32.mrf.mxu0
      %v3816 = vadd.f32 %v3463, %v3815
      %v3817 = vpop.f32.mrf.mxu0
      %v3818 = vadd.f32 %v3465, %v3817
      %v3819 = vpop.f32.mrf.mxu0
      %v3820 = vadd.f32 %v3467, %v3819
      %3821 = vmatprep.mubr.bf16.mxu0 %v2495
      %3822 = vmatmul.mubr.bf16.gmra.mxu0 %v1091
      %v3823 = vpop.f32.mrf.mxu0
      %v3824 = vadd.f32 %v3471, %v3823
      %v3825 = vpop.f32.mrf.mxu0
      %v3826 = vadd.f32 %v3473, %v3825
      %v3827 = vpop.f32.mrf.mxu0
      %v3828 = vadd.f32 %v3475, %v3827
      %v3829 = vpop.f32.mrf.mxu0
      %v3830 = vadd.f32 %v3477, %v3829
      %3831 = vmatprep.mubr.bf16.mxu0 %v2498
      %3832 = vmatmul.mubr.bf16.gmra.mxu0 %v1095
      %v3833 = vpop.f32.mrf.mxu0
      %v3834 = vadd.f32 %v3481, %v3833
      %v3835 = vpop.f32.mrf.mxu0
      %v3836 = vadd.f32 %v3483, %v3835
      %v3837 = vpop.f32.mrf.mxu0
      %v3838 = vadd.f32 %v3485, %v3837
      %v3839 = vpop.f32.mrf.mxu0
      %v3840 = vadd.f32 %v3487, %v3839
      %3841 = vmatprep.mubr.bf16.mxu0 %v2501
      %3842 = vmatmul.mubr.bf16.gmra.mxu0 %v1099
      %v3843 = vpop.f32.mrf.mxu0
      %v3844 = vadd.f32 %v3491, %v3843
      %v3845 = vpop.f32.mrf.mxu0
      %v3846 = vadd.f32 %v3493, %v3845
      %v3847 = vpop.f32.mrf.mxu0
      %v3848 = vadd.f32 %v3495, %v3847
      %v3849 = vpop.f32.mrf.mxu0
      %v3850 = vadd.f32 %v3497, %v3849
      %3851 = vmatprep.mubr.bf16.mxu0 %v2504
      %3852 = vmatmul.mubr.bf16.gmra.mxu0 %v1103
      %v3853 = vpop.f32.mrf.mxu0
      %v3854 = vadd.f32 %v3501, %v3853
      %v3855 = vpop.f32.mrf.mxu0
      %v3856 = vadd.f32 %v3503, %v3855
      %v3857 = vpop.f32.mrf.mxu0
      %v3858 = vadd.f32 %v3505, %v3857
      %v3859 = vpop.f32.mrf.mxu0
      %v3860 = vadd.f32 %v3507, %v3859
      %3861 = vmatprep.mubr.bf16.mxu0 %v2507
      %3862 = vmatmul.mubr.bf16.gmra.mxu0 %v1107
      %v3863 = vpop.f32.mrf.mxu0
      %v3864 = vadd.f32 %v3511, %v3863
      %v3865 = vpop.f32.mrf.mxu0
      %v3866 = vadd.f32 %v3513, %v3865
      %v3867 = vpop.f32.mrf.mxu0
      %v3868 = vadd.f32 %v3515, %v3867
      %v3869 = vpop.f32.mrf.mxu0
      %v3870 = vadd.f32 %v3517, %v3869
      %3871 = vmatprep.mubr.bf16.mxu0 %v2510
      %3872 = vmatmul.mubr.bf16.gmra.mxu0 %v1111
      %v3873 = vpop.f32.mrf.mxu0
      %v3874 = vadd.f32 %v3521, %v3873
      %v3875 = vpop.f32.mrf.mxu0
      %v3876 = vadd.f32 %v3523, %v3875
      %v3877 = vpop.f32.mrf.mxu0
      %v3878 = vadd.f32 %v3525, %v3877
      %v3879 = vpop.f32.mrf.mxu0
      %v3880 = vadd.f32 %v3527, %v3879
      %3881 = vmatprep.mubr.bf16.mxu0 %v2513
      %3882 = vmatmul.mubr.bf16.gmra.mxu0 %v1115
      %v3883 = vpop.f32.mrf.mxu0
      %v3884 = vadd.f32 %v3531, %v3883
      %v3885 = vpop.f32.mrf.mxu0
      %v3886 = vadd.f32 %v3533, %v3885
      %v3887 = vpop.f32.mrf.mxu0
      %v3888 = vadd.f32 %v3535, %v3887
      %v3889 = vpop.f32.mrf.mxu0
      %v3890 = vadd.f32 %v3537, %v3889
      %3891 = vmatprep.mubr.bf16.mxu0 %v2516
      %3892 = vmatmul.mubr.bf16.gmra.mxu0 %v1119
      %v3893 = vpop.f32.mrf.mxu0
      %v3894 = vadd.f32 %v3541, %v3893
      %v3895 = vpop.f32.mrf.mxu0
      %v3896 = vadd.f32 %v3543, %v3895
      %v3897 = vpop.f32.mrf.mxu0
      %v3898 = vadd.f32 %v3545, %v3897
      %v3899 = vpop.f32.mrf.mxu0
      %v3900 = vadd.f32 %v3547, %v3899
      %3901 = vmatprep.mubr.bf16.mxu0 %v2519
      %3902 = vmatmul.mubr.bf16.gmra.mxu0 %v1123
      %v3903 = vpop.f32.mrf.mxu0
      %v3904 = vadd.f32 %v3551, %v3903
      %v3905 = vpop.f32.mrf.mxu0
      %v3906 = vadd.f32 %v3553, %v3905
      %v3907 = vpop.f32.mrf.mxu0
      %v3908 = vadd.f32 %v3555, %v3907
      %v3909 = vpop.f32.mrf.mxu0
      %v3910 = vadd.f32 %v3557, %v3909
      %3911 = vmatprep.mubr.bf16.mxu0 %v2522
      %3912 = vmatmul.mubr.bf16.gmra.mxu0 %v1127
      %v3913 = vpop.f32.mrf.mxu0
      %v3914 = vadd.f32 %v3561, %v3913
      %v3915 = vpop.f32.mrf.mxu0
      %v3916 = vadd.f32 %v3563, %v3915
      %v3917 = vpop.f32.mrf.mxu0
      %v3918 = vadd.f32 %v3565, %v3917
      %v3919 = vpop.f32.mrf.mxu0
      %v3920 = vadd.f32 %v3567, %v3919
      %3921 = vmatprep.mubr.bf16.mxu0 %v2525
      %3922 = vmatmul.mubr.bf16.gmra.mxu0 %v1131
      %v3923 = vpop.f32.mrf.mxu0
      %v3924 = vadd.f32 %v3571, %v3923
      %v3925 = vpop.f32.mrf.mxu0
      %v3926 = vadd.f32 %v3573, %v3925
      %v3927 = vpop.f32.mrf.mxu0
      %v3928 = vadd.f32 %v3575, %v3927
      %v3929 = vpop.f32.mrf.mxu0
      %v3930 = vadd.f32 %v3577, %v3929
      %3931 = vmatprep.mubr.bf16.mxu0 %v2528
      %3932 = vmatmul.mubr.bf16.gmra.mxu0 %v1135
      %v3933 = vpop.f32.mrf.mxu0
      %v3934 = vadd.f32 %v3581, %v3933
      %v3935 = vpop.f32.mrf.mxu0
      %v3936 = vadd.f32 %v3583, %v3935
      %v3937 = vpop.f32.mrf.mxu0
      %v3938 = vadd.f32 %v3585, %v3937
      %v3939 = vpop.f32.mrf.mxu0
      %v3940 = vadd.f32 %v3587, %v3939
      %3941 = vdwg.mxu0
      %3942 = vmatprep.subr.bf16.mxu0 %v2014
      %3943 = vmatpush1.bf16.msra.mxu0 %v2013
      %3944 = vmatprep.subr.bf16.mxu0 %v2006
      %3945 = vmatpush1.bf16.msra.mxu0 %v2005
      %3946 = vmatprep.subr.bf16.mxu0 %v1998
      %3947 = vmatpush1.bf16.msra.mxu0 %v1997
      %3948 = vmatprep.subr.bf16.mxu0 %v1990
      %3949 = vmatpush1.bf16.msra.mxu0 %v1989
      %3950 = vmatprep.subr.bf16.mxu0 %v1982
      %3951 = vmatpush1.bf16.msra.mxu0 %v1981
      %3952 = vmatprep.subr.bf16.mxu0 %v1974
      %3953 = vmatpush1.bf16.msra.mxu0 %v1973
      %3954 = vmatprep.subr.bf16.mxu0 %v1966
      %3955 = vmatpush1.bf16.msra.mxu0 %v1965
      %3956 = vmatprep.subr.bf16.mxu0 %v1958
      %3957 = vmatpush1.bf16.msra.mxu0 %v1957
      %3958 = vmatprep.subr.bf16.mxu0 %v2078
      %3959 = vmatpush2.bf16.msra.mxu0 %v2077
      %3960 = vmatprep.subr.bf16.mxu0 %v2070
      %3961 = vmatpush2.bf16.msra.mxu0 %v2069
      %3962 = vmatprep.subr.bf16.mxu0 %v2062
      %3963 = vmatpush2.bf16.msra.mxu0 %v2061
      %3964 = vmatprep.subr.bf16.mxu0 %v2054
      %3965 = vmatpush2.bf16.msra.mxu0 %v2053
      %3966 = vmatprep.subr.bf16.mxu0 %v2046
      %3967 = vmatpush2.bf16.msra.mxu0 %v2045
      %3968 = vmatprep.subr.bf16.mxu0 %v2038
      %3969 = vmatpush2.bf16.msra.mxu0 %v2037
      %3970 = vmatprep.subr.bf16.mxu0 %v2030
      %3971 = vmatpush2.bf16.msra.mxu0 %v2029
      %3972 = vmatprep.subr.bf16.mxu0 %v2022
      %3973 = vmatpush2.bf16.msra.mxu0 %v2021
      %3974 = vmatprep.mubr.bf16.mxu0 %v1010
      %3975 = vmatmul.mubr.bf16.gmra.mxu0 %v1009
      %v3976 = vpop.f32.mrf.mxu0
      %v3977 = vadd.f32 0.0, %v3976
      %v3978 = vpop.f32.mrf.mxu0
      %v3979 = vadd.f32 0.0, %v3978
      %v3980 = vpop.f32.mrf.mxu0
      %v3981 = vadd.f32 0.0, %v3980
      %v3982 = vpop.f32.mrf.mxu0
      %v3983 = vadd.f32 0.0, %v3982
      %3984 = vmatprep.mubr.bf16.mxu0 %v1014
      %3985 = vmatmul.mubr.bf16.gmra.mxu0 %v1013
      %v3986 = vpop.f32.mrf.mxu0
      %v3987 = vadd.f32 0.0, %v3986
      %v3988 = vpop.f32.mrf.mxu0
      %v3989 = vadd.f32 0.0, %v3988
      %v3990 = vpop.f32.mrf.mxu0
      %v3991 = vadd.f32 0.0, %v3990
      %v3992 = vpop.f32.mrf.mxu0
      %v3993 = vadd.f32 0.0, %v3992
      %3994 = vmatprep.mubr.bf16.mxu0 %v1018
      %3995 = vmatmul.mubr.bf16.gmra.mxu0 %v1017
      %v3996 = vpop.f32.mrf.mxu0
      %v3997 = vadd.f32 0.0, %v3996
      %v3998 = vpop.f32.mrf.mxu0
      %v3999 = vadd.f32 0.0, %v3998
      %v4000 = vpop.f32.mrf.mxu0
      %v4001 = vadd.f32 0.0, %v4000
      %v4002 = vpop.f32.mrf.mxu0
      %v4003 = vadd.f32 0.0, %v4002
      %4004 = vmatprep.mubr.bf16.mxu0 %v1022
      %4005 = vmatmul.mubr.bf16.gmra.mxu0 %v1021
      %v4006 = vpop.f32.mrf.mxu0
      %v4007 = vadd.f32 0.0, %v4006
      %v4008 = vpop.f32.mrf.mxu0
      %v4009 = vadd.f32 0.0, %v4008
      %v4010 = vpop.f32.mrf.mxu0
      %v4011 = vadd.f32 0.0, %v4010
      %v4012 = vpop.f32.mrf.mxu0
      %v4013 = vadd.f32 0.0, %v4012
      %4014 = vmatprep.mubr.bf16.mxu0 %v1026
      %4015 = vmatmul.mubr.bf16.gmra.mxu0 %v1025
      %v4016 = vpop.f32.mrf.mxu0
      %v4017 = vadd.f32 0.0, %v4016
      %v4018 = vpop.f32.mrf.mxu0
      %v4019 = vadd.f32 0.0, %v4018
      %v4020 = vpop.f32.mrf.mxu0
      %v4021 = vadd.f32 0.0, %v4020
      %v4022 = vpop.f32.mrf.mxu0
      %v4023 = vadd.f32 0.0, %v4022
      %4024 = vmatprep.mubr.bf16.mxu0 %v1030
      %4025 = vmatmul.mubr.bf16.gmra.mxu0 %v1029
      %v4026 = vpop.f32.mrf.mxu0
      %v4027 = vadd.f32 0.0, %v4026
      %v4028 = vpop.f32.mrf.mxu0
      %v4029 = vadd.f32 0.0, %v4028
      %v4030 = vpop.f32.mrf.mxu0
      %v4031 = vadd.f32 0.0, %v4030
      %v4032 = vpop.f32.mrf.mxu0
      %v4033 = vadd.f32 0.0, %v4032
      %4034 = vmatprep.mubr.bf16.mxu0 %v1034
      %4035 = vmatmul.mubr.bf16.gmra.mxu0 %v1033
      %v4036 = vpop.f32.mrf.mxu0
      %v4037 = vadd.f32 0.0, %v4036
      %v4038 = vpop.f32.mrf.mxu0
      %v4039 = vadd.f32 0.0, %v4038
      %v4040 = vpop.f32.mrf.mxu0
      %v4041 = vadd.f32 0.0, %v4040
      %v4042 = vpop.f32.mrf.mxu0
      %v4043 = vadd.f32 0.0, %v4042
      %4044 = vmatprep.mubr.bf16.mxu0 %v1038
      %4045 = vmatmul.mubr.bf16.gmra.mxu0 %v1037
      %v4046 = vpop.f32.mrf.mxu0
      %v4047 = vadd.f32 0.0, %v4046
      %v4048 = vpop.f32.mrf.mxu0
      %v4049 = vadd.f32 0.0, %v4048
      %v4050 = vpop.f32.mrf.mxu0
      %v4051 = vadd.f32 0.0, %v4050
      %v4052 = vpop.f32.mrf.mxu0
      %v4053 = vadd.f32 0.0, %v4052
      %4054 = vmatprep.mubr.bf16.mxu0 %v1042
      %4055 = vmatmul.mubr.bf16.gmra.mxu0 %v1041
      %v4056 = vpop.f32.mrf.mxu0
      %v4057 = vadd.f32 0.0, %v4056
      %v4058 = vpop.f32.mrf.mxu0
      %v4059 = vadd.f32 0.0, %v4058
      %v4060 = vpop.f32.mrf.mxu0
      %v4061 = vadd.f32 0.0, %v4060
      %v4062 = vpop.f32.mrf.mxu0
      %v4063 = vadd.f32 0.0, %v4062
      %4064 = vmatprep.mubr.bf16.mxu0 %v1046
      %4065 = vmatmul.mubr.bf16.gmra.mxu0 %v1045
      %v4066 = vpop.f32.mrf.mxu0
      %v4067 = vadd.f32 0.0, %v4066
      %v4068 = vpop.f32.mrf.mxu0
      %v4069 = vadd.f32 0.0, %v4068
      %v4070 = vpop.f32.mrf.mxu0
      %v4071 = vadd.f32 0.0, %v4070
      %v4072 = vpop.f32.mrf.mxu0
      %v4073 = vadd.f32 0.0, %v4072
      %4074 = vmatprep.mubr.bf16.mxu0 %v1050
      %4075 = vmatmul.mubr.bf16.gmra.mxu0 %v1049
      %v4076 = vpop.f32.mrf.mxu0
      %v4077 = vadd.f32 0.0, %v4076
      %v4078 = vpop.f32.mrf.mxu0
      %v4079 = vadd.f32 0.0, %v4078
      %v4080 = vpop.f32.mrf.mxu0
      %v4081 = vadd.f32 0.0, %v4080
      %v4082 = vpop.f32.mrf.mxu0
      %v4083 = vadd.f32 0.0, %v4082
      %4084 = vmatprep.mubr.bf16.mxu0 %v1054
      %4085 = vmatmul.mubr.bf16.gmra.mxu0 %v1053
      %v4086 = vpop.f32.mrf.mxu0
      %v4087 = vadd.f32 0.0, %v4086
      %v4088 = vpop.f32.mrf.mxu0
      %v4089 = vadd.f32 0.0, %v4088
      %v4090 = vpop.f32.mrf.mxu0
      %v4091 = vadd.f32 0.0, %v4090
      %v4092 = vpop.f32.mrf.mxu0
      %v4093 = vadd.f32 0.0, %v4092
      %4094 = vmatprep.mubr.bf16.mxu0 %v1058
      %4095 = vmatmul.mubr.bf16.gmra.mxu0 %v1057
      %v4096 = vpop.f32.mrf.mxu0
      %v4097 = vadd.f32 0.0, %v4096
      %v4098 = vpop.f32.mrf.mxu0
      %v4099 = vadd.f32 0.0, %v4098
      %v4100 = vpop.f32.mrf.mxu0
      %v4101 = vadd.f32 0.0, %v4100
      %v4102 = vpop.f32.mrf.mxu0
      %v4103 = vadd.f32 0.0, %v4102
      %4104 = vmatprep.mubr.bf16.mxu0 %v1062
      %4105 = vmatmul.mubr.bf16.gmra.mxu0 %v1061
      %v4106 = vpop.f32.mrf.mxu0
      %v4107 = vadd.f32 0.0, %v4106
      %v4108 = vpop.f32.mrf.mxu0
      %v4109 = vadd.f32 0.0, %v4108
      %v4110 = vpop.f32.mrf.mxu0
      %v4111 = vadd.f32 0.0, %v4110
      %v4112 = vpop.f32.mrf.mxu0
      %v4113 = vadd.f32 0.0, %v4112
      %4114 = vmatprep.mubr.bf16.mxu0 %v1066
      %4115 = vmatmul.mubr.bf16.gmra.mxu0 %v1065
      %v4116 = vpop.f32.mrf.mxu0
      %v4117 = vadd.f32 0.0, %v4116
      %v4118 = vpop.f32.mrf.mxu0
      %v4119 = vadd.f32 0.0, %v4118
      %v4120 = vpop.f32.mrf.mxu0
      %v4121 = vadd.f32 0.0, %v4120
      %v4122 = vpop.f32.mrf.mxu0
      %v4123 = vadd.f32 0.0, %v4122
      %4124 = vmatprep.mubr.bf16.mxu0 %v1070
      %4125 = vmatmul.mubr.bf16.gmra.mxu0 %v1069
      %v4126 = vpop.f32.mrf.mxu0
      %v4127 = vadd.f32 0.0, %v4126
      %v4128 = vpop.f32.mrf.mxu0
      %v4129 = vadd.f32 0.0, %v4128
      %v4130 = vpop.f32.mrf.mxu0
      %v4131 = vadd.f32 0.0, %v4130
      %v4132 = vpop.f32.mrf.mxu0
      %v4133 = vadd.f32 0.0, %v4132
      %4134 = vmatprep.mubr.bf16.mxu0 %v1074
      %4135 = vmatmul.mubr.bf16.gmra.mxu0 %v1073
      %v4136 = vpop.f32.mrf.mxu0
      %v4137 = vadd.f32 0.0, %v4136
      %v4138 = vpop.f32.mrf.mxu0
      %v4139 = vadd.f32 0.0, %v4138
      %v4140 = vpop.f32.mrf.mxu0
      %v4141 = vadd.f32 0.0, %v4140
      %v4142 = vpop.f32.mrf.mxu0
      %v4143 = vadd.f32 0.0, %v4142
      %4144 = vmatprep.mubr.bf16.mxu0 %v1078
      %4145 = vmatmul.mubr.bf16.gmra.mxu0 %v1077
      %v4146 = vpop.f32.mrf.mxu0
      %v4147 = vadd.f32 0.0, %v4146
      %v4148 = vpop.f32.mrf.mxu0
      %v4149 = vadd.f32 0.0, %v4148
      %v4150 = vpop.f32.mrf.mxu0
      %v4151 = vadd.f32 0.0, %v4150
      %v4152 = vpop.f32.mrf.mxu0
      %v4153 = vadd.f32 0.0, %v4152
      %4154 = vmatprep.mubr.bf16.mxu0 %v1082
      %4155 = vmatmul.mubr.bf16.gmra.mxu0 %v1081
      %v4156 = vpop.f32.mrf.mxu0
      %v4157 = vadd.f32 0.0, %v4156
      %v4158 = vpop.f32.mrf.mxu0
      %v4159 = vadd.f32 0.0, %v4158
      %v4160 = vpop.f32.mrf.mxu0
      %v4161 = vadd.f32 0.0, %v4160
      %v4162 = vpop.f32.mrf.mxu0
      %v4163 = vadd.f32 0.0, %v4162
      %4164 = vmatprep.mubr.bf16.mxu0 %v1086
      %4165 = vmatmul.mubr.bf16.gmra.mxu0 %v1085
      %v4166 = vpop.f32.mrf.mxu0
      %v4167 = vadd.f32 0.0, %v4166
      %v4168 = vpop.f32.mrf.mxu0
      %v4169 = vadd.f32 0.0, %v4168
      %v4170 = vpop.f32.mrf.mxu0
      %v4171 = vadd.f32 0.0, %v4170
      %v4172 = vpop.f32.mrf.mxu0
      %v4173 = vadd.f32 0.0, %v4172
      %4174 = vmatprep.mubr.bf16.mxu0 %v1090
      %4175 = vmatmul.mubr.bf16.gmra.mxu0 %v1089
      %v4176 = vpop.f32.mrf.mxu0
      %v4177 = vadd.f32 0.0, %v4176
      %v4178 = vpop.f32.mrf.mxu0
      %v4179 = vadd.f32 0.0, %v4178
      %v4180 = vpop.f32.mrf.mxu0
      %v4181 = vadd.f32 0.0, %v4180
      %v4182 = vpop.f32.mrf.mxu0
      %v4183 = vadd.f32 0.0, %v4182
      %4184 = vmatprep.mubr.bf16.mxu0 %v1094
      %4185 = vmatmul.mubr.bf16.gmra.mxu0 %v1093
      %v4186 = vpop.f32.mrf.mxu0
      %v4187 = vadd.f32 0.0, %v4186
      %v4188 = vpop.f32.mrf.mxu0
      %v4189 = vadd.f32 0.0, %v4188
      %v4190 = vpop.f32.mrf.mxu0
      %v4191 = vadd.f32 0.0, %v4190
      %v4192 = vpop.f32.mrf.mxu0
      %v4193 = vadd.f32 0.0, %v4192
      %4194 = vmatprep.mubr.bf16.mxu0 %v1098
      %4195 = vmatmul.mubr.bf16.gmra.mxu0 %v1097
      %v4196 = vpop.f32.mrf.mxu0
      %v4197 = vadd.f32 0.0, %v4196
      %v4198 = vpop.f32.mrf.mxu0
      %v4199 = vadd.f32 0.0, %v4198
      %v4200 = vpop.f32.mrf.mxu0
      %v4201 = vadd.f32 0.0, %v4200
      %v4202 = vpop.f32.mrf.mxu0
      %v4203 = vadd.f32 0.0, %v4202
      %4204 = vmatprep.mubr.bf16.mxu0 %v1102
      %4205 = vmatmul.mubr.bf16.gmra.mxu0 %v1101
      %v4206 = vpop.f32.mrf.mxu0
      %v4207 = vadd.f32 0.0, %v4206
      %v4208 = vpop.f32.mrf.mxu0
      %v4209 = vadd.f32 0.0, %v4208
      %v4210 = vpop.f32.mrf.mxu0
      %v4211 = vadd.f32 0.0, %v4210
      %v4212 = vpop.f32.mrf.mxu0
      %v4213 = vadd.f32 0.0, %v4212
      %4214 = vmatprep.mubr.bf16.mxu0 %v1106
      %4215 = vmatmul.mubr.bf16.gmra.mxu0 %v1105
      %v4216 = vpop.f32.mrf.mxu0
      %v4217 = vadd.f32 0.0, %v4216
      %v4218 = vpop.f32.mrf.mxu0
      %v4219 = vadd.f32 0.0, %v4218
      %v4220 = vpop.f32.mrf.mxu0
      %v4221 = vadd.f32 0.0, %v4220
      %v4222 = vpop.f32.mrf.mxu0
      %v4223 = vadd.f32 0.0, %v4222
      %4224 = vmatprep.mubr.bf16.mxu0 %v1110
      %4225 = vmatmul.mubr.bf16.gmra.mxu0 %v1109
      %v4226 = vpop.f32.mrf.mxu0
      %v4227 = vadd.f32 0.0, %v4226
      %v4228 = vpop.f32.mrf.mxu0
      %v4229 = vadd.f32 0.0, %v4228
      %v4230 = vpop.f32.mrf.mxu0
      %v4231 = vadd.f32 0.0, %v4230
      %v4232 = vpop.f32.mrf.mxu0
      %v4233 = vadd.f32 0.0, %v4232
      %4234 = vmatprep.mubr.bf16.mxu0 %v1114
      %4235 = vmatmul.mubr.bf16.gmra.mxu0 %v1113
      %v4236 = vpop.f32.mrf.mxu0
      %v4237 = vadd.f32 0.0, %v4236
      %v4238 = vpop.f32.mrf.mxu0
      %v4239 = vadd.f32 0.0, %v4238
      %v4240 = vpop.f32.mrf.mxu0
      %v4241 = vadd.f32 0.0, %v4240
      %v4242 = vpop.f32.mrf.mxu0
      %v4243 = vadd.f32 0.0, %v4242
      %4244 = vmatprep.mubr.bf16.mxu0 %v1118
      %4245 = vmatmul.mubr.bf16.gmra.mxu0 %v1117
      %v4246 = vpop.f32.mrf.mxu0
      %v4247 = vadd.f32 0.0, %v4246
      %v4248 = vpop.f32.mrf.mxu0
      %v4249 = vadd.f32 0.0, %v4248
      %v4250 = vpop.f32.mrf.mxu0
      %v4251 = vadd.f32 0.0, %v4250
      %v4252 = vpop.f32.mrf.mxu0
      %v4253 = vadd.f32 0.0, %v4252
      %4254 = vmatprep.mubr.bf16.mxu0 %v1122
      %4255 = vmatmul.mubr.bf16.gmra.mxu0 %v1121
      %v4256 = vpop.f32.mrf.mxu0
      %v4257 = vadd.f32 0.0, %v4256
      %v4258 = vpop.f32.mrf.mxu0
      %v4259 = vadd.f32 0.0, %v4258
      %v4260 = vpop.f32.mrf.mxu0
      %v4261 = vadd.f32 0.0, %v4260
      %v4262 = vpop.f32.mrf.mxu0
      %v4263 = vadd.f32 0.0, %v4262
      %4264 = vmatprep.mubr.bf16.mxu0 %v1126
      %4265 = vmatmul.mubr.bf16.gmra.mxu0 %v1125
      %v4266 = vpop.f32.mrf.mxu0
      %v4267 = vadd.f32 0.0, %v4266
      %v4268 = vpop.f32.mrf.mxu0
      %v4269 = vadd.f32 0.0, %v4268
      %v4270 = vpop.f32.mrf.mxu0
      %v4271 = vadd.f32 0.0, %v4270
      %v4272 = vpop.f32.mrf.mxu0
      %v4273 = vadd.f32 0.0, %v4272
      %4274 = vmatprep.mubr.bf16.mxu0 %v1130
      %4275 = vmatmul.mubr.bf16.gmra.mxu0 %v1129
      %v4276 = vpop.f32.mrf.mxu0
      %v4277 = vadd.f32 0.0, %v4276
      %v4278 = vpop.f32.mrf.mxu0
      %v4279 = vadd.f32 0.0, %v4278
      %v4280 = vpop.f32.mrf.mxu0
      %v4281 = vadd.f32 0.0, %v4280
      %v4282 = vpop.f32.mrf.mxu0
      %v4283 = vadd.f32 0.0, %v4282
      %4284 = vmatprep.mubr.bf16.mxu0 %v1134
      %4285 = vmatmul.mubr.bf16.gmra.mxu0 %v1133
      %v4286 = vpop.f32.mrf.mxu0
      %v4287 = vadd.f32 0.0, %v4286
      %v4288 = vpop.f32.mrf.mxu0
      %v4289 = vadd.f32 0.0, %v4288
      %v4290 = vpop.f32.mrf.mxu0
      %v4291 = vadd.f32 0.0, %v4290
      %v4292 = vpop.f32.mrf.mxu0
      %v4293 = vadd.f32 0.0, %v4292
      %4294 = vdwg.mxu0
      %4295 = vmatprep.subr.bf16.mxu0 %v2142
      %4296 = vmatpush1.bf16.msra.mxu0 %v2141
      %4297 = vmatprep.subr.bf16.mxu0 %v2134
      %4298 = vmatpush1.bf16.msra.mxu0 %v2133
      %4299 = vmatprep.subr.bf16.mxu0 %v2126
      %4300 = vmatpush1.bf16.msra.mxu0 %v2125
      %4301 = vmatprep.subr.bf16.mxu0 %v2118
      %4302 = vmatpush1.bf16.msra.mxu0 %v2117
      %4303 = vmatprep.subr.bf16.mxu0 %v2110
      %4304 = vmatpush1.bf16.msra.mxu0 %v2109
      %4305 = vmatprep.subr.bf16.mxu0 %v2102
      %4306 = vmatpush1.bf16.msra.mxu0 %v2101
      %4307 = vmatprep.subr.bf16.mxu0 %v2094
      %4308 = vmatpush1.bf16.msra.mxu0 %v2093
      %4309 = vmatprep.subr.bf16.mxu0 %v2086
      %4310 = vmatpush1.bf16.msra.mxu0 %v2085
      %4311 = vmatprep.subr.bf16.mxu0 0
      %4312 = vmatpush2.bf16.msra.mxu0 0
      %4313 = vmatprep.subr.bf16.mxu0 0
      %4314 = vmatpush2.bf16.msra.mxu0 0
      %4315 = vmatprep.subr.bf16.mxu0 %v2190
      %4316 = vmatpush2.bf16.msra.mxu0 %v2189
      %4317 = vmatprep.subr.bf16.mxu0 %v2182
      %4318 = vmatpush2.bf16.msra.mxu0 %v2181
      %4319 = vmatprep.subr.bf16.mxu0 %v2174
      %4320 = vmatpush2.bf16.msra.mxu0 %v2173
      %4321 = vmatprep.subr.bf16.mxu0 %v2166
      %4322 = vmatpush2.bf16.msra.mxu0 %v2165
      %4323 = vmatprep.subr.bf16.mxu0 %v2158
      %4324 = vmatpush2.bf16.msra.mxu0 %v2157
      %4325 = vmatprep.subr.bf16.mxu0 %v2150
      %4326 = vmatpush2.bf16.msra.mxu0 %v2149
      %4327 = vmatprep.mubr.bf16.mxu0 %v2435
      %4328 = vmatmul.mubr.bf16.gmra.mxu0 %v1011
      %v4329 = vpop.f32.mrf.mxu0
      %v4330 = vadd.f32 %v3977, %v4329
      %v4331 = vpop.f32.mrf.mxu0
      %v4332 = vadd.f32 %v3979, %v4331
      %v4333 = vpop.f32.mrf.mxu0
      %v4334 = vadd.f32 %v3981, %v4333
      %v4335 = vpop.f32.mrf.mxu0
      %v4336 = vadd.f32 %v3983, %v4335
      %4337 = vmatprep.mubr.bf16.mxu0 %v2438
      %4338 = vmatmul.mubr.bf16.gmra.mxu0 %v1015
      %v4339 = vpop.f32.mrf.mxu0
      %v4340 = vadd.f32 %v3987, %v4339
      %v4341 = vpop.f32.mrf.mxu0
      %v4342 = vadd.f32 %v3989, %v4341
      %v4343 = vpop.f32.mrf.mxu0
      %v4344 = vadd.f32 %v3991, %v4343
      %v4345 = vpop.f32.mrf.mxu0
      %v4346 = vadd.f32 %v3993, %v4345
      %4347 = vmatprep.mubr.bf16.mxu0 %v2441
      %4348 = vmatmul.mubr.bf16.gmra.mxu0 %v1019
      %v4349 = vpop.f32.mrf.mxu0
      %v4350 = vadd.f32 %v3997, %v4349
      %v4351 = vpop.f32.mrf.mxu0
      %v4352 = vadd.f32 %v3999, %v4351
      %v4353 = vpop.f32.mrf.mxu0
      %v4354 = vadd.f32 %v4001, %v4353
      %v4355 = vpop.f32.mrf.mxu0
      %v4356 = vadd.f32 %v4003, %v4355
      %4357 = vmatprep.mubr.bf16.mxu0 %v2444
      %4358 = vmatmul.mubr.bf16.gmra.mxu0 %v1023
      %v4359 = vpop.f32.mrf.mxu0
      %v4360 = vadd.f32 %v4007, %v4359
      %v4361 = vpop.f32.mrf.mxu0
      %v4362 = vadd.f32 %v4009, %v4361
      %v4363 = vpop.f32.mrf.mxu0
      %v4364 = vadd.f32 %v4011, %v4363
      %v4365 = vpop.f32.mrf.mxu0
      %v4366 = vadd.f32 %v4013, %v4365
      %4367 = vmatprep.mubr.bf16.mxu0 %v2447
      %4368 = vmatmul.mubr.bf16.gmra.mxu0 %v1027
      %v4369 = vpop.f32.mrf.mxu0
      %v4370 = vadd.f32 %v4017, %v4369
      %v4371 = vpop.f32.mrf.mxu0
      %v4372 = vadd.f32 %v4019, %v4371
      %v4373 = vpop.f32.mrf.mxu0
      %v4374 = vadd.f32 %v4021, %v4373
      %v4375 = vpop.f32.mrf.mxu0
      %v4376 = vadd.f32 %v4023, %v4375
      %4377 = vmatprep.mubr.bf16.mxu0 %v2450
      %4378 = vmatmul.mubr.bf16.gmra.mxu0 %v1031
      %v4379 = vpop.f32.mrf.mxu0
      %v4380 = vadd.f32 %v4027, %v4379
      %v4381 = vpop.f32.mrf.mxu0
      %v4382 = vadd.f32 %v4029, %v4381
      %v4383 = vpop.f32.mrf.mxu0
      %v4384 = vadd.f32 %v4031, %v4383
      %v4385 = vpop.f32.mrf.mxu0
      %v4386 = vadd.f32 %v4033, %v4385
      %4387 = vmatprep.mubr.bf16.mxu0 %v2453
      %4388 = vmatmul.mubr.bf16.gmra.mxu0 %v1035
      %v4389 = vpop.f32.mrf.mxu0
      %v4390 = vadd.f32 %v4037, %v4389
      %v4391 = vpop.f32.mrf.mxu0
      %v4392 = vadd.f32 %v4039, %v4391
      %v4393 = vpop.f32.mrf.mxu0
      %v4394 = vadd.f32 %v4041, %v4393
      %v4395 = vpop.f32.mrf.mxu0
      %v4396 = vadd.f32 %v4043, %v4395
      %4397 = vmatprep.mubr.bf16.mxu0 %v2456
      %4398 = vmatmul.mubr.bf16.gmra.mxu0 %v1039
      %v4399 = vpop.f32.mrf.mxu0
      %v4400 = vadd.f32 %v4047, %v4399
      %v4401 = vpop.f32.mrf.mxu0
      %v4402 = vadd.f32 %v4049, %v4401
      %v4403 = vpop.f32.mrf.mxu0
      %v4404 = vadd.f32 %v4051, %v4403
      %v4405 = vpop.f32.mrf.mxu0
      %v4406 = vadd.f32 %v4053, %v4405
      %4407 = vmatprep.mubr.bf16.mxu0 %v2459
      %4408 = vmatmul.mubr.bf16.gmra.mxu0 %v1043
      %v4409 = vpop.f32.mrf.mxu0
      %v4410 = vadd.f32 %v4057, %v4409
      %v4411 = vpop.f32.mrf.mxu0
      %v4412 = vadd.f32 %v4059, %v4411
      %v4413 = vpop.f32.mrf.mxu0
      %v4414 = vadd.f32 %v4061, %v4413
      %v4415 = vpop.f32.mrf.mxu0
      %v4416 = vadd.f32 %v4063, %v4415
      %4417 = vmatprep.mubr.bf16.mxu0 %v2462
      %4418 = vmatmul.mubr.bf16.gmra.mxu0 %v1047
      %v4419 = vpop.f32.mrf.mxu0
      %v4420 = vadd.f32 %v4067, %v4419
      %v4421 = vpop.f32.mrf.mxu0
      %v4422 = vadd.f32 %v4069, %v4421
      %v4423 = vpop.f32.mrf.mxu0
      %v4424 = vadd.f32 %v4071, %v4423
      %v4425 = vpop.f32.mrf.mxu0
      %v4426 = vadd.f32 %v4073, %v4425
      %4427 = vmatprep.mubr.bf16.mxu0 %v2465
      %4428 = vmatmul.mubr.bf16.gmra.mxu0 %v1051
      %v4429 = vpop.f32.mrf.mxu0
      %v4430 = vadd.f32 %v4077, %v4429
      %v4431 = vpop.f32.mrf.mxu0
      %v4432 = vadd.f32 %v4079, %v4431
      %v4433 = vpop.f32.mrf.mxu0
      %v4434 = vadd.f32 %v4081, %v4433
      %v4435 = vpop.f32.mrf.mxu0
      %v4436 = vadd.f32 %v4083, %v4435
      %4437 = vmatprep.mubr.bf16.mxu0 %v2468
      %4438 = vmatmul.mubr.bf16.gmra.mxu0 %v1055
      %v4439 = vpop.f32.mrf.mxu0
      %v4440 = vadd.f32 %v4087, %v4439
      %v4441 = vpop.f32.mrf.mxu0
      %v4442 = vadd.f32 %v4089, %v4441
      %v4443 = vpop.f32.mrf.mxu0
      %v4444 = vadd.f32 %v4091, %v4443
      %v4445 = vpop.f32.mrf.mxu0
      %v4446 = vadd.f32 %v4093, %v4445
      %4447 = vmatprep.mubr.bf16.mxu0 %v2471
      %4448 = vmatmul.mubr.bf16.gmra.mxu0 %v1059
      %v4449 = vpop.f32.mrf.mxu0
      %v4450 = vadd.f32 %v4097, %v4449
      %v4451 = vpop.f32.mrf.mxu0
      %v4452 = vadd.f32 %v4099, %v4451
      %v4453 = vpop.f32.mrf.mxu0
      %v4454 = vadd.f32 %v4101, %v4453
      %v4455 = vpop.f32.mrf.mxu0
      %v4456 = vadd.f32 %v4103, %v4455
      %4457 = vmatprep.mubr.bf16.mxu0 %v2474
      %4458 = vmatmul.mubr.bf16.gmra.mxu0 %v1063
      %v4459 = vpop.f32.mrf.mxu0
      %v4460 = vadd.f32 %v4107, %v4459
      %v4461 = vpop.f32.mrf.mxu0
      %v4462 = vadd.f32 %v4109, %v4461
      %v4463 = vpop.f32.mrf.mxu0
      %v4464 = vadd.f32 %v4111, %v4463
      %v4465 = vpop.f32.mrf.mxu0
      %v4466 = vadd.f32 %v4113, %v4465
      %4467 = vmatprep.mubr.bf16.mxu0 %v2477
      %4468 = vmatmul.mubr.bf16.gmra.mxu0 %v1067
      %v4469 = vpop.f32.mrf.mxu0
      %v4470 = vadd.f32 %v4117, %v4469
      %v4471 = vpop.f32.mrf.mxu0
      %v4472 = vadd.f32 %v4119, %v4471
      %v4473 = vpop.f32.mrf.mxu0
      %v4474 = vadd.f32 %v4121, %v4473
      %v4475 = vpop.f32.mrf.mxu0
      %v4476 = vadd.f32 %v4123, %v4475
      %4477 = vmatprep.mubr.bf16.mxu0 %v2480
      %4478 = vmatmul.mubr.bf16.gmra.mxu0 %v1071
      %v4479 = vpop.f32.mrf.mxu0
      %v4480 = vadd.f32 %v4127, %v4479
      %v4481 = vpop.f32.mrf.mxu0
      %v4482 = vadd.f32 %v4129, %v4481
      %v4483 = vpop.f32.mrf.mxu0
      %v4484 = vadd.f32 %v4131, %v4483
      %v4485 = vpop.f32.mrf.mxu0
      %v4486 = vadd.f32 %v4133, %v4485
      %4487 = vmatprep.mubr.bf16.mxu0 %v2483
      %4488 = vmatmul.mubr.bf16.gmra.mxu0 %v1075
      %v4489 = vpop.f32.mrf.mxu0
      %v4490 = vadd.f32 %v4137, %v4489
      %v4491 = vpop.f32.mrf.mxu0
      %v4492 = vadd.f32 %v4139, %v4491
      %v4493 = vpop.f32.mrf.mxu0
      %v4494 = vadd.f32 %v4141, %v4493
      %v4495 = vpop.f32.mrf.mxu0
      %v4496 = vadd.f32 %v4143, %v4495
      %4497 = vmatprep.mubr.bf16.mxu0 %v2486
      %4498 = vmatmul.mubr.bf16.gmra.mxu0 %v1079
      %v4499 = vpop.f32.mrf.mxu0
      %v4500 = vadd.f32 %v4147, %v4499
      %v4501 = vpop.f32.mrf.mxu0
      %v4502 = vadd.f32 %v4149, %v4501
      %v4503 = vpop.f32.mrf.mxu0
      %v4504 = vadd.f32 %v4151, %v4503
      %v4505 = vpop.f32.mrf.mxu0
      %v4506 = vadd.f32 %v4153, %v4505
      %4507 = vmatprep.mubr.bf16.mxu0 %v2489
      %4508 = vmatmul.mubr.bf16.gmra.mxu0 %v1083
      %v4509 = vpop.f32.mrf.mxu0
      %v4510 = vadd.f32 %v4157, %v4509
      %v4511 = vpop.f32.mrf.mxu0
      %v4512 = vadd.f32 %v4159, %v4511
      %v4513 = vpop.f32.mrf.mxu0
      %v4514 = vadd.f32 %v4161, %v4513
      %v4515 = vpop.f32.mrf.mxu0
      %v4516 = vadd.f32 %v4163, %v4515
      %4517 = vmatprep.mubr.bf16.mxu0 %v2492
      %4518 = vmatmul.mubr.bf16.gmra.mxu0 %v1087
      %v4519 = vpop.f32.mrf.mxu0
      %v4520 = vadd.f32 %v4167, %v4519
      %v4521 = vpop.f32.mrf.mxu0
      %v4522 = vadd.f32 %v4169, %v4521
      %v4523 = vpop.f32.mrf.mxu0
      %v4524 = vadd.f32 %v4171, %v4523
      %v4525 = vpop.f32.mrf.mxu0
      %v4526 = vadd.f32 %v4173, %v4525
      %4527 = vmatprep.mubr.bf16.mxu0 %v2495
      %4528 = vmatmul.mubr.bf16.gmra.mxu0 %v1091
      %v4529 = vpop.f32.mrf.mxu0
      %v4530 = vadd.f32 %v4177, %v4529
      %v4531 = vpop.f32.mrf.mxu0
      %v4532 = vadd.f32 %v4179, %v4531
      %v4533 = vpop.f32.mrf.mxu0
      %v4534 = vadd.f32 %v4181, %v4533
      %v4535 = vpop.f32.mrf.mxu0
      %v4536 = vadd.f32 %v4183, %v4535
      %4537 = vmatprep.mubr.bf16.mxu0 %v2498
      %4538 = vmatmul.mubr.bf16.gmra.mxu0 %v1095
      %v4539 = vpop.f32.mrf.mxu0
      %v4540 = vadd.f32 %v4187, %v4539
      %v4541 = vpop.f32.mrf.mxu0
      %v4542 = vadd.f32 %v4189, %v4541
      %v4543 = vpop.f32.mrf.mxu0
      %v4544 = vadd.f32 %v4191, %v4543
      %v4545 = vpop.f32.mrf.mxu0
      %v4546 = vadd.f32 %v4193, %v4545
      %4547 = vmatprep.mubr.bf16.mxu0 %v2501
      %4548 = vmatmul.mubr.bf16.gmra.mxu0 %v1099
      %v4549 = vpop.f32.mrf.mxu0
      %v4550 = vadd.f32 %v4197, %v4549
      %v4551 = vpop.f32.mrf.mxu0
      %v4552 = vadd.f32 %v4199, %v4551
      %v4553 = vpop.f32.mrf.mxu0
      %v4554 = vadd.f32 %v4201, %v4553
      %v4555 = vpop.f32.mrf.mxu0
      %v4556 = vadd.f32 %v4203, %v4555
      %4557 = vmatprep.mubr.bf16.mxu0 %v2504
      %4558 = vmatmul.mubr.bf16.gmra.mxu0 %v1103
      %v4559 = vpop.f32.mrf.mxu0
      %v4560 = vadd.f32 %v4207, %v4559
      %v4561 = vpop.f32.mrf.mxu0
      %v4562 = vadd.f32 %v4209, %v4561
      %v4563 = vpop.f32.mrf.mxu0
      %v4564 = vadd.f32 %v4211, %v4563
      %v4565 = vpop.f32.mrf.mxu0
      %v4566 = vadd.f32 %v4213, %v4565
      %4567 = vmatprep.mubr.bf16.mxu0 %v2507
      %4568 = vmatmul.mubr.bf16.gmra.mxu0 %v1107
      %v4569 = vpop.f32.mrf.mxu0
      %v4570 = vadd.f32 %v4217, %v4569
      %v4571 = vpop.f32.mrf.mxu0
      %v4572 = vadd.f32 %v4219, %v4571
      %v4573 = vpop.f32.mrf.mxu0
      %v4574 = vadd.f32 %v4221, %v4573
      %v4575 = vpop.f32.mrf.mxu0
      %v4576 = vadd.f32 %v4223, %v4575
      %4577 = vmatprep.mubr.bf16.mxu0 %v2510
      %4578 = vmatmul.mubr.bf16.gmra.mxu0 %v1111
      %v4579 = vpop.f32.mrf.mxu0
      %v4580 = vadd.f32 %v4227, %v4579
      %v4581 = vpop.f32.mrf.mxu0
      %v4582 = vadd.f32 %v4229, %v4581
      %v4583 = vpop.f32.mrf.mxu0
      %v4584 = vadd.f32 %v4231, %v4583
      %v4585 = vpop.f32.mrf.mxu0
      %v4586 = vadd.f32 %v4233, %v4585
      %4587 = vmatprep.mubr.bf16.mxu0 %v2513
      %4588 = vmatmul.mubr.bf16.gmra.mxu0 %v1115
      %v4589 = vpop.f32.mrf.mxu0
      %v4590 = vadd.f32 %v4237, %v4589
      %v4591 = vpop.f32.mrf.mxu0
      %v4592 = vadd.f32 %v4239, %v4591
      %v4593 = vpop.f32.mrf.mxu0
      %v4594 = vadd.f32 %v4241, %v4593
      %v4595 = vpop.f32.mrf.mxu0
      %v4596 = vadd.f32 %v4243, %v4595
      %4597 = vmatprep.mubr.bf16.mxu0 %v2516
      %4598 = vmatmul.mubr.bf16.gmra.mxu0 %v1119
      %v4599 = vpop.f32.mrf.mxu0
      %v4600 = vadd.f32 %v4247, %v4599
      %v4601 = vpop.f32.mrf.mxu0
      %v4602 = vadd.f32 %v4249, %v4601
      %v4603 = vpop.f32.mrf.mxu0
      %v4604 = vadd.f32 %v4251, %v4603
      %v4605 = vpop.f32.mrf.mxu0
      %v4606 = vadd.f32 %v4253, %v4605
      %4607 = vmatprep.mubr.bf16.mxu0 %v2519
      %4608 = vmatmul.mubr.bf16.gmra.mxu0 %v1123
      %v4609 = vpop.f32.mrf.mxu0
      %v4610 = vadd.f32 %v4257, %v4609
      %v4611 = vpop.f32.mrf.mxu0
      %v4612 = vadd.f32 %v4259, %v4611
      %v4613 = vpop.f32.mrf.mxu0
      %v4614 = vadd.f32 %v4261, %v4613
      %v4615 = vpop.f32.mrf.mxu0
      %v4616 = vadd.f32 %v4263, %v4615
      %4617 = vmatprep.mubr.bf16.mxu0 %v2522
      %4618 = vmatmul.mubr.bf16.gmra.mxu0 %v1127
      %v4619 = vpop.f32.mrf.mxu0
      %v4620 = vadd.f32 %v4267, %v4619
      %v4621 = vpop.f32.mrf.mxu0
      %v4622 = vadd.f32 %v4269, %v4621
      %v4623 = vpop.f32.mrf.mxu0
      %v4624 = vadd.f32 %v4271, %v4623
      %v4625 = vpop.f32.mrf.mxu0
      %v4626 = vadd.f32 %v4273, %v4625
      %4627 = vmatprep.mubr.bf16.mxu0 %v2525
      %4628 = vmatmul.mubr.bf16.gmra.mxu0 %v1131
      %v4629 = vpop.f32.mrf.mxu0
      %v4630 = vadd.f32 %v4277, %v4629
      %v4631 = vpop.f32.mrf.mxu0
      %v4632 = vadd.f32 %v4279, %v4631
      %v4633 = vpop.f32.mrf.mxu0
      %v4634 = vadd.f32 %v4281, %v4633
      %v4635 = vpop.f32.mrf.mxu0
      %v4636 = vadd.f32 %v4283, %v4635
      %4637 = vmatprep.mubr.bf16.mxu0 %v2528
      %4638 = vmatmul.mubr.bf16.gmra.mxu0 %v1135
      %v4639 = vpop.f32.mrf.mxu0
      %v4640 = vadd.f32 %v4287, %v4639
      %v4641 = vpop.f32.mrf.mxu0
      %v4642 = vadd.f32 %v4289, %v4641
      %v4643 = vpop.f32.mrf.mxu0
      %v4644 = vadd.f32 %v4291, %v4643
      %v4645 = vpop.f32.mrf.mxu0
      %v4646 = vadd.f32 %v4293, %v4645
      %4647 = vdwg.mxu0
      %4648 = vmatprep.subr.bf16.mxu0 %v2016
      %4649 = vmatpush1.bf16.msra.mxu0 %v2015
      %4650 = vmatprep.subr.bf16.mxu0 %v2008
      %4651 = vmatpush1.bf16.msra.mxu0 %v2007
      %4652 = vmatprep.subr.bf16.mxu0 %v2000
      %4653 = vmatpush1.bf16.msra.mxu0 %v1999
      %4654 = vmatprep.subr.bf16.mxu0 %v1992
      %4655 = vmatpush1.bf16.msra.mxu0 %v1991
      %4656 = vmatprep.subr.bf16.mxu0 %v1984
      %4657 = vmatpush1.bf16.msra.mxu0 %v1983
      %4658 = vmatprep.subr.bf16.mxu0 %v1976
      %4659 = vmatpush1.bf16.msra.mxu0 %v1975
      %4660 = vmatprep.subr.bf16.mxu0 %v1968
      %4661 = vmatpush1.bf16.msra.mxu0 %v1967
      %4662 = vmatprep.subr.bf16.mxu0 %v1960
      %4663 = vmatpush1.bf16.msra.mxu0 %v1959
      %4664 = vmatprep.subr.bf16.mxu0 %v2080
      %4665 = vmatpush2.bf16.msra.mxu0 %v2079
      %4666 = vmatprep.subr.bf16.mxu0 %v2072
      %4667 = vmatpush2.bf16.msra.mxu0 %v2071
      %4668 = vmatprep.subr.bf16.mxu0 %v2064
      %4669 = vmatpush2.bf16.msra.mxu0 %v2063
      %4670 = vmatprep.subr.bf16.mxu0 %v2056
      %4671 = vmatpush2.bf16.msra.mxu0 %v2055
      %4672 = vmatprep.subr.bf16.mxu0 %v2048
      %4673 = vmatpush2.bf16.msra.mxu0 %v2047
      %4674 = vmatprep.subr.bf16.mxu0 %v2040
      %4675 = vmatpush2.bf16.msra.mxu0 %v2039
      %4676 = vmatprep.subr.bf16.mxu0 %v2032
      %4677 = vmatpush2.bf16.msra.mxu0 %v2031
      %4678 = vmatprep.subr.bf16.mxu0 %v2024
      %4679 = vmatpush2.bf16.msra.mxu0 %v2023
      %4680 = vmatprep.mubr.bf16.mxu0 %v1010
      %4681 = vmatmul.mubr.bf16.gmra.mxu0 %v1009
      %v4682 = vpop.f32.mrf.mxu0
      %v4683 = vadd.f32 0.0, %v4682
      %v4684 = vpop.f32.mrf.mxu0
      %v4685 = vadd.f32 0.0, %v4684
      %v4686 = vpop.f32.mrf.mxu0
      %v4687 = vadd.f32 0.0, %v4686
      %v4688 = vpop.f32.mrf.mxu0
      %v4689 = vadd.f32 0.0, %v4688
      %4690 = vmatprep.mubr.bf16.mxu0 %v1014
      %4691 = vmatmul.mubr.bf16.gmra.mxu0 %v1013
      %v4692 = vpop.f32.mrf.mxu0
      %v4693 = vadd.f32 0.0, %v4692
      %v4694 = vpop.f32.mrf.mxu0
      %v4695 = vadd.f32 0.0, %v4694
      %v4696 = vpop.f32.mrf.mxu0
      %v4697 = vadd.f32 0.0, %v4696
      %v4698 = vpop.f32.mrf.mxu0
      %v4699 = vadd.f32 0.0, %v4698
      %4700 = vmatprep.mubr.bf16.mxu0 %v1018
      %4701 = vmatmul.mubr.bf16.gmra.mxu0 %v1017
      %v4702 = vpop.f32.mrf.mxu0
      %v4703 = vadd.f32 0.0, %v4702
      %v4704 = vpop.f32.mrf.mxu0
      %v4705 = vadd.f32 0.0, %v4704
      %v4706 = vpop.f32.mrf.mxu0
      %v4707 = vadd.f32 0.0, %v4706
      %v4708 = vpop.f32.mrf.mxu0
      %v4709 = vadd.f32 0.0, %v4708
      %4710 = vmatprep.mubr.bf16.mxu0 %v1022
      %4711 = vmatmul.mubr.bf16.gmra.mxu0 %v1021
      %v4712 = vpop.f32.mrf.mxu0
      %v4713 = vadd.f32 0.0, %v4712
      %v4714 = vpop.f32.mrf.mxu0
      %v4715 = vadd.f32 0.0, %v4714
      %v4716 = vpop.f32.mrf.mxu0
      %v4717 = vadd.f32 0.0, %v4716
      %v4718 = vpop.f32.mrf.mxu0
      %v4719 = vadd.f32 0.0, %v4718
      %4720 = vmatprep.mubr.bf16.mxu0 %v1026
      %4721 = vmatmul.mubr.bf16.gmra.mxu0 %v1025
      %v4722 = vpop.f32.mrf.mxu0
      %v4723 = vadd.f32 0.0, %v4722
      %v4724 = vpop.f32.mrf.mxu0
      %v4725 = vadd.f32 0.0, %v4724
      %v4726 = vpop.f32.mrf.mxu0
      %v4727 = vadd.f32 0.0, %v4726
      %v4728 = vpop.f32.mrf.mxu0
      %v4729 = vadd.f32 0.0, %v4728
      %4730 = vmatprep.mubr.bf16.mxu0 %v1030
      %4731 = vmatmul.mubr.bf16.gmra.mxu0 %v1029
      %v4732 = vpop.f32.mrf.mxu0
      %v4733 = vadd.f32 0.0, %v4732
      %v4734 = vpop.f32.mrf.mxu0
      %v4735 = vadd.f32 0.0, %v4734
      %v4736 = vpop.f32.mrf.mxu0
      %v4737 = vadd.f32 0.0, %v4736
      %v4738 = vpop.f32.mrf.mxu0
      %v4739 = vadd.f32 0.0, %v4738
      %4740 = vmatprep.mubr.bf16.mxu0 %v1034
      %4741 = vmatmul.mubr.bf16.gmra.mxu0 %v1033
      %v4742 = vpop.f32.mrf.mxu0
      %v4743 = vadd.f32 0.0, %v4742
      %v4744 = vpop.f32.mrf.mxu0
      %v4745 = vadd.f32 0.0, %v4744
      %v4746 = vpop.f32.mrf.mxu0
      %v4747 = vadd.f32 0.0, %v4746
      %v4748 = vpop.f32.mrf.mxu0
      %v4749 = vadd.f32 0.0, %v4748
      %4750 = vmatprep.mubr.bf16.mxu0 %v1038
      %4751 = vmatmul.mubr.bf16.gmra.mxu0 %v1037
      %v4752 = vpop.f32.mrf.mxu0
      %v4753 = vadd.f32 0.0, %v4752
      %v4754 = vpop.f32.mrf.mxu0
      %v4755 = vadd.f32 0.0, %v4754
      %v4756 = vpop.f32.mrf.mxu0
      %v4757 = vadd.f32 0.0, %v4756
      %v4758 = vpop.f32.mrf.mxu0
      %v4759 = vadd.f32 0.0, %v4758
      %4760 = vmatprep.mubr.bf16.mxu0 %v1042
      %4761 = vmatmul.mubr.bf16.gmra.mxu0 %v1041
      %v4762 = vpop.f32.mrf.mxu0
      %v4763 = vadd.f32 0.0, %v4762
      %v4764 = vpop.f32.mrf.mxu0
      %v4765 = vadd.f32 0.0, %v4764
      %v4766 = vpop.f32.mrf.mxu0
      %v4767 = vadd.f32 0.0, %v4766
      %v4768 = vpop.f32.mrf.mxu0
      %v4769 = vadd.f32 0.0, %v4768
      %4770 = vmatprep.mubr.bf16.mxu0 %v1046
      %4771 = vmatmul.mubr.bf16.gmra.mxu0 %v1045
      %v4772 = vpop.f32.mrf.mxu0
      %v4773 = vadd.f32 0.0, %v4772
      %v4774 = vpop.f32.mrf.mxu0
      %v4775 = vadd.f32 0.0, %v4774
      %v4776 = vpop.f32.mrf.mxu0
      %v4777 = vadd.f32 0.0, %v4776
      %v4778 = vpop.f32.mrf.mxu0
      %v4779 = vadd.f32 0.0, %v4778
      %4780 = vmatprep.mubr.bf16.mxu0 %v1050
      %4781 = vmatmul.mubr.bf16.gmra.mxu0 %v1049
      %v4782 = vpop.f32.mrf.mxu0
      %v4783 = vadd.f32 0.0, %v4782
      %v4784 = vpop.f32.mrf.mxu0
      %v4785 = vadd.f32 0.0, %v4784
      %v4786 = vpop.f32.mrf.mxu0
      %v4787 = vadd.f32 0.0, %v4786
      %v4788 = vpop.f32.mrf.mxu0
      %v4789 = vadd.f32 0.0, %v4788
      %4790 = vmatprep.mubr.bf16.mxu0 %v1054
      %4791 = vmatmul.mubr.bf16.gmra.mxu0 %v1053
      %v4792 = vpop.f32.mrf.mxu0
      %v4793 = vadd.f32 0.0, %v4792
      %v4794 = vpop.f32.mrf.mxu0
      %v4795 = vadd.f32 0.0, %v4794
      %v4796 = vpop.f32.mrf.mxu0
      %v4797 = vadd.f32 0.0, %v4796
      %v4798 = vpop.f32.mrf.mxu0
      %v4799 = vadd.f32 0.0, %v4798
      %4800 = vmatprep.mubr.bf16.mxu0 %v1058
      %4801 = vmatmul.mubr.bf16.gmra.mxu0 %v1057
      %v4802 = vpop.f32.mrf.mxu0
      %v4803 = vadd.f32 0.0, %v4802
      %v4804 = vpop.f32.mrf.mxu0
      %v4805 = vadd.f32 0.0, %v4804
      %v4806 = vpop.f32.mrf.mxu0
      %v4807 = vadd.f32 0.0, %v4806
      %v4808 = vpop.f32.mrf.mxu0
      %v4809 = vadd.f32 0.0, %v4808
      %4810 = vmatprep.mubr.bf16.mxu0 %v1062
      %4811 = vmatmul.mubr.bf16.gmra.mxu0 %v1061
      %v4812 = vpop.f32.mrf.mxu0
      %v4813 = vadd.f32 0.0, %v4812
      %v4814 = vpop.f32.mrf.mxu0
      %v4815 = vadd.f32 0.0, %v4814
      %v4816 = vpop.f32.mrf.mxu0
      %v4817 = vadd.f32 0.0, %v4816
      %v4818 = vpop.f32.mrf.mxu0
      %v4819 = vadd.f32 0.0, %v4818
      %4820 = vmatprep.mubr.bf16.mxu0 %v1066
      %4821 = vmatmul.mubr.bf16.gmra.mxu0 %v1065
      %v4822 = vpop.f32.mrf.mxu0
      %v4823 = vadd.f32 0.0, %v4822
      %v4824 = vpop.f32.mrf.mxu0
      %v4825 = vadd.f32 0.0, %v4824
      %v4826 = vpop.f32.mrf.mxu0
      %v4827 = vadd.f32 0.0, %v4826
      %v4828 = vpop.f32.mrf.mxu0
      %v4829 = vadd.f32 0.0, %v4828
      %4830 = vmatprep.mubr.bf16.mxu0 %v1070
      %4831 = vmatmul.mubr.bf16.gmra.mxu0 %v1069
      %v4832 = vpop.f32.mrf.mxu0
      %v4833 = vadd.f32 0.0, %v4832
      %v4834 = vpop.f32.mrf.mxu0
      %v4835 = vadd.f32 0.0, %v4834
      %v4836 = vpop.f32.mrf.mxu0
      %v4837 = vadd.f32 0.0, %v4836
      %v4838 = vpop.f32.mrf.mxu0
      %v4839 = vadd.f32 0.0, %v4838
      %4840 = vmatprep.mubr.bf16.mxu0 %v1074
      %4841 = vmatmul.mubr.bf16.gmra.mxu0 %v1073
      %v4842 = vpop.f32.mrf.mxu0
      %v4843 = vadd.f32 0.0, %v4842
      %v4844 = vpop.f32.mrf.mxu0
      %v4845 = vadd.f32 0.0, %v4844
      %v4846 = vpop.f32.mrf.mxu0
      %v4847 = vadd.f32 0.0, %v4846
      %v4848 = vpop.f32.mrf.mxu0
      %v4849 = vadd.f32 0.0, %v4848
      %4850 = vmatprep.mubr.bf16.mxu0 %v1078
      %4851 = vmatmul.mubr.bf16.gmra.mxu0 %v1077
      %v4852 = vpop.f32.mrf.mxu0
      %v4853 = vadd.f32 0.0, %v4852
      %v4854 = vpop.f32.mrf.mxu0
      %v4855 = vadd.f32 0.0, %v4854
      %v4856 = vpop.f32.mrf.mxu0
      %v4857 = vadd.f32 0.0, %v4856
      %v4858 = vpop.f32.mrf.mxu0
      %v4859 = vadd.f32 0.0, %v4858
      %4860 = vmatprep.mubr.bf16.mxu0 %v1082
      %4861 = vmatmul.mubr.bf16.gmra.mxu0 %v1081
      %v4862 = vpop.f32.mrf.mxu0
      %v4863 = vadd.f32 0.0, %v4862
      %v4864 = vpop.f32.mrf.mxu0
      %v4865 = vadd.f32 0.0, %v4864
      %v4866 = vpop.f32.mrf.mxu0
      %v4867 = vadd.f32 0.0, %v4866
      %v4868 = vpop.f32.mrf.mxu0
      %v4869 = vadd.f32 0.0, %v4868
      %4870 = vmatprep.mubr.bf16.mxu0 %v1086
      %4871 = vmatmul.mubr.bf16.gmra.mxu0 %v1085
      %v4872 = vpop.f32.mrf.mxu0
      %v4873 = vadd.f32 0.0, %v4872
      %v4874 = vpop.f32.mrf.mxu0
      %v4875 = vadd.f32 0.0, %v4874
      %v4876 = vpop.f32.mrf.mxu0
      %v4877 = vadd.f32 0.0, %v4876
      %v4878 = vpop.f32.mrf.mxu0
      %v4879 = vadd.f32 0.0, %v4878
      %4880 = vmatprep.mubr.bf16.mxu0 %v1090
      %4881 = vmatmul.mubr.bf16.gmra.mxu0 %v1089
      %v4882 = vpop.f32.mrf.mxu0
      %v4883 = vadd.f32 0.0, %v4882
      %v4884 = vpop.f32.mrf.mxu0
      %v4885 = vadd.f32 0.0, %v4884
      %v4886 = vpop.f32.mrf.mxu0
      %v4887 = vadd.f32 0.0, %v4886
      %v4888 = vpop.f32.mrf.mxu0
      %v4889 = vadd.f32 0.0, %v4888
      %4890 = vmatprep.mubr.bf16.mxu0 %v1094
      %4891 = vmatmul.mubr.bf16.gmra.mxu0 %v1093
      %v4892 = vpop.f32.mrf.mxu0
      %v4893 = vadd.f32 0.0, %v4892
      %v4894 = vpop.f32.mrf.mxu0
      %v4895 = vadd.f32 0.0, %v4894
      %v4896 = vpop.f32.mrf.mxu0
      %v4897 = vadd.f32 0.0, %v4896
      %v4898 = vpop.f32.mrf.mxu0
      %v4899 = vadd.f32 0.0, %v4898
      %4900 = vmatprep.mubr.bf16.mxu0 %v1098
      %4901 = vmatmul.mubr.bf16.gmra.mxu0 %v1097
      %v4902 = vpop.f32.mrf.mxu0
      %v4903 = vadd.f32 0.0, %v4902
      %v4904 = vpop.f32.mrf.mxu0
      %v4905 = vadd.f32 0.0, %v4904
      %v4906 = vpop.f32.mrf.mxu0
      %v4907 = vadd.f32 0.0, %v4906
      %v4908 = vpop.f32.mrf.mxu0
      %v4909 = vadd.f32 0.0, %v4908
      %4910 = vmatprep.mubr.bf16.mxu0 %v1102
      %4911 = vmatmul.mubr.bf16.gmra.mxu0 %v1101
      %v4912 = vpop.f32.mrf.mxu0
      %v4913 = vadd.f32 0.0, %v4912
      %v4914 = vpop.f32.mrf.mxu0
      %v4915 = vadd.f32 0.0, %v4914
      %v4916 = vpop.f32.mrf.mxu0
      %v4917 = vadd.f32 0.0, %v4916
      %v4918 = vpop.f32.mrf.mxu0
      %v4919 = vadd.f32 0.0, %v4918
      %4920 = vmatprep.mubr.bf16.mxu0 %v1106
      %4921 = vmatmul.mubr.bf16.gmra.mxu0 %v1105
      %v4922 = vpop.f32.mrf.mxu0
      %v4923 = vadd.f32 0.0, %v4922
      %v4924 = vpop.f32.mrf.mxu0
      %v4925 = vadd.f32 0.0, %v4924
      %v4926 = vpop.f32.mrf.mxu0
      %v4927 = vadd.f32 0.0, %v4926
      %v4928 = vpop.f32.mrf.mxu0
      %v4929 = vadd.f32 0.0, %v4928
      %4930 = vmatprep.mubr.bf16.mxu0 %v1110
      %4931 = vmatmul.mubr.bf16.gmra.mxu0 %v1109
      %v4932 = vpop.f32.mrf.mxu0
      %v4933 = vadd.f32 0.0, %v4932
      %v4934 = vpop.f32.mrf.mxu0
      %v4935 = vadd.f32 0.0, %v4934
      %v4936 = vpop.f32.mrf.mxu0
      %v4937 = vadd.f32 0.0, %v4936
      %v4938 = vpop.f32.mrf.mxu0
      %v4939 = vadd.f32 0.0, %v4938
      %4940 = vmatprep.mubr.bf16.mxu0 %v1114
      %4941 = vmatmul.mubr.bf16.gmra.mxu0 %v1113
      %v4942 = vpop.f32.mrf.mxu0
      %v4943 = vadd.f32 0.0, %v4942
      %v4944 = vpop.f32.mrf.mxu0
      %v4945 = vadd.f32 0.0, %v4944
      %v4946 = vpop.f32.mrf.mxu0
      %v4947 = vadd.f32 0.0, %v4946
      %v4948 = vpop.f32.mrf.mxu0
      %v4949 = vadd.f32 0.0, %v4948
      %4950 = vmatprep.mubr.bf16.mxu0 %v1118
      %4951 = vmatmul.mubr.bf16.gmra.mxu0 %v1117
      %v4952 = vpop.f32.mrf.mxu0
      %v4953 = vadd.f32 0.0, %v4952
      %v4954 = vpop.f32.mrf.mxu0
      %v4955 = vadd.f32 0.0, %v4954
      %v4956 = vpop.f32.mrf.mxu0
      %v4957 = vadd.f32 0.0, %v4956
      %v4958 = vpop.f32.mrf.mxu0
      %v4959 = vadd.f32 0.0, %v4958
      %4960 = vmatprep.mubr.bf16.mxu0 %v1122
      %4961 = vmatmul.mubr.bf16.gmra.mxu0 %v1121
      %v4962 = vpop.f32.mrf.mxu0
      %v4963 = vadd.f32 0.0, %v4962
      %v4964 = vpop.f32.mrf.mxu0
      %v4965 = vadd.f32 0.0, %v4964
      %v4966 = vpop.f32.mrf.mxu0
      %v4967 = vadd.f32 0.0, %v4966
      %v4968 = vpop.f32.mrf.mxu0
      %v4969 = vadd.f32 0.0, %v4968
      %4970 = vmatprep.mubr.bf16.mxu0 %v1126
      %4971 = vmatmul.mubr.bf16.gmra.mxu0 %v1125
      %v4972 = vpop.f32.mrf.mxu0
      %v4973 = vadd.f32 0.0, %v4972
      %v4974 = vpop.f32.mrf.mxu0
      %v4975 = vadd.f32 0.0, %v4974
      %v4976 = vpop.f32.mrf.mxu0
      %v4977 = vadd.f32 0.0, %v4976
      %v4978 = vpop.f32.mrf.mxu0
      %v4979 = vadd.f32 0.0, %v4978
      %4980 = vmatprep.mubr.bf16.mxu0 %v1130
      %4981 = vmatmul.mubr.bf16.gmra.mxu0 %v1129
      %v4982 = vpop.f32.mrf.mxu0
      %v4983 = vadd.f32 0.0, %v4982
      %v4984 = vpop.f32.mrf.mxu0
      %v4985 = vadd.f32 0.0, %v4984
      %v4986 = vpop.f32.mrf.mxu0
      %v4987 = vadd.f32 0.0, %v4986
      %v4988 = vpop.f32.mrf.mxu0
      %v4989 = vadd.f32 0.0, %v4988
      %4990 = vmatprep.mubr.bf16.mxu0 %v1134
      %4991 = vmatmul.mubr.bf16.gmra.mxu0 %v1133
      %v4992 = vpop.f32.mrf.mxu0
      %v4993 = vadd.f32 0.0, %v4992
      %v4994 = vpop.f32.mrf.mxu0
      %v4995 = vadd.f32 0.0, %v4994
      %v4996 = vpop.f32.mrf.mxu0
      %v4997 = vadd.f32 0.0, %v4996
      %v4998 = vpop.f32.mrf.mxu0
      %v4999 = vadd.f32 0.0, %v4998
      %5000 = vdwg.mxu0
      %5001 = vmatprep.subr.bf16.mxu0 %v2144
      %5002 = vmatpush1.bf16.msra.mxu0 %v2143
      %5003 = vmatprep.subr.bf16.mxu0 %v2136
      %5004 = vmatpush1.bf16.msra.mxu0 %v2135
      %5005 = vmatprep.subr.bf16.mxu0 %v2128
      %5006 = vmatpush1.bf16.msra.mxu0 %v2127
      %5007 = vmatprep.subr.bf16.mxu0 %v2120
      %5008 = vmatpush1.bf16.msra.mxu0 %v2119
      %5009 = vmatprep.subr.bf16.mxu0 %v2112
      %5010 = vmatpush1.bf16.msra.mxu0 %v2111
      %5011 = vmatprep.subr.bf16.mxu0 %v2104
      %5012 = vmatpush1.bf16.msra.mxu0 %v2103
      %5013 = vmatprep.subr.bf16.mxu0 %v2096
      %5014 = vmatpush1.bf16.msra.mxu0 %v2095
      %5015 = vmatprep.subr.bf16.mxu0 %v2088
      %5016 = vmatpush1.bf16.msra.mxu0 %v2087
      %5017 = vmatprep.subr.bf16.mxu0 0
      %5018 = vmatpush2.bf16.msra.mxu0 0
      %5019 = vmatprep.subr.bf16.mxu0 0
      %5020 = vmatpush2.bf16.msra.mxu0 0
      %5021 = vmatprep.subr.bf16.mxu0 %v2192
      %5022 = vmatpush2.bf16.msra.mxu0 %v2191
      %5023 = vmatprep.subr.bf16.mxu0 %v2184
      %5024 = vmatpush2.bf16.msra.mxu0 %v2183
      %5025 = vmatprep.subr.bf16.mxu0 %v2176
      %5026 = vmatpush2.bf16.msra.mxu0 %v2175
      %5027 = vmatprep.subr.bf16.mxu0 %v2168
      %5028 = vmatpush2.bf16.msra.mxu0 %v2167
      %5029 = vmatprep.subr.bf16.mxu0 %v2160
      %5030 = vmatpush2.bf16.msra.mxu0 %v2159
      %5031 = vmatprep.subr.bf16.mxu0 %v2152
      %5032 = vmatpush2.bf16.msra.mxu0 %v2151
      %5033 = vmatprep.mubr.bf16.mxu0 %v2435
      %5034 = vmatmul.mubr.bf16.gmra.mxu0 %v1011
      %v5035 = vpop.f32.mrf.mxu0
      %v5036 = vadd.f32 %v4683, %v5035
      %v5037 = vpop.f32.mrf.mxu0
      %v5038 = vadd.f32 %v4685, %v5037
      %v5039 = vpop.f32.mrf.mxu0
      %v5040 = vadd.f32 %v4687, %v5039
      %v5041 = vpop.f32.mrf.mxu0
      %v5042 = vadd.f32 %v4689, %v5041
      %5043 = vmatprep.mubr.bf16.mxu0 %v2438
      %5044 = vmatmul.mubr.bf16.gmra.mxu0 %v1015
      %v5045 = vpop.f32.mrf.mxu0
      %v5046 = vadd.f32 %v4693, %v5045
      %v5047 = vpop.f32.mrf.mxu0
      %v5048 = vadd.f32 %v4695, %v5047
      %v5049 = vpop.f32.mrf.mxu0
      %v5050 = vadd.f32 %v4697, %v5049
      %v5051 = vpop.f32.mrf.mxu0
      %v5052 = vadd.f32 %v4699, %v5051
      %5053 = vmatprep.mubr.bf16.mxu0 %v2441
      %5054 = vmatmul.mubr.bf16.gmra.mxu0 %v1019
      %v5055 = vpop.f32.mrf.mxu0
      %v5056 = vadd.f32 %v4703, %v5055
      %v5057 = vpop.f32.mrf.mxu0
      %v5058 = vadd.f32 %v4705, %v5057
      %v5059 = vpop.f32.mrf.mxu0
      %v5060 = vadd.f32 %v4707, %v5059
      %v5061 = vpop.f32.mrf.mxu0
      %v5062 = vadd.f32 %v4709, %v5061
      %5063 = vmatprep.mubr.bf16.mxu0 %v2444
      %5064 = vmatmul.mubr.bf16.gmra.mxu0 %v1023
      %v5065 = vpop.f32.mrf.mxu0
      %v5066 = vadd.f32 %v4713, %v5065
      %v5067 = vpop.f32.mrf.mxu0
      %v5068 = vadd.f32 %v4715, %v5067
      %v5069 = vpop.f32.mrf.mxu0
      %v5070 = vadd.f32 %v4717, %v5069
      %v5071 = vpop.f32.mrf.mxu0
      %v5072 = vadd.f32 %v4719, %v5071
      %5073 = vmatprep.mubr.bf16.mxu0 %v2447
      %5074 = vmatmul.mubr.bf16.gmra.mxu0 %v1027
      %v5075 = vpop.f32.mrf.mxu0
      %v5076 = vadd.f32 %v4723, %v5075
      %v5077 = vpop.f32.mrf.mxu0
      %v5078 = vadd.f32 %v4725, %v5077
      %v5079 = vpop.f32.mrf.mxu0
      %v5080 = vadd.f32 %v4727, %v5079
      %v5081 = vpop.f32.mrf.mxu0
      %v5082 = vadd.f32 %v4729, %v5081
      %5083 = vmatprep.mubr.bf16.mxu0 %v2450
      %5084 = vmatmul.mubr.bf16.gmra.mxu0 %v1031
      %v5085 = vpop.f32.mrf.mxu0
      %v5086 = vadd.f32 %v4733, %v5085
      %v5087 = vpop.f32.mrf.mxu0
      %v5088 = vadd.f32 %v4735, %v5087
      %v5089 = vpop.f32.mrf.mxu0
      %v5090 = vadd.f32 %v4737, %v5089
      %v5091 = vpop.f32.mrf.mxu0
      %v5092 = vadd.f32 %v4739, %v5091
      %5093 = vmatprep.mubr.bf16.mxu0 %v2453
      %5094 = vmatmul.mubr.bf16.gmra.mxu0 %v1035
      %v5095 = vpop.f32.mrf.mxu0
      %v5096 = vadd.f32 %v4743, %v5095
      %v5097 = vpop.f32.mrf.mxu0
      %v5098 = vadd.f32 %v4745, %v5097
      %v5099 = vpop.f32.mrf.mxu0
      %v5100 = vadd.f32 %v4747, %v5099
      %v5101 = vpop.f32.mrf.mxu0
      %v5102 = vadd.f32 %v4749, %v5101
      %5103 = vmatprep.mubr.bf16.mxu0 %v2456
      %5104 = vmatmul.mubr.bf16.gmra.mxu0 %v1039
      %v5105 = vpop.f32.mrf.mxu0
      %v5106 = vadd.f32 %v4753, %v5105
      %v5107 = vpop.f32.mrf.mxu0
      %v5108 = vadd.f32 %v4755, %v5107
      %v5109 = vpop.f32.mrf.mxu0
      %v5110 = vadd.f32 %v4757, %v5109
      %v5111 = vpop.f32.mrf.mxu0
      %v5112 = vadd.f32 %v4759, %v5111
      %5113 = vmatprep.mubr.bf16.mxu0 %v2459
      %5114 = vmatmul.mubr.bf16.gmra.mxu0 %v1043
      %v5115 = vpop.f32.mrf.mxu0
      %v5116 = vadd.f32 %v4763, %v5115
      %v5117 = vpop.f32.mrf.mxu0
      %v5118 = vadd.f32 %v4765, %v5117
      %v5119 = vpop.f32.mrf.mxu0
      %v5120 = vadd.f32 %v4767, %v5119
      %v5121 = vpop.f32.mrf.mxu0
      %v5122 = vadd.f32 %v4769, %v5121
      %5123 = vmatprep.mubr.bf16.mxu0 %v2462
      %5124 = vmatmul.mubr.bf16.gmra.mxu0 %v1047
      %v5125 = vpop.f32.mrf.mxu0
      %v5126 = vadd.f32 %v4773, %v5125
      %v5127 = vpop.f32.mrf.mxu0
      %v5128 = vadd.f32 %v4775, %v5127
      %v5129 = vpop.f32.mrf.mxu0
      %v5130 = vadd.f32 %v4777, %v5129
      %v5131 = vpop.f32.mrf.mxu0
      %v5132 = vadd.f32 %v4779, %v5131
      %5133 = vmatprep.mubr.bf16.mxu0 %v2465
      %5134 = vmatmul.mubr.bf16.gmra.mxu0 %v1051
      %v5135 = vpop.f32.mrf.mxu0
      %v5136 = vadd.f32 %v4783, %v5135
      %v5137 = vpop.f32.mrf.mxu0
      %v5138 = vadd.f32 %v4785, %v5137
      %v5139 = vpop.f32.mrf.mxu0
      %v5140 = vadd.f32 %v4787, %v5139
      %v5141 = vpop.f32.mrf.mxu0
      %v5142 = vadd.f32 %v4789, %v5141
      %5143 = vmatprep.mubr.bf16.mxu0 %v2468
      %5144 = vmatmul.mubr.bf16.gmra.mxu0 %v1055
      %v5145 = vpop.f32.mrf.mxu0
      %v5146 = vadd.f32 %v4793, %v5145
      %v5147 = vpop.f32.mrf.mxu0
      %v5148 = vadd.f32 %v4795, %v5147
      %v5149 = vpop.f32.mrf.mxu0
      %v5150 = vadd.f32 %v4797, %v5149
      %v5151 = vpop.f32.mrf.mxu0
      %v5152 = vadd.f32 %v4799, %v5151
      %5153 = vmatprep.mubr.bf16.mxu0 %v2471
      %5154 = vmatmul.mubr.bf16.gmra.mxu0 %v1059
      %v5155 = vpop.f32.mrf.mxu0
      %v5156 = vadd.f32 %v4803, %v5155
      %v5157 = vpop.f32.mrf.mxu0
      %v5158 = vadd.f32 %v4805, %v5157
      %v5159 = vpop.f32.mrf.mxu0
      %v5160 = vadd.f32 %v4807, %v5159
      %v5161 = vpop.f32.mrf.mxu0
      %v5162 = vadd.f32 %v4809, %v5161
      %5163 = vmatprep.mubr.bf16.mxu0 %v2474
      %5164 = vmatmul.mubr.bf16.gmra.mxu0 %v1063
      %v5165 = vpop.f32.mrf.mxu0
      %v5166 = vadd.f32 %v4813, %v5165
      %v5167 = vpop.f32.mrf.mxu0
      %v5168 = vadd.f32 %v4815, %v5167
      %v5169 = vpop.f32.mrf.mxu0
      %v5170 = vadd.f32 %v4817, %v5169
      %v5171 = vpop.f32.mrf.mxu0
      %v5172 = vadd.f32 %v4819, %v5171
      %5173 = vmatprep.mubr.bf16.mxu0 %v2477
      %5174 = vmatmul.mubr.bf16.gmra.mxu0 %v1067
      %v5175 = vpop.f32.mrf.mxu0
      %v5176 = vadd.f32 %v4823, %v5175
      %v5177 = vpop.f32.mrf.mxu0
      %v5178 = vadd.f32 %v4825, %v5177
      %v5179 = vpop.f32.mrf.mxu0
      %v5180 = vadd.f32 %v4827, %v5179
      %v5181 = vpop.f32.mrf.mxu0
      %v5182 = vadd.f32 %v4829, %v5181
      %5183 = vmatprep.mubr.bf16.mxu0 %v2480
      %5184 = vmatmul.mubr.bf16.gmra.mxu0 %v1071
      %v5185 = vpop.f32.mrf.mxu0
      %v5186 = vadd.f32 %v4833, %v5185
      %v5187 = vpop.f32.mrf.mxu0
      %v5188 = vadd.f32 %v4835, %v5187
      %v5189 = vpop.f32.mrf.mxu0
      %v5190 = vadd.f32 %v4837, %v5189
      %v5191 = vpop.f32.mrf.mxu0
      %v5192 = vadd.f32 %v4839, %v5191
      %5193 = vmatprep.mubr.bf16.mxu0 %v2483
      %5194 = vmatmul.mubr.bf16.gmra.mxu0 %v1075
      %v5195 = vpop.f32.mrf.mxu0
      %v5196 = vadd.f32 %v4843, %v5195
      %v5197 = vpop.f32.mrf.mxu0
      %v5198 = vadd.f32 %v4845, %v5197
      %v5199 = vpop.f32.mrf.mxu0
      %v5200 = vadd.f32 %v4847, %v5199
      %v5201 = vpop.f32.mrf.mxu0
      %v5202 = vadd.f32 %v4849, %v5201
      %5203 = vmatprep.mubr.bf16.mxu0 %v2486
      %5204 = vmatmul.mubr.bf16.gmra.mxu0 %v1079
      %v5205 = vpop.f32.mrf.mxu0
      %v5206 = vadd.f32 %v4853, %v5205
      %v5207 = vpop.f32.mrf.mxu0
      %v5208 = vadd.f32 %v4855, %v5207
      %v5209 = vpop.f32.mrf.mxu0
      %v5210 = vadd.f32 %v4857, %v5209
      %v5211 = vpop.f32.mrf.mxu0
      %v5212 = vadd.f32 %v4859, %v5211
      %5213 = vmatprep.mubr.bf16.mxu0 %v2489
      %5214 = vmatmul.mubr.bf16.gmra.mxu0 %v1083
      %v5215 = vpop.f32.mrf.mxu0
      %v5216 = vadd.f32 %v4863, %v5215
      %v5217 = vpop.f32.mrf.mxu0
      %v5218 = vadd.f32 %v4865, %v5217
      %v5219 = vpop.f32.mrf.mxu0
      %v5220 = vadd.f32 %v4867, %v5219
      %v5221 = vpop.f32.mrf.mxu0
      %v5222 = vadd.f32 %v4869, %v5221
      %5223 = vmatprep.mubr.bf16.mxu0 %v2492
      %5224 = vmatmul.mubr.bf16.gmra.mxu0 %v1087
      %v5225 = vpop.f32.mrf.mxu0
      %v5226 = vadd.f32 %v4873, %v5225
      %v5227 = vpop.f32.mrf.mxu0
      %v5228 = vadd.f32 %v4875, %v5227
      %v5229 = vpop.f32.mrf.mxu0
      %v5230 = vadd.f32 %v4877, %v5229
      %v5231 = vpop.f32.mrf.mxu0
      %v5232 = vadd.f32 %v4879, %v5231
      %5233 = vmatprep.mubr.bf16.mxu0 %v2495
      %5234 = vmatmul.mubr.bf16.gmra.mxu0 %v1091
      %v5235 = vpop.f32.mrf.mxu0
      %v5236 = vadd.f32 %v4883, %v5235
      %v5237 = vpop.f32.mrf.mxu0
      %v5238 = vadd.f32 %v4885, %v5237
      %v5239 = vpop.f32.mrf.mxu0
      %v5240 = vadd.f32 %v4887, %v5239
      %v5241 = vpop.f32.mrf.mxu0
      %v5242 = vadd.f32 %v4889, %v5241
      %5243 = vmatprep.mubr.bf16.mxu0 %v2498
      %5244 = vmatmul.mubr.bf16.gmra.mxu0 %v1095
      %v5245 = vpop.f32.mrf.mxu0
      %v5246 = vadd.f32 %v4893, %v5245
      %v5247 = vpop.f32.mrf.mxu0
      %v5248 = vadd.f32 %v4895, %v5247
      %v5249 = vpop.f32.mrf.mxu0
      %v5250 = vadd.f32 %v4897, %v5249
      %v5251 = vpop.f32.mrf.mxu0
      %v5252 = vadd.f32 %v4899, %v5251
      %5253 = vmatprep.mubr.bf16.mxu0 %v2501
      %5254 = vmatmul.mubr.bf16.gmra.mxu0 %v1099
      %v5255 = vpop.f32.mrf.mxu0
      %v5256 = vadd.f32 %v4903, %v5255
      %v5257 = vpop.f32.mrf.mxu0
      %v5258 = vadd.f32 %v4905, %v5257
      %v5259 = vpop.f32.mrf.mxu0
      %v5260 = vadd.f32 %v4907, %v5259
      %v5261 = vpop.f32.mrf.mxu0
      %v5262 = vadd.f32 %v4909, %v5261
      %5263 = vmatprep.mubr.bf16.mxu0 %v2504
      %5264 = vmatmul.mubr.bf16.gmra.mxu0 %v1103
      %v5265 = vpop.f32.mrf.mxu0
      %v5266 = vadd.f32 %v4913, %v5265
      %v5267 = vpop.f32.mrf.mxu0
      %v5268 = vadd.f32 %v4915, %v5267
      %v5269 = vpop.f32.mrf.mxu0
      %v5270 = vadd.f32 %v4917, %v5269
      %v5271 = vpop.f32.mrf.mxu0
      %v5272 = vadd.f32 %v4919, %v5271
      %5273 = vmatprep.mubr.bf16.mxu0 %v2507
      %5274 = vmatmul.mubr.bf16.gmra.mxu0 %v1107
      %v5275 = vpop.f32.mrf.mxu0
      %v5276 = vadd.f32 %v4923, %v5275
      %v5277 = vpop.f32.mrf.mxu0
      %v5278 = vadd.f32 %v4925, %v5277
      %v5279 = vpop.f32.mrf.mxu0
      %v5280 = vadd.f32 %v4927, %v5279
      %v5281 = vpop.f32.mrf.mxu0
      %v5282 = vadd.f32 %v4929, %v5281
      %5283 = vmatprep.mubr.bf16.mxu0 %v2510
      %5284 = vmatmul.mubr.bf16.gmra.mxu0 %v1111
      %v5285 = vpop.f32.mrf.mxu0
      %v5286 = vadd.f32 %v4933, %v5285
      %v5287 = vpop.f32.mrf.mxu0
      %v5288 = vadd.f32 %v4935, %v5287
      %v5289 = vpop.f32.mrf.mxu0
      %v5290 = vadd.f32 %v4937, %v5289
      %v5291 = vpop.f32.mrf.mxu0
      %v5292 = vadd.f32 %v4939, %v5291
      %5293 = vmatprep.mubr.bf16.mxu0 %v2513
      %5294 = vmatmul.mubr.bf16.gmra.mxu0 %v1115
      %v5295 = vpop.f32.mrf.mxu0
      %v5296 = vadd.f32 %v4943, %v5295
      %v5297 = vpop.f32.mrf.mxu0
      %v5298 = vadd.f32 %v4945, %v5297
      %v5299 = vpop.f32.mrf.mxu0
      %v5300 = vadd.f32 %v4947, %v5299
      %v5301 = vpop.f32.mrf.mxu0
      %v5302 = vadd.f32 %v4949, %v5301
      %5303 = vmatprep.mubr.bf16.mxu0 %v2516
      %5304 = vmatmul.mubr.bf16.gmra.mxu0 %v1119
      %v5305 = vpop.f32.mrf.mxu0
      %v5306 = vadd.f32 %v4953, %v5305
      %v5307 = vpop.f32.mrf.mxu0
      %v5308 = vadd.f32 %v4955, %v5307
      %v5309 = vpop.f32.mrf.mxu0
      %v5310 = vadd.f32 %v4957, %v5309
      %v5311 = vpop.f32.mrf.mxu0
      %v5312 = vadd.f32 %v4959, %v5311
      %5313 = vmatprep.mubr.bf16.mxu0 %v2519
      %5314 = vmatmul.mubr.bf16.gmra.mxu0 %v1123
      %v5315 = vpop.f32.mrf.mxu0
      %v5316 = vadd.f32 %v4963, %v5315
      %v5317 = vpop.f32.mrf.mxu0
      %v5318 = vadd.f32 %v4965, %v5317
      %v5319 = vpop.f32.mrf.mxu0
      %v5320 = vadd.f32 %v4967, %v5319
      %v5321 = vpop.f32.mrf.mxu0
      %v5322 = vadd.f32 %v4969, %v5321
      %5323 = vmatprep.mubr.bf16.mxu0 %v2522
      %5324 = vmatmul.mubr.bf16.gmra.mxu0 %v1127
      %v5325 = vpop.f32.mrf.mxu0
      %v5326 = vadd.f32 %v4973, %v5325
      %v5327 = vpop.f32.mrf.mxu0
      %v5328 = vadd.f32 %v4975, %v5327
      %v5329 = vpop.f32.mrf.mxu0
      %v5330 = vadd.f32 %v4977, %v5329
      %v5331 = vpop.f32.mrf.mxu0
      %v5332 = vadd.f32 %v4979, %v5331
      %5333 = vmatprep.mubr.bf16.mxu0 %v2525
      %5334 = vmatmul.mubr.bf16.gmra.mxu0 %v1131
      %v5335 = vpop.f32.mrf.mxu0
      %v5336 = vadd.f32 %v4983, %v5335
      %v5337 = vpop.f32.mrf.mxu0
      %v5338 = vadd.f32 %v4985, %v5337
      %v5339 = vpop.f32.mrf.mxu0
      %v5340 = vadd.f32 %v4987, %v5339
      %v5341 = vpop.f32.mrf.mxu0
      %v5342 = vadd.f32 %v4989, %v5341
      %5343 = vmatprep.mubr.bf16.mxu0 %v2528
      %5344 = vmatmul.mubr.bf16.gmra.mxu0 %v1135
      %v5345 = vpop.f32.mrf.mxu0
      %v5346 = vadd.f32 %v4993, %v5345
      %v5347 = vpop.f32.mrf.mxu0
      %v5348 = vadd.f32 %v4995, %v5347
      %v5349 = vpop.f32.mrf.mxu0
      %v5350 = vadd.f32 %v4997, %v5349
      %v5351 = vpop.f32.mrf.mxu0
      %v5352 = vadd.f32 %v4999, %v5351
      %5353 = vdwg.mxu0
      %v5354 = vmul.f32 %v2918, %v2918
      %v5355 = vmul.f32 %v2920, %v2920
      %v5356 = vmul.f32 %v3624, %v3624
      %v5357 = vmul.f32 %v3626, %v3626
      %v5358 = vmul.f32 %v4330, %v4330
      %v5359 = vmul.f32 %v4332, %v4332
      %v5360 = vmul.f32 %v5036, %v5036
      %v5361 = vmul.f32 %v5038, %v5038
      %v5362 = vmul.f32 %v2922, %v2922
      %v5363 = vmul.f32 %v2924, %v2924
      %v5364 = vmul.f32 %v3628, %v3628
      %v5365 = vmul.f32 %v3630, %v3630
      %v5366 = vmul.f32 %v4334, %v4334
      %v5367 = vmul.f32 %v4336, %v4336
      %v5368 = vmul.f32 %v5040, %v5040
      %v5369 = vmul.f32 %v5042, %v5042
      %v5370 = vmul.f32 %v2928, %v2928
      %v5371 = vmul.f32 %v2930, %v2930
      %v5372 = vmul.f32 %v3634, %v3634
      %v5373 = vmul.f32 %v3636, %v3636
      %v5374 = vmul.f32 %v4340, %v4340
      %v5375 = vmul.f32 %v4342, %v4342
      %v5376 = vmul.f32 %v5046, %v5046
      %v5377 = vmul.f32 %v5048, %v5048
      %v5378 = vmul.f32 %v2932, %v2932
      %v5379 = vmul.f32 %v2934, %v2934
      %v5380 = vmul.f32 %v3638, %v3638
      %v5381 = vmul.f32 %v3640, %v3640
      %v5382 = vmul.f32 %v4344, %v4344
      %v5383 = vmul.f32 %v4346, %v4346
      %v5384 = vmul.f32 %v5050, %v5050
      %v5385 = vmul.f32 %v5052, %v5052
      %v5386 = vmul.f32 %v2938, %v2938
      %v5387 = vmul.f32 %v2940, %v2940
      %v5388 = vmul.f32 %v3644, %v3644
      %v5389 = vmul.f32 %v3646, %v3646
      %v5390 = vmul.f32 %v4350, %v4350
      %v5391 = vmul.f32 %v4352, %v4352
      %v5392 = vmul.f32 %v5056, %v5056
      %v5393 = vmul.f32 %v5058, %v5058
      %v5394 = vmul.f32 %v2942, %v2942
      %v5395 = vmul.f32 %v2944, %v2944
      %v5396 = vmul.f32 %v3648, %v3648
      %v5397 = vmul.f32 %v3650, %v3650
      %v5398 = vmul.f32 %v4354, %v4354
      %v5399 = vmul.f32 %v4356, %v4356
      %v5400 = vmul.f32 %v5060, %v5060
      %v5401 = vmul.f32 %v5062, %v5062
      %v5402 = vmul.f32 %v2948, %v2948
      %v5403 = vmul.f32 %v2950, %v2950
      %v5404 = vmul.f32 %v3654, %v3654
      %v5405 = vmul.f32 %v3656, %v3656
      %v5406 = vmul.f32 %v4360, %v4360
      %v5407 = vmul.f32 %v4362, %v4362
      %v5408 = vmul.f32 %v5066, %v5066
      %v5409 = vmul.f32 %v5068, %v5068
      %v5410 = vmul.f32 %v2952, %v2952
      %v5411 = vmul.f32 %v2954, %v2954
      %v5412 = vmul.f32 %v3658, %v3658
      %v5413 = vmul.f32 %v3660, %v3660
      %v5414 = vmul.f32 %v4364, %v4364
      %v5415 = vmul.f32 %v4366, %v4366
      %v5416 = vmul.f32 %v5070, %v5070
      %v5417 = vmul.f32 %v5072, %v5072
      %v5418 = vmul.f32 %v2958, %v2958
      %v5419 = vmul.f32 %v2960, %v2960
      %v5420 = vmul.f32 %v3664, %v3664
      %v5421 = vmul.f32 %v3666, %v3666
      %v5422 = vmul.f32 %v4370, %v4370
      %v5423 = vmul.f32 %v4372, %v4372
      %v5424 = vmul.f32 %v5076, %v5076
      %v5425 = vmul.f32 %v5078, %v5078
      %v5426 = vmul.f32 %v2962, %v2962
      %v5427 = vmul.f32 %v2964, %v2964
      %v5428 = vmul.f32 %v3668, %v3668
      %v5429 = vmul.f32 %v3670, %v3670
      %v5430 = vmul.f32 %v4374, %v4374
      %v5431 = vmul.f32 %v4376, %v4376
      %v5432 = vmul.f32 %v5080, %v5080
      %v5433 = vmul.f32 %v5082, %v5082
      %v5434 = vmul.f32 %v2968, %v2968
      %v5435 = vmul.f32 %v2970, %v2970
      %v5436 = vmul.f32 %v3674, %v3674
      %v5437 = vmul.f32 %v3676, %v3676
      %v5438 = vmul.f32 %v4380, %v4380
      %v5439 = vmul.f32 %v4382, %v4382
      %v5440 = vmul.f32 %v5086, %v5086
      %v5441 = vmul.f32 %v5088, %v5088
      %v5442 = vmul.f32 %v2972, %v2972
      %v5443 = vmul.f32 %v2974, %v2974
      %v5444 = vmul.f32 %v3678, %v3678
      %v5445 = vmul.f32 %v3680, %v3680
      %v5446 = vmul.f32 %v4384, %v4384
      %v5447 = vmul.f32 %v4386, %v4386
      %v5448 = vmul.f32 %v5090, %v5090
      %v5449 = vmul.f32 %v5092, %v5092
      %v5450 = vmul.f32 %v2978, %v2978
      %v5451 = vmul.f32 %v2980, %v2980
      %v5452 = vmul.f32 %v3684, %v3684
      %v5453 = vmul.f32 %v3686, %v3686
      %v5454 = vmul.f32 %v4390, %v4390
      %v5455 = vmul.f32 %v4392, %v4392
      %v5456 = vmul.f32 %v5096, %v5096
      %v5457 = vmul.f32 %v5098, %v5098
      %v5458 = vmul.f32 %v2982, %v2982
      %v5459 = vmul.f32 %v2984, %v2984
      %v5460 = vmul.f32 %v3688, %v3688
      %v5461 = vmul.f32 %v3690, %v3690
      %v5462 = vmul.f32 %v4394, %v4394
      %v5463 = vmul.f32 %v4396, %v4396
      %v5464 = vmul.f32 %v5100, %v5100
      %v5465 = vmul.f32 %v5102, %v5102
      %v5466 = vmul.f32 %v2988, %v2988
      %v5467 = vmul.f32 %v2990, %v2990
      %v5468 = vmul.f32 %v3694, %v3694
      %v5469 = vmul.f32 %v3696, %v3696
      %v5470 = vmul.f32 %v4400, %v4400
      %v5471 = vmul.f32 %v4402, %v4402
      %v5472 = vmul.f32 %v5106, %v5106
      %v5473 = vmul.f32 %v5108, %v5108
      %v5474 = vmul.f32 %v2992, %v2992
      %v5475 = vmul.f32 %v2994, %v2994
      %v5476 = vmul.f32 %v3698, %v3698
      %v5477 = vmul.f32 %v3700, %v3700
      %v5478 = vmul.f32 %v4404, %v4404
      %v5479 = vmul.f32 %v4406, %v4406
      %v5480 = vmul.f32 %v5110, %v5110
      %v5481 = vmul.f32 %v5112, %v5112
      %v5482 = vmul.f32 %v2998, %v2998
      %v5483 = vmul.f32 %v3000, %v3000
      %v5484 = vmul.f32 %v3704, %v3704
      %v5485 = vmul.f32 %v3706, %v3706
      %v5486 = vmul.f32 %v4410, %v4410
      %v5487 = vmul.f32 %v4412, %v4412
      %v5488 = vmul.f32 %v5116, %v5116
      %v5489 = vmul.f32 %v5118, %v5118
      %v5490 = vmul.f32 %v3002, %v3002
      %v5491 = vmul.f32 %v3004, %v3004
      %v5492 = vmul.f32 %v3708, %v3708
      %v5493 = vmul.f32 %v3710, %v3710
      %v5494 = vmul.f32 %v4414, %v4414
      %v5495 = vmul.f32 %v4416, %v4416
      %v5496 = vmul.f32 %v5120, %v5120
      %v5497 = vmul.f32 %v5122, %v5122
      %v5498 = vmul.f32 %v3008, %v3008
      %v5499 = vmul.f32 %v3010, %v3010
      %v5500 = vmul.f32 %v3714, %v3714
      %v5501 = vmul.f32 %v3716, %v3716
      %v5502 = vmul.f32 %v4420, %v4420
      %v5503 = vmul.f32 %v4422, %v4422
      %v5504 = vmul.f32 %v5126, %v5126
      %v5505 = vmul.f32 %v5128, %v5128
      %v5506 = vmul.f32 %v3012, %v3012
      %v5507 = vmul.f32 %v3014, %v3014
      %v5508 = vmul.f32 %v3718, %v3718
      %v5509 = vmul.f32 %v3720, %v3720
      %v5510 = vmul.f32 %v4424, %v4424
      %v5511 = vmul.f32 %v4426, %v4426
      %v5512 = vmul.f32 %v5130, %v5130
      %v5513 = vmul.f32 %v5132, %v5132
      %v5514 = vmul.f32 %v3018, %v3018
      %v5515 = vmul.f32 %v3020, %v3020
      %v5516 = vmul.f32 %v3724, %v3724
      %v5517 = vmul.f32 %v3726, %v3726
      %v5518 = vmul.f32 %v4430, %v4430
      %v5519 = vmul.f32 %v4432, %v4432
      %v5520 = vmul.f32 %v5136, %v5136
      %v5521 = vmul.f32 %v5138, %v5138
      %v5522 = vmul.f32 %v3022, %v3022
      %v5523 = vmul.f32 %v3024, %v3024
      %v5524 = vmul.f32 %v3728, %v3728
      %v5525 = vmul.f32 %v3730, %v3730
      %v5526 = vmul.f32 %v4434, %v4434
      %v5527 = vmul.f32 %v4436, %v4436
      %v5528 = vmul.f32 %v5140, %v5140
      %v5529 = vmul.f32 %v5142, %v5142
      %v5530 = vmul.f32 %v3028, %v3028
      %v5531 = vmul.f32 %v3030, %v3030
      %v5532 = vmul.f32 %v3734, %v3734
      %v5533 = vmul.f32 %v3736, %v3736
      %v5534 = vmul.f32 %v4440, %v4440
      %v5535 = vmul.f32 %v4442, %v4442
      %v5536 = vmul.f32 %v5146, %v5146
      %v5537 = vmul.f32 %v5148, %v5148
      %v5538 = vmul.f32 %v3032, %v3032
      %v5539 = vmul.f32 %v3034, %v3034
      %v5540 = vmul.f32 %v3738, %v3738
      %v5541 = vmul.f32 %v3740, %v3740
      %v5542 = vmul.f32 %v4444, %v4444
      %v5543 = vmul.f32 %v4446, %v4446
      %v5544 = vmul.f32 %v5150, %v5150
      %v5545 = vmul.f32 %v5152, %v5152
      %v5546 = vmul.f32 %v3038, %v3038
      %v5547 = vmul.f32 %v3040, %v3040
      %v5548 = vmul.f32 %v3744, %v3744
      %v5549 = vmul.f32 %v3746, %v3746
      %v5550 = vmul.f32 %v4450, %v4450
      %v5551 = vmul.f32 %v4452, %v4452
      %v5552 = vmul.f32 %v5156, %v5156
      %v5553 = vmul.f32 %v5158, %v5158
      %v5554 = vmul.f32 %v3042, %v3042
      %v5555 = vmul.f32 %v3044, %v3044
      %v5556 = vmul.f32 %v3748, %v3748
      %v5557 = vmul.f32 %v3750, %v3750
      %v5558 = vmul.f32 %v4454, %v4454
      %v5559 = vmul.f32 %v4456, %v4456
      %v5560 = vmul.f32 %v5160, %v5160
      %v5561 = vmul.f32 %v5162, %v5162
      %v5562 = vmul.f32 %v3048, %v3048
      %v5563 = vmul.f32 %v3050, %v3050
      %v5564 = vmul.f32 %v3754, %v3754
      %v5565 = vmul.f32 %v3756, %v3756
      %v5566 = vmul.f32 %v4460, %v4460
      %v5567 = vmul.f32 %v4462, %v4462
      %v5568 = vmul.f32 %v5166, %v5166
      %v5569 = vmul.f32 %v5168, %v5168
      %v5570 = vmul.f32 %v3052, %v3052
      %v5571 = vmul.f32 %v3054, %v3054
      %v5572 = vmul.f32 %v3758, %v3758
      %v5573 = vmul.f32 %v3760, %v3760
      %v5574 = vmul.f32 %v4464, %v4464
      %v5575 = vmul.f32 %v4466, %v4466
      %v5576 = vmul.f32 %v5170, %v5170
      %v5577 = vmul.f32 %v5172, %v5172
      %v5578 = vmul.f32 %v3058, %v3058
      %v5579 = vmul.f32 %v3060, %v3060
      %v5580 = vmul.f32 %v3764, %v3764
      %v5581 = vmul.f32 %v3766, %v3766
      %v5582 = vmul.f32 %v4470, %v4470
      %v5583 = vmul.f32 %v4472, %v4472
      %v5584 = vmul.f32 %v5176, %v5176
      %v5585 = vmul.f32 %v5178, %v5178
      %v5586 = vmul.f32 %v3062, %v3062
      %v5587 = vmul.f32 %v3064, %v3064
      %v5588 = vmul.f32 %v3768, %v3768
      %v5589 = vmul.f32 %v3770, %v3770
      %v5590 = vmul.f32 %v4474, %v4474
      %v5591 = vmul.f32 %v4476, %v4476
      %v5592 = vmul.f32 %v5180, %v5180
      %v5593 = vmul.f32 %v5182, %v5182
      %v5594 = vmul.f32 %v3068, %v3068
      %v5595 = vmul.f32 %v3070, %v3070
      %v5596 = vmul.f32 %v3774, %v3774
      %v5597 = vmul.f32 %v3776, %v3776
      %v5598 = vmul.f32 %v4480, %v4480
      %v5599 = vmul.f32 %v4482, %v4482
      %v5600 = vmul.f32 %v5186, %v5186
      %v5601 = vmul.f32 %v5188, %v5188
      %v5602 = vmul.f32 %v3072, %v3072
      %v5603 = vmul.f32 %v3074, %v3074
      %v5604 = vmul.f32 %v3778, %v3778
      %v5605 = vmul.f32 %v3780, %v3780
      %v5606 = vmul.f32 %v4484, %v4484
      %v5607 = vmul.f32 %v4486, %v4486
      %v5608 = vmul.f32 %v5190, %v5190
      %v5609 = vmul.f32 %v5192, %v5192
      %v5610 = vmul.f32 %v3078, %v3078
      %v5611 = vmul.f32 %v3080, %v3080
      %v5612 = vmul.f32 %v3784, %v3784
      %v5613 = vmul.f32 %v3786, %v3786
      %v5614 = vmul.f32 %v4490, %v4490
      %v5615 = vmul.f32 %v4492, %v4492
      %v5616 = vmul.f32 %v5196, %v5196
      %v5617 = vmul.f32 %v5198, %v5198
      %v5618 = vmul.f32 %v3082, %v3082
      %v5619 = vmul.f32 %v3084, %v3084
      %v5620 = vmul.f32 %v3788, %v3788
      %v5621 = vmul.f32 %v3790, %v3790
      %v5622 = vmul.f32 %v4494, %v4494
      %v5623 = vmul.f32 %v4496, %v4496
      %v5624 = vmul.f32 %v5200, %v5200
      %v5625 = vmul.f32 %v5202, %v5202
      %v5626 = vmul.f32 %v3088, %v3088
      %v5627 = vmul.f32 %v3090, %v3090
      %v5628 = vmul.f32 %v3794, %v3794
      %v5629 = vmul.f32 %v3796, %v3796
      %v5630 = vmul.f32 %v4500, %v4500
      %v5631 = vmul.f32 %v4502, %v4502
      %v5632 = vmul.f32 %v5206, %v5206
      %v5633 = vmul.f32 %v5208, %v5208
      %v5634 = vmul.f32 %v3092, %v3092
      %v5635 = vmul.f32 %v3094, %v3094
      %v5636 = vmul.f32 %v3798, %v3798
      %v5637 = vmul.f32 %v3800, %v3800
      %v5638 = vmul.f32 %v4504, %v4504
      %v5639 = vmul.f32 %v4506, %v4506
      %v5640 = vmul.f32 %v5210, %v5210
      %v5641 = vmul.f32 %v5212, %v5212
      %v5642 = vmul.f32 %v3098, %v3098
      %v5643 = vmul.f32 %v3100, %v3100
      %v5644 = vmul.f32 %v3804, %v3804
      %v5645 = vmul.f32 %v3806, %v3806
      %v5646 = vmul.f32 %v4510, %v4510
      %v5647 = vmul.f32 %v4512, %v4512
      %v5648 = vmul.f32 %v5216, %v5216
      %v5649 = vmul.f32 %v5218, %v5218
      %v5650 = vmul.f32 %v3102, %v3102
      %v5651 = vmul.f32 %v3104, %v3104
      %v5652 = vmul.f32 %v3808, %v3808
      %v5653 = vmul.f32 %v3810, %v3810
      %v5654 = vmul.f32 %v4514, %v4514
      %v5655 = vmul.f32 %v4516, %v4516
      %v5656 = vmul.f32 %v5220, %v5220
      %v5657 = vmul.f32 %v5222, %v5222
      %v5658 = vmul.f32 %v3108, %v3108
      %v5659 = vmul.f32 %v3110, %v3110
      %v5660 = vmul.f32 %v3814, %v3814
      %v5661 = vmul.f32 %v3816, %v3816
      %v5662 = vmul.f32 %v4520, %v4520
      %v5663 = vmul.f32 %v4522, %v4522
      %v5664 = vmul.f32 %v5226, %v5226
      %v5665 = vmul.f32 %v5228, %v5228
      %v5666 = vmul.f32 %v3112, %v3112
      %v5667 = vmul.f32 %v3114, %v3114
      %v5668 = vmul.f32 %v3818, %v3818
      %v5669 = vmul.f32 %v3820, %v3820
      %v5670 = vmul.f32 %v4524, %v4524
      %v5671 = vmul.f32 %v4526, %v4526
      %v5672 = vmul.f32 %v5230, %v5230
      %v5673 = vmul.f32 %v5232, %v5232
      %v5674 = vmul.f32 %v3118, %v3118
      %v5675 = vmul.f32 %v3120, %v3120
      %v5676 = vmul.f32 %v3824, %v3824
      %v5677 = vmul.f32 %v3826, %v3826
      %v5678 = vmul.f32 %v4530, %v4530
      %v5679 = vmul.f32 %v4532, %v4532
      %v5680 = vmul.f32 %v5236, %v5236
      %v5681 = vmul.f32 %v5238, %v5238
      %v5682 = vmul.f32 %v3122, %v3122
      %v5683 = vmul.f32 %v3124, %v3124
      %v5684 = vmul.f32 %v3828, %v3828
      %v5685 = vmul.f32 %v3830, %v3830
      %v5686 = vmul.f32 %v4534, %v4534
      %v5687 = vmul.f32 %v4536, %v4536
      %v5688 = vmul.f32 %v5240, %v5240
      %v5689 = vmul.f32 %v5242, %v5242
      %v5690 = vmul.f32 %v3128, %v3128
      %v5691 = vmul.f32 %v3130, %v3130
      %v5692 = vmul.f32 %v3834, %v3834
      %v5693 = vmul.f32 %v3836, %v3836
      %v5694 = vmul.f32 %v4540, %v4540
      %v5695 = vmul.f32 %v4542, %v4542
      %v5696 = vmul.f32 %v5246, %v5246
      %v5697 = vmul.f32 %v5248, %v5248
      %v5698 = vmul.f32 %v3132, %v3132
      %v5699 = vmul.f32 %v3134, %v3134
      %v5700 = vmul.f32 %v3838, %v3838
      %v5701 = vmul.f32 %v3840, %v3840
      %v5702 = vmul.f32 %v4544, %v4544
      %v5703 = vmul.f32 %v4546, %v4546
      %v5704 = vmul.f32 %v5250, %v5250
      %v5705 = vmul.f32 %v5252, %v5252
      %v5706 = vmul.f32 %v3138, %v3138
      %v5707 = vmul.f32 %v3140, %v3140
      %v5708 = vmul.f32 %v3844, %v3844
      %v5709 = vmul.f32 %v3846, %v3846
      %v5710 = vmul.f32 %v4550, %v4550
      %v5711 = vmul.f32 %v4552, %v4552
      %v5712 = vmul.f32 %v5256, %v5256
      %v5713 = vmul.f32 %v5258, %v5258
      %v5714 = vmul.f32 %v3142, %v3142
      %v5715 = vmul.f32 %v3144, %v3144
      %v5716 = vmul.f32 %v3848, %v3848
      %v5717 = vmul.f32 %v3850, %v3850
      %v5718 = vmul.f32 %v4554, %v4554
      %v5719 = vmul.f32 %v4556, %v4556
      %v5720 = vmul.f32 %v5260, %v5260
      %v5721 = vmul.f32 %v5262, %v5262
      %v5722 = vmul.f32 %v3148, %v3148
      %v5723 = vmul.f32 %v3150, %v3150
      %v5724 = vmul.f32 %v3854, %v3854
      %v5725 = vmul.f32 %v3856, %v3856
      %v5726 = vmul.f32 %v4560, %v4560
      %v5727 = vmul.f32 %v4562, %v4562
      %v5728 = vmul.f32 %v5266, %v5266
      %v5729 = vmul.f32 %v5268, %v5268
      %v5730 = vmul.f32 %v3152, %v3152
      %v5731 = vmul.f32 %v3154, %v3154
      %v5732 = vmul.f32 %v3858, %v3858
      %v5733 = vmul.f32 %v3860, %v3860
      %v5734 = vmul.f32 %v4564, %v4564
      %v5735 = vmul.f32 %v4566, %v4566
      %v5736 = vmul.f32 %v5270, %v5270
      %v5737 = vmul.f32 %v5272, %v5272
      %v5738 = vmul.f32 %v3158, %v3158
      %v5739 = vmul.f32 %v3160, %v3160
      %v5740 = vmul.f32 %v3864, %v3864
      %v5741 = vmul.f32 %v3866, %v3866
      %v5742 = vmul.f32 %v4570, %v4570
      %v5743 = vmul.f32 %v4572, %v4572
      %v5744 = vmul.f32 %v5276, %v5276
      %v5745 = vmul.f32 %v5278, %v5278
      %v5746 = vmul.f32 %v3162, %v3162
      %v5747 = vmul.f32 %v3164, %v3164
      %v5748 = vmul.f32 %v3868, %v3868
      %v5749 = vmul.f32 %v3870, %v3870
      %v5750 = vmul.f32 %v4574, %v4574
      %v5751 = vmul.f32 %v4576, %v4576
      %v5752 = vmul.f32 %v5280, %v5280
      %v5753 = vmul.f32 %v5282, %v5282
      %v5754 = vmul.f32 %v3168, %v3168
      %v5755 = vmul.f32 %v3170, %v3170
      %v5756 = vmul.f32 %v3874, %v3874
      %v5757 = vmul.f32 %v3876, %v3876
      %v5758 = vmul.f32 %v4580, %v4580
      %v5759 = vmul.f32 %v4582, %v4582
      %v5760 = vmul.f32 %v5286, %v5286
      %v5761 = vmul.f32 %v5288, %v5288
      %v5762 = vmul.f32 %v3172, %v3172
      %v5763 = vmul.f32 %v3174, %v3174
      %v5764 = vmul.f32 %v3878, %v3878
      %v5765 = vmul.f32 %v3880, %v3880
      %v5766 = vmul.f32 %v4584, %v4584
      %v5767 = vmul.f32 %v4586, %v4586
      %v5768 = vmul.f32 %v5290, %v5290
      %v5769 = vmul.f32 %v5292, %v5292
      %v5770 = vmul.f32 %v3178, %v3178
      %v5771 = vmul.f32 %v3180, %v3180
      %v5772 = vmul.f32 %v3884, %v3884
      %v5773 = vmul.f32 %v3886, %v3886
      %v5774 = vmul.f32 %v4590, %v4590
      %v5775 = vmul.f32 %v4592, %v4592
      %v5776 = vmul.f32 %v5296, %v5296
      %v5777 = vmul.f32 %v5298, %v5298
      %v5778 = vmul.f32 %v3182, %v3182
      %v5779 = vmul.f32 %v3184, %v3184
      %v5780 = vmul.f32 %v3888, %v3888
      %v5781 = vmul.f32 %v3890, %v3890
      %v5782 = vmul.f32 %v4594, %v4594
      %v5783 = vmul.f32 %v4596, %v4596
      %v5784 = vmul.f32 %v5300, %v5300
      %v5785 = vmul.f32 %v5302, %v5302
      %v5786 = vmul.f32 %v3188, %v3188
      %v5787 = vmul.f32 %v3190, %v3190
      %v5788 = vmul.f32 %v3894, %v3894
      %v5789 = vmul.f32 %v3896, %v3896
      %v5790 = vmul.f32 %v4600, %v4600
      %v5791 = vmul.f32 %v4602, %v4602
      %v5792 = vmul.f32 %v5306, %v5306
      %v5793 = vmul.f32 %v5308, %v5308
      %v5794 = vmul.f32 %v3192, %v3192
      %v5795 = vmul.f32 %v3194, %v3194
      %v5796 = vmul.f32 %v3898, %v3898
      %v5797 = vmul.f32 %v3900, %v3900
      %v5798 = vmul.f32 %v4604, %v4604
      %v5799 = vmul.f32 %v4606, %v4606
      %v5800 = vmul.f32 %v5310, %v5310
      %v5801 = vmul.f32 %v5312, %v5312
      %v5802 = vmul.f32 %v3198, %v3198
      %v5803 = vmul.f32 %v3200, %v3200
      %v5804 = vmul.f32 %v3904, %v3904
      %v5805 = vmul.f32 %v3906, %v3906
      %v5806 = vmul.f32 %v4610, %v4610
      %v5807 = vmul.f32 %v4612, %v4612
      %v5808 = vmul.f32 %v5316, %v5316
      %v5809 = vmul.f32 %v5318, %v5318
      %v5810 = vmul.f32 %v3202, %v3202
      %v5811 = vmul.f32 %v3204, %v3204
      %v5812 = vmul.f32 %v3908, %v3908
      %v5813 = vmul.f32 %v3910, %v3910
      %v5814 = vmul.f32 %v4614, %v4614
      %v5815 = vmul.f32 %v4616, %v4616
      %v5816 = vmul.f32 %v5320, %v5320
      %v5817 = vmul.f32 %v5322, %v5322
      %v5818 = vmul.f32 %v3208, %v3208
      %v5819 = vmul.f32 %v3210, %v3210
      %v5820 = vmul.f32 %v3914, %v3914
      %v5821 = vmul.f32 %v3916, %v3916
      %v5822 = vmul.f32 %v4620, %v4620
      %v5823 = vmul.f32 %v4622, %v4622
      %v5824 = vmul.f32 %v5326, %v5326
      %v5825 = vmul.f32 %v5328, %v5328
      %v5826 = vmul.f32 %v3212, %v3212
      %v5827 = vmul.f32 %v3214, %v3214
      %v5828 = vmul.f32 %v3918, %v3918
      %v5829 = vmul.f32 %v3920, %v3920
      %v5830 = vmul.f32 %v4624, %v4624
      %v5831 = vmul.f32 %v4626, %v4626
      %v5832 = vmul.f32 %v5330, %v5330
      %v5833 = vmul.f32 %v5332, %v5332
      %v5834 = vmul.f32 %v3218, %v3218
      %v5835 = vmul.f32 %v3220, %v3220
      %v5836 = vmul.f32 %v3924, %v3924
      %v5837 = vmul.f32 %v3926, %v3926
      %v5838 = vmul.f32 %v4630, %v4630
      %v5839 = vmul.f32 %v4632, %v4632
      %v5840 = vmul.f32 %v5336, %v5336
      %v5841 = vmul.f32 %v5338, %v5338
      %v5842 = vmul.f32 %v3222, %v3222
      %v5843 = vmul.f32 %v3224, %v3224
      %v5844 = vmul.f32 %v3928, %v3928
      %v5845 = vmul.f32 %v3930, %v3930
      %v5846 = vmul.f32 %v4634, %v4634
      %v5847 = vmul.f32 %v4636, %v4636
      %v5848 = vmul.f32 %v5340, %v5340
      %v5849 = vmul.f32 %v5342, %v5342
      %v5850 = vmul.f32 %v3228, %v3228
      %v5851 = vmul.f32 %v3230, %v3230
      %v5852 = vmul.f32 %v3934, %v3934
      %v5853 = vmul.f32 %v3936, %v3936
      %v5854 = vmul.f32 %v4640, %v4640
      %v5855 = vmul.f32 %v4642, %v4642
      %v5856 = vmul.f32 %v5346, %v5346
      %v5857 = vmul.f32 %v5348, %v5348
      %v5858 = vmul.f32 %v3232, %v3232
      %v5859 = vmul.f32 %v3234, %v3234
      %v5860 = vmul.f32 %v3938, %v3938
      %v5861 = vmul.f32 %v3940, %v3940
      %v5862 = vmul.f32 %v4644, %v4644
      %v5863 = vmul.f32 %v4646, %v4646
      %v5864 = vmul.f32 %v5350, %v5350
      %v5865 = vmul.f32 %v5352, %v5352
      %v5866 = vadd.f32 %v5354, %v5610
      %v5867 = vadd.f32 %v5355, %v5611
      %v5868 = vadd.f32 %v5356, %v5612
      %v5869 = vadd.f32 %v5357, %v5613
      %v5870 = vadd.f32 %v5358, %v5614
      %v5871 = vadd.f32 %v5359, %v5615
      %v5872 = vadd.f32 %v5360, %v5616
      %v5873 = vadd.f32 %v5361, %v5617
      %v5874 = vadd.f32 %v5362, %v5618
      %v5875 = vadd.f32 %v5363, %v5619
      %v5876 = vadd.f32 %v5364, %v5620
      %v5877 = vadd.f32 %v5365, %v5621
      %v5878 = vadd.f32 %v5366, %v5622
      %v5879 = vadd.f32 %v5367, %v5623
      %v5880 = vadd.f32 %v5368, %v5624
      %v5881 = vadd.f32 %v5369, %v5625
      %v5882 = vadd.f32 %v5370, %v5626
      %v5883 = vadd.f32 %v5371, %v5627
      %v5884 = vadd.f32 %v5372, %v5628
      %v5885 = vadd.f32 %v5373, %v5629
      %v5886 = vadd.f32 %v5374, %v5630
      %v5887 = vadd.f32 %v5375, %v5631
      %v5888 = vadd.f32 %v5376, %v5632
      %v5889 = vadd.f32 %v5377, %v5633
      %v5890 = vadd.f32 %v5378, %v5634
      %v5891 = vadd.f32 %v5379, %v5635
      %v5892 = vadd.f32 %v5380, %v5636
      %v5893 = vadd.f32 %v5381, %v5637
      %v5894 = vadd.f32 %v5382, %v5638
      %v5895 = vadd.f32 %v5383, %v5639
      %v5896 = vadd.f32 %v5384, %v5640
      %v5897 = vadd.f32 %v5385, %v5641
      %v5898 = vadd.f32 %v5386, %v5642
      %v5899 = vadd.f32 %v5387, %v5643
      %v5900 = vadd.f32 %v5388, %v5644
      %v5901 = vadd.f32 %v5389, %v5645
      %v5902 = vadd.f32 %v5390, %v5646
      %v5903 = vadd.f32 %v5391, %v5647
      %v5904 = vadd.f32 %v5392, %v5648
      %v5905 = vadd.f32 %v5393, %v5649
      %v5906 = vadd.f32 %v5394, %v5650
      %v5907 = vadd.f32 %v5395, %v5651
      %v5908 = vadd.f32 %v5396, %v5652
      %v5909 = vadd.f32 %v5397, %v5653
      %v5910 = vadd.f32 %v5398, %v5654
      %v5911 = vadd.f32 %v5399, %v5655
      %v5912 = vadd.f32 %v5400, %v5656
      %v5913 = vadd.f32 %v5401, %v5657
      %v5914 = vadd.f32 %v5402, %v5658
      %v5915 = vadd.f32 %v5403, %v5659
      %v5916 = vadd.f32 %v5404, %v5660
      %v5917 = vadd.f32 %v5405, %v5661
      %v5918 = vadd.f32 %v5406, %v5662
      %v5919 = vadd.f32 %v5407, %v5663
      %v5920 = vadd.f32 %v5408, %v5664
      %v5921 = vadd.f32 %v5409, %v5665
      %v5922 = vadd.f32 %v5410, %v5666
      %v5923 = vadd.f32 %v5411, %v5667
      %v5924 = vadd.f32 %v5412, %v5668
      %v5925 = vadd.f32 %v5413, %v5669
      %v5926 = vadd.f32 %v5414, %v5670
      %v5927 = vadd.f32 %v5415, %v5671
      %v5928 = vadd.f32 %v5416, %v5672
      %v5929 = vadd.f32 %v5417, %v5673
      %v5930 = vadd.f32 %v5418, %v5674
      %v5931 = vadd.f32 %v5419, %v5675
      %v5932 = vadd.f32 %v5420, %v5676
      %v5933 = vadd.f32 %v5421, %v5677
      %v5934 = vadd.f32 %v5422, %v5678
      %v5935 = vadd.f32 %v5423, %v5679
      %v5936 = vadd.f32 %v5424, %v5680
      %v5937 = vadd.f32 %v5425, %v5681
      %v5938 = vadd.f32 %v5426, %v5682
      %v5939 = vadd.f32 %v5427, %v5683
      %v5940 = vadd.f32 %v5428, %v5684
      %v5941 = vadd.f32 %v5429, %v5685
      %v5942 = vadd.f32 %v5430, %v5686
      %v5943 = vadd.f32 %v5431, %v5687
      %v5944 = vadd.f32 %v5432, %v5688
      %v5945 = vadd.f32 %v5433, %v5689
      %v5946 = vadd.f32 %v5434, %v5690
      %v5947 = vadd.f32 %v5435, %v5691
      %v5948 = vadd.f32 %v5436, %v5692
      %v5949 = vadd.f32 %v5437, %v5693
      %v5950 = vadd.f32 %v5438, %v5694
      %v5951 = vadd.f32 %v5439, %v5695
      %v5952 = vadd.f32 %v5440, %v5696
      %v5953 = vadd.f32 %v5441, %v5697
      %v5954 = vadd.f32 %v5442, %v5698
      %v5955 = vadd.f32 %v5443, %v5699
      %v5956 = vadd.f32 %v5444, %v5700
      %v5957 = vadd.f32 %v5445, %v5701
      %v5958 = vadd.f32 %v5446, %v5702
      %v5959 = vadd.f32 %v5447, %v5703
      %v5960 = vadd.f32 %v5448, %v5704
      %v5961 = vadd.f32 %v5449, %v5705
      %v5962 = vadd.f32 %v5450, %v5706
      %v5963 = vadd.f32 %v5451, %v5707
      %v5964 = vadd.f32 %v5452, %v5708
      %v5965 = vadd.f32 %v5453, %v5709
      %v5966 = vadd.f32 %v5454, %v5710
      %v5967 = vadd.f32 %v5455, %v5711
      %v5968 = vadd.f32 %v5456, %v5712
      %v5969 = vadd.f32 %v5457, %v5713
      %v5970 = vadd.f32 %v5458, %v5714
      %v5971 = vadd.f32 %v5459, %v5715
      %v5972 = vadd.f32 %v5460, %v5716
      %v5973 = vadd.f32 %v5461, %v5717
      %v5974 = vadd.f32 %v5462, %v5718
      %v5975 = vadd.f32 %v5463, %v5719
      %v5976 = vadd.f32 %v5464, %v5720
      %v5977 = vadd.f32 %v5465, %v5721
      %v5978 = vadd.f32 %v5466, %v5722
      %v5979 = vadd.f32 %v5467, %v5723
      %v5980 = vadd.f32 %v5468, %v5724
      %v5981 = vadd.f32 %v5469, %v5725
      %v5982 = vadd.f32 %v5470, %v5726
      %v5983 = vadd.f32 %v5471, %v5727
      %v5984 = vadd.f32 %v5472, %v5728
      %v5985 = vadd.f32 %v5473, %v5729
      %v5986 = vadd.f32 %v5474, %v5730
      %v5987 = vadd.f32 %v5475, %v5731
      %v5988 = vadd.f32 %v5476, %v5732
      %v5989 = vadd.f32 %v5477, %v5733
      %v5990 = vadd.f32 %v5478, %v5734
      %v5991 = vadd.f32 %v5479, %v5735
      %v5992 = vadd.f32 %v5480, %v5736
      %v5993 = vadd.f32 %v5481, %v5737
      %v5994 = vadd.f32 %v5482, %v5738
      %v5995 = vadd.f32 %v5483, %v5739
      %v5996 = vadd.f32 %v5484, %v5740
      %v5997 = vadd.f32 %v5485, %v5741
      %v5998 = vadd.f32 %v5486, %v5742
      %v5999 = vadd.f32 %v5487, %v5743
      %v6000 = vadd.f32 %v5488, %v5744
      %v6001 = vadd.f32 %v5489, %v5745
      %v6002 = vadd.f32 %v5490, %v5746
      %v6003 = vadd.f32 %v5491, %v5747
      %v6004 = vadd.f32 %v5492, %v5748
      %v6005 = vadd.f32 %v5493, %v5749
      %v6006 = vadd.f32 %v5494, %v5750
      %v6007 = vadd.f32 %v5495, %v5751
      %v6008 = vadd.f32 %v5496, %v5752
      %v6009 = vadd.f32 %v5497, %v5753
      %v6010 = vadd.f32 %v5498, %v5754
      %v6011 = vadd.f32 %v5499, %v5755
      %v6012 = vadd.f32 %v5500, %v5756
      %v6013 = vadd.f32 %v5501, %v5757
      %v6014 = vadd.f32 %v5502, %v5758
      %v6015 = vadd.f32 %v5503, %v5759
      %v6016 = vadd.f32 %v5504, %v5760
      %v6017 = vadd.f32 %v5505, %v5761
      %v6018 = vadd.f32 %v5506, %v5762
      %v6019 = vadd.f32 %v5507, %v5763
      %v6020 = vadd.f32 %v5508, %v5764
      %v6021 = vadd.f32 %v5509, %v5765
      %v6022 = vadd.f32 %v5510, %v5766
      %v6023 = vadd.f32 %v5511, %v5767
      %v6024 = vadd.f32 %v5512, %v5768
      %v6025 = vadd.f32 %v5513, %v5769
      %v6026 = vadd.f32 %v5514, %v5770
      %v6027 = vadd.f32 %v5515, %v5771
      %v6028 = vadd.f32 %v5516, %v5772
      %v6029 = vadd.f32 %v5517, %v5773
      %v6030 = vadd.f32 %v5518, %v5774
      %v6031 = vadd.f32 %v5519, %v5775
      %v6032 = vadd.f32 %v5520, %v5776
      %v6033 = vadd.f32 %v5521, %v5777
      %v6034 = vadd.f32 %v5522, %v5778
      %v6035 = vadd.f32 %v5523, %v5779
      %v6036 = vadd.f32 %v5524, %v5780
      %v6037 = vadd.f32 %v5525, %v5781
      %v6038 = vadd.f32 %v5526, %v5782
      %v6039 = vadd.f32 %v5527, %v5783
      %v6040 = vadd.f32 %v5528, %v5784
      %v6041 = vadd.f32 %v5529, %v5785
      %v6042 = vadd.f32 %v5530, %v5786
      %v6043 = vadd.f32 %v5531, %v5787
      %v6044 = vadd.f32 %v5532, %v5788
      %v6045 = vadd.f32 %v5533, %v5789
      %v6046 = vadd.f32 %v5534, %v5790
      %v6047 = vadd.f32 %v5535, %v5791
      %v6048 = vadd.f32 %v5536, %v5792
      %v6049 = vadd.f32 %v5537, %v5793
      %v6050 = vadd.f32 %v5538, %v5794
      %v6051 = vadd.f32 %v5539, %v5795
      %v6052 = vadd.f32 %v5540, %v5796
      %v6053 = vadd.f32 %v5541, %v5797
      %v6054 = vadd.f32 %v5542, %v5798
      %v6055 = vadd.f32 %v5543, %v5799
      %v6056 = vadd.f32 %v5544, %v5800
      %v6057 = vadd.f32 %v5545, %v5801
      %v6058 = vadd.f32 %v5546, %v5802
      %v6059 = vadd.f32 %v5547, %v5803
      %v6060 = vadd.f32 %v5548, %v5804
      %v6061 = vadd.f32 %v5549, %v5805
      %v6062 = vadd.f32 %v5550, %v5806
      %v6063 = vadd.f32 %v5551, %v5807
      %v6064 = vadd.f32 %v5552, %v5808
      %v6065 = vadd.f32 %v5553, %v5809
      %v6066 = vadd.f32 %v5554, %v5810
      %v6067 = vadd.f32 %v5555, %v5811
      %v6068 = vadd.f32 %v5556, %v5812
      %v6069 = vadd.f32 %v5557, %v5813
      %v6070 = vadd.f32 %v5558, %v5814
      %v6071 = vadd.f32 %v5559, %v5815
      %v6072 = vadd.f32 %v5560, %v5816
      %v6073 = vadd.f32 %v5561, %v5817
      %v6074 = vadd.f32 %v5562, %v5818
      %v6075 = vadd.f32 %v5563, %v5819
      %v6076 = vadd.f32 %v5564, %v5820
      %v6077 = vadd.f32 %v5565, %v5821
      %v6078 = vadd.f32 %v5566, %v5822
      %v6079 = vadd.f32 %v5567, %v5823
      %v6080 = vadd.f32 %v5568, %v5824
      %v6081 = vadd.f32 %v5569, %v5825
      %v6082 = vadd.f32 %v5570, %v5826
      %v6083 = vadd.f32 %v5571, %v5827
      %v6084 = vadd.f32 %v5572, %v5828
      %v6085 = vadd.f32 %v5573, %v5829
      %v6086 = vadd.f32 %v5574, %v5830
      %v6087 = vadd.f32 %v5575, %v5831
      %v6088 = vadd.f32 %v5576, %v5832
      %v6089 = vadd.f32 %v5577, %v5833
      %v6090 = vadd.f32 %v5578, %v5834
      %v6091 = vadd.f32 %v5579, %v5835
      %v6092 = vadd.f32 %v5580, %v5836
      %v6093 = vadd.f32 %v5581, %v5837
      %v6094 = vadd.f32 %v5582, %v5838
      %v6095 = vadd.f32 %v5583, %v5839
      %v6096 = vadd.f32 %v5584, %v5840
      %v6097 = vadd.f32 %v5585, %v5841
      %v6098 = vadd.f32 %v5586, %v5842
      %v6099 = vadd.f32 %v5587, %v5843
      %v6100 = vadd.f32 %v5588, %v5844
      %v6101 = vadd.f32 %v5589, %v5845
      %v6102 = vadd.f32 %v5590, %v5846
      %v6103 = vadd.f32 %v5591, %v5847
      %v6104 = vadd.f32 %v5592, %v5848
      %v6105 = vadd.f32 %v5593, %v5849
      %v6106 = vadd.f32 %v5594, %v5850
      %v6107 = vadd.f32 %v5595, %v5851
      %v6108 = vadd.f32 %v5596, %v5852
      %v6109 = vadd.f32 %v5597, %v5853
      %v6110 = vadd.f32 %v5598, %v5854
      %v6111 = vadd.f32 %v5599, %v5855
      %v6112 = vadd.f32 %v5600, %v5856
      %v6113 = vadd.f32 %v5601, %v5857
      %v6114 = vadd.f32 %v5602, %v5858
      %v6115 = vadd.f32 %v5603, %v5859
      %v6116 = vadd.f32 %v5604, %v5860
      %v6117 = vadd.f32 %v5605, %v5861
      %v6118 = vadd.f32 %v5606, %v5862
      %v6119 = vadd.f32 %v5607, %v5863
      %v6120 = vadd.f32 %v5608, %v5864
      %v6121 = vadd.f32 %v5609, %v5865
      %v6122 = vld [vmem:[%s2] sm:$0xff]
      %v6123 = vld [vmem:[%s2 + $0x8] sm:$0xff]
      %v6124 = vld [vmem:[%s2 + $0x10] sm:$0xff]
      %v6125 = vld [vmem:[%s2 + $0x18] sm:$0xff]
      %v6126 = vld [vmem:[%s2 + $0x20] sm:$0xff]
      %v6127 = vld [vmem:[%s2 + $0x28] sm:$0xff]
      %v6128 = vld [vmem:[%s2 + $0x30] sm:$0xff]
      %v6129 = vld [vmem:[%s2 + $0x38] sm:$0xff]
      %v6130 = vld [vmem:[%s2 + $0x40] sm:$0xff]
      %v6131 = vld [vmem:[%s2 + $0x48] sm:$0xff]
      %v6132 = vld [vmem:[%s2 + $0x50] sm:$0xff]
      %v6133 = vld [vmem:[%s2 + $0x58] sm:$0xff]
      %v6134 = vld [vmem:[%s2 + $0x60] sm:$0xff]
      %v6135 = vld [vmem:[%s2 + $0x68] sm:$0xff]
      %v6136 = vld [vmem:[%s2 + $0x70] sm:$0xff]
      %v6137 = vld [vmem:[%s2 + $0x78] sm:$0xff]
      %v6138 = vld [vmem:[%s2 + $0x80] sm:$0xff]
      %v6139 = vld [vmem:[%s2 + $0x88] sm:$0xff]
      %v6140 = vld [vmem:[%s2 + $0x90] sm:$0xff]
      %v6141 = vld [vmem:[%s2 + $0x98] sm:$0xff]
      %v6142 = vld [vmem:[%s2 + $0xa0] sm:$0xff]
      %v6143 = vld [vmem:[%s2 + $0xa8] sm:$0xff]
      %v6144 = vld [vmem:[%s2 + $0xb0] sm:$0xff]
      %v6145 = vld [vmem:[%s2 + $0xb8] sm:$0xff]
      %v6146 = vld [vmem:[%s2 + $0xc0] sm:$0xff]
      %v6147 = vld [vmem:[%s2 + $0xc8] sm:$0xff]
      %v6148 = vld [vmem:[%s2 + $0xd0] sm:$0xff]
      %v6149 = vld [vmem:[%s2 + $0xd8] sm:$0xff]
      %v6150 = vld [vmem:[%s2 + $0xe0] sm:$0xff]
      %v6151 = vld [vmem:[%s2 + $0xe8] sm:$0xff]
      %v6152 = vld [vmem:[%s2 + $0xf0] sm:$0xff]
      %v6153 = vld [vmem:[%s2 + $0xf8] sm:$0xff]
      %6154 = vmatprep.subr.mxu0 %v5987
      %6155 = vmatpush1.msra.mxu0 %v5986
      %6156 = vmatprep.subr.mxu0 %v5979
      %6157 = vmatpush1.msra.mxu0 %v5978
      %6158 = vmatprep.subr.mxu0 %v5971
      %6159 = vmatpush1.msra.mxu0 %v5970
      %6160 = vmatprep.subr.mxu0 %v5963
      %6161 = vmatpush1.msra.mxu0 %v5962
      %6162 = vmatprep.subr.mxu0 %v5955
      %6163 = vmatpush1.msra.mxu0 %v5954
      %6164 = vmatprep.subr.mxu0 %v5947
      %6165 = vmatpush1.msra.mxu0 %v5946
      %6166 = vmatprep.subr.mxu0 %v5939
      %6167 = vmatpush1.msra.mxu0 %v5938
      %6168 = vmatprep.subr.mxu0 %v5931
      %6169 = vmatpush1.msra.mxu0 %v5930
      %6170 = vmatprep.subr.mxu0 %v5923
      %6171 = vmatpush1.msra.mxu0 %v5922
      %6172 = vmatprep.subr.mxu0 %v5915
      %6173 = vmatpush1.msra.mxu0 %v5914
      %6174 = vmatprep.subr.mxu0 %v5907
      %6175 = vmatpush1.msra.mxu0 %v5906
      %6176 = vmatprep.subr.mxu0 %v5899
      %6177 = vmatpush1.msra.mxu0 %v5898
      %6178 = vmatprep.subr.mxu0 %v5891
      %6179 = vmatpush1.msra.mxu0 %v5890
      %6180 = vmatprep.subr.mxu0 %v5883
      %6181 = vmatpush1.msra.mxu0 %v5882
      %6182 = vmatprep.subr.mxu0 %v5875
      %6183 = vmatpush1.msra.mxu0 %v5874
      %6184 = vmatprep.subr.mxu0 %v5867
      %6185 = vmatpush1.msra.mxu0 %v5866
      %6186 = vmatprep.subr.mxu0 %v6115
      %6187 = vmatpush2.msra.mxu0 %v6114
      %6188 = vmatprep.subr.mxu0 %v6107
      %6189 = vmatpush2.msra.mxu0 %v6106
      %6190 = vmatprep.subr.mxu0 %v6099
      %6191 = vmatpush2.msra.mxu0 %v6098
      %6192 = vmatprep.subr.mxu0 %v6091
      %6193 = vmatpush2.msra.mxu0 %v6090
      %6194 = vmatprep.subr.mxu0 %v6083
      %6195 = vmatpush2.msra.mxu0 %v6082
      %6196 = vmatprep.subr.mxu0 %v6075
      %6197 = vmatpush2.msra.mxu0 %v6074
      %6198 = vmatprep.subr.mxu0 %v6067
      %6199 = vmatpush2.msra.mxu0 %v6066
      %6200 = vmatprep.subr.mxu0 %v6059
      %6201 = vmatpush2.msra.mxu0 %v6058
      %6202 = vmatprep.subr.mxu0 %v6051
      %6203 = vmatpush2.msra.mxu0 %v6050
      %6204 = vmatprep.subr.mxu0 %v6043
      %6205 = vmatpush2.msra.mxu0 %v6042
      %6206 = vmatprep.subr.mxu0 %v6035
      %6207 = vmatpush2.msra.mxu0 %v6034
      %6208 = vmatprep.subr.mxu0 %v6027
      %6209 = vmatpush2.msra.mxu0 %v6026
      %6210 = vmatprep.subr.mxu0 %v6019
      %6211 = vmatpush2.msra.mxu0 %v6018
      %6212 = vmatprep.subr.mxu0 %v6011
      %6213 = vmatpush2.msra.mxu0 %v6010
      %6214 = vmatprep.subr.mxu0 %v6003
      %6215 = vmatpush2.msra.mxu0 %v6002
      %6216 = vmatprep.subr.mxu0 %v5995
      %6217 = vmatpush2.msra.mxu0 %v5994
      %6218 = vmatprep.mubr.f32.mxu0 %v6123
      %6219 = vmatmul.mubr.f32.gmra.mxu0 %v6122
      %v6220 = vpop.f32.mrf.mxu0
      %v6221 = vadd.f32 0.0, %v6220
      %v6222 = vpop.f32.mrf.mxu0
      %v6223 = vadd.f32 0.0, %v6222
      %6224 = vmatprep.mubr.f32.mxu0 %v6125
      %6225 = vmatmul.mubr.f32.gmra.mxu0 %v6124
      %v6226 = vpop.f32.mrf.mxu0
      %v6227 = vadd.f32 0.0, %v6226
      %v6228 = vpop.f32.mrf.mxu0
      %v6229 = vadd.f32 0.0, %v6228
      %6230 = vmatprep.mubr.f32.mxu0 %v6127
      %6231 = vmatmul.mubr.f32.gmra.mxu0 %v6126
      %v6232 = vpop.f32.mrf.mxu0
      %v6233 = vadd.f32 0.0, %v6232
      %v6234 = vpop.f32.mrf.mxu0
      %v6235 = vadd.f32 0.0, %v6234
      %6236 = vmatprep.mubr.f32.mxu0 %v6129
      %6237 = vmatmul.mubr.f32.gmra.mxu0 %v6128
      %v6238 = vpop.f32.mrf.mxu0
      %v6239 = vadd.f32 0.0, %v6238
      %v6240 = vpop.f32.mrf.mxu0
      %v6241 = vadd.f32 0.0, %v6240
      %6242 = vmatprep.mubr.f32.mxu0 %v6131
      %6243 = vmatmul.mubr.f32.gmra.mxu0 %v6130
      %v6244 = vpop.f32.mrf.mxu0
      %v6245 = vadd.f32 0.0, %v6244
      %v6246 = vpop.f32.mrf.mxu0
      %v6247 = vadd.f32 0.0, %v6246
      %6248 = vmatprep.mubr.f32.mxu0 %v6133
      %6249 = vmatmul.mubr.f32.gmra.mxu0 %v6132
      %v6250 = vpop.f32.mrf.mxu0
      %v6251 = vadd.f32 0.0, %v6250
      %v6252 = vpop.f32.mrf.mxu0
      %v6253 = vadd.f32 0.0, %v6252
      %6254 = vmatprep.mubr.f32.mxu0 %v6135
      %6255 = vmatmul.mubr.f32.gmra.mxu0 %v6134
      %v6256 = vpop.f32.mrf.mxu0
      %v6257 = vadd.f32 0.0, %v6256
      %v6258 = vpop.f32.mrf.mxu0
      %v6259 = vadd.f32 0.0, %v6258
      %6260 = vmatprep.mubr.f32.mxu0 %v6137
      %6261 = vmatmul.mubr.f32.gmra.mxu0 %v6136
      %v6262 = vpop.f32.mrf.mxu0
      %v6263 = vadd.f32 0.0, %v6262
      %v6264 = vpop.f32.mrf.mxu0
      %v6265 = vadd.f32 0.0, %v6264
      %6266 = vmatprep.mubr.f32.mxu0 %v6139
      %6267 = vmatmul.mubr.f32.gmra.mxu0 %v6138
      %v6268 = vpop.f32.mrf.mxu0
      %v6269 = vadd.f32 0.0, %v6268
      %v6270 = vpop.f32.mrf.mxu0
      %v6271 = vadd.f32 0.0, %v6270
      %6272 = vmatprep.mubr.f32.mxu0 %v6141
      %6273 = vmatmul.mubr.f32.gmra.mxu0 %v6140
      %v6274 = vpop.f32.mrf.mxu0
      %v6275 = vadd.f32 0.0, %v6274
      %v6276 = vpop.f32.mrf.mxu0
      %v6277 = vadd.f32 0.0, %v6276
      %6278 = vmatprep.mubr.f32.mxu0 %v6143
      %6279 = vmatmul.mubr.f32.gmra.mxu0 %v6142
      %v6280 = vpop.f32.mrf.mxu0
      %v6281 = vadd.f32 0.0, %v6280
      %v6282 = vpop.f32.mrf.mxu0
      %v6283 = vadd.f32 0.0, %v6282
      %6284 = vmatprep.mubr.f32.mxu0 %v6145
      %6285 = vmatmul.mubr.f32.gmra.mxu0 %v6144
      %v6286 = vpop.f32.mrf.mxu0
      %v6287 = vadd.f32 0.0, %v6286
      %v6288 = vpop.f32.mrf.mxu0
      %v6289 = vadd.f32 0.0, %v6288
      %6290 = vmatprep.mubr.f32.mxu0 %v6147
      %6291 = vmatmul.mubr.f32.gmra.mxu0 %v6146
      %v6292 = vpop.f32.mrf.mxu0
      %v6293 = vadd.f32 0.0, %v6292
      %v6294 = vpop.f32.mrf.mxu0
      %v6295 = vadd.f32 0.0, %v6294
      %6296 = vmatprep.mubr.f32.mxu0 %v6149
      %6297 = vmatmul.mubr.f32.gmra.mxu0 %v6148
      %v6298 = vpop.f32.mrf.mxu0
      %v6299 = vadd.f32 0.0, %v6298
      %v6300 = vpop.f32.mrf.mxu0
      %v6301 = vadd.f32 0.0, %v6300
      %6302 = vmatprep.mubr.f32.mxu0 %v6151
      %6303 = vmatmul.mubr.f32.gmra.mxu0 %v6150
      %v6304 = vpop.f32.mrf.mxu0
      %v6305 = vadd.f32 0.0, %v6304
      %v6306 = vpop.f32.mrf.mxu0
      %v6307 = vadd.f32 0.0, %v6306
      %6308 = vmatprep.mubr.f32.mxu0 %v6153
      %6309 = vmatmul.mubr.f32.gmra.mxu0 %v6152
      %v6310 = vpop.f32.mrf.mxu0
      %v6311 = vadd.f32 0.0, %v6310
      %v6312 = vpop.f32.mrf.mxu0
      %v6313 = vadd.f32 0.0, %v6312
      %6314 = vdwg.mxu0
      %6315 = vmatprep.subr.mxu0 %v5989
      %6316 = vmatpush1.msra.mxu0 %v5988
      %6317 = vmatprep.subr.mxu0 %v5981
      %6318 = vmatpush1.msra.mxu0 %v5980
      %6319 = vmatprep.subr.mxu0 %v5973
      %6320 = vmatpush1.msra.mxu0 %v5972
      %6321 = vmatprep.subr.mxu0 %v5965
      %6322 = vmatpush1.msra.mxu0 %v5964
      %6323 = vmatprep.subr.mxu0 %v5957
      %6324 = vmatpush1.msra.mxu0 %v5956
      %6325 = vmatprep.subr.mxu0 %v5949
      %6326 = vmatpush1.msra.mxu0 %v5948
      %6327 = vmatprep.subr.mxu0 %v5941
      %6328 = vmatpush1.msra.mxu0 %v5940
      %6329 = vmatprep.subr.mxu0 %v5933
      %6330 = vmatpush1.msra.mxu0 %v5932
      %6331 = vmatprep.subr.mxu0 %v5925
      %6332 = vmatpush1.msra.mxu0 %v5924
      %6333 = vmatprep.subr.mxu0 %v5917
      %6334 = vmatpush1.msra.mxu0 %v5916
      %6335 = vmatprep.subr.mxu0 %v5909
      %6336 = vmatpush1.msra.mxu0 %v5908
      %6337 = vmatprep.subr.mxu0 %v5901
      %6338 = vmatpush1.msra.mxu0 %v5900
      %6339 = vmatprep.subr.mxu0 %v5893
      %6340 = vmatpush1.msra.mxu0 %v5892
      %6341 = vmatprep.subr.mxu0 %v5885
      %6342 = vmatpush1.msra.mxu0 %v5884
      %6343 = vmatprep.subr.mxu0 %v5877
      %6344 = vmatpush1.msra.mxu0 %v5876
      %6345 = vmatprep.subr.mxu0 %v5869
      %6346 = vmatpush1.msra.mxu0 %v5868
      %6347 = vmatprep.subr.mxu0 %v6117
      %6348 = vmatpush2.msra.mxu0 %v6116
      %6349 = vmatprep.subr.mxu0 %v6109
      %6350 = vmatpush2.msra.mxu0 %v6108
      %6351 = vmatprep.subr.mxu0 %v6101
      %6352 = vmatpush2.msra.mxu0 %v6100
      %6353 = vmatprep.subr.mxu0 %v6093
      %6354 = vmatpush2.msra.mxu0 %v6092
      %6355 = vmatprep.subr.mxu0 %v6085
      %6356 = vmatpush2.msra.mxu0 %v6084
      %6357 = vmatprep.subr.mxu0 %v6077
      %6358 = vmatpush2.msra.mxu0 %v6076
      %6359 = vmatprep.subr.mxu0 %v6069
      %6360 = vmatpush2.msra.mxu0 %v6068
      %6361 = vmatprep.subr.mxu0 %v6061
      %6362 = vmatpush2.msra.mxu0 %v6060
      %6363 = vmatprep.subr.mxu0 %v6053
      %6364 = vmatpush2.msra.mxu0 %v6052
      %6365 = vmatprep.subr.mxu0 %v6045
      %6366 = vmatpush2.msra.mxu0 %v6044
      %6367 = vmatprep.subr.mxu0 %v6037
      %6368 = vmatpush2.msra.mxu0 %v6036
      %6369 = vmatprep.subr.mxu0 %v6029
      %6370 = vmatpush2.msra.mxu0 %v6028
      %6371 = vmatprep.subr.mxu0 %v6021
      %6372 = vmatpush2.msra.mxu0 %v6020
      %6373 = vmatprep.subr.mxu0 %v6013
      %6374 = vmatpush2.msra.mxu0 %v6012
      %6375 = vmatprep.subr.mxu0 %v6005
      %6376 = vmatpush2.msra.mxu0 %v6004
      %6377 = vmatprep.subr.mxu0 %v5997
      %6378 = vmatpush2.msra.mxu0 %v5996
      %6379 = vmatprep.mubr.f32.mxu0 %v6123
      %6380 = vmatmul.mubr.f32.gmra.mxu0 %v6122
      %v6381 = vpop.f32.mrf.mxu0
      %v6382 = vadd.f32 0.0, %v6381
      %v6383 = vpop.f32.mrf.mxu0
      %v6384 = vadd.f32 0.0, %v6383
      %6385 = vmatprep.mubr.f32.mxu0 %v6125
      %6386 = vmatmul.mubr.f32.gmra.mxu0 %v6124
      %v6387 = vpop.f32.mrf.mxu0
      %v6388 = vadd.f32 0.0, %v6387
      %v6389 = vpop.f32.mrf.mxu0
      %v6390 = vadd.f32 0.0, %v6389
      %6391 = vmatprep.mubr.f32.mxu0 %v6127
      %6392 = vmatmul.mubr.f32.gmra.mxu0 %v6126
      %v6393 = vpop.f32.mrf.mxu0
      %v6394 = vadd.f32 0.0, %v6393
      %v6395 = vpop.f32.mrf.mxu0
      %v6396 = vadd.f32 0.0, %v6395
      %6397 = vmatprep.mubr.f32.mxu0 %v6129
      %6398 = vmatmul.mubr.f32.gmra.mxu0 %v6128
      %v6399 = vpop.f32.mrf.mxu0
      %v6400 = vadd.f32 0.0, %v6399
      %v6401 = vpop.f32.mrf.mxu0
      %v6402 = vadd.f32 0.0, %v6401
      %6403 = vmatprep.mubr.f32.mxu0 %v6131
      %6404 = vmatmul.mubr.f32.gmra.mxu0 %v6130
      %v6405 = vpop.f32.mrf.mxu0
      %v6406 = vadd.f32 0.0, %v6405
      %v6407 = vpop.f32.mrf.mxu0
      %v6408 = vadd.f32 0.0, %v6407
      %6409 = vmatprep.mubr.f32.mxu0 %v6133
      %6410 = vmatmul.mubr.f32.gmra.mxu0 %v6132
      %v6411 = vpop.f32.mrf.mxu0
      %v6412 = vadd.f32 0.0, %v6411
      %v6413 = vpop.f32.mrf.mxu0
      %v6414 = vadd.f32 0.0, %v6413
      %6415 = vmatprep.mubr.f32.mxu0 %v6135
      %6416 = vmatmul.mubr.f32.gmra.mxu0 %v6134
      %v6417 = vpop.f32.mrf.mxu0
      %v6418 = vadd.f32 0.0, %v6417
      %v6419 = vpop.f32.mrf.mxu0
      %v6420 = vadd.f32 0.0, %v6419
      %6421 = vmatprep.mubr.f32.mxu0 %v6137
      %6422 = vmatmul.mubr.f32.gmra.mxu0 %v6136
      %v6423 = vpop.f32.mrf.mxu0
      %v6424 = vadd.f32 0.0, %v6423
      %v6425 = vpop.f32.mrf.mxu0
      %v6426 = vadd.f32 0.0, %v6425
      %6427 = vmatprep.mubr.f32.mxu0 %v6139
      %6428 = vmatmul.mubr.f32.gmra.mxu0 %v6138
      %v6429 = vpop.f32.mrf.mxu0
      %v6430 = vadd.f32 0.0, %v6429
      %v6431 = vpop.f32.mrf.mxu0
      %v6432 = vadd.f32 0.0, %v6431
      %6433 = vmatprep.mubr.f32.mxu0 %v6141
      %6434 = vmatmul.mubr.f32.gmra.mxu0 %v6140
      %v6435 = vpop.f32.mrf.mxu0
      %v6436 = vadd.f32 0.0, %v6435
      %v6437 = vpop.f32.mrf.mxu0
      %v6438 = vadd.f32 0.0, %v6437
      %6439 = vmatprep.mubr.f32.mxu0 %v6143
      %6440 = vmatmul.mubr.f32.gmra.mxu0 %v6142
      %v6441 = vpop.f32.mrf.mxu0
      %v6442 = vadd.f32 0.0, %v6441
      %v6443 = vpop.f32.mrf.mxu0
      %v6444 = vadd.f32 0.0, %v6443
      %6445 = vmatprep.mubr.f32.mxu0 %v6145
      %6446 = vmatmul.mubr.f32.gmra.mxu0 %v6144
      %v6447 = vpop.f32.mrf.mxu0
      %v6448 = vadd.f32 0.0, %v6447
      %v6449 = vpop.f32.mrf.mxu0
      %v6450 = vadd.f32 0.0, %v6449
      %6451 = vmatprep.mubr.f32.mxu0 %v6147
      %6452 = vmatmul.mubr.f32.gmra.mxu0 %v6146
      %v6453 = vpop.f32.mrf.mxu0
      %v6454 = vadd.f32 0.0, %v6453
      %v6455 = vpop.f32.mrf.mxu0
      %v6456 = vadd.f32 0.0, %v6455
      %6457 = vmatprep.mubr.f32.mxu0 %v6149
      %6458 = vmatmul.mubr.f32.gmra.mxu0 %v6148
      %v6459 = vpop.f32.mrf.mxu0
      %v6460 = vadd.f32 0.0, %v6459
      %v6461 = vpop.f32.mrf.mxu0
      %v6462 = vadd.f32 0.0, %v6461
      %6463 = vmatprep.mubr.f32.mxu0 %v6151
      %6464 = vmatmul.mubr.f32.gmra.mxu0 %v6150
      %v6465 = vpop.f32.mrf.mxu0
      %v6466 = vadd.f32 0.0, %v6465
      %v6467 = vpop.f32.mrf.mxu0
      %v6468 = vadd.f32 0.0, %v6467
      %6469 = vmatprep.mubr.f32.mxu0 %v6153
      %6470 = vmatmul.mubr.f32.gmra.mxu0 %v6152
      %v6471 = vpop.f32.mrf.mxu0
      %v6472 = vadd.f32 0.0, %v6471
      %v6473 = vpop.f32.mrf.mxu0
      %v6474 = vadd.f32 0.0, %v6473
      %6475 = vdwg.mxu0
      %6476 = vmatprep.subr.mxu0 %v5991
      %6477 = vmatpush1.msra.mxu0 %v5990
      %6478 = vmatprep.subr.mxu0 %v5983
      %6479 = vmatpush1.msra.mxu0 %v5982
      %6480 = vmatprep.subr.mxu0 %v5975
      %6481 = vmatpush1.msra.mxu0 %v5974
      %6482 = vmatprep.subr.mxu0 %v5967
      %6483 = vmatpush1.msra.mxu0 %v5966
      %6484 = vmatprep.subr.mxu0 %v5959
      %6485 = vmatpush1.msra.mxu0 %v5958
      %6486 = vmatprep.subr.mxu0 %v5951
      %6487 = vmatpush1.msra.mxu0 %v5950
      %6488 = vmatprep.subr.mxu0 %v5943
      %6489 = vmatpush1.msra.mxu0 %v5942
      %6490 = vmatprep.subr.mxu0 %v5935
      %6491 = vmatpush1.msra.mxu0 %v5934
      %6492 = vmatprep.subr.mxu0 %v5927
      %6493 = vmatpush1.msra.mxu0 %v5926
      %6494 = vmatprep.subr.mxu0 %v5919
      %6495 = vmatpush1.msra.mxu0 %v5918
      %6496 = vmatprep.subr.mxu0 %v5911
      %6497 = vmatpush1.msra.mxu0 %v5910
      %6498 = vmatprep.subr.mxu0 %v5903
      %6499 = vmatpush1.msra.mxu0 %v5902
      %6500 = vmatprep.subr.mxu0 %v5895
      %6501 = vmatpush1.msra.mxu0 %v5894
      %6502 = vmatprep.subr.mxu0 %v5887
      %6503 = vmatpush1.msra.mxu0 %v5886
      %6504 = vmatprep.subr.mxu0 %v5879
      %6505 = vmatpush1.msra.mxu0 %v5878
      %6506 = vmatprep.subr.mxu0 %v5871
      %6507 = vmatpush1.msra.mxu0 %v5870
      %6508 = vmatprep.subr.mxu0 %v6119
      %6509 = vmatpush2.msra.mxu0 %v6118
      %6510 = vmatprep.subr.mxu0 %v6111
      %6511 = vmatpush2.msra.mxu0 %v6110
      %6512 = vmatprep.subr.mxu0 %v6103
      %6513 = vmatpush2.msra.mxu0 %v6102
      %6514 = vmatprep.subr.mxu0 %v6095
      %6515 = vmatpush2.msra.mxu0 %v6094
      %6516 = vmatprep.subr.mxu0 %v6087
      %6517 = vmatpush2.msra.mxu0 %v6086
      %6518 = vmatprep.subr.mxu0 %v6079
      %6519 = vmatpush2.msra.mxu0 %v6078
      %6520 = vmatprep.subr.mxu0 %v6071
      %6521 = vmatpush2.msra.mxu0 %v6070
      %6522 = vmatprep.subr.mxu0 %v6063
      %6523 = vmatpush2.msra.mxu0 %v6062
      %6524 = vmatprep.subr.mxu0 %v6055
      %6525 = vmatpush2.msra.mxu0 %v6054
      %6526 = vmatprep.subr.mxu0 %v6047
      %6527 = vmatpush2.msra.mxu0 %v6046
      %6528 = vmatprep.subr.mxu0 %v6039
      %6529 = vmatpush2.msra.mxu0 %v6038
      %6530 = vmatprep.subr.mxu0 %v6031
      %6531 = vmatpush2.msra.mxu0 %v6030
      %6532 = vmatprep.subr.mxu0 %v6023
      %6533 = vmatpush2.msra.mxu0 %v6022
      %6534 = vmatprep.subr.mxu0 %v6015
      %6535 = vmatpush2.msra.mxu0 %v6014
      %6536 = vmatprep.subr.mxu0 %v6007
      %6537 = vmatpush2.msra.mxu0 %v6006
      %6538 = vmatprep.subr.mxu0 %v5999
      %6539 = vmatpush2.msra.mxu0 %v5998
      %6540 = vmatprep.mubr.f32.mxu0 %v6123
      %6541 = vmatmul.mubr.f32.gmra.mxu0 %v6122
      %v6542 = vpop.f32.mrf.mxu0
      %v6543 = vadd.f32 0.0, %v6542
      %v6544 = vpop.f32.mrf.mxu0
      %v6545 = vadd.f32 0.0, %v6544
      %6546 = vmatprep.mubr.f32.mxu0 %v6125
      %6547 = vmatmul.mubr.f32.gmra.mxu0 %v6124
      %v6548 = vpop.f32.mrf.mxu0
      %v6549 = vadd.f32 0.0, %v6548
      %v6550 = vpop.f32.mrf.mxu0
      %v6551 = vadd.f32 0.0, %v6550
      %6552 = vmatprep.mubr.f32.mxu0 %v6127
      %6553 = vmatmul.mubr.f32.gmra.mxu0 %v6126
      %v6554 = vpop.f32.mrf.mxu0
      %v6555 = vadd.f32 0.0, %v6554
      %v6556 = vpop.f32.mrf.mxu0
      %v6557 = vadd.f32 0.0, %v6556
      %6558 = vmatprep.mubr.f32.mxu0 %v6129
      %6559 = vmatmul.mubr.f32.gmra.mxu0 %v6128
      %v6560 = vpop.f32.mrf.mxu0
      %v6561 = vadd.f32 0.0, %v6560
      %v6562 = vpop.f32.mrf.mxu0
      %v6563 = vadd.f32 0.0, %v6562
      %6564 = vmatprep.mubr.f32.mxu0 %v6131
      %6565 = vmatmul.mubr.f32.gmra.mxu0 %v6130
      %v6566 = vpop.f32.mrf.mxu0
      %v6567 = vadd.f32 0.0, %v6566
      %v6568 = vpop.f32.mrf.mxu0
      %v6569 = vadd.f32 0.0, %v6568
      %6570 = vmatprep.mubr.f32.mxu0 %v6133
      %6571 = vmatmul.mubr.f32.gmra.mxu0 %v6132
      %v6572 = vpop.f32.mrf.mxu0
      %v6573 = vadd.f32 0.0, %v6572
      %v6574 = vpop.f32.mrf.mxu0
      %v6575 = vadd.f32 0.0, %v6574
      %6576 = vmatprep.mubr.f32.mxu0 %v6135
      %6577 = vmatmul.mubr.f32.gmra.mxu0 %v6134
      %v6578 = vpop.f32.mrf.mxu0
      %v6579 = vadd.f32 0.0, %v6578
      %v6580 = vpop.f32.mrf.mxu0
      %v6581 = vadd.f32 0.0, %v6580
      %6582 = vmatprep.mubr.f32.mxu0 %v6137
      %6583 = vmatmul.mubr.f32.gmra.mxu0 %v6136
      %v6584 = vpop.f32.mrf.mxu0
      %v6585 = vadd.f32 0.0, %v6584
      %v6586 = vpop.f32.mrf.mxu0
      %v6587 = vadd.f32 0.0, %v6586
      %6588 = vmatprep.mubr.f32.mxu0 %v6139
      %6589 = vmatmul.mubr.f32.gmra.mxu0 %v6138
      %v6590 = vpop.f32.mrf.mxu0
      %v6591 = vadd.f32 0.0, %v6590
      %v6592 = vpop.f32.mrf.mxu0
      %v6593 = vadd.f32 0.0, %v6592
      %6594 = vmatprep.mubr.f32.mxu0 %v6141
      %6595 = vmatmul.mubr.f32.gmra.mxu0 %v6140
      %v6596 = vpop.f32.mrf.mxu0
      %v6597 = vadd.f32 0.0, %v6596
      %v6598 = vpop.f32.mrf.mxu0
      %v6599 = vadd.f32 0.0, %v6598
      %6600 = vmatprep.mubr.f32.mxu0 %v6143
      %6601 = vmatmul.mubr.f32.gmra.mxu0 %v6142
      %v6602 = vpop.f32.mrf.mxu0
      %v6603 = vadd.f32 0.0, %v6602
      %v6604 = vpop.f32.mrf.mxu0
      %v6605 = vadd.f32 0.0, %v6604
      %6606 = vmatprep.mubr.f32.mxu0 %v6145
      %6607 = vmatmul.mubr.f32.gmra.mxu0 %v6144
      %v6608 = vpop.f32.mrf.mxu0
      %v6609 = vadd.f32 0.0, %v6608
      %v6610 = vpop.f32.mrf.mxu0
      %v6611 = vadd.f32 0.0, %v6610
      %6612 = vmatprep.mubr.f32.mxu0 %v6147
      %6613 = vmatmul.mubr.f32.gmra.mxu0 %v6146
      %v6614 = vpop.f32.mrf.mxu0
      %v6615 = vadd.f32 0.0, %v6614
      %v6616 = vpop.f32.mrf.mxu0
      %v6617 = vadd.f32 0.0, %v6616
      %6618 = vmatprep.mubr.f32.mxu0 %v6149
      %6619 = vmatmul.mubr.f32.gmra.mxu0 %v6148
      %v6620 = vpop.f32.mrf.mxu0
      %v6621 = vadd.f32 0.0, %v6620
      %v6622 = vpop.f32.mrf.mxu0
      %v6623 = vadd.f32 0.0, %v6622
      %6624 = vmatprep.mubr.f32.mxu0 %v6151
      %6625 = vmatmul.mubr.f32.gmra.mxu0 %v6150
      %v6626 = vpop.f32.mrf.mxu0
      %v6627 = vadd.f32 0.0, %v6626
      %v6628 = vpop.f32.mrf.mxu0
      %v6629 = vadd.f32 0.0, %v6628
      %6630 = vmatprep.mubr.f32.mxu0 %v6153
      %6631 = vmatmul.mubr.f32.gmra.mxu0 %v6152
      %v6632 = vpop.f32.mrf.mxu0
      %v6633 = vadd.f32 0.0, %v6632
      %v6634 = vpop.f32.mrf.mxu0
      %v6635 = vadd.f32 0.0, %v6634
      %6636 = vdwg.mxu0
      %6637 = vmatprep.subr.mxu0 %v5993
      %6638 = vmatpush1.msra.mxu0 %v5992
      %6639 = vmatprep.subr.mxu0 %v5985
      %6640 = vmatpush1.msra.mxu0 %v5984
      %6641 = vmatprep.subr.mxu0 %v5977
      %6642 = vmatpush1.msra.mxu0 %v5976
      %6643 = vmatprep.subr.mxu0 %v5969
      %6644 = vmatpush1.msra.mxu0 %v5968
      %6645 = vmatprep.subr.mxu0 %v5961
      %6646 = vmatpush1.msra.mxu0 %v5960
      %6647 = vmatprep.subr.mxu0 %v5953
      %6648 = vmatpush1.msra.mxu0 %v5952
      %6649 = vmatprep.subr.mxu0 %v5945
      %6650 = vmatpush1.msra.mxu0 %v5944
      %6651 = vmatprep.subr.mxu0 %v5937
      %6652 = vmatpush1.msra.mxu0 %v5936
      %6653 = vmatprep.subr.mxu0 %v5929
      %6654 = vmatpush1.msra.mxu0 %v5928
      %6655 = vmatprep.subr.mxu0 %v5921
      %6656 = vmatpush1.msra.mxu0 %v5920
      %6657 = vmatprep.subr.mxu0 %v5913
      %6658 = vmatpush1.msra.mxu0 %v5912
      %6659 = vmatprep.subr.mxu0 %v5905
      %6660 = vmatpush1.msra.mxu0 %v5904
      %6661 = vmatprep.subr.mxu0 %v5897
      %6662 = vmatpush1.msra.mxu0 %v5896
      %6663 = vmatprep.subr.mxu0 %v5889
      %6664 = vmatpush1.msra.mxu0 %v5888
      %6665 = vmatprep.subr.mxu0 %v5881
      %6666 = vmatpush1.msra.mxu0 %v5880
      %6667 = vmatprep.subr.mxu0 %v5873
      %6668 = vmatpush1.msra.mxu0 %v5872
      %6669 = vmatprep.subr.mxu0 %v6121
      %6670 = vmatpush2.msra.mxu0 %v6120
      %6671 = vmatprep.subr.mxu0 %v6113
      %6672 = vmatpush2.msra.mxu0 %v6112
      %6673 = vmatprep.subr.mxu0 %v6105
      %6674 = vmatpush2.msra.mxu0 %v6104
      %6675 = vmatprep.subr.mxu0 %v6097
      %6676 = vmatpush2.msra.mxu0 %v6096
      %6677 = vmatprep.subr.mxu0 %v6089
      %6678 = vmatpush2.msra.mxu0 %v6088
      %6679 = vmatprep.subr.mxu0 %v6081
      %6680 = vmatpush2.msra.mxu0 %v6080
      %6681 = vmatprep.subr.mxu0 %v6073
      %6682 = vmatpush2.msra.mxu0 %v6072
      %6683 = vmatprep.subr.mxu0 %v6065
      %6684 = vmatpush2.msra.mxu0 %v6064
      %6685 = vmatprep.subr.mxu0 %v6057
      %6686 = vmatpush2.msra.mxu0 %v6056
      %6687 = vmatprep.subr.mxu0 %v6049
      %6688 = vmatpush2.msra.mxu0 %v6048
      %6689 = vmatprep.subr.mxu0 %v6041
      %6690 = vmatpush2.msra.mxu0 %v6040
      %6691 = vmatprep.subr.mxu0 %v6033
      %6692 = vmatpush2.msra.mxu0 %v6032
      %6693 = vmatprep.subr.mxu0 %v6025
      %6694 = vmatpush2.msra.mxu0 %v6024
      %6695 = vmatprep.subr.mxu0 %v6017
      %6696 = vmatpush2.msra.mxu0 %v6016
      %6697 = vmatprep.subr.mxu0 %v6009
      %6698 = vmatpush2.msra.mxu0 %v6008
      %6699 = vmatprep.subr.mxu0 %v6001
      %6700 = vmatpush2.msra.mxu0 %v6000
      %6701 = vmatprep.mubr.f32.mxu0 %v6123
      %6702 = vmatmul.mubr.f32.gmra.mxu0 %v6122
      %v6703 = vpop.f32.mrf.mxu0
      %v6704 = vadd.f32 0.0, %v6703
      %v6705 = vpop.f32.mrf.mxu0
      %v6706 = vadd.f32 0.0, %v6705
      %6707 = vmatprep.mubr.f32.mxu0 %v6125
      %6708 = vmatmul.mubr.f32.gmra.mxu0 %v6124
      %v6709 = vpop.f32.mrf.mxu0
      %v6710 = vadd.f32 0.0, %v6709
      %v6711 = vpop.f32.mrf.mxu0
      %v6712 = vadd.f32 0.0, %v6711
      %6713 = vmatprep.mubr.f32.mxu0 %v6127
      %6714 = vmatmul.mubr.f32.gmra.mxu0 %v6126
      %v6715 = vpop.f32.mrf.mxu0
      %v6716 = vadd.f32 0.0, %v6715
      %v6717 = vpop.f32.mrf.mxu0
      %v6718 = vadd.f32 0.0, %v6717
      %6719 = vmatprep.mubr.f32.mxu0 %v6129
      %6720 = vmatmul.mubr.f32.gmra.mxu0 %v6128
      %v6721 = vpop.f32.mrf.mxu0
      %v6722 = vadd.f32 0.0, %v6721
      %v6723 = vpop.f32.mrf.mxu0
      %v6724 = vadd.f32 0.0, %v6723
      %6725 = vmatprep.mubr.f32.mxu0 %v6131
      %6726 = vmatmul.mubr.f32.gmra.mxu0 %v6130
      %v6727 = vpop.f32.mrf.mxu0
      %v6728 = vadd.f32 0.0, %v6727
      %v6729 = vpop.f32.mrf.mxu0
      %v6730 = vadd.f32 0.0, %v6729
      %6731 = vmatprep.mubr.f32.mxu0 %v6133
      %6732 = vmatmul.mubr.f32.gmra.mxu0 %v6132
      %v6733 = vpop.f32.mrf.mxu0
      %v6734 = vadd.f32 0.0, %v6733
      %v6735 = vpop.f32.mrf.mxu0
      %v6736 = vadd.f32 0.0, %v6735
      %6737 = vmatprep.mubr.f32.mxu0 %v6135
      %6738 = vmatmul.mubr.f32.gmra.mxu0 %v6134
      %v6739 = vpop.f32.mrf.mxu0
      %v6740 = vadd.f32 0.0, %v6739
      %v6741 = vpop.f32.mrf.mxu0
      %v6742 = vadd.f32 0.0, %v6741
      %6743 = vmatprep.mubr.f32.mxu0 %v6137
      %6744 = vmatmul.mubr.f32.gmra.mxu0 %v6136
      %v6745 = vpop.f32.mrf.mxu0
      %v6746 = vadd.f32 0.0, %v6745
      %v6747 = vpop.f32.mrf.mxu0
      %v6748 = vadd.f32 0.0, %v6747
      %6749 = vmatprep.mubr.f32.mxu0 %v6139
      %6750 = vmatmul.mubr.f32.gmra.mxu0 %v6138
      %v6751 = vpop.f32.mrf.mxu0
      %v6752 = vadd.f32 0.0, %v6751
      %v6753 = vpop.f32.mrf.mxu0
      %v6754 = vadd.f32 0.0, %v6753
      %6755 = vmatprep.mubr.f32.mxu0 %v6141
      %6756 = vmatmul.mubr.f32.gmra.mxu0 %v6140
      %v6757 = vpop.f32.mrf.mxu0
      %v6758 = vadd.f32 0.0, %v6757
      %v6759 = vpop.f32.mrf.mxu0
      %v6760 = vadd.f32 0.0, %v6759
      %6761 = vmatprep.mubr.f32.mxu0 %v6143
      %6762 = vmatmul.mubr.f32.gmra.mxu0 %v6142
      %v6763 = vpop.f32.mrf.mxu0
      %v6764 = vadd.f32 0.0, %v6763
      %v6765 = vpop.f32.mrf.mxu0
      %v6766 = vadd.f32 0.0, %v6765
      %6767 = vmatprep.mubr.f32.mxu0 %v6145
      %6768 = vmatmul.mubr.f32.gmra.mxu0 %v6144
      %v6769 = vpop.f32.mrf.mxu0
      %v6770 = vadd.f32 0.0, %v6769
      %v6771 = vpop.f32.mrf.mxu0
      %v6772 = vadd.f32 0.0, %v6771
      %6773 = vmatprep.mubr.f32.mxu0 %v6147
      %6774 = vmatmul.mubr.f32.gmra.mxu0 %v6146
      %v6775 = vpop.f32.mrf.mxu0
      %v6776 = vadd.f32 0.0, %v6775
      %v6777 = vpop.f32.mrf.mxu0
      %v6778 = vadd.f32 0.0, %v6777
      %6779 = vmatprep.mubr.f32.mxu0 %v6149
      %6780 = vmatmul.mubr.f32.gmra.mxu0 %v6148
      %v6781 = vpop.f32.mrf.mxu0
      %v6782 = vadd.f32 0.0, %v6781
      %v6783 = vpop.f32.mrf.mxu0
      %v6784 = vadd.f32 0.0, %v6783
      %6785 = vmatprep.mubr.f32.mxu0 %v6151
      %6786 = vmatmul.mubr.f32.gmra.mxu0 %v6150
      %v6787 = vpop.f32.mrf.mxu0
      %v6788 = vadd.f32 0.0, %v6787
      %v6789 = vpop.f32.mrf.mxu0
      %v6790 = vadd.f32 0.0, %v6789
      %6791 = vmatprep.mubr.f32.mxu0 %v6153
      %6792 = vmatmul.mubr.f32.gmra.mxu0 %v6152
      %v6793 = vpop.f32.mrf.mxu0
      %v6794 = vadd.f32 0.0, %v6793
      %v6795 = vpop.f32.mrf.mxu0
      %v6796 = vadd.f32 0.0, %v6795
      %6797 = vdwg.mxu0
      %v6798 = vmax.f32 %v6221, 1e-10
      %v6799 = vmax.f32 %v6223, 1e-10
      %v6800 = vmax.f32 %v6382, 1e-10
      %v6801 = vmax.f32 %v6384, 1e-10
      %v6802 = vmax.f32 %v6543, 1e-10
      %v6803 = vmax.f32 %v6545, 1e-10
      %v6804 = vmax.f32 %v6704, 1e-10
      %v6805 = vmax.f32 %v6706, 1e-10
      %v6806 = vmax.f32 %v6227, 1e-10
      %v6807 = vmax.f32 %v6229, 1e-10
      %v6808 = vmax.f32 %v6388, 1e-10
      %v6809 = vmax.f32 %v6390, 1e-10
      %v6810 = vmax.f32 %v6549, 1e-10
      %v6811 = vmax.f32 %v6551, 1e-10
      %v6812 = vmax.f32 %v6710, 1e-10
      %v6813 = vmax.f32 %v6712, 1e-10
      %v6814 = vmax.f32 %v6233, 1e-10
      %v6815 = vmax.f32 %v6235, 1e-10
      %v6816 = vmax.f32 %v6394, 1e-10
      %v6817 = vmax.f32 %v6396, 1e-10
      %v6818 = vmax.f32 %v6555, 1e-10
      %v6819 = vmax.f32 %v6557, 1e-10
      %v6820 = vmax.f32 %v6716, 1e-10
      %v6821 = vmax.f32 %v6718, 1e-10
      %v6822 = vmax.f32 %v6239, 1e-10
      %v6823 = vmax.f32 %v6241, 1e-10
      %v6824 = vmax.f32 %v6400, 1e-10
      %v6825 = vmax.f32 %v6402, 1e-10
      %v6826 = vmax.f32 %v6561, 1e-10
      %v6827 = vmax.f32 %v6563, 1e-10
      %v6828 = vmax.f32 %v6722, 1e-10
      %v6829 = vmax.f32 %v6724, 1e-10
      %v6830 = vmax.f32 %v6245, 1e-10
      %v6831 = vmax.f32 %v6247, 1e-10
      %v6832 = vmax.f32 %v6406, 1e-10
      %v6833 = vmax.f32 %v6408, 1e-10
      %v6834 = vmax.f32 %v6567, 1e-10
      %v6835 = vmax.f32 %v6569, 1e-10
      %v6836 = vmax.f32 %v6728, 1e-10
      %v6837 = vmax.f32 %v6730, 1e-10
      %v6838 = vmax.f32 %v6251, 1e-10
      %v6839 = vmax.f32 %v6253, 1e-10
      %v6840 = vmax.f32 %v6412, 1e-10
      %v6841 = vmax.f32 %v6414, 1e-10
      %v6842 = vmax.f32 %v6573, 1e-10
      %v6843 = vmax.f32 %v6575, 1e-10
      %v6844 = vmax.f32 %v6734, 1e-10
      %v6845 = vmax.f32 %v6736, 1e-10
      %v6846 = vmax.f32 %v6257, 1e-10
      %v6847 = vmax.f32 %v6259, 1e-10
      %v6848 = vmax.f32 %v6418, 1e-10
      %v6849 = vmax.f32 %v6420, 1e-10
      %v6850 = vmax.f32 %v6579, 1e-10
      %v6851 = vmax.f32 %v6581, 1e-10
      %v6852 = vmax.f32 %v6740, 1e-10
      %v6853 = vmax.f32 %v6742, 1e-10
      %v6854 = vmax.f32 %v6263, 1e-10
      %v6855 = vmax.f32 %v6265, 1e-10
      %v6856 = vmax.f32 %v6424, 1e-10
      %v6857 = vmax.f32 %v6426, 1e-10
      %v6858 = vmax.f32 %v6585, 1e-10
      %v6859 = vmax.f32 %v6587, 1e-10
      %v6860 = vmax.f32 %v6746, 1e-10
      %v6861 = vmax.f32 %v6748, 1e-10
      %v6862 = vmax.f32 %v6269, 1e-10
      %v6863 = vmax.f32 %v6271, 1e-10
      %v6864 = vmax.f32 %v6430, 1e-10
      %v6865 = vmax.f32 %v6432, 1e-10
      %v6866 = vmax.f32 %v6591, 1e-10
      %v6867 = vmax.f32 %v6593, 1e-10
      %v6868 = vmax.f32 %v6752, 1e-10
      %v6869 = vmax.f32 %v6754, 1e-10
      %v6870 = vmax.f32 %v6275, 1e-10
      %v6871 = vmax.f32 %v6277, 1e-10
      %v6872 = vmax.f32 %v6436, 1e-10
      %v6873 = vmax.f32 %v6438, 1e-10
      %v6874 = vmax.f32 %v6597, 1e-10
      %v6875 = vmax.f32 %v6599, 1e-10
      %v6876 = vmax.f32 %v6758, 1e-10
      %v6877 = vmax.f32 %v6760, 1e-10
      %v6878 = vmax.f32 %v6281, 1e-10
      %v6879 = vmax.f32 %v6283, 1e-10
      %v6880 = vmax.f32 %v6442, 1e-10
      %v6881 = vmax.f32 %v6444, 1e-10
      %v6882 = vmax.f32 %v6603, 1e-10
      %v6883 = vmax.f32 %v6605, 1e-10
      %v6884 = vmax.f32 %v6764, 1e-10
      %v6885 = vmax.f32 %v6766, 1e-10
      %v6886 = vmax.f32 %v6287, 1e-10
      %v6887 = vmax.f32 %v6289, 1e-10
      %v6888 = vmax.f32 %v6448, 1e-10
      %v6889 = vmax.f32 %v6450, 1e-10
      %v6890 = vmax.f32 %v6609, 1e-10
      %v6891 = vmax.f32 %v6611, 1e-10
      %v6892 = vmax.f32 %v6770, 1e-10
      %v6893 = vmax.f32 %v6772, 1e-10
      %v6894 = vmax.f32 %v6293, 1e-10
      %v6895 = vmax.f32 %v6295, 1e-10
      %v6896 = vmax.f32 %v6454, 1e-10
      %v6897 = vmax.f32 %v6456, 1e-10
      %v6898 = vmax.f32 %v6615, 1e-10
      %v6899 = vmax.f32 %v6617, 1e-10
      %v6900 = vmax.f32 %v6776, 1e-10
      %v6901 = vmax.f32 %v6778, 1e-10
      %v6902 = vmax.f32 %v6299, 1e-10
      %v6903 = vmax.f32 %v6301, 1e-10
      %v6904 = vmax.f32 %v6460, 1e-10
      %v6905 = vmax.f32 %v6462, 1e-10
      %v6906 = vmax.f32 %v6621, 1e-10
      %v6907 = vmax.f32 %v6623, 1e-10
      %v6908 = vmax.f32 %v6782, 1e-10
      %v6909 = vmax.f32 %v6784, 1e-10
      %v6910 = vmax.f32 %v6305, 1e-10
      %v6911 = vmax.f32 %v6307, 1e-10
      %v6912 = vmax.f32 %v6466, 1e-10
      %v6913 = vmax.f32 %v6468, 1e-10
      %v6914 = vmax.f32 %v6627, 1e-10
      %v6915 = vmax.f32 %v6629, 1e-10
      %v6916 = vmax.f32 %v6788, 1e-10
      %v6917 = vmax.f32 %v6790, 1e-10
      %v6918 = vmax.f32 %v6311, 1e-10
      %v6919 = vmax.f32 %v6313, 1e-10
      %v6920 = vmax.f32 %v6472, 1e-10
      %v6921 = vmax.f32 %v6474, 1e-10
      %v6922 = vmax.f32 %v6633, 1e-10
      %v6923 = vmax.f32 %v6635, 1e-10
      %v6924 = vmax.f32 %v6794, 1e-10
      %v6925 = vmax.f32 %v6796, 1e-10
      %v6926 = vlog2.pop %v6798
      %v6927 = vmul.f32 %v6926, 0.6931472
      %v6928 = vlog2.pop %v6799
      %v6929 = vmul.f32 %v6928, 0.6931472
      %v6930 = vlog2.pop %v6800
      %v6931 = vmul.f32 %v6930, 0.6931472
      %v6932 = vlog2.pop %v6801
      %v6933 = vmul.f32 %v6932, 0.6931472
      %v6934 = vlog2.pop %v6802
      %v6935 = vmul.f32 %v6934, 0.6931472
      %v6936 = vlog2.pop %v6803
      %v6937 = vmul.f32 %v6936, 0.6931472
      %v6938 = vlog2.pop %v6804
      %v6939 = vmul.f32 %v6938, 0.6931472
      %v6940 = vlog2.pop %v6805
      %v6941 = vmul.f32 %v6940, 0.6931472
      %v6942 = vlog2.pop %v6806
      %v6943 = vmul.f32 %v6942, 0.6931472
      %v6944 = vlog2.pop %v6807
      %v6945 = vmul.f32 %v6944, 0.6931472
      %v6946 = vlog2.pop %v6808
      %v6947 = vmul.f32 %v6946, 0.6931472
      %v6948 = vlog2.pop %v6809
      %v6949 = vmul.f32 %v6948, 0.6931472
      %v6950 = vlog2.pop %v6810
      %v6951 = vmul.f32 %v6950, 0.6931472
      %v6952 = vlog2.pop %v6811
      %v6953 = vmul.f32 %v6952, 0.6931472
      %v6954 = vlog2.pop %v6812
      %v6955 = vmul.f32 %v6954, 0.6931472
      %v6956 = vlog2.pop %v6813
      %v6957 = vmul.f32 %v6956, 0.6931472
      %v6958 = vlog2.pop %v6814
      %v6959 = vmul.f32 %v6958, 0.6931472
      %v6960 = vlog2.pop %v6815
      %v6961 = vmul.f32 %v6960, 0.6931472
      %v6962 = vlog2.pop %v6816
      %v6963 = vmul.f32 %v6962, 0.6931472
      %v6964 = vlog2.pop %v6817
      %v6965 = vmul.f32 %v6964, 0.6931472
      %v6966 = vlog2.pop %v6818
      %v6967 = vmul.f32 %v6966, 0.6931472
      %v6968 = vlog2.pop %v6819
      %v6969 = vmul.f32 %v6968, 0.6931472
      %v6970 = vlog2.pop %v6820
      %v6971 = vmul.f32 %v6970, 0.6931472
      %v6972 = vlog2.pop %v6821
      %v6973 = vmul.f32 %v6972, 0.6931472
      %v6974 = vlog2.pop %v6822
      %v6975 = vmul.f32 %v6974, 0.6931472
      %v6976 = vlog2.pop %v6823
      %v6977 = vmul.f32 %v6976, 0.6931472
      %v6978 = vlog2.pop %v6824
      %v6979 = vmul.f32 %v6978, 0.6931472
      %v6980 = vlog2.pop %v6825
      %v6981 = vmul.f32 %v6980, 0.6931472
      %v6982 = vlog2.pop %v6826
      %v6983 = vmul.f32 %v6982, 0.6931472
      %v6984 = vlog2.pop %v6827
      %v6985 = vmul.f32 %v6984, 0.6931472
      %v6986 = vlog2.pop %v6828
      %v6987 = vmul.f32 %v6986, 0.6931472
      %v6988 = vlog2.pop %v6829
      %v6989 = vmul.f32 %v6988, 0.6931472
      %v6990 = vlog2.pop %v6830
      %v6991 = vmul.f32 %v6990, 0.6931472
      %v6992 = vlog2.pop %v6831
      %v6993 = vmul.f32 %v6992, 0.6931472
      %v6994 = vlog2.pop %v6832
      %v6995 = vmul.f32 %v6994, 0.6931472
      %v6996 = vlog2.pop %v6833
      %v6997 = vmul.f32 %v6996, 0.6931472
      %v6998 = vlog2.pop %v6834
      %v6999 = vmul.f32 %v6998, 0.6931472
      %v7000 = vlog2.pop %v6835
      %v7001 = vmul.f32 %v7000, 0.6931472
      %v7002 = vlog2.pop %v6836
      %v7003 = vmul.f32 %v7002, 0.6931472
      %v7004 = vlog2.pop %v6837
      %v7005 = vmul.f32 %v7004, 0.6931472
      %v7006 = vlog2.pop %v6838
      %v7007 = vmul.f32 %v7006, 0.6931472
      %v7008 = vlog2.pop %v6839
      %v7009 = vmul.f32 %v7008, 0.6931472
      %v7010 = vlog2.pop %v6840
      %v7011 = vmul.f32 %v7010, 0.6931472
      %v7012 = vlog2.pop %v6841
      %v7013 = vmul.f32 %v7012, 0.6931472
      %v7014 = vlog2.pop %v6842
      %v7015 = vmul.f32 %v7014, 0.6931472
      %v7016 = vlog2.pop %v6843
      %v7017 = vmul.f32 %v7016, 0.6931472
      %v7018 = vlog2.pop %v6844
      %v7019 = vmul.f32 %v7018, 0.6931472
      %v7020 = vlog2.pop %v6845
      %v7021 = vmul.f32 %v7020, 0.6931472
      %v7022 = vlog2.pop %v6846
      %v7023 = vmul.f32 %v7022, 0.6931472
      %v7024 = vlog2.pop %v6847
      %v7025 = vmul.f32 %v7024, 0.6931472
      %v7026 = vlog2.pop %v6848
      %v7027 = vmul.f32 %v7026, 0.6931472
      %v7028 = vlog2.pop %v6849
      %v7029 = vmul.f32 %v7028, 0.6931472
      %v7030 = vlog2.pop %v6850
      %v7031 = vmul.f32 %v7030, 0.6931472
      %v7032 = vlog2.pop %v6851
      %v7033 = vmul.f32 %v7032, 0.6931472
      %v7034 = vlog2.pop %v6852
      %v7035 = vmul.f32 %v7034, 0.6931472
      %v7036 = vlog2.pop %v6853
      %v7037 = vmul.f32 %v7036, 0.6931472
      %v7038 = vlog2.pop %v6854
      %v7039 = vmul.f32 %v7038, 0.6931472
      %v7040 = vlog2.pop %v6855
      %v7041 = vmul.f32 %v7040, 0.6931472
      %v7042 = vlog2.pop %v6856
      %v7043 = vmul.f32 %v7042, 0.6931472
      %v7044 = vlog2.pop %v6857
      %v7045 = vmul.f32 %v7044, 0.6931472
      %v7046 = vlog2.pop %v6858
      %v7047 = vmul.f32 %v7046, 0.6931472
      %v7048 = vlog2.pop %v6859
      %v7049 = vmul.f32 %v7048, 0.6931472
      %v7050 = vlog2.pop %v6860
      %v7051 = vmul.f32 %v7050, 0.6931472
      %v7052 = vlog2.pop %v6861
      %v7053 = vmul.f32 %v7052, 0.6931472
      %v7054 = vlog2.pop %v6862
      %v7055 = vmul.f32 %v7054, 0.6931472
      %v7056 = vlog2.pop %v6863
      %v7057 = vmul.f32 %v7056, 0.6931472
      %v7058 = vlog2.pop %v6864
      %v7059 = vmul.f32 %v7058, 0.6931472
      %v7060 = vlog2.pop %v6865
      %v7061 = vmul.f32 %v7060, 0.6931472
      %v7062 = vlog2.pop %v6866
      %v7063 = vmul.f32 %v7062, 0.6931472
      %v7064 = vlog2.pop %v6867
      %v7065 = vmul.f32 %v7064, 0.6931472
      %v7066 = vlog2.pop %v6868
      %v7067 = vmul.f32 %v7066, 0.6931472
      %v7068 = vlog2.pop %v6869
      %v7069 = vmul.f32 %v7068, 0.6931472
      %v7070 = vlog2.pop %v6870
      %v7071 = vmul.f32 %v7070, 0.6931472
      %v7072 = vlog2.pop %v6871
      %v7073 = vmul.f32 %v7072, 0.6931472
      %v7074 = vlog2.pop %v6872
      %v7075 = vmul.f32 %v7074, 0.6931472
      %v7076 = vlog2.pop %v6873
      %v7077 = vmul.f32 %v7076, 0.6931472
      %v7078 = vlog2.pop %v6874
      %v7079 = vmul.f32 %v7078, 0.6931472
      %v7080 = vlog2.pop %v6875
      %v7081 = vmul.f32 %v7080, 0.6931472
      %v7082 = vlog2.pop %v6876
      %v7083 = vmul.f32 %v7082, 0.6931472
      %v7084 = vlog2.pop %v6877
      %v7085 = vmul.f32 %v7084, 0.6931472
      %v7086 = vlog2.pop %v6878
      %v7087 = vmul.f32 %v7086, 0.6931472
      %v7088 = vlog2.pop %v6879
      %v7089 = vmul.f32 %v7088, 0.6931472
      %v7090 = vlog2.pop %v6880
      %v7091 = vmul.f32 %v7090, 0.6931472
      %v7092 = vlog2.pop %v6881
      %v7093 = vmul.f32 %v7092, 0.6931472
      %v7094 = vlog2.pop %v6882
      %v7095 = vmul.f32 %v7094, 0.6931472
      %v7096 = vlog2.pop %v6883
      %v7097 = vmul.f32 %v7096, 0.6931472
      %v7098 = vlog2.pop %v6884
      %v7099 = vmul.f32 %v7098, 0.6931472
      %v7100 = vlog2.pop %v6885
      %v7101 = vmul.f32 %v7100, 0.6931472
      %v7102 = vlog2.pop %v6886
      %v7103 = vmul.f32 %v7102, 0.6931472
      %v7104 = vlog2.pop %v6887
      %v7105 = vmul.f32 %v7104, 0.6931472
      %v7106 = vlog2.pop %v6888
      %v7107 = vmul.f32 %v7106, 0.6931472
      %v7108 = vlog2.pop %v6889
      %v7109 = vmul.f32 %v7108, 0.6931472
      %v7110 = vlog2.pop %v6890
      %v7111 = vmul.f32 %v7110, 0.6931472
      %v7112 = vlog2.pop %v6891
      %v7113 = vmul.f32 %v7112, 0.6931472
      %v7114 = vlog2.pop %v6892
      %v7115 = vmul.f32 %v7114, 0.6931472
      %v7116 = vlog2.pop %v6893
      %v7117 = vmul.f32 %v7116, 0.6931472
      %v7118 = vlog2.pop %v6894
      %v7119 = vmul.f32 %v7118, 0.6931472
      %v7120 = vlog2.pop %v6895
      %v7121 = vmul.f32 %v7120, 0.6931472
      %v7122 = vlog2.pop %v6896
      %v7123 = vmul.f32 %v7122, 0.6931472
      %v7124 = vlog2.pop %v6897
      %v7125 = vmul.f32 %v7124, 0.6931472
      %v7126 = vlog2.pop %v6898
      %v7127 = vmul.f32 %v7126, 0.6931472
      %v7128 = vlog2.pop %v6899
      %v7129 = vmul.f32 %v7128, 0.6931472
      %v7130 = vlog2.pop %v6900
      %v7131 = vmul.f32 %v7130, 0.6931472
      %v7132 = vlog2.pop %v6901
      %v7133 = vmul.f32 %v7132, 0.6931472
      %v7134 = vlog2.pop %v6902
      %v7135 = vmul.f32 %v7134, 0.6931472
      %v7136 = vlog2.pop %v6903
      %v7137 = vmul.f32 %v7136, 0.6931472
      %v7138 = vlog2.pop %v6904
      %v7139 = vmul.f32 %v7138, 0.6931472
      %v7140 = vlog2.pop %v6905
      %v7141 = vmul.f32 %v7140, 0.6931472
      %v7142 = vlog2.pop %v6906
      %v7143 = vmul.f32 %v7142, 0.6931472
      %v7144 = vlog2.pop %v6907
      %v7145 = vmul.f32 %v7144, 0.6931472
      %v7146 = vlog2.pop %v6908
      %v7147 = vmul.f32 %v7146, 0.6931472
      %v7148 = vlog2.pop %v6909
      %v7149 = vmul.f32 %v7148, 0.6931472
      %v7150 = vlog2.pop %v6910
      %v7151 = vmul.f32 %v7150, 0.6931472
      %v7152 = vlog2.pop %v6911
      %v7153 = vmul.f32 %v7152, 0.6931472
      %v7154 = vlog2.pop %v6912
      %v7155 = vmul.f32 %v7154, 0.6931472
      %v7156 = vlog2.pop %v6913
      %v7157 = vmul.f32 %v7156, 0.6931472
      %v7158 = vlog2.pop %v6914
      %v7159 = vmul.f32 %v7158, 0.6931472
      %v7160 = vlog2.pop %v6915
      %v7161 = vmul.f32 %v7160, 0.6931472
      %v7162 = vlog2.pop %v6916
      %v7163 = vmul.f32 %v7162, 0.6931472
      %v7164 = vlog2.pop %v6917
      %v7165 = vmul.f32 %v7164, 0.6931472
      %v7166 = vlog2.pop %v6918
      %v7167 = vmul.f32 %v7166, 0.6931472
      %v7168 = vlog2.pop %v6919
      %v7169 = vmul.f32 %v7168, 0.6931472
      %v7170 = vlog2.pop %v6920
      %v7171 = vmul.f32 %v7170, 0.6931472
      %v7172 = vlog2.pop %v6921
      %v7173 = vmul.f32 %v7172, 0.6931472
      %v7174 = vlog2.pop %v6922
      %v7175 = vmul.f32 %v7174, 0.6931472
      %v7176 = vlog2.pop %v6923
      %v7177 = vmul.f32 %v7176, 0.6931472
      %v7178 = vlog2.pop %v6924
      %v7179 = vmul.f32 %v7178, 0.6931472
      %v7180 = vlog2.pop %v6925
      %v7181 = vmul.f32 %v7180, 0.6931472
      %v7182 = vmul.f32 %v6927, 0.4342945
      %v7183 = vmul.f32 %v6929, 0.4342945
      %v7184 = vmul.f32 %v6931, 0.4342945
      %v7185 = vmul.f32 %v6933, 0.4342945
      %v7186 = vmul.f32 %v6935, 0.4342945
      %v7187 = vmul.f32 %v6937, 0.4342945
      %v7188 = vmul.f32 %v6939, 0.4342945
      %v7189 = vmul.f32 %v6941, 0.4342945
      %v7190 = vmul.f32 %v6943, 0.4342945
      %v7191 = vmul.f32 %v6945, 0.4342945
      %v7192 = vmul.f32 %v6947, 0.4342945
      %v7193 = vmul.f32 %v6949, 0.4342945
      %v7194 = vmul.f32 %v6951, 0.4342945
      %v7195 = vmul.f32 %v6953, 0.4342945
      %v7196 = vmul.f32 %v6955, 0.4342945
      %v7197 = vmul.f32 %v6957, 0.4342945
      %v7198 = vmul.f32 %v6959, 0.4342945
      %v7199 = vmul.f32 %v6961, 0.4342945
      %v7200 = vmul.f32 %v6963, 0.4342945
      %v7201 = vmul.f32 %v6965, 0.4342945
      %v7202 = vmul.f32 %v6967, 0.4342945
      %v7203 = vmul.f32 %v6969, 0.4342945
      %v7204 = vmul.f32 %v6971, 0.4342945
      %v7205 = vmul.f32 %v6973, 0.4342945
      %v7206 = vmul.f32 %v6975, 0.4342945
      %v7207 = vmul.f32 %v6977, 0.4342945
      %v7208 = vmul.f32 %v6979, 0.4342945
      %v7209 = vmul.f32 %v6981, 0.4342945
      %v7210 = vmul.f32 %v6983, 0.4342945
      %v7211 = vmul.f32 %v6985, 0.4342945
      %v7212 = vmul.f32 %v6987, 0.4342945
      %v7213 = vmul.f32 %v6989, 0.4342945
      %v7214 = vmul.f32 %v6991, 0.4342945
      %v7215 = vmul.f32 %v6993, 0.4342945
      %v7216 = vmul.f32 %v6995, 0.4342945
      %v7217 = vmul.f32 %v6997, 0.4342945
      %v7218 = vmul.f32 %v6999, 0.4342945
      %v7219 = vmul.f32 %v7001, 0.4342945
      %v7220 = vmul.f32 %v7003, 0.4342945
      %v7221 = vmul.f32 %v7005, 0.4342945
      %v7222 = vmul.f32 %v7007, 0.4342945
      %v7223 = vmul.f32 %v7009, 0.4342945
      %v7224 = vmul.f32 %v7011, 0.4342945
      %v7225 = vmul.f32 %v7013, 0.4342945
      %v7226 = vmul.f32 %v7015, 0.4342945
      %v7227 = vmul.f32 %v7017, 0.4342945
      %v7228 = vmul.f32 %v7019, 0.4342945
      %v7229 = vmul.f32 %v7021, 0.4342945
      %v7230 = vmul.f32 %v7023, 0.4342945
      %v7231 = vmul.f32 %v7025, 0.4342945
      %v7232 = vmul.f32 %v7027, 0.4342945
      %v7233 = vmul.f32 %v7029, 0.4342945
      %v7234 = vmul.f32 %v7031, 0.4342945
      %v7235 = vmul.f32 %v7033, 0.4342945
      %v7236 = vmul.f32 %v7035, 0.4342945
      %v7237 = vmul.f32 %v7037, 0.4342945
      %v7238 = vmul.f32 %v7039, 0.4342945
      %v7239 = vmul.f32 %v7041, 0.4342945
      %v7240 = vmul.f32 %v7043, 0.4342945
      %v7241 = vmul.f32 %v7045, 0.4342945
      %v7242 = vmul.f32 %v7047, 0.4342945
      %v7243 = vmul.f32 %v7049, 0.4342945
      %v7244 = vmul.f32 %v7051, 0.4342945
      %v7245 = vmul.f32 %v7053, 0.4342945
      %v7246 = vmul.f32 %v7055, 0.4342945
      %v7247 = vmul.f32 %v7057, 0.4342945
      %v7248 = vmul.f32 %v7059, 0.4342945
      %v7249 = vmul.f32 %v7061, 0.4342945
      %v7250 = vmul.f32 %v7063, 0.4342945
      %v7251 = vmul.f32 %v7065, 0.4342945
      %v7252 = vmul.f32 %v7067, 0.4342945
      %v7253 = vmul.f32 %v7069, 0.4342945
      %v7254 = vmul.f32 %v7071, 0.4342945
      %v7255 = vmul.f32 %v7073, 0.4342945
      %v7256 = vmul.f32 %v7075, 0.4342945
      %v7257 = vmul.f32 %v7077, 0.4342945
      %v7258 = vmul.f32 %v7079, 0.4342945
      %v7259 = vmul.f32 %v7081, 0.4342945
      %v7260 = vmul.f32 %v7083, 0.4342945
      %v7261 = vmul.f32 %v7085, 0.4342945
      %v7262 = vmul.f32 %v7087, 0.4342945
      %v7263 = vmul.f32 %v7089, 0.4342945
      %v7264 = vmul.f32 %v7091, 0.4342945
      %v7265 = vmul.f32 %v7093, 0.4342945
      %v7266 = vmul.f32 %v7095, 0.4342945
      %v7267 = vmul.f32 %v7097, 0.4342945
      %v7268 = vmul.f32 %v7099, 0.4342945
      %v7269 = vmul.f32 %v7101, 0.4342945
      %v7270 = vmul.f32 %v7103, 0.4342945
      %v7271 = vmul.f32 %v7105, 0.4342945
      %v7272 = vmul.f32 %v7107, 0.4342945
      %v7273 = vmul.f32 %v7109, 0.4342945
      %v7274 = vmul.f32 %v7111, 0.4342945
      %v7275 = vmul.f32 %v7113, 0.4342945
      %v7276 = vmul.f32 %v7115, 0.4342945
      %v7277 = vmul.f32 %v7117, 0.4342945
      %v7278 = vmul.f32 %v7119, 0.4342945
      %v7279 = vmul.f32 %v7121, 0.4342945
      %v7280 = vmul.f32 %v7123, 0.4342945
      %v7281 = vmul.f32 %v7125, 0.4342945
      %v7282 = vmul.f32 %v7127, 0.4342945
      %v7283 = vmul.f32 %v7129, 0.4342945
      %v7284 = vmul.f32 %v7131, 0.4342945
      %v7285 = vmul.f32 %v7133, 0.4342945
      %v7286 = vmul.f32 %v7135, 0.4342945
      %v7287 = vmul.f32 %v7137, 0.4342945
      %v7288 = vmul.f32 %v7139, 0.4342945
      %v7289 = vmul.f32 %v7141, 0.4342945
      %v7290 = vmul.f32 %v7143, 0.4342945
      %v7291 = vmul.f32 %v7145, 0.4342945
      %v7292 = vmul.f32 %v7147, 0.4342945
      %v7293 = vmul.f32 %v7149, 0.4342945
      %v7294 = vmul.f32 %v7151, 0.4342945
      %v7295 = vmul.f32 %v7153, 0.4342945
      %v7296 = vmul.f32 %v7155, 0.4342945
      %v7297 = vmul.f32 %v7157, 0.4342945
      %v7298 = vmul.f32 %v7159, 0.4342945
      %v7299 = vmul.f32 %v7161, 0.4342945
      %v7300 = vmul.f32 %v7163, 0.4342945
      %v7301 = vmul.f32 %v7165, 0.4342945
      %v7302 = vmul.f32 %v7167, 0.4342945
      %v7303 = vmul.f32 %v7169, 0.4342945
      %v7304 = vmul.f32 %v7171, 0.4342945
      %v7305 = vmul.f32 %v7173, 0.4342945
      %v7306 = vmul.f32 %v7175, 0.4342945
      %v7307 = vmul.f32 %v7177, 0.4342945
      %v7308 = vmul.f32 %v7179, 0.4342945
      %v7309 = vmul.f32 %v7181, 0.4342945
      %7310 = vst [vmem:[%s247] sm:$0xff] %v7182
      %7311 = vst [vmem:[%s247 + $0x8] sm:$0xff] %v7183
      %7312 = vst [vmem:[%s247 + $0x10] sm:$0xff] %v7184
      %7313 = vst [vmem:[%s247 + $0x18] sm:$0xff] %v7185
      %7314 = vst [vmem:[%s247 + $0x20] sm:$0xff] %v7186
      %7315 = vst [vmem:[%s247 + $0x28] sm:$0xff] %v7187
      %7316 = vst [vmem:[%s247 + $0x30] sm:$0xff] %v7188
      %7317 = vst [vmem:[%s247 + $0x38] sm:$0xff] %v7189
      %7318 = vst [vmem:[%s247 + $0x40] sm:$0xff] %v7190
      %7319 = vst [vmem:[%s247 + $0x48] sm:$0xff] %v7191
      %7320 = vst [vmem:[%s247 + $0x50] sm:$0xff] %v7192
      %7321 = vst [vmem:[%s247 + $0x58] sm:$0xff] %v7193
      %7322 = vst [vmem:[%s247 + $0x60] sm:$0xff] %v7194
      %7323 = vst [vmem:[%s247 + $0x68] sm:$0xff] %v7195
      %7324 = vst [vmem:[%s247 + $0x70] sm:$0xff] %v7196
      %7325 = vst [vmem:[%s247 + $0x78] sm:$0xff] %v7197
      %7326 = vst [vmem:[%s247 + $0x80] sm:$0xff] %v7198
      %7327 = vst [vmem:[%s247 + $0x88] sm:$0xff] %v7199
      %7328 = vst [vmem:[%s247 + $0x90] sm:$0xff] %v7200
      %7329 = vst [vmem:[%s247 + $0x98] sm:$0xff] %v7201
      %7330 = vst [vmem:[%s247 + $0xa0] sm:$0xff] %v7202
      %7331 = vst [vmem:[%s247 + $0xa8] sm:$0xff] %v7203
      %7332 = vst [vmem:[%s247 + $0xb0] sm:$0xff] %v7204
      %7333 = vst [vmem:[%s247 + $0xb8] sm:$0xff] %v7205
      %7334 = vst [vmem:[%s247 + $0xc0] sm:$0xff] %v7206
      %7335 = vst [vmem:[%s247 + $0xc8] sm:$0xff] %v7207
      %7336 = vst [vmem:[%s247 + $0xd0] sm:$0xff] %v7208
      %7337 = vst [vmem:[%s247 + $0xd8] sm:$0xff] %v7209
      %7338 = vst [vmem:[%s247 + $0xe0] sm:$0xff] %v7210
      %7339 = vst [vmem:[%s247 + $0xe8] sm:$0xff] %v7211
      %7340 = vst [vmem:[%s247 + $0xf0] sm:$0xff] %v7212
      %7341 = vst [vmem:[%s247 + $0xf8] sm:$0xff] %v7213
      %7342 = vst [vmem:[%s247 + $0x100] sm:$0xff] %v7214
      %7343 = vst [vmem:[%s247 + $0x108] sm:$0xff] %v7215
      %7344 = vst [vmem:[%s247 + $0x110] sm:$0xff] %v7216
      %7345 = vst [vmem:[%s247 + $0x118] sm:$0xff] %v7217
      %7346 = vst [vmem:[%s247 + $0x120] sm:$0xff] %v7218
      %7347 = vst [vmem:[%s247 + $0x128] sm:$0xff] %v7219
      %7348 = vst [vmem:[%s247 + $0x130] sm:$0xff] %v7220
      %7349 = vst [vmem:[%s247 + $0x138] sm:$0xff] %v7221
      %7350 = vst [vmem:[%s247 + $0x140] sm:$0xff] %v7222
      %7351 = vst [vmem:[%s247 + $0x148] sm:$0xff] %v7223
      %7352 = vst [vmem:[%s247 + $0x150] sm:$0xff] %v7224
      %7353 = vst [vmem:[%s247 + $0x158] sm:$0xff] %v7225
      %7354 = vst [vmem:[%s247 + $0x160] sm:$0xff] %v7226
      %7355 = vst [vmem:[%s247 + $0x168] sm:$0xff] %v7227
      %7356 = vst [vmem:[%s247 + $0x170] sm:$0xff] %v7228
      %7357 = vst [vmem:[%s247 + $0x178] sm:$0xff] %v7229
      %7358 = vst [vmem:[%s247 + $0x180] sm:$0xff] %v7230
      %7359 = vst [vmem:[%s247 + $0x188] sm:$0xff] %v7231
      %7360 = vst [vmem:[%s247 + $0x190] sm:$0xff] %v7232
      %7361 = vst [vmem:[%s247 + $0x198] sm:$0xff] %v7233
      %7362 = vst [vmem:[%s247 + $0x1a0] sm:$0xff] %v7234
      %7363 = vst [vmem:[%s247 + $0x1a8] sm:$0xff] %v7235
      %7364 = vst [vmem:[%s247 + $0x1b0] sm:$0xff] %v7236
      %7365 = vst [vmem:[%s247 + $0x1b8] sm:$0xff] %v7237
      %7366 = vst [vmem:[%s247 + $0x1c0] sm:$0xff] %v7238
      %7367 = vst [vmem:[%s247 + $0x1c8] sm:$0xff] %v7239
      %7368 = vst [vmem:[%s247 + $0x1d0] sm:$0xff] %v7240
      %7369 = vst [vmem:[%s247 + $0x1d8] sm:$0xff] %v7241
      %7370 = vst [vmem:[%s247 + $0x1e0] sm:$0xff] %v7242
      %7371 = vst [vmem:[%s247 + $0x1e8] sm:$0xff] %v7243
      %7372 = vst [vmem:[%s247 + $0x1f0] sm:$0xff] %v7244
      %7373 = vst [vmem:[%s247 + $0x1f8] sm:$0xff] %v7245
      %7374 = vst [vmem:[%s247 + $0x200] sm:$0xff] %v7246
      %7375 = vst [vmem:[%s247 + $0x208] sm:$0xff] %v7247
      %7376 = vst [vmem:[%s247 + $0x210] sm:$0xff] %v7248
      %7377 = vst [vmem:[%s247 + $0x218] sm:$0xff] %v7249
      %7378 = vst [vmem:[%s247 + $0x220] sm:$0xff] %v7250
      %7379 = vst [vmem:[%s247 + $0x228] sm:$0xff] %v7251
      %7380 = vst [vmem:[%s247 + $0x230] sm:$0xff] %v7252
      %7381 = vst [vmem:[%s247 + $0x238] sm:$0xff] %v7253
      %7382 = vst [vmem:[%s247 + $0x240] sm:$0xff] %v7254
      %7383 = vst [vmem:[%s247 + $0x248] sm:$0xff] %v7255
      %7384 = vst [vmem:[%s247 + $0x250] sm:$0xff] %v7256
      %7385 = vst [vmem:[%s247 + $0x258] sm:$0xff] %v7257
      %7386 = vst [vmem:[%s247 + $0x260] sm:$0xff] %v7258
      %7387 = vst [vmem:[%s247 + $0x268] sm:$0xff] %v7259
      %7388 = vst [vmem:[%s247 + $0x270] sm:$0xff] %v7260
      %7389 = vst [vmem:[%s247 + $0x278] sm:$0xff] %v7261
      %v7390 = vlaneseq
      %v7391 = vshrl.u32 %v7390, 7
      %v7392 = vadd.s32 %v7391, 8
      %v7393 = vadd.s32 %v7391, 16
      %v7394 = vadd.s32 %v7391, 24
      %v7395 = vadd.s32 %v7391, 32
      %v7396 = vadd.s32 %v7391, 40
      %v7397 = vadd.s32 %v7391, 48
      %v7398 = vadd.s32 %v7391, 56
      %v7399 = vadd.s32 %v7391, 64
      %v7400 = vadd.s32 %v7391, 72
      %v7401 = vadd.s32 %v7391, 80
      %v7402 = vadd.s32 %v7391, 88
      %v7403 = vadd.s32 %v7391, 96
      %v7404 = vadd.s32 %v7391, 104
      %v7405 = vadd.s32 %v7391, 112
      %v7406 = vadd.s32 %v7391, 120
      %v7407 = vlaneseq
      %v7408 = vand.u32 %v7407, 127
      %v7409 = vadd.s32 %v7408, 128
      %v7410 = vadd.s32 %v7408, 256
      %v7411 = vadd.s32 %v7408, 384
      %v7412 = vadd.s32 %v7408, 512
      %v7413 = vadd.s32 %v7408, 640
      %v7414 = vadd.s32 %v7408, 768
      %v7415 = vadd.s32 %v7408, 896
      %vm7416 = vcmp.lt.s32.totalorder %v7391, 80
      %vm7417 = vcmp.lt.s32.totalorder %v7392, 80
      %vm7418 = vcmp.lt.s32.totalorder %v7393, 80
      %vm7419 = vcmp.lt.s32.totalorder %v7394, 80
      %vm7420 = vcmp.lt.s32.totalorder %v7395, 80
      %vm7421 = vcmp.lt.s32.totalorder %v7396, 80
      %vm7422 = vcmp.lt.s32.totalorder %v7397, 80
      %vm7423 = vcmp.lt.s32.totalorder %v7398, 80
      %vm7424 = vcmp.lt.s32.totalorder %v7399, 80
      %vm7425 = vcmp.lt.s32.totalorder %v7400, 80
      %vm7426 = vcmp.lt.s32.totalorder %v7401, 80
      %vm7427 = vcmp.lt.s32.totalorder %v7402, 80
      %vm7428 = vcmp.lt.s32.totalorder %v7403, 80
      %vm7429 = vcmp.lt.s32.totalorder %v7404, 80
      %vm7430 = vcmp.lt.s32.totalorder %v7405, 80
      %vm7431 = vcmp.lt.s32.totalorder %v7406, 80
      %s7432 = smul.u32 %s21, 1024
      %v7433 = vstv %s7432
      %v7434 = vadd.s32 %v7408, %v7433
      %v7435 = vadd.s32 %v7409, %v7433
      %v7436 = vadd.s32 %v7410, %v7433
      %v7437 = vadd.s32 %v7411, %v7433
      %v7438 = vadd.s32 %v7412, %v7433
      %v7439 = vadd.s32 %v7413, %v7433
      %v7440 = vadd.s32 %v7414, %v7433
      %v7441 = vadd.s32 %v7415, %v7433
      %vm7442 = vcmp.lt.s32.totalorder %v7434, 50
      %vm7443 = vcmp.lt.s32.totalorder %v7435, 50
      %vm7444 = vcmp.lt.s32.totalorder %v7436, 50
      %vm7445 = vcmp.lt.s32.totalorder %v7437, 50
      %vm7446 = vcmp.lt.s32.totalorder %v7438, 50
      %vm7447 = vcmp.lt.s32.totalorder %v7439, 50
      %vm7448 = vcmp.lt.s32.totalorder %v7440, 50
      %vm7449 = vcmp.lt.s32.totalorder %v7441, 50
      %vm7450 = vmand %vm7416, %vm7442
      %vm7451 = vmand %vm7416, %vm7443
      %vm7452 = vmand %vm7416, %vm7444
      %vm7453 = vmand %vm7416, %vm7445
      %vm7454 = vmand %vm7416, %vm7446
      %vm7455 = vmand %vm7416, %vm7447
      %vm7456 = vmand %vm7416, %vm7448
      %vm7457 = vmand %vm7416, %vm7449
      %vm7458 = vmand %vm7417, %vm7442
      %vm7459 = vmand %vm7417, %vm7443
      %vm7460 = vmand %vm7417, %vm7444
      %vm7461 = vmand %vm7417, %vm7445
      %vm7462 = vmand %vm7417, %vm7446
      %vm7463 = vmand %vm7417, %vm7447
      %vm7464 = vmand %vm7417, %vm7448
      %vm7465 = vmand %vm7417, %vm7449
      %vm7466 = vmand %vm7418, %vm7442
      %vm7467 = vmand %vm7418, %vm7443
      %vm7468 = vmand %vm7418, %vm7444
      %vm7469 = vmand %vm7418, %vm7445
      %vm7470 = vmand %vm7418, %vm7446
      %vm7471 = vmand %vm7418, %vm7447
      %vm7472 = vmand %vm7418, %vm7448
      %vm7473 = vmand %vm7418, %vm7449
      %vm7474 = vmand %vm7419, %vm7442
      %vm7475 = vmand %vm7419, %vm7443
      %vm7476 = vmand %vm7419, %vm7444
      %vm7477 = vmand %vm7419, %vm7445
      %vm7478 = vmand %vm7419, %vm7446
      %vm7479 = vmand %vm7419, %vm7447
      %vm7480 = vmand %vm7419, %vm7448
      %vm7481 = vmand %vm7419, %vm7449
      %vm7482 = vmand %vm7420, %vm7442
      %vm7483 = vmand %vm7420, %vm7443
      %vm7484 = vmand %vm7420, %vm7444
      %vm7485 = vmand %vm7420, %vm7445
      %vm7486 = vmand %vm7420, %vm7446
      %vm7487 = vmand %vm7420, %vm7447
      %vm7488 = vmand %vm7420, %vm7448
      %vm7489 = vmand %vm7420, %vm7449
      %vm7490 = vmand %vm7421, %vm7442
      %vm7491 = vmand %vm7421, %vm7443
      %vm7492 = vmand %vm7421, %vm7444
      %vm7493 = vmand %vm7421, %vm7445
      %vm7494 = vmand %vm7421, %vm7446
      %vm7495 = vmand %vm7421, %vm7447
      %vm7496 = vmand %vm7421, %vm7448
      %vm7497 = vmand %vm7421, %vm7449
      %vm7498 = vmand %vm7422, %vm7442
      %vm7499 = vmand %vm7422, %vm7443
      %vm7500 = vmand %vm7422, %vm7444
      %vm7501 = vmand %vm7422, %vm7445
      %vm7502 = vmand %vm7422, %vm7446
      %vm7503 = vmand %vm7422, %vm7447
      %vm7504 = vmand %vm7422, %vm7448
      %vm7505 = vmand %vm7422, %vm7449
      %vm7506 = vmand %vm7423, %vm7442
      %vm7507 = vmand %vm7423, %vm7443
      %vm7508 = vmand %vm7423, %vm7444
      %vm7509 = vmand %vm7423, %vm7445
      %vm7510 = vmand %vm7423, %vm7446
      %vm7511 = vmand %vm7423, %vm7447
      %vm7512 = vmand %vm7423, %vm7448
      %vm7513 = vmand %vm7423, %vm7449
      %vm7514 = vmand %vm7424, %vm7442
      %vm7515 = vmand %vm7424, %vm7443
      %vm7516 = vmand %vm7424, %vm7444
      %vm7517 = vmand %vm7424, %vm7445
      %vm7518 = vmand %vm7424, %vm7446
      %vm7519 = vmand %vm7424, %vm7447
      %vm7520 = vmand %vm7424, %vm7448
      %vm7521 = vmand %vm7424, %vm7449
      %vm7522 = vmand %vm7425, %vm7442
      %vm7523 = vmand %vm7425, %vm7443
      %vm7524 = vmand %vm7425, %vm7444
      %vm7525 = vmand %vm7425, %vm7445
      %vm7526 = vmand %vm7425, %vm7446
      %vm7527 = vmand %vm7425, %vm7447
      %vm7528 = vmand %vm7425, %vm7448
      %vm7529 = vmand %vm7425, %vm7449
      %vm7530 = vmand %vm7426, %vm7442
      %vm7531 = vmand %vm7426, %vm7443
      %vm7532 = vmand %vm7426, %vm7444
      %vm7533 = vmand %vm7426, %vm7445
      %vm7534 = vmand %vm7426, %vm7446
      %vm7535 = vmand %vm7426, %vm7447
      %vm7536 = vmand %vm7426, %vm7448
      %vm7537 = vmand %vm7426, %vm7449
      %vm7538 = vmand %vm7427, %vm7442
      %vm7539 = vmand %vm7427, %vm7443
      %vm7540 = vmand %vm7427, %vm7444
      %vm7541 = vmand %vm7427, %vm7445
      %vm7542 = vmand %vm7427, %vm7446
      %vm7543 = vmand %vm7427, %vm7447
      %vm7544 = vmand %vm7427, %vm7448
      %vm7545 = vmand %vm7427, %vm7449
      %vm7546 = vmand %vm7428, %vm7442
      %vm7547 = vmand %vm7428, %vm7443
      %vm7548 = vmand %vm7428, %vm7444
      %vm7549 = vmand %vm7428, %vm7445
      %vm7550 = vmand %vm7428, %vm7446
      %vm7551 = vmand %vm7428, %vm7447
      %vm7552 = vmand %vm7428, %vm7448
      %vm7553 = vmand %vm7428, %vm7449
      %vm7554 = vmand %vm7429, %vm7442
      %vm7555 = vmand %vm7429, %vm7443
      %vm7556 = vmand %vm7429, %vm7444
      %vm7557 = vmand %vm7429, %vm7445
      %vm7558 = vmand %vm7429, %vm7446
      %vm7559 = vmand %vm7429, %vm7447
      %vm7560 = vmand %vm7429, %vm7448
      %vm7561 = vmand %vm7429, %vm7449
      %vm7562 = vmand %vm7430, %vm7442
      %vm7563 = vmand %vm7430, %vm7443
      %vm7564 = vmand %vm7430, %vm7444
      %vm7565 = vmand %vm7430, %vm7445
      %vm7566 = vmand %vm7430, %vm7446
      %vm7567 = vmand %vm7430, %vm7447
      %vm7568 = vmand %vm7430, %vm7448
      %vm7569 = vmand %vm7430, %vm7449
      %vm7570 = vmand %vm7431, %vm7442
      %vm7571 = vmand %vm7431, %vm7443
      %vm7572 = vmand %vm7431, %vm7444
      %vm7573 = vmand %vm7431, %vm7445
      %vm7574 = vmand %vm7431, %vm7446
      %vm7575 = vmand %vm7431, %vm7447
      %vm7576 = vmand %vm7431, %vm7448
      %vm7577 = vmand %vm7431, %vm7449
      %v7578 = vsel %vm7450, %v7182, -inf
      %v7579 = vsel %vm7451, %v7183, -inf
      %v7580 = vsel %vm7452, %v7184, -inf
      %v7581 = vsel %vm7453, %v7185, -inf
      %v7582 = vsel %vm7454, %v7186, -inf
      %v7583 = vsel %vm7455, %v7187, -inf
      %v7584 = vsel %vm7456, %v7188, -inf
      %v7585 = vsel %vm7457, %v7189, -inf
      %v7586 = vsel %vm7458, %v7190, -inf
      %v7587 = vsel %vm7459, %v7191, -inf
      %v7588 = vsel %vm7460, %v7192, -inf
      %v7589 = vsel %vm7461, %v7193, -inf
      %v7590 = vsel %vm7462, %v7194, -inf
      %v7591 = vsel %vm7463, %v7195, -inf
      %v7592 = vsel %vm7464, %v7196, -inf
      %v7593 = vsel %vm7465, %v7197, -inf
      %v7594 = vsel %vm7466, %v7198, -inf
      %v7595 = vsel %vm7467, %v7199, -inf
      %v7596 = vsel %vm7468, %v7200, -inf
      %v7597 = vsel %vm7469, %v7201, -inf
      %v7598 = vsel %vm7470, %v7202, -inf
      %v7599 = vsel %vm7471, %v7203, -inf
      %v7600 = vsel %vm7472, %v7204, -inf
      %v7601 = vsel %vm7473, %v7205, -inf
      %v7602 = vsel %vm7474, %v7206, -inf
      %v7603 = vsel %vm7475, %v7207, -inf
      %v7604 = vsel %vm7476, %v7208, -inf
      %v7605 = vsel %vm7477, %v7209, -inf
      %v7606 = vsel %vm7478, %v7210, -inf
      %v7607 = vsel %vm7479, %v7211, -inf
      %v7608 = vsel %vm7480, %v7212, -inf
      %v7609 = vsel %vm7481, %v7213, -inf
      %v7610 = vsel %vm7482, %v7214, -inf
      %v7611 = vsel %vm7483, %v7215, -inf
      %v7612 = vsel %vm7484, %v7216, -inf
      %v7613 = vsel %vm7485, %v7217, -inf
      %v7614 = vsel %vm7486, %v7218, -inf
      %v7615 = vsel %vm7487, %v7219, -inf
      %v7616 = vsel %vm7488, %v7220, -inf
      %v7617 = vsel %vm7489, %v7221, -inf
      %v7618 = vsel %vm7490, %v7222, -inf
      %v7619 = vsel %vm7491, %v7223, -inf
      %v7620 = vsel %vm7492, %v7224, -inf
      %v7621 = vsel %vm7493, %v7225, -inf
      %v7622 = vsel %vm7494, %v7226, -inf
      %v7623 = vsel %vm7495, %v7227, -inf
      %v7624 = vsel %vm7496, %v7228, -inf
      %v7625 = vsel %vm7497, %v7229, -inf
      %v7626 = vsel %vm7498, %v7230, -inf
      %v7627 = vsel %vm7499, %v7231, -inf
      %v7628 = vsel %vm7500, %v7232, -inf
      %v7629 = vsel %vm7501, %v7233, -inf
      %v7630 = vsel %vm7502, %v7234, -inf
      %v7631 = vsel %vm7503, %v7235, -inf
      %v7632 = vsel %vm7504, %v7236, -inf
      %v7633 = vsel %vm7505, %v7237, -inf
      %v7634 = vsel %vm7506, %v7238, -inf
      %v7635 = vsel %vm7507, %v7239, -inf
      %v7636 = vsel %vm7508, %v7240, -inf
      %v7637 = vsel %vm7509, %v7241, -inf
      %v7638 = vsel %vm7510, %v7242, -inf
      %v7639 = vsel %vm7511, %v7243, -inf
      %v7640 = vsel %vm7512, %v7244, -inf
      %v7641 = vsel %vm7513, %v7245, -inf
      %v7642 = vsel %vm7514, %v7246, -inf
      %v7643 = vsel %vm7515, %v7247, -inf
      %v7644 = vsel %vm7516, %v7248, -inf
      %v7645 = vsel %vm7517, %v7249, -inf
      %v7646 = vsel %vm7518, %v7250, -inf
      %v7647 = vsel %vm7519, %v7251, -inf
      %v7648 = vsel %vm7520, %v7252, -inf
      %v7649 = vsel %vm7521, %v7253, -inf
      %v7650 = vsel %vm7522, %v7254, -inf
      %v7651 = vsel %vm7523, %v7255, -inf
      %v7652 = vsel %vm7524, %v7256, -inf
      %v7653 = vsel %vm7525, %v7257, -inf
      %v7654 = vsel %vm7526, %v7258, -inf
      %v7655 = vsel %vm7527, %v7259, -inf
      %v7656 = vsel %vm7528, %v7260, -inf
      %v7657 = vsel %vm7529, %v7261, -inf
      %v7658 = vsel %vm7530, %v7262, -inf
      %v7659 = vsel %vm7531, %v7263, -inf
      %v7660 = vsel %vm7532, %v7264, -inf
      %v7661 = vsel %vm7533, %v7265, -inf
      %v7662 = vsel %vm7534, %v7266, -inf
      %v7663 = vsel %vm7535, %v7267, -inf
      %v7664 = vsel %vm7536, %v7268, -inf
      %v7665 = vsel %vm7537, %v7269, -inf
      %v7666 = vsel %vm7538, %v7270, -inf
      %v7667 = vsel %vm7539, %v7271, -inf
      %v7668 = vsel %vm7540, %v7272, -inf
      %v7669 = vsel %vm7541, %v7273, -inf
      %v7670 = vsel %vm7542, %v7274, -inf
      %v7671 = vsel %vm7543, %v7275, -inf
      %v7672 = vsel %vm7544, %v7276, -inf
      %v7673 = vsel %vm7545, %v7277, -inf
      %v7674 = vsel %vm7546, %v7278, -inf
      %v7675 = vsel %vm7547, %v7279, -inf
      %v7676 = vsel %vm7548, %v7280, -inf
      %v7677 = vsel %vm7549, %v7281, -inf
      %v7678 = vsel %vm7550, %v7282, -inf
      %v7679 = vsel %vm7551, %v7283, -inf
      %v7680 = vsel %vm7552, %v7284, -inf
      %v7681 = vsel %vm7553, %v7285, -inf
      %v7682 = vsel %vm7554, %v7286, -inf
      %v7683 = vsel %vm7555, %v7287, -inf
      %v7684 = vsel %vm7556, %v7288, -inf
      %v7685 = vsel %vm7557, %v7289, -inf
      %v7686 = vsel %vm7558, %v7290, -inf
      %v7687 = vsel %vm7559, %v7291, -inf
      %v7688 = vsel %vm7560, %v7292, -inf
      %v7689 = vsel %vm7561, %v7293, -inf
      %v7690 = vsel %vm7562, %v7294, -inf
      %v7691 = vsel %vm7563, %v7295, -inf
      %v7692 = vsel %vm7564, %v7296, -inf
      %v7693 = vsel %vm7565, %v7297, -inf
      %v7694 = vsel %vm7566, %v7298, -inf
      %v7695 = vsel %vm7567, %v7299, -inf
      %v7696 = vsel %vm7568, %v7300, -inf
      %v7697 = vsel %vm7569, %v7301, -inf
      %v7698 = vsel %vm7570, %v7302, -inf
      %v7699 = vsel %vm7571, %v7303, -inf
      %v7700 = vsel %vm7572, %v7304, -inf
      %v7701 = vsel %vm7573, %v7305, -inf
      %v7702 = vsel %vm7574, %v7306, -inf
      %v7703 = vsel %vm7575, %v7307, -inf
      %v7704 = vsel %vm7576, %v7308, -inf
      %v7705 = vsel %vm7577, %v7309, -inf
      %v7706 = vmax.f32 %v7578, %v7582
      %v7707 = vmax.f32 %v7579, %v7583
      %v7708 = vmax.f32 %v7580, %v7584
      %v7709 = vmax.f32 %v7581, %v7585
      %v7710 = vmax.f32 %v7706, %v7586
      %v7711 = vmax.f32 %v7707, %v7587
      %v7712 = vmax.f32 %v7708, %v7588
      %v7713 = vmax.f32 %v7709, %v7589
      %v7714 = vmax.f32 %v7710, %v7590
      %v7715 = vmax.f32 %v7711, %v7591
      %v7716 = vmax.f32 %v7712, %v7592
      %v7717 = vmax.f32 %v7713, %v7593
      %v7718 = vmax.f32 %v7714, %v7594
      %v7719 = vmax.f32 %v7715, %v7595
      %v7720 = vmax.f32 %v7716, %v7596
      %v7721 = vmax.f32 %v7717, %v7597
      %v7722 = vmax.f32 %v7718, %v7598
      %v7723 = vmax.f32 %v7719, %v7599
      %v7724 = vmax.f32 %v7720, %v7600
      %v7725 = vmax.f32 %v7721, %v7601
      %v7726 = vmax.f32 %v7722, %v7602
      %v7727 = vmax.f32 %v7723, %v7603
      %v7728 = vmax.f32 %v7724, %v7604
      %v7729 = vmax.f32 %v7725, %v7605
      %v7730 = vmax.f32 %v7726, %v7606
      %v7731 = vmax.f32 %v7727, %v7607
      %v7732 = vmax.f32 %v7728, %v7608
      %v7733 = vmax.f32 %v7729, %v7609
      %v7734 = vmax.f32 %v7730, %v7610
      %v7735 = vmax.f32 %v7731, %v7611
      %v7736 = vmax.f32 %v7732, %v7612
      %v7737 = vmax.f32 %v7733, %v7613
      %v7738 = vmax.f32 %v7734, %v7614
      %v7739 = vmax.f32 %v7735, %v7615
      %v7740 = vmax.f32 %v7736, %v7616
      %v7741 = vmax.f32 %v7737, %v7617
      %v7742 = vmax.f32 %v7738, %v7618
      %v7743 = vmax.f32 %v7739, %v7619
      %v7744 = vmax.f32 %v7740, %v7620
      %v7745 = vmax.f32 %v7741, %v7621
      %v7746 = vmax.f32 %v7742, %v7622
      %v7747 = vmax.f32 %v7743, %v7623
      %v7748 = vmax.f32 %v7744, %v7624
      %v7749 = vmax.f32 %v7745, %v7625
      %v7750 = vmax.f32 %v7746, %v7626
      %v7751 = vmax.f32 %v7747, %v7627
      %v7752 = vmax.f32 %v7748, %v7628
      %v7753 = vmax.f32 %v7749, %v7629
      %v7754 = vmax.f32 %v7750, %v7630
      %v7755 = vmax.f32 %v7751, %v7631
      %v7756 = vmax.f32 %v7752, %v7632
      %v7757 = vmax.f32 %v7753, %v7633
      %v7758 = vmax.f32 %v7754, %v7634
      %v7759 = vmax.f32 %v7755, %v7635
      %v7760 = vmax.f32 %v7756, %v7636
      %v7761 = vmax.f32 %v7757, %v7637
      %v7762 = vmax.f32 %v7758, %v7638
      %v7763 = vmax.f32 %v7759, %v7639
      %v7764 = vmax.f32 %v7760, %v7640
      %v7765 = vmax.f32 %v7761, %v7641
      %v7766 = vmax.f32 %v7762, %v7642
      %v7767 = vmax.f32 %v7763, %v7643
      %v7768 = vmax.f32 %v7764, %v7644
      %v7769 = vmax.f32 %v7765, %v7645
      %v7770 = vmax.f32 %v7766, %v7646
      %v7771 = vmax.f32 %v7767, %v7647
      %v7772 = vmax.f32 %v7768, %v7648
      %v7773 = vmax.f32 %v7769, %v7649
      %v7774 = vmax.f32 %v7770, %v7650
      %v7775 = vmax.f32 %v7771, %v7651
      %v7776 = vmax.f32 %v7772, %v7652
      %v7777 = vmax.f32 %v7773, %v7653
      %v7778 = vmax.f32 %v7774, %v7654
      %v7779 = vmax.f32 %v7775, %v7655
      %v7780 = vmax.f32 %v7776, %v7656
      %v7781 = vmax.f32 %v7777, %v7657
      %v7782 = vmax.f32 %v7778, %v7658
      %v7783 = vmax.f32 %v7779, %v7659
      %v7784 = vmax.f32 %v7780, %v7660
      %v7785 = vmax.f32 %v7781, %v7661
      %v7786 = vmax.f32 %v7782, %v7662
      %v7787 = vmax.f32 %v7783, %v7663
      %v7788 = vmax.f32 %v7784, %v7664
      %v7789 = vmax.f32 %v7785, %v7665
      %v7790 = vmax.f32 %v7786, %v7666
      %v7791 = vmax.f32 %v7787, %v7667
      %v7792 = vmax.f32 %v7788, %v7668
      %v7793 = vmax.f32 %v7789, %v7669
      %v7794 = vmax.f32 %v7790, %v7670
      %v7795 = vmax.f32 %v7791, %v7671
      %v7796 = vmax.f32 %v7792, %v7672
      %v7797 = vmax.f32 %v7793, %v7673
      %v7798 = vmax.f32 %v7794, %v7674
      %v7799 = vmax.f32 %v7795, %v7675
      %v7800 = vmax.f32 %v7796, %v7676
      %v7801 = vmax.f32 %v7797, %v7677
      %v7802 = vmax.f32 %v7798, %v7678
      %v7803 = vmax.f32 %v7799, %v7679
      %v7804 = vmax.f32 %v7800, %v7680
      %v7805 = vmax.f32 %v7801, %v7681
      %v7806 = vmax.f32 %v7802, %v7682
      %v7807 = vmax.f32 %v7803, %v7683
      %v7808 = vmax.f32 %v7804, %v7684
      %v7809 = vmax.f32 %v7805, %v7685
      %v7810 = vmax.f32 %v7806, %v7686
      %v7811 = vmax.f32 %v7807, %v7687
      %v7812 = vmax.f32 %v7808, %v7688
      %v7813 = vmax.f32 %v7809, %v7689
      %v7814 = vmax.f32 %v7810, %v7690
      %v7815 = vmax.f32 %v7811, %v7691
      %v7816 = vmax.f32 %v7812, %v7692
      %v7817 = vmax.f32 %v7813, %v7693
      %v7818 = vmax.f32 %v7814, %v7694
      %v7819 = vmax.f32 %v7815, %v7695
      %v7820 = vmax.f32 %v7816, %v7696
      %v7821 = vmax.f32 %v7817, %v7697
      %v7822 = vmax.f32 %v7818, %v7698
      %v7823 = vmax.f32 %v7819, %v7699
      %v7824 = vmax.f32 %v7820, %v7700
      %v7825 = vmax.f32 %v7821, %v7701
      %v7826 = vmax.f32 %v7822, %v7702
      %v7827 = vmax.f32 %v7823, %v7703
      %v7828 = vmax.f32 %v7824, %v7704
      %v7829 = vmax.f32 %v7825, %v7705
      %v7830 = vmax.f32 %v7826, %v7827
      %v7831 = vmax.f32 %v7828, %v7829
      %v7832 = vmax.f32 %v7830, %v7831
      %7833 = vmax.xlane.f32.xlu0 %v7832
      %v7834 = vpop.xlane.xlu0 %7833
      %v7835 = vrot.slane %v7834, 4
      %v7836 = vmax.f32 %v7834, %v7835
      %v7837 = vrot.slane %v7836, 2
      %v7838 = vmax.f32 %v7836, %v7837
      %v7839 = vrot.slane %v7838, 1
      %v7840 = vmax.f32 %v7838, %v7839
      %s7841 = vtos %v7840
      %v7842 = vstv %s7841
      %7843 = vst [vmem:[%s255] sm:$0xff] %v7842
      %s7844 = smul.u32 8, %s21
      %p7845 = scmp.lt.s32.totalorder %s20, 1
      %s7846 = scalar_select %p7845, %s20, 1
      %p7847 = scmp.lt.s32.totalorder %s7844, 7
      %s7848 = scalar_select %p7847, %s7844, 7
      %s7849 = smul.addr %s7846, 80
      %s7850 = sadd.s32 %s7848, %s7849
      %s7851 = smul.addr %s7850, 8
      %s7852 = scalar_lea.vmem %s3, %s7851
      %p7853 = scmp.lt.s32.totalorder %s20, 1
      %s7854 = scalar_select %p7853, %s20, 1
      %p7855 = scmp.lt.s32.totalorder %s21, 0
      %s7856 = scalar_select %p7855, %s21, 0
      %s7857 = sadd.s32 %s7856, %s7854
      %s7858 = smul.addr %s7857, 8
      %s7859 = scalar_lea.vmem %s4, %s7858
      // Predicated region
      $region33: #{whisper_pre_pipeline.2} parent=31 // pred_check
        %p7860 = pneg %p118
      $region34: #{whisper_pre_pipeline.2} parent=31 // pred_check_branch
        %7862 = sbr.rel (%p7860) target = $region36
      $region35: #{whisper_pre_pipeline.2} parent=31 // pred_region
        %s7863 = smul.u32 8, %s21
      $region36: #{whisper_pre_pipeline.2} parent=31 // pred_fallthru
        _
      // Predicated region
      $region37: #{whisper_pre_pipeline.2} parent=31 // pred_check
        %p7864 = pneg %p146
      $region38: #{whisper_pre_pipeline.2} parent=31 // pred_check_branch
        %7866 = sbr.rel (%p7864) target = $region40
      $region39: #{whisper_pre_pipeline.2} parent=31 // pred_region
        _
      $region40: #{whisper_pre_pipeline.2} parent=31 // pred_fallthru
        _
    $region32: #{whisper_pre_pipeline.2} parent=5 // pred_fallthru
      _
    %p7867 = scmp.le.s32.totalorder 2, %s11
    // Predicated region
    $region41: #{whisper_pre_pipeline.2} parent=5 // pred_check
      %p7868 = pneg %p7867
    $region42: #{whisper_pre_pipeline.2} parent=5 // pred_check_branch
      %7870 = sbr.rel (%p7868) target = $region44
    $region43: #{whisper_pre_pipeline.2} parent=5 // pred_region
      %s7871 = ssub.s32 %s11, 2
      // Predicated region
      $region45: #{whisper_pre_pipeline.2} parent=43 // pred_check
        %p7872 = pneg %p124
      $region46: #{whisper_pre_pipeline.2} parent=43 // pred_check_branch
        %7874 = sbr.rel (%p7872) target = $region48
      $region47: #{whisper_pre_pipeline.2} parent=43 // pred_region
        %s7875 = smul.u32 8, %s23
        %p7876 = scmp.lt.s32.totalorder %s22, 1
        %s7877 = scalar_select %p7876, %s22, 1
        %p7878 = scmp.lt.s32.totalorder %s7875, 7
        %s7879 = scalar_select %p7878, %s7875, 7
        %s7880 = smul.addr %s7877, 80
        %s7881 = sadd.s32 %s7879, %s7880
        %s7882 = smul.addr %s7881, 8
        %s7883 = scalar_lea.vmem %s3, %s7882
      $region48: #{whisper_pre_pipeline.2} parent=43 // pred_fallthru
        _
      // Predicated region
      $region49: #{whisper_pre_pipeline.2} parent=43 // pred_check
        %p7884 = pneg %p152
      $region50: #{whisper_pre_pipeline.2} parent=43 // pred_check_branch
        %7886 = sbr.rel (%p7884) target = $region52
      $region51: #{whisper_pre_pipeline.2} parent=43 // pred_region
        %p7887 = scmp.lt.s32.totalorder %s22, 1
        %s7888 = scalar_select %p7887, %s22, 1
        %p7889 = scmp.lt.s32.totalorder %s23, 0
        %s7890 = scalar_select %p7889, %s23, 0
        %s7891 = sadd.s32 %s7890, %s7888
        %s7892 = smul.addr %s7891, 8
        %s7893 = scalar_lea.vmem %s4, %s7892
      $region52: #{whisper_pre_pipeline.2} parent=43 // pred_fallthru
        _
    $region44: #{whisper_pre_pipeline.2} parent=5 // pred_fallthru
      _
  $region6: #{whisper_pre_pipeline.2} parent=0 // loop_footer
    %s15 = sadd.s32 1, %s11
  $region7: #{whisper_pre_pipeline.2} parent=0 // loop_footer_branch
    %10 = sbr.rel target = $region3
  $region8: #{whisper_pre_pipeline.2} parent=0 // loop_exit
    _

// kernel: whisper_pre_pipeline.3
$region0: #{whisper_pre_pipeline.3}
  #allocation0 [shape = 'u32[]', space=smem, size = 0x4, offset = 0x4, fixed_abs, tag = 'smem constant byte address 0x4 - core index']
  #allocation1 [shape = 'u32[144,128]{1,0:T(1,128)}', space=vmem, size = 0x12000, scoped, tag = 'internal scratch']
  #allocation2 [shape = 'f32[1]{0:T(128)S(6)}', space=smem, size = 0x200, scoped, tag = 'scoped memory for whisper_pre_pipeline.3']
  %s0 = inlined_call_operand.<no memory space> [shape: f32[1], index: 0, kind: input, shape index: {}]
  %s1 = inlined_call_operand.vmem [shape: f32[2,80,1024], index: 1, kind: input, shape index: {}]
  %s2 = inlined_call_operand.hbm [shape: f32[2,80,3000], index: 2, kind: output, shape index: {}]
  %s3 = sld [smem:[#allocation0]]
  $region41: #{whisper_pre_pipeline.3} parent=0
    _
  %s5 = ssub.s32 1, %s3
  %s6 = scalar_select 0, %s5, %s3
  %7 = sst [smem:[#allocation2]] %s0
  $region1: #{whisper_pre_pipeline.3} parent=0
    #allocation3 [shape = 'u8[1966080]{0}', space=vmem, size = 0x1e0000, scoped, tag = 'output window, operand 0']
    #allocation4 [shape = 's32[2]{0}', space=sflag, size = 0x8, scoped, tag = 'scoped memory for whisper_pre_pipeline.3']
    %8 = vsyncpa [#allocation4], 0
    %s9 = scalar_lea.sflag [#allocation4], 1
    %10 = vsyncpa %s9, 0
    loop: start=0, step=1, limit=4
    $region2: #{whisper_pre_pipeline.3} parent=1 // loop_pre_header
      _
    $region3: #{whisper_pre_pipeline.3} parent=1 // loop_header
      %s12 = sphi 0, %s16
      %p13 = scmp.ge.s32.totalorder %s12, 4
      %s20 = sphi 0, %s20
      %s22 = sphi 0, %s20
      %s23 = sphi 0, %s22
      %s37 = sphi 0, %s23
      %s43 = sphi 0, %s45
      %s46 = sphi 0, %s43
      %s47 = sphi 0, %s46
      %s63 = sphi 0, %s47
      %s69 = sphi 0, %s71
      %s72 = sphi 0, %s69
      %s73 = sphi 0, %s72
      %s89 = sphi 0, %s73
    $region4: #{whisper_pre_pipeline.3} parent=1 // loop_header_branch
      %15 = sbr.rel (%p13) target = $region8
    $region5: #{whisper_pre_pipeline.3} parent=1 // loop_body
      %s17 = ssub.s32 %s12, 1
      %s18 = ssub.s32 %s12, 2
      %s19 = sadd.s32 %s12, 1
      %s21 = sadd.s32 %s20, 1
      %p24 = scmp.eq.s32.totalorder %s12, 1
      %p25 = scmp.ne.s32.totalorder %s20, %s22
      %p26 = scmp.eq.s32.totalorder %s12, 0
      %p27 = por %p25, %p26
      %p28 = scmp.ne.s32.totalorder %s20, %s22
      %p29 = scmp.eq.s32.totalorder %s17, 1
      %p30 = por %p28, %p29
      %p31 = scmp.ne.s32.totalorder %s22, %s23
      %p32 = scmp.eq.s32.totalorder %s17, 0
      %p33 = por %p31, %p32
      %p34 = scmp.ne.s32.totalorder %s22, %s23
      %p35 = scmp.eq.s32.totalorder %s18, 1
      %p36 = por %p34, %p35
      %p38 = scmp.ne.s32.totalorder %s23, %s37
      %p39 = scmp.eq.s32.totalorder %s18, 0
      %p40 = por %p38, %p39
      %s41 = ssub.s32 %s12, %s19
      %p42 = scmp.eq.s32.totalorder %s41, 0
      %s44 = sadd.s32 %s43, 1
      %s45 = scalar_select %p42, %s43, %s44
      %p48 = pneg %p42
      %p49 = scmp.eq.s32.totalorder %s12, 1
      %p50 = por %p48, %p49
      %p51 = scmp.ne.s32.totalorder %s43, %s46
      %p52 = scmp.eq.s32.totalorder %s12, 0
      %p53 = por %p51, %p52
      %p54 = scmp.ne.s32.totalorder %s43, %s46
      %p55 = scmp.eq.s32.totalorder %s17, 1
      %p56 = por %p54, %p55
      %p57 = scmp.ne.s32.totalorder %s46, %s47
      %p58 = scmp.eq.s32.totalorder %s17, 0
      %p59 = por %p57, %p58
      %p60 = scmp.ne.s32.totalorder %s46, %s47
      %p61 = scmp.eq.s32.totalorder %s18, 1
      %p62 = por %p60, %p61
      %p64 = scmp.ne.s32.totalorder %s47, %s63
      %p65 = scmp.eq.s32.totalorder %s18, 0
      %p66 = por %p64, %p65
      %s67 = ssub.s32 %s12, %s19
      %p68 = scmp.eq.s32.totalorder %s67, 0
      %s70 = sadd.s32 %s69, 1
      %s71 = scalar_select %p68, %s69, %s70
      %p74 = pneg %p68
      %p75 = scmp.eq.s32.totalorder %s12, 1
      %p76 = por %p74, %p75
      %p77 = scmp.ne.s32.totalorder %s69, %s72
      %p78 = scmp.eq.s32.totalorder %s12, 0
      %p79 = por %p77, %p78
      %p80 = scmp.ne.s32.totalorder %s69, %s72
      %p81 = scmp.eq.s32.totalorder %s17, 1
      %p82 = por %p80, %p81
      %p83 = scmp.ne.s32.totalorder %s72, %s73
      %p84 = scmp.eq.s32.totalorder %s17, 0
      %p85 = por %p83, %p84
      %p86 = scmp.ne.s32.totalorder %s72, %s73
      %p87 = scmp.eq.s32.totalorder %s18, 1
      %p88 = por %p86, %p87
      %p90 = scmp.ne.s32.totalorder %s73, %s89
      %p91 = scmp.eq.s32.totalorder %s18, 0
      %p92 = por %p90, %p91
      %p93 = scmp.le.s32.totalorder 1, %s12
      %p94 = scmp.lt.s32.totalorder %s12, 3
      %p95 = pnand %p93, %p94
      %p96 = pneg %p95
      // Predicated region
      $region9: #{whisper_pre_pipeline.3} parent=5 // pred_check
        _
      $region10: #{whisper_pre_pipeline.3} parent=5 // pred_check_branch
        %98 = sbr.rel (%p95) target = $region12
      $region11: #{whisper_pre_pipeline.3} parent=5 // pred_region
        %s99 = ssub.s32 %s12, 1
        // Predicated region
        $region13: #{whisper_pre_pipeline.3} parent=11 // pred_check
          %p100 = pneg %p33
        $region14: #{whisper_pre_pipeline.3} parent=11 // pred_check_branch
          %102 = sbr.rel (%p100) target = $region16
        $region15: #{whisper_pre_pipeline.3} parent=11 // pred_region
          _
        $region16: #{whisper_pre_pipeline.3} parent=11 // pred_fallthru
          _
      $region12: #{whisper_pre_pipeline.3} parent=5 // pred_fallthru
        _
      %p103 = scmp.lt.s32.totalorder %s12, 2
      // Predicated region
      $region17: #{whisper_pre_pipeline.3} parent=5 // pred_check
        %p104 = pneg %p103
      $region18: #{whisper_pre_pipeline.3} parent=5 // pred_check_branch
        %106 = sbr.rel (%p104) target = $region20
      $region19: #{whisper_pre_pipeline.3} parent=5 // pred_region
        // Predicated region
        $region21: #{whisper_pre_pipeline.3} parent=19 // pred_check
          %p107 = pneg %p53
        $region22: #{whisper_pre_pipeline.3} parent=19 // pred_check_branch
          %109 = sbr.rel (%p107) target = $region24
        $region23: #{whisper_pre_pipeline.3} parent=19 // pred_region
          %p110 = scmp.lt.s32.totalorder %s12, 1
          %s111 = scalar_select %p110, %s12, 1
          %s112 = smul.addr %s111, 80
          %s113 = smul.addr %s112, 8
          %s114 = scalar_lea.vmem %s1, %s113
        $region24: #{whisper_pre_pipeline.3} parent=19 // pred_fallthru
          _
      $region20: #{whisper_pre_pipeline.3} parent=5 // pred_fallthru
        _
      %p115 = scmp.le.s32.totalorder 1, %s12
      %p116 = scmp.lt.s32.totalorder %s12, 3
      %p117 = pnand %p115, %p116
      %p118 = pneg %p117
      // Predicated region
      $region25: #{whisper_pre_pipeline.3} parent=5 // pred_check
        _
      $region26: #{whisper_pre_pipeline.3} parent=5 // pred_check_branch
        %120 = sbr.rel (%p117) target = $region28
      $region27: #{whisper_pre_pipeline.3} parent=5 // pred_region
        %s121 = ssub.s32 %s12, 1
        %p122 = pneg %p33
        %p123 = pneg %p30
        %p124 = scmp.lt.s32.totalorder %s17, 1
        %s125 = scalar_select %p124, %s17, 1
        %s126 = smul.addr %s125, 80
        %s127 = smul.addr %s126, 8
        %s128 = scalar_lea.vmem %s1, %s127
        %p129 = pneg %p59
        %p130 = pneg %p56
        %p131 = pneg %p85
        %p132 = pneg %p82
        %s133 = sand.u32 %s72, 1
        %s134 = scalar_lea.sflag [#allocation4], %s133
        %s135 = sand.u32 %s72, 1
        %s136 = smul.addr %s135, 1920
        %s137 = scalar_lea.vmem [#allocation3], %s136
        %p138 = scmp.lt.s32.totalorder %s17, 1
        %s139 = scalar_select %p138, %s17, 1
        %s140 = smul.addr %s139, 80
        %s141 = smul.addr %s140, 8
        %s142 = scalar_lea.vmem %s1, %s141
        %s143 = sld [smem:[#allocation2]]
        %v144 = vld [vmem:[%s142] sm:$0xff]
        %v145 = vld [vmem:[%s142 + $0x40] sm:$0xff]
        %v146 = vld [vmem:[%s142 + $0x80] sm:$0xff]
        %v147 = vld [vmem:[%s142 + $0xc0] sm:$0xff]
        %v148 = vld [vmem:[%s142 + $0x100] sm:$0xff]
        %v149 = vld [vmem:[%s142 + $0x140] sm:$0xff]
        %v150 = vld [vmem:[%s142 + $0x180] sm:$0xff]
        %v151 = vld [vmem:[%s142 + $0x1c0] sm:$0xff]
        %v152 = vld [vmem:[%s142 + $0x200] sm:$0xff]
        %v153 = vld [vmem:[%s142 + $0x240] sm:$0xff]
        %v154 = vstv %s143
        %v155 = vmax.f32 %v144, %v154
        %v156 = vmax.f32 %v145, %v154
        %v157 = vmax.f32 %v146, %v154
        %v158 = vmax.f32 %v147, %v154
        %v159 = vmax.f32 %v148, %v154
        %v160 = vmax.f32 %v149, %v154
        %v161 = vmax.f32 %v150, %v154
        %v162 = vmax.f32 %v151, %v154
        %v163 = vmax.f32 %v152, %v154
        %v164 = vmax.f32 %v153, %v154
        %v165 = vadd.f32 %v155, 4.0
        %v166 = vadd.f32 %v156, 4.0
        %v167 = vadd.f32 %v157, 4.0
        %v168 = vadd.f32 %v158, 4.0
        %v169 = vadd.f32 %v159, 4.0
        %v170 = vadd.f32 %v160, 4.0
        %v171 = vadd.f32 %v161, 4.0
        %v172 = vadd.f32 %v162, 4.0
        %v173 = vadd.f32 %v163, 4.0
        %v174 = vadd.f32 %v164, 4.0
        %v175 = vmul.f32 %v165, 0.25
        %v176 = vmul.f32 %v166, 0.25
        %v177 = vmul.f32 %v167, 0.25
        %v178 = vmul.f32 %v168, 0.25
        %v179 = vmul.f32 %v169, 0.25
        %v180 = vmul.f32 %v170, 0.25
        %v181 = vmul.f32 %v171, 0.25
        %v182 = vmul.f32 %v172, 0.25
        %v183 = vmul.f32 %v173, 0.25
        %v184 = vmul.f32 %v174, 0.25
        %185 = vst [vmem:[%s137] sm:$0xff] %v175
        %186 = vst [vmem:[%s137 + $0xc0] sm:$0xff] %v176
        %187 = vst [vmem:[%s137 + $0x180] sm:$0xff] %v177
        %188 = vst [vmem:[%s137 + $0x240] sm:$0xff] %v178
        %189 = vst [vmem:[%s137 + $0x300] sm:$0xff] %v179
        %190 = vst [vmem:[%s137 + $0x3c0] sm:$0xff] %v180
        %191 = vst [vmem:[%s137 + $0x480] sm:$0xff] %v181
        %192 = vst [vmem:[%s137 + $0x540] sm:$0xff] %v182
        %193 = vst [vmem:[%s137 + $0x600] sm:$0xff] %v183
        %194 = vst [vmem:[%s137 + $0x6c0] sm:$0xff] %v184
        %s195 = sadd.f32 %s143, 4.0
        %s196 = smul.f32 %s195, 0.25
        %v197 = vstv %s196
        %vm198 = vcmask 1047952
        %199 = vst.msk [vmem:[%s137] sm:$0xff] %vm198, %v197
        %200 = vst [vmem:[%s137 + $0x8] sm:$0xff] %v197
        %201 = vst [vmem:[%s137 + $0x10] sm:$0xff] %v197
        %202 = vst [vmem:[%s137 + $0x18] sm:$0xff] %v197
        %203 = vst [vmem:[%s137 + $0x20] sm:$0xff] %v197
        %204 = vst [vmem:[%s137 + $0x28] sm:$0xff] %v197
        %205 = vst [vmem:[%s137 + $0x30] sm:$0xff] %v197
        %206 = vst [vmem:[%s137 + $0x38] sm:$0xff] %v197
        %207 = vst [vmem:[%s137 + $0x40] sm:$0xff] %v197
        %208 = vst [vmem:[%s137 + $0x48] sm:$0xff] %v197
        %209 = vst [vmem:[%s137 + $0x50] sm:$0xff] %v197
        %210 = vst [vmem:[%s137 + $0x58] sm:$0xff] %v197
        %211 = vst [vmem:[%s137 + $0x60] sm:$0xff] %v197
        %212 = vst [vmem:[%s137 + $0x68] sm:$0xff] %v197
        %213 = vst [vmem:[%s137 + $0x70] sm:$0xff] %v197
        %214 = vst [vmem:[%s137 + $0x78] sm:$0xff] %v197
        %215 = vst [vmem:[%s137 + $0x80] sm:$0xff] %v197
        %216 = vst [vmem:[%s137 + $0x88] sm:$0xff] %v197
        %217 = vst [vmem:[%s137 + $0x90] sm:$0xff] %v197
        %218 = vst [vmem:[%s137 + $0x98] sm:$0xff] %v197
        %219 = vst [vmem:[%s137 + $0xa0] sm:$0xff] %v197
        %220 = vst [vmem:[%s137 + $0xa8] sm:$0xff] %v197
        %221 = vst [vmem:[%s137 + $0xb0] sm:$0xff] %v197
        %vm222 = vcmask 457728
        %223 = vst.msk [vmem:[%s137 + $0xb8] sm:$0xff] %vm222, %v197
        %224 = vst.msk [vmem:[%s137 + $0xc0] sm:$0xff] %vm198, %v197
        %225 = vst [vmem:[%s137 + $0xc8] sm:$0xff] %v197
        %226 = vst [vmem:[%s137 + $0xd0] sm:$0xff] %v197
        %227 = vst [vmem:[%s137 + $0xd8] sm:$0xff] %v197
        %228 = vst [vmem:[%s137 + $0xe0] sm:$0xff] %v197
        %229 = vst [vmem:[%s137 + $0xe8] sm:$0xff] %v197
        %230 = vst [vmem:[%s137 + $0xf0] sm:$0xff] %v197
        %231 = vst [vmem:[%s137 + $0xf8] sm:$0xff] %v197
        %232 = vst [vmem:[%s137 + $0x100] sm:$0xff] %v197
        %233 = vst [vmem:[%s137 + $0x108] sm:$0xff] %v197
        %234 = vst [vmem:[%s137 + $0x110] sm:$0xff] %v197
        %235 = vst [vmem:[%s137 + $0x118] sm:$0xff] %v197
        %236 = vst [vmem:[%s137 + $0x120] sm:$0xff] %v197
        %237 = vst [vmem:[%s137 + $0x128] sm:$0xff] %v197
        %238 = vst [vmem:[%s137 + $0x130] sm:$0xff] %v197
        %239 = vst [vmem:[%s137 + $0x138] sm:$0xff] %v197
        %240 = vst [vmem:[%s137 + $0x140] sm:$0xff] %v197
        %241 = vst [vmem:[%s137 + $0x148] sm:$0xff] %v197
        %242 = vst [vmem:[%s137 + $0x150] sm:$0xff] %v197
        %243 = vst [vmem:[%s137 + $0x158] sm:$0xff] %v197
        %244 = vst [vmem:[%s137 + $0x160] sm:$0xff] %v197
        %245 = vst [vmem:[%s137 + $0x168] sm:$0xff] %v197
        %246 = vst [vmem:[%s137 + $0x170] sm:$0xff] %v197
        %247 = vst.msk [vmem:[%s137 + $0x178] sm:$0xff] %vm222, %v197
        %248 = vst.msk [vmem:[%s137 + $0x180] sm:$0xff] %vm198, %v197
        %249 = vst [vmem:[%s137 + $0x188] sm:$0xff] %v197
        %250 = vst [vmem:[%s137 + $0x190] sm:$0xff] %v197
        %251 = vst [vmem:[%s137 + $0x198] sm:$0xff] %v197
        %252 = vst [vmem:[%s137 + $0x1a0] sm:$0xff] %v197
        %253 = vst [vmem:[%s137 + $0x1a8] sm:$0xff] %v197
        %254 = vst [vmem:[%s137 + $0x1b0] sm:$0xff] %v197
        %255 = vst [vmem:[%s137 + $0x1b8] sm:$0xff] %v197
        %256 = vst [vmem:[%s137 + $0x1c0] sm:$0xff] %v197
        %257 = vst [vmem:[%s137 + $0x1c8] sm:$0xff] %v197
        %258 = vst [vmem:[%s137 + $0x1d0] sm:$0xff] %v197
        %259 = vst [vmem:[%s137 + $0x1d8] sm:$0xff] %v197
        %260 = vst [vmem:[%s137 + $0x1e0] sm:$0xff] %v197
        %261 = vst [vmem:[%s137 + $0x1e8] sm:$0xff] %v197
        %262 = vst [vmem:[%s137 + $0x1f0] sm:$0xff] %v197
        %263 = vst [vmem:[%s137 + $0x1f8] sm:$0xff] %v197
        %264 = vst [vmem:[%s137 + $0x200] sm:$0xff] %v197
        %265 = vst [vmem:[%s137 + $0x208] sm:$0xff] %v197
        %266 = vst [vmem:[%s137 + $0x210] sm:$0xff] %v197
        %267 = vst [vmem:[%s137 + $0x218] sm:$0xff] %v197
        %268 = vst [vmem:[%s137 + $0x220] sm:$0xff] %v197
        %269 = vst [vmem:[%s137 + $0x228] sm:$0xff] %v197
        %270 = vst [vmem:[%s137 + $0x230] sm:$0xff] %v197
        %271 = vst.msk [vmem:[%s137 + $0x238] sm:$0xff] %vm222, %v197
        %272 = vst.msk [vmem:[%s137 + $0x240] sm:$0xff] %vm198, %v197
        %273 = vst [vmem:[%s137 + $0x248] sm:$0xff] %v197
        %274 = vst [vmem:[%s137 + $0x250] sm:$0xff] %v197
        %275 = vst [vmem:[%s137 + $0x258] sm:$0xff] %v197
        %276 = vst [vmem:[%s137 + $0x260] sm:$0xff] %v197
        %277 = vst [vmem:[%s137 + $0x268] sm:$0xff] %v197
        %278 = vst [vmem:[%s137 + $0x270] sm:$0xff] %v197
        %279 = vst [vmem:[%s137 + $0x278] sm:$0xff] %v197
        %280 = vst [vmem:[%s137 + $0x280] sm:$0xff] %v197
        %281 = vst [vmem:[%s137 + $0x288] sm:$0xff] %v197
        %282 = vst [vmem:[%s137 + $0x290] sm:$0xff] %v197
        %283 = vst [vmem:[%s137 + $0x298] sm:$0xff] %v197
        %284 = vst [vmem:[%s137 + $0x2a0] sm:$0xff] %v197
        %285 = vst [vmem:[%s137 + $0x2a8] sm:$0xff] %v197
        %286 = vst [vmem:[%s137 + $0x2b0] sm:$0xff] %v197
        %287 = vst [vmem:[%s137 + $0x2b8] sm:$0xff] %v197
        %288 = vst [vmem:[%s137 + $0x2c0] sm:$0xff] %v197
        %289 = vst [vmem:[%s137 + $0x2c8] sm:$0xff] %v197
        %290 = vst [vmem:[%s137 + $0x2d0] sm:$0xff] %v197
        %291 = vst [vmem:[%s137 + $0x2d8] sm:$0xff] %v197
        %292 = vst [vmem:[%s137 + $0x2e0] sm:$0xff] %v197
        %293 = vst [vmem:[%s137 + $0x2e8] sm:$0xff] %v197
        %294 = vst [vmem:[%s137 + $0x2f0] sm:$0xff] %v197
        %295 = vst.msk [vmem:[%s137 + $0x2f8] sm:$0xff] %vm222, %v197
        %296 = vst.msk [vmem:[%s137 + $0x300] sm:$0xff] %vm198, %v197
        %297 = vst [vmem:[%s137 + $0x308] sm:$0xff] %v197
        %298 = vst [vmem:[%s137 + $0x310] sm:$0xff] %v197
        %299 = vst [vmem:[%s137 + $0x318] sm:$0xff] %v197
        %300 = vst [vmem:[%s137 + $0x320] sm:$0xff] %v197
        %301 = vst [vmem:[%s137 + $0x328] sm:$0xff] %v197
        %302 = vst [vmem:[%s137 + $0x330] sm:$0xff] %v197
        %303 = vst [vmem:[%s137 + $0x338] sm:$0xff] %v197
        %304 = vst [vmem:[%s137 + $0x340] sm:$0xff] %v197
        %305 = vst [vmem:[%s137 + $0x348] sm:$0xff] %v197
        %306 = vst [vmem:[%s137 + $0x350] sm:$0xff] %v197
        %307 = vst [vmem:[%s137 + $0x358] sm:$0xff] %v197
        %308 = vst [vmem:[%s137 + $0x360] sm:$0xff] %v197
        %309 = vst [vmem:[%s137 + $0x368] sm:$0xff] %v197
        %310 = vst [vmem:[%s137 + $0x370] sm:$0xff] %v197
        %311 = vst [vmem:[%s137 + $0x378] sm:$0xff] %v197
        %312 = vst [vmem:[%s137 + $0x380] sm:$0xff] %v197
        %313 = vst [vmem:[%s137 + $0x388] sm:$0xff] %v197
        %314 = vst [vmem:[%s137 + $0x390] sm:$0xff] %v197
        %315 = vst [vmem:[%s137 + $0x398] sm:$0xff] %v197
        %316 = vst [vmem:[%s137 + $0x3a0] sm:$0xff] %v197
        %317 = vst [vmem:[%s137 + $0x3a8] sm:$0xff] %v197
        %318 = vst [vmem:[%s137 + $0x3b0] sm:$0xff] %v197
        %319 = vst.msk [vmem:[%s137 + $0x3b8] sm:$0xff] %vm222, %v197
        %320 = vst.msk [vmem:[%s137 + $0x3c0] sm:$0xff] %vm198, %v197
        %321 = vst [vmem:[%s137 + $0x3c8] sm:$0xff] %v197
        %322 = vst [vmem:[%s137 + $0x3d0] sm:$0xff] %v197
        %323 = vst [vmem:[%s137 + $0x3d8] sm:$0xff] %v197
        %324 = vst [vmem:[%s137 + $0x3e0] sm:$0xff] %v197
        %325 = vst [vmem:[%s137 + $0x3e8] sm:$0xff] %v197
        %326 = vst [vmem:[%s137 + $0x3f0] sm:$0xff] %v197
        %327 = vst [vmem:[%s137 + $0x3f8] sm:$0xff] %v197
        %328 = vst [vmem:[%s137 + $0x400] sm:$0xff] %v197
        %329 = vst [vmem:[%s137 + $0x408] sm:$0xff] %v197
        %330 = vst [vmem:[%s137 + $0x410] sm:$0xff] %v197
        %331 = vst [vmem:[%s137 + $0x418] sm:$0xff] %v197
        %332 = vst [vmem:[%s137 + $0x420] sm:$0xff] %v197
        %333 = vst [vmem:[%s137 + $0x428] sm:$0xff] %v197
        %334 = vst [vmem:[%s137 + $0x430] sm:$0xff] %v197
        %335 = vst [vmem:[%s137 + $0x438] sm:$0xff] %v197
        %336 = vst [vmem:[%s137 + $0x440] sm:$0xff] %v197
        %337 = vst [vmem:[%s137 + $0x448] sm:$0xff] %v197
        %338 = vst [vmem:[%s137 + $0x450] sm:$0xff] %v197
        %339 = vst [vmem:[%s137 + $0x458] sm:$0xff] %v197
        %340 = vst [vmem:[%s137 + $0x460] sm:$0xff] %v197
        %341 = vst [vmem:[%s137 + $0x468] sm:$0xff] %v197
        %342 = vst [vmem:[%s137 + $0x470] sm:$0xff] %v197
        %343 = vst.msk [vmem:[%s137 + $0x478] sm:$0xff] %vm222, %v197
        %344 = vst.msk [vmem:[%s137 + $0x480] sm:$0xff] %vm198, %v197
        %345 = vst [vmem:[%s137 + $0x488] sm:$0xff] %v197
        %346 = vst [vmem:[%s137 + $0x490] sm:$0xff] %v197
        %347 = vst [vmem:[%s137 + $0x498] sm:$0xff] %v197
        %348 = vst [vmem:[%s137 + $0x4a0] sm:$0xff] %v197
        %349 = vst [vmem:[%s137 + $0x4a8] sm:$0xff] %v197
        %350 = vst [vmem:[%s137 + $0x4b0] sm:$0xff] %v197
        %351 = vst [vmem:[%s137 + $0x4b8] sm:$0xff] %v197
        %352 = vst [vmem:[%s137 + $0x4c0] sm:$0xff] %v197
        %353 = vst [vmem:[%s137 + $0x4c8] sm:$0xff] %v197
        %354 = vst [vmem:[%s137 + $0x4d0] sm:$0xff] %v197
        %355 = vst [vmem:[%s137 + $0x4d8] sm:$0xff] %v197
        %356 = vst [vmem:[%s137 + $0x4e0] sm:$0xff] %v197
        %357 = vst [vmem:[%s137 + $0x4e8] sm:$0xff] %v197
        %358 = vst [vmem:[%s137 + $0x4f0] sm:$0xff] %v197
        %359 = vst [vmem:[%s137 + $0x4f8] sm:$0xff] %v197
        %360 = vst [vmem:[%s137 + $0x500] sm:$0xff] %v197
        %361 = vst [vmem:[%s137 + $0x508] sm:$0xff] %v197
        %362 = vst [vmem:[%s137 + $0x510] sm:$0xff] %v197
        %363 = vst [vmem:[%s137 + $0x518] sm:$0xff] %v197
        %364 = vst [vmem:[%s137 + $0x520] sm:$0xff] %v197
        %365 = vst [vmem:[%s137 + $0x528] sm:$0xff] %v197
        %366 = vst [vmem:[%s137 + $0x530] sm:$0xff] %v197
        %367 = vst.msk [vmem:[%s137 + $0x538] sm:$0xff] %vm222, %v197
        %368 = vst.msk [vmem:[%s137 + $0x540] sm:$0xff] %vm198, %v197
        %369 = vst [vmem:[%s137 + $0x548] sm:$0xff] %v197
        %370 = vst [vmem:[%s137 + $0x550] sm:$0xff] %v197
        %371 = vst [vmem:[%s137 + $0x558] sm:$0xff] %v197
        %372 = vst [vmem:[%s137 + $0x560] sm:$0xff] %v197
        %373 = vst [vmem:[%s137 + $0x568] sm:$0xff] %v197
        %374 = vst [vmem:[%s137 + $0x570] sm:$0xff] %v197
        %375 = vst [vmem:[%s137 + $0x578] sm:$0xff] %v197
        %376 = vst [vmem:[%s137 + $0x580] sm:$0xff] %v197
        %377 = vst [vmem:[%s137 + $0x588] sm:$0xff] %v197
        %378 = vst [vmem:[%s137 + $0x590] sm:$0xff] %v197
        %379 = vst [vmem:[%s137 + $0x598] sm:$0xff] %v197
        %380 = vst [vmem:[%s137 + $0x5a0] sm:$0xff] %v197
        %381 = vst [vmem:[%s137 + $0x5a8] sm:$0xff] %v197
        %382 = vst [vmem:[%s137 + $0x5b0] sm:$0xff] %v197
        %383 = vst [vmem:[%s137 + $0x5b8] sm:$0xff] %v197
        %384 = vst [vmem:[%s137 + $0x5c0] sm:$0xff] %v197
        %385 = vst [vmem:[%s137 + $0x5c8] sm:$0xff] %v197
        %386 = vst [vmem:[%s137 + $0x5d0] sm:$0xff] %v197
        %387 = vst [vmem:[%s137 + $0x5d8] sm:$0xff] %v197
        %388 = vst [vmem:[%s137 + $0x5e0] sm:$0xff] %v197
        %389 = vst [vmem:[%s137 + $0x5e8] sm:$0xff] %v197
        %390 = vst [vmem:[%s137 + $0x5f0] sm:$0xff] %v197
        %391 = vst.msk [vmem:[%s137 + $0x5f8] sm:$0xff] %vm222, %v197
        %392 = vst.msk [vmem:[%s137 + $0x600] sm:$0xff] %vm198, %v197
        %393 = vst [vmem:[%s137 + $0x608] sm:$0xff] %v197
        %394 = vst [vmem:[%s137 + $0x610] sm:$0xff] %v197
        %395 = vst [vmem:[%s137 + $0x618] sm:$0xff] %v197
        %396 = vst [vmem:[%s137 + $0x620] sm:$0xff] %v197
        %397 = vst [vmem:[%s137 + $0x628] sm:$0xff] %v197
        %398 = vst [vmem:[%s137 + $0x630] sm:$0xff] %v197
        %399 = vst [vmem:[%s137 + $0x638] sm:$0xff] %v197
        %400 = vst [vmem:[%s137 + $0x640] sm:$0xff] %v197
        %401 = vst [vmem:[%s137 + $0x648] sm:$0xff] %v197
        %402 = vst [vmem:[%s137 + $0x650] sm:$0xff] %v197
        %403 = vst [vmem:[%s137 + $0x658] sm:$0xff] %v197
        %404 = vst [vmem:[%s137 + $0x660] sm:$0xff] %v197
        %405 = vst [vmem:[%s137 + $0x668] sm:$0xff] %v197
        %406 = vst [vmem:[%s137 + $0x670] sm:$0xff] %v197
        %407 = vst [vmem:[%s137 + $0x678] sm:$0xff] %v197
        %408 = vst [vmem:[%s137 + $0x680] sm:$0xff] %v197
        %409 = vst [vmem:[%s137 + $0x688] sm:$0xff] %v197
        %410 = vst [vmem:[%s137 + $0x690] sm:$0xff] %v197
        %411 = vst [vmem:[%s137 + $0x698] sm:$0xff] %v197
        %412 = vst [vmem:[%s137 + $0x6a0] sm:$0xff] %v197
        %413 = vst [vmem:[%s137 + $0x6a8] sm:$0xff] %v197
        %414 = vst [vmem:[%s137 + $0x6b0] sm:$0xff] %v197
        %415 = vst.msk [vmem:[%s137 + $0x6b8] sm:$0xff] %vm222, %v197
        %416 = vst.msk [vmem:[%s137 + $0x6c0] sm:$0xff] %vm198, %v197
        %417 = vst [vmem:[%s137 + $0x6c8] sm:$0xff] %v197
        %418 = vst [vmem:[%s137 + $0x6d0] sm:$0xff] %v197
        %419 = vst [vmem:[%s137 + $0x6d8] sm:$0xff] %v197
        %420 = vst [vmem:[%s137 + $0x6e0] sm:$0xff] %v197
        %421 = vst [vmem:[%s137 + $0x6e8] sm:$0xff] %v197
        %422 = vst [vmem:[%s137 + $0x6f0] sm:$0xff] %v197
        %423 = vst [vmem:[%s137 + $0x6f8] sm:$0xff] %v197
        %424 = vst [vmem:[%s137 + $0x700] sm:$0xff] %v197
        %425 = vst [vmem:[%s137 + $0x708] sm:$0xff] %v197
        %426 = vst [vmem:[%s137 + $0x710] sm:$0xff] %v197
        %427 = vst [vmem:[%s137 + $0x718] sm:$0xff] %v197
        %428 = vst [vmem:[%s137 + $0x720] sm:$0xff] %v197
        %429 = vst [vmem:[%s137 + $0x728] sm:$0xff] %v197
        %430 = vst [vmem:[%s137 + $0x730] sm:$0xff] %v197
        %431 = vst [vmem:[%s137 + $0x738] sm:$0xff] %v197
        %432 = vst [vmem:[%s137 + $0x740] sm:$0xff] %v197
        %433 = vst [vmem:[%s137 + $0x748] sm:$0xff] %v197
        %434 = vst [vmem:[%s137 + $0x750] sm:$0xff] %v197
        %435 = vst [vmem:[%s137 + $0x758] sm:$0xff] %v197
        %436 = vst [vmem:[%s137 + $0x760] sm:$0xff] %v197
        %437 = vst [vmem:[%s137 + $0x768] sm:$0xff] %v197
        %438 = vst [vmem:[%s137 + $0x770] sm:$0xff] %v197
        %439 = vst.msk [vmem:[%s137 + $0x778] sm:$0xff] %vm222, %v197
        %s440 = sand.u32 %s72, 1
        %s441 = scalar_lea.sflag [#allocation4], %s440
        %s442 = sand.u32 %s72, 1
        %s443 = smul.addr %s442, 1920
        %s444 = scalar_lea.vmem [#allocation3], %s443
        // Predicated region
        $region29: #{whisper_pre_pipeline.3} parent=27 // pred_check
          %p445 = pneg %p82
        $region30: #{whisper_pre_pipeline.3} parent=27 // pred_check_branch
          %447 = sbr.rel (%p445) target = $region32
        $region31: #{whisper_pre_pipeline.3} parent=27 // pred_region
          %s449 = ssub.s32 30720, 30720
          %450 = vsyncadd %s441, %s449
          %s451 = smul.addr %s17, 240
          %s452 = smul.addr %s451, 128
          %s453 = scalar_lea.hbm %s2, %s452
          %s454 = sshll.u32 %s444, 4
          %s455 = int_to_ptr.vmem [resolvable:$true] %s454
          %460 = dma.vmem_to_hbm [thread:$0]  %s455, 30720, %s453, %s441, 3072, 3072, 192
        $region32: #{whisper_pre_pipeline.3} parent=27 // pred_fallthru
          _
      $region28: #{whisper_pre_pipeline.3} parent=5 // pred_fallthru
        _
      %p461 = scmp.le.s32.totalorder 2, %s12
      // Predicated region
      $region33: #{whisper_pre_pipeline.3} parent=5 // pred_check
        %p462 = pneg %p461
      $region34: #{whisper_pre_pipeline.3} parent=5 // pred_check_branch
        %464 = sbr.rel (%p462) target = $region36
      $region35: #{whisper_pre_pipeline.3} parent=5 // pred_region
        %s465 = ssub.s32 %s12, 2
        // Predicated region
        $region37: #{whisper_pre_pipeline.3} parent=35 // pred_check
          %p466 = pneg %p88
        $region38: #{whisper_pre_pipeline.3} parent=35 // pred_check_branch
          %468 = sbr.rel (%p466) target = $region40
        $region39: #{whisper_pre_pipeline.3} parent=35 // pred_region
          %s469 = sand.u32 %s73, 1
          %s470 = scalar_lea.sflag [#allocation4], %s469
          %s471 = sand.u32 %s73, 1
          %s472 = smul.addr %s471, 1920
          %s473 = scalar_lea.vmem [#allocation3], %s472
          %474 = dma.done %s470, 30720
        $region40: #{whisper_pre_pipeline.3} parent=35 // pred_fallthru
          _
      $region36: #{whisper_pre_pipeline.3} parent=5 // pred_fallthru
        _
    $region6: #{whisper_pre_pipeline.3} parent=1 // loop_footer
      %s16 = sadd.s32 1, %s12
    $region7: #{whisper_pre_pipeline.3} parent=1 // loop_footer_branch
      %11 = sbr.rel target = $region3
    $region8: #{whisper_pre_pipeline.3} parent=1 // loop_exit
      _
    %475 = vsyncpa [#allocation4], 1
    %s476 = scalar_lea.sflag [#allocation4], 1
    %477 = vsyncpa %s476, 1

</llo_original>
